<compile_context>
chip_gen: v7x
topology: tpu7x:2x2x1
jax: 0.10.0
libtpu: 0.0.40
codegen_flags: <defaults>
</compile_context>

<pallas_src>
import functools

import numpy as np

import jax
import jax.numpy as jnp
from jax import lax
from jax.experimental import pallas as pl
from jax.experimental.pallas import tpu as pltpu


# ----------------------------------------------------------------------------
# Constant matrices: pooling + tap-shifted pooling, built once in numpy.
# ----------------------------------------------------------------------------
@functools.lru_cache(maxsize=None)
def _pool_conv_constants(H, W, pool_ratios, lp):
    """Returns (A, E, sizes):
       A : (9*P, N) f32.  Block t (rows t*P..(t+1)*P) maps flattened x (N, C) to the
           (di, dj) = (t//3-1, t%3-1) shifted adaptive-avg-pooled maps of all levels
           (zeros at the spatial border), levels stacked in order.
       E : (P, lp) f32 one-hot level-membership matrix (level dim padded to lp).
       sizes: per-level (oh, ow)."""
    N = H * W
    sizes = tuple((int(round(H / r)), int(round(W / r))) for r in pool_ratios)

    pool_mats = []
    for oh, ow in sizes:
        M = np.zeros((oh * ow, N), np.float32)
        for i in range(oh):
            h0 = (i * H) // oh
            h1 = -(-((i + 1) * H) // oh)               # ceil
            for j in range(ow):
                w0 = (j * W) // ow
                w1 = -(-((j + 1) * W) // ow)
                val = 1.0 / ((h1 - h0) * (w1 - w0))
                for r in range(h0, h1):
                    M[i * ow + j, r * W + w0:r * W + w1] = val
        pool_mats.append(M)

    blocks = []
    for t in range(9):                                  # tap-major, then level-major
        di, dj = t // 3 - 1, t % 3 - 1
        for (oh, ow), M in zip(sizes, pool_mats):
            S = np.zeros((oh * ow, oh * ow), np.float32)
            for i in range(oh):
                si = i + di
                if not (0 <= si < oh):
                    continue
                for j in range(ow):
                    sj = j + dj
                    if 0 <= sj < ow:
                        S[i * ow + j, si * ow + sj] = 1.0
            blocks.append(S @ M)
    A = np.concatenate(blocks, axis=0)                  # (9*P, N)

    P = sum(oh * ow for oh, ow in sizes)
    E = np.zeros((P, lp), np.float32)
    off = 0
    for l, (oh, ow) in enumerate(sizes):
        E[off:off + oh * ow, l] = 1.0
        off += oh * ow
    return A, E, sizes


# ----------------------------------------------------------------------------
# Fused kernel: pool-pyramid + DWConv + LayerNorm + multi-head attention + proj
# ----------------------------------------------------------------------------
def _fused_kernel(x_ref, a_ref, e_ref, w9_ref, bc_ref, g_ref, beta_ref,
                  wq_ref, wk_ref, wv_ref, wp_ref, bp_ref, o_ref, *,
                  num_heads, num_pool, lp, scale, eps):
    x = x_ref[0]                                        # (N, C)
    N, C = x.shape
    P = num_pool

    # ---- pooling + depthwise 3x3 conv + bias for the whole pyramid ----------
    # One MXU matmul produces every tap-shifted pooled map (all levels stacked).
    y = jnp.dot(a_ref[...], x, preferred_element_type=jnp.float32)    # (9P, C)
    e = e_ref[...]                                      # (P, lp) level one-hot
    w9 = w9_ref[...]                                    # (9*lp, C) tap-major taps
    # residual (centre-tap block t=4 is the un-shifted pooled map) + conv bias
    pools = y[4 * P:5 * P] + jnp.dot(e, bc_ref[...],
                                     preferred_element_type=jnp.float32)
    for t in range(9):                                  # static 3x3 taps
        w_t = jnp.dot(e, w9[t * lp:(t + 1) * lp, :],
                      preferred_element_type=jnp.float32)              # (P, C)
        pools = pools + y[t * P:(t + 1) * P] * w_t

    # ---- LayerNorm over channels ---------------------------------------------
    mu = jnp.mean(pools, axis=-1, keepdims=True)
    var = jnp.mean(jnp.square(pools - mu), axis=-1, keepdims=True)
    pn = (pools - mu) * lax.rsqrt(var + eps) * g_ref[...] + beta_ref[...]

    # ---- q / k / v projections (qkv_bias=False; scale folded into q) ---------
    q = jnp.dot(x, wq_ref[...], preferred_element_type=jnp.float32) * scale
    k = jnp.dot(pn, wk_ref[...], preferred_element_type=jnp.float32)   # (P, C)
    v = jnp.dot(pn, wv_ref[...], preferred_element_type=jnp.float32)   # (P, C)

    # ---- multi-head attention: channel-masked full-width heads ---------------
    # Requires C == num_heads * head_dim with contiguous per-head channel blocks
    # (asserted in the wrapper).  QK^T contracts the full C (other heads' k
    # channels zeroed), and a @ (v*mask) lands each head directly in its own
    # output columns, so no 16-lane head slices and no concat are needed.
    hd = C // num_heads
    c_idx = lax.broadcasted_iota(jnp.int32, (1, C), 1)
    out = jnp.zeros((N, C), jnp.float32)
    for h in range(num_heads):                          # static, tiny (num_heads=2)
        m = jnp.logical_and(c_idx >= h * hd, c_idx < (h + 1) * hd)
        kh = jnp.where(m, k, 0.0)
        vh = jnp.where(m, v, 0.0)
        s = jnp.einsum("nc,pc->np", q, kh, preferred_element_type=jnp.float32)
        s = s - jnp.max(s, axis=-1, keepdims=True)
        es = jnp.exp(s)
        att = es * pl.reciprocal(jnp.sum(es, axis=-1, keepdims=True), approx=True)
        out = out + jnp.dot(att, vh, preferred_element_type=jnp.float32)

    # ---- output projection (+ bias); dropouts are identity -------------------
    o_ref[0] = (jnp.dot(out, wp_ref[...], preferred_element_type=jnp.float32)
                + bp_ref[...]).astype(o_ref.dtype)


# ----------------------------------------------------------------------------
# Forward wrapper — one pallas_call, grid over batch ("parallel" for v7x 2 TCs)
# ----------------------------------------------------------------------------
def pooling_attention(x, H, W, params, pool_ratios=(1, 2, 3, 6), num_heads=2):
    B, N, C = x.shape
    assert N == H * W
    assert C % num_heads == 0        # masked-head trick assumes contiguous head blocks
    head_dim = C // num_heads
    scale = head_dim ** -0.5
    LP = 8                           # level dim padded to 8 (sublane-aligned K)

    A_np, E_np, sizes = _pool_conv_constants(H, W, tuple(pool_ratios), LP)
    P = sum(oh * ow for oh, ow in sizes)
    a_mat = jnp.asarray(A_np)        # (9P, N) constant
    e_mat = jnp.asarray(E_np)        # (P, LP) constant

    def shared(shape):
        nd = len(shape)
        return pl.BlockSpec(shape, lambda b, _nd=nd: (0,) * _nd)

    kernel = functools.partial(_fused_kernel, num_heads=num_heads,
                               num_pool=P, lp=LP, scale=scale, eps=1e-5)
    # TODO(synk): at real pcpvt stage dims (N~3136, P~4300) tile the query dim
    # (grid over (B, N//tq)) with online softmax over P and bf16 operands to fit
    # v7x's 64 MiB VMEM; unnecessary at this config.
    return pl.pallas_call(
        kernel,
        out_shape=jax.ShapeDtypeStruct((B, N, C), x.dtype),
        grid=(B,),
        in_specs=[
            pl.BlockSpec((1, N, C), lambda b: (b, 0, 0)),   # x
            shared(a_mat.shape),                            # A (pool + tap shifts)
            shared(e_mat.shape),                            # E (level one-hot)
            shared(params["dconv_w"].shape),                # (9*LP, C) dwconv taps
            shared(params["dconv_b"].shape),                # (LP, C)  dwconv bias
            shared(params["ln_g"].shape),                   # LN gamma
            shared(params["ln_b"].shape),                   # LN beta
            shared(params["wq"].shape),                     # Wq
            shared(params["wk"].shape),                     # Wk
            shared(params["wv"].shape),                     # Wv
            shared(params["wproj"].shape),                  # Wproj
            shared(params["bproj"].shape),                  # bproj
        ],
        out_specs=pl.BlockSpec((1, N, C), lambda b: (b, 0, 0)),
        compiler_params=pltpu.CompilerParams(dimension_semantics=("parallel",)),
    )(x, a_mat, e_mat, params["dconv_w"], params["dconv_b"],
      params["ln_g"], params["ln_b"], params["wq"], params["wk"], params["wv"],
      params["wproj"], params["bproj"])


def init_params(key, dim, pool_ratios=(1, 2, 3, 6), lp=8):
    L = len(pool_ratios)
    ks = jax.random.split(key, 4 + 2 * L)
    s = 0.02
    wkv = s * jax.random.normal(ks[1], (dim, 2 * dim), jnp.float32)
    p = {
        "wq":    s * jax.random.normal(ks[0], (dim, dim), jnp.float32),
        "wkv":   wkv,
        "wk":    wkv[:, :dim],
        "wv":    wkv[:, dim:],
        "wproj": s * jax.random.normal(ks[2], (dim, dim), jnp.float32),
        "bproj": s * jax.random.normal(ks[3], (1, dim), jnp.float32),
        "ln_g":  jnp.ones((1, dim), jnp.float32),
        "ln_b":  jnp.zeros((1, dim), jnp.float32),
        "d_convs": [],
    }
    for i in range(L):
        w = s * jax.random.normal(ks[4 + 2 * i], (3, 3, dim), jnp.float32)
        b = s * jax.random.normal(ks[5 + 2 * i], (1, dim), jnp.float32)
        p["d_convs"].append({"w9": w.reshape(9, dim), "b": b})
    # Packed depthwise weights for the fused kernel (done once at init, no per-call glue):
    # tap-major rows, level dim padded to lp.
    w_stack = jnp.stack([dc["w9"] for dc in p["d_convs"]], axis=1)      # (9, L, C)
    w_stack = jnp.pad(w_stack, ((0, 0), (0, lp - L), (0, 0)))           # (9, lp, C)
    p["dconv_w"] = w_stack.reshape(9 * lp, dim)
    b_stack = jnp.concatenate([dc["b"] for dc in p["d_convs"]], axis=0)  # (L, C)
    p["dconv_b"] = jnp.pad(b_stack, ((0, lp - L), (0, 0)))              # (lp, C)
    return p


# ----------------------------------------------------------------------------
# Pure-JAX reference (mirrors the PyTorch forward) for a sanity check
# ----------------------------------------------------------------------------
def _adaptive_avg_pool_exact(x, out_h, out_w):
    """Exact adaptive_avg_pool2d semantics (floor/ceil bin edges), NHWC. Test-only."""
    B, H, W, C = x.shape
    rows = []
    for i in range(out_h):
        h0, h1 = (i * H) // out_h, -(-((i + 1) * H) // out_h)
        cols = []
        for j in range(out_w):
            w0, w1 = (j * W) // out_w, -(-((j + 1) * W) // out_w)
            cols.append(jnp.mean(x[:, h0:h1, w0:w1, :], axis=(1, 2)))
        rows.append(jnp.stack(cols, axis=1))
    return jnp.stack(rows, axis=1)


def reference(x, H, W, params, pool_ratios=(1, 2, 3, 6), num_heads=2):
    B, N, C = x.shape
    hd = C // num_heads
    scale = hd ** -0.5
    x_sp = x.reshape(B, H, W, C)
    pools = []
    for r, dc in zip(pool_ratios, params["d_convs"]):
        oh, ow = int(round(H / r)), int(round(W / r))
        pooled = _adaptive_avg_pool_exact(x_sp, oh, ow)
        w = dc["w9"].reshape(3, 3, C)[:, :, None, :]            # HWIO, depthwise
        conv = lax.conv_general_dilated(
            pooled, w, window_strides=(1, 1), padding="SAME",
            dimension_numbers=("NHWC", "HWIO", "NHWC"),
            feature_group_count=C) + dc["b"][0]
        pooled = pooled + conv
        pools.append(pooled.reshape(B, oh * ow, C))
    pools = jnp.concatenate(pools, axis=1)
    mu = pools.mean(-1, keepdims=True)
    var = ((pools - mu) ** 2).mean(-1, keepdims=True)
    pn = (pools - mu) / jnp.sqrt(var + 1e-5) * params["ln_g"][0] + params["ln_b"][0]
    q = x @ params["wq"]
    kv = pn @ params["wkv"]
    k, v = kv[..., :C], kv[..., C:]
    qh = q.reshape(B, N, num_heads, hd).transpose(0, 2, 1, 3)
    kh = k.reshape(B, -1, num_heads, hd).transpose(0, 2, 1, 3)
    vh = v.reshape(B, -1, num_heads, hd).transpose(0, 2, 1, 3)
    a = jax.nn.softmax(jnp.einsum("bhnd,bhpd->bhnp", qh, kh) * scale, axis=-1)
    o = jnp.einsum("bhnp,bhpd->bhnd", a, vh).transpose(0, 2, 1, 3).reshape(B, N, C)
    return o @ params["wproj"] + params["bproj"][0]


if __name__ == "__main__":
    key = jax.random.PRNGKey(0)
    kx, kp = jax.random.split(key)

    B, H, W, C = 2, 12, 12, 32
    N = H * W
    pool_ratios = (1, 2, 3, 6)      # P = 144 + 36 + 16 + 4 = 200
    num_heads = 2

    x = jax.random.normal(kx, (B, N, C), jnp.float32)
    params = init_params(kp, C, pool_ratios)

    out = pooling_attention(x, H, W, params, pool_ratios, num_heads)
    out = jax.block_until_ready(out)

    ref = reference(x, H, W, params, pool_ratios, num_heads)
    assert out.shape == (B, N, C)
    assert bool(jnp.all(jnp.isfinite(out)))
    err = float(jnp.max(jnp.abs(out - ref)))
    assert err < 1e-2, err

    print("KERNEL_OK")
</pallas_src>

<mosaic_0001>
module attributes {stable_mosaic.version = 11 : i64} {
  func.func @_fused_kernel(%arg0: i32, %arg1: memref<1x144x32xf32, #tpu.memory_space<vmem>>, %arg2: memref<1800x144xf32, #tpu.memory_space<vmem>>, %arg3: memref<200x8xf32, #tpu.memory_space<vmem>>, %arg4: memref<72x32xf32, #tpu.memory_space<vmem>>, %arg5: memref<8x32xf32, #tpu.memory_space<vmem>>, %arg6: memref<1x32xf32, #tpu.memory_space<vmem>>, %arg7: memref<1x32xf32, #tpu.memory_space<vmem>>, %arg8: memref<32x32xf32, #tpu.memory_space<vmem>>, %arg9: memref<32x32xf32, #tpu.memory_space<vmem>>, %arg10: memref<32x32xf32, #tpu.memory_space<vmem>>, %arg11: memref<32x32xf32, #tpu.memory_space<vmem>>, %arg12: memref<1x32xf32, #tpu.memory_space<vmem>>, %arg13: memref<1x144x32xf32, #tpu.memory_space<vmem>>) attributes {dimension_semantics = [#tpu.dimension_semantics<parallel>], iteration_bounds = array<i64: 2>, scalar_prefetch = 0 : i64, scratch_operands = 0 : i64, tpu.core_type = #tpu.core_type<tc>, window_params = [{transform_indices = @transform_0, window_bounds = array<i64: 1, 144, 32>}, {pipeline_mode = #tpu.pipeline_mode<synchronous>, transform_indices = @transform_1, window_bounds = array<i64: 1800, 144>}, {pipeline_mode = #tpu.pipeline_mode<synchronous>, transform_indices = @transform_2, window_bounds = array<i64: 200, 8>}, {pipeline_mode = #tpu.pipeline_mode<synchronous>, transform_indices = @transform_3, window_bounds = array<i64: 72, 32>}, {pipeline_mode = #tpu.pipeline_mode<synchronous>, transform_indices = @transform_4, window_bounds = array<i64: 8, 32>}, {pipeline_mode = #tpu.pipeline_mode<synchronous>, transform_indices = @transform_5, window_bounds = array<i64: 1, 32>}, {pipeline_mode = #tpu.pipeline_mode<synchronous>, transform_indices = @transform_6, window_bounds = array<i64: 1, 32>}, {pipeline_mode = #tpu.pipeline_mode<synchronous>, transform_indices = @transform_7, window_bounds = array<i64: 32, 32>}, {pipeline_mode = #tpu.pipeline_mode<synchronous>, transform_indices = @transform_8, window_bounds = array<i64: 32, 32>}, {pipeline_mode = #tpu.pipeline_mode<synchronous>, transform_indices = @transform_9, window_bounds = array<i64: 32, 32>}, {pipeline_mode = #tpu.pipeline_mode<synchronous>, transform_indices = @transform_10, window_bounds = array<i64: 32, 32>}, {pipeline_mode = #tpu.pipeline_mode<synchronous>, transform_indices = @transform_11, window_bounds = array<i64: 1, 32>}, {transform_indices = @transform_12, window_bounds = array<i64: 1, 144, 32>}]} {
    %c0 = arith.constant 0 : index
    %c0_0 = arith.constant 0 : index
    %c0_1 = arith.constant 0 : index
    %0 = vector.load %arg1[%c0, %c0_0, %c0_1] : memref<1x144x32xf32, #tpu.memory_space<vmem>>, vector<1x144x32xf32>
    %1 = vector.shape_cast %0 : vector<1x144x32xf32> to vector<144x32xf32>
    %c0_2 = arith.constant 0 : index
    %c0_3 = arith.constant 0 : index
    %2 = vector.load %arg2[%c0_2, %c0_3] : memref<1800x144xf32, #tpu.memory_space<vmem>>, vector<1800x144xf32>
    %cst = arith.constant dense<0.000000e+00> : vector<1800x32xf32>
    %3 = tpu.matmul %2, %1, %cst {dimension_numbers = #tpu.dot_dimension_numbers<[1], [0], [0], [1], [0, 0, 1, 1], [], []>} : vector<1800x144xf32>, vector<144x32xf32>, vector<1800x32xf32> -> vector<1800x32xf32>
    %c0_4 = arith.constant 0 : index
    %c0_5 = arith.constant 0 : index
    %4 = vector.load %arg3[%c0_4, %c0_5] : memref<200x8xf32, #tpu.memory_space<vmem>>, vector<200x8xf32>
    %c0_6 = arith.constant 0 : index
    %c0_7 = arith.constant 0 : index
    %5 = vector.load %arg4[%c0_6, %c0_7] : memref<72x32xf32, #tpu.memory_space<vmem>>, vector<72x32xf32>
    %6 = vector.extract_strided_slice %3 {offsets = [800, 0], sizes = [200, 32], strides = [1, 1]} : vector<1800x32xf32> to vector<200x32xf32>
    %c0_8 = arith.constant 0 : index
    %c0_9 = arith.constant 0 : index
    %7 = vector.load %arg5[%c0_8, %c0_9] : memref<8x32xf32, #tpu.memory_space<vmem>>, vector<8x32xf32>
    %cst_10 = arith.constant dense<0.000000e+00> : vector<200x32xf32>
    %8 = tpu.matmul %4, %7, %cst_10 {dimension_numbers = #tpu.dot_dimension_numbers<[1], [0], [0], [1], [0, 0, 1, 1], [], []>} : vector<200x8xf32>, vector<8x32xf32>, vector<200x32xf32> -> vector<200x32xf32>
    %9 = arith.addf %6, %8 : vector<200x32xf32>
    %10 = vector.extract_strided_slice %5 {offsets = [0, 0], sizes = [8, 32], strides = [1, 1]} : vector<72x32xf32> to vector<8x32xf32>
    %cst_11 = arith.constant dense<0.000000e+00> : vector<200x32xf32>
    %11 = tpu.matmul %4, %10, %cst_11 {dimension_numbers = #tpu.dot_dimension_numbers<[1], [0], [0], [1], [0, 0, 1, 1], [], []>} : vector<200x8xf32>, vector<8x32xf32>, vector<200x32xf32> -> vector<200x32xf32>
    %12 = vector.extract_strided_slice %3 {offsets = [0, 0], sizes = [200, 32], strides = [1, 1]} : vector<1800x32xf32> to vector<200x32xf32>
    %13 = arith.mulf %12, %11 : vector<200x32xf32>
    %14 = arith.addf %9, %13 : vector<200x32xf32>
    %15 = vector.extract_strided_slice %5 {offsets = [8, 0], sizes = [8, 32], strides = [1, 1]} : vector<72x32xf32> to vector<8x32xf32>
    %cst_12 = arith.constant dense<0.000000e+00> : vector<200x32xf32>
    %16 = tpu.matmul %4, %15, %cst_12 {dimension_numbers = #tpu.dot_dimension_numbers<[1], [0], [0], [1], [0, 0, 1, 1], [], []>} : vector<200x8xf32>, vector<8x32xf32>, vector<200x32xf32> -> vector<200x32xf32>
    %17 = vector.extract_strided_slice %3 {offsets = [200, 0], sizes = [200, 32], strides = [1, 1]} : vector<1800x32xf32> to vector<200x32xf32>
    %18 = arith.mulf %17, %16 : vector<200x32xf32>
    %19 = arith.addf %14, %18 : vector<200x32xf32>
    %20 = vector.extract_strided_slice %5 {offsets = [16, 0], sizes = [8, 32], strides = [1, 1]} : vector<72x32xf32> to vector<8x32xf32>
    %cst_13 = arith.constant dense<0.000000e+00> : vector<200x32xf32>
    %21 = tpu.matmul %4, %20, %cst_13 {dimension_numbers = #tpu.dot_dimension_numbers<[1], [0], [0], [1], [0, 0, 1, 1], [], []>} : vector<200x8xf32>, vector<8x32xf32>, vector<200x32xf32> -> vector<200x32xf32>
    %22 = vector.extract_strided_slice %3 {offsets = [400, 0], sizes = [200, 32], strides = [1, 1]} : vector<1800x32xf32> to vector<200x32xf32>
    %23 = arith.mulf %22, %21 : vector<200x32xf32>
    %24 = arith.addf %19, %23 : vector<200x32xf32>
    %25 = vector.extract_strided_slice %5 {offsets = [24, 0], sizes = [8, 32], strides = [1, 1]} : vector<72x32xf32> to vector<8x32xf32>
    %cst_14 = arith.constant dense<0.000000e+00> : vector<200x32xf32>
    %26 = tpu.matmul %4, %25, %cst_14 {dimension_numbers = #tpu.dot_dimension_numbers<[1], [0], [0], [1], [0, 0, 1, 1], [], []>} : vector<200x8xf32>, vector<8x32xf32>, vector<200x32xf32> -> vector<200x32xf32>
    %27 = vector.extract_strided_slice %3 {offsets = [600, 0], sizes = [200, 32], strides = [1, 1]} : vector<1800x32xf32> to vector<200x32xf32>
    %28 = arith.mulf %27, %26 : vector<200x32xf32>
    %29 = arith.addf %24, %28 : vector<200x32xf32>
    %30 = vector.extract_strided_slice %5 {offsets = [32, 0], sizes = [8, 32], strides = [1, 1]} : vector<72x32xf32> to vector<8x32xf32>
    %cst_15 = arith.constant dense<0.000000e+00> : vector<200x32xf32>
    %31 = tpu.matmul %4, %30, %cst_15 {dimension_numbers = #tpu.dot_dimension_numbers<[1], [0], [0], [1], [0, 0, 1, 1], [], []>} : vector<200x8xf32>, vector<8x32xf32>, vector<200x32xf32> -> vector<200x32xf32>
    %32 = vector.extract_strided_slice %3 {offsets = [800, 0], sizes = [200, 32], strides = [1, 1]} : vector<1800x32xf32> to vector<200x32xf32>
    %33 = arith.mulf %32, %31 : vector<200x32xf32>
    %34 = arith.addf %29, %33 : vector<200x32xf32>
    %35 = vector.extract_strided_slice %5 {offsets = [40, 0], sizes = [8, 32], strides = [1, 1]} : vector<72x32xf32> to vector<8x32xf32>
    %cst_16 = arith.constant dense<0.000000e+00> : vector<200x32xf32>
    %36 = tpu.matmul %4, %35, %cst_16 {dimension_numbers = #tpu.dot_dimension_numbers<[1], [0], [0], [1], [0, 0, 1, 1], [], []>} : vector<200x8xf32>, vector<8x32xf32>, vector<200x32xf32> -> vector<200x32xf32>
    %37 = vector.extract_strided_slice %3 {offsets = [1000, 0], sizes = [200, 32], strides = [1, 1]} : vector<1800x32xf32> to vector<200x32xf32>
    %38 = arith.mulf %37, %36 : vector<200x32xf32>
    %39 = arith.addf %34, %38 : vector<200x32xf32>
    %40 = vector.extract_strided_slice %5 {offsets = [48, 0], sizes = [8, 32], strides = [1, 1]} : vector<72x32xf32> to vector<8x32xf32>
    %cst_17 = arith.constant dense<0.000000e+00> : vector<200x32xf32>
    %41 = tpu.matmul %4, %40, %cst_17 {dimension_numbers = #tpu.dot_dimension_numbers<[1], [0], [0], [1], [0, 0, 1, 1], [], []>} : vector<200x8xf32>, vector<8x32xf32>, vector<200x32xf32> -> vector<200x32xf32>
    %42 = vector.extract_strided_slice %3 {offsets = [1200, 0], sizes = [200, 32], strides = [1, 1]} : vector<1800x32xf32> to vector<200x32xf32>
    %43 = arith.mulf %42, %41 : vector<200x32xf32>
    %44 = arith.addf %39, %43 : vector<200x32xf32>
    %45 = vector.extract_strided_slice %5 {offsets = [56, 0], sizes = [8, 32], strides = [1, 1]} : vector<72x32xf32> to vector<8x32xf32>
    %cst_18 = arith.constant dense<0.000000e+00> : vector<200x32xf32>
    %46 = tpu.matmul %4, %45, %cst_18 {dimension_numbers = #tpu.dot_dimension_numbers<[1], [0], [0], [1], [0, 0, 1, 1], [], []>} : vector<200x8xf32>, vector<8x32xf32>, vector<200x32xf32> -> vector<200x32xf32>
    %47 = vector.extract_strided_slice %3 {offsets = [1400, 0], sizes = [200, 32], strides = [1, 1]} : vector<1800x32xf32> to vector<200x32xf32>
    %48 = arith.mulf %47, %46 : vector<200x32xf32>
    %49 = arith.addf %44, %48 : vector<200x32xf32>
    %50 = vector.extract_strided_slice %5 {offsets = [64, 0], sizes = [8, 32], strides = [1, 1]} : vector<72x32xf32> to vector<8x32xf32>
    %cst_19 = arith.constant dense<0.000000e+00> : vector<200x32xf32>
    %51 = tpu.matmul %4, %50, %cst_19 {dimension_numbers = #tpu.dot_dimension_numbers<[1], [0], [0], [1], [0, 0, 1, 1], [], []>} : vector<200x8xf32>, vector<8x32xf32>, vector<200x32xf32> -> vector<200x32xf32>
    %52 = vector.extract_strided_slice %3 {offsets = [1600, 0], sizes = [200, 32], strides = [1, 1]} : vector<1800x32xf32> to vector<200x32xf32>
    %53 = arith.mulf %52, %51 : vector<200x32xf32>
    %54 = arith.addf %49, %53 : vector<200x32xf32>
    %cst_20 = arith.constant dense<0.000000e+00> : vector<200xf32>
    %55 = vector.multi_reduction <add>, %54, %cst_20 [1] : vector<200x32xf32> to vector<200xf32>
    %56 = vector.shape_cast %55 : vector<200xf32> to vector<200x1xf32>
    %cst_21 = arith.constant 3.200000e+01 : f32
    %57 = vector.broadcast %cst_21 : f32 to vector<200x1xf32>
    %58 = arith.divf %56, %57 : vector<200x1xf32>
    %59 = vector.broadcast %58 : vector<200x1xf32> to vector<200x32xf32>
    %60 = arith.subf %54, %59 : vector<200x32xf32>
    %61 = arith.mulf %60, %60 : vector<200x32xf32>
    %cst_22 = arith.constant dense<0.000000e+00> : vector<200xf32>
    %62 = vector.multi_reduction <add>, %61, %cst_22 [1] : vector<200x32xf32> to vector<200xf32>
    %63 = vector.shape_cast %62 : vector<200xf32> to vector<200x1xf32>
    %cst_23 = arith.constant 3.200000e+01 : f32
    %64 = vector.broadcast %cst_23 : f32 to vector<200x1xf32>
    %65 = arith.divf %63, %64 : vector<200x1xf32>
    %66 = vector.broadcast %58 : vector<200x1xf32> to vector<200x32xf32>
    %67 = arith.subf %54, %66 : vector<200x32xf32>
    %cst_24 = arith.constant 9.99999974E-6 : f32
    %68 = vector.broadcast %cst_24 : f32 to vector<200x1xf32>
    %69 = arith.addf %65, %68 : vector<200x1xf32>
    %70 = math.rsqrt %69 : vector<200x1xf32>
    %71 = vector.broadcast %70 : vector<200x1xf32> to vector<200x32xf32>
    %72 = arith.mulf %67, %71 : vector<200x32xf32>
    %c0_25 = arith.constant 0 : index
    %c0_26 = arith.constant 0 : index
    %73 = vector.load %arg6[%c0_25, %c0_26] : memref<1x32xf32, #tpu.memory_space<vmem>>, vector<1x32xf32>
    %74 = vector.broadcast %73 : vector<1x32xf32> to vector<200x32xf32>
    %75 = arith.mulf %72, %74 : vector<200x32xf32>
    %c0_27 = arith.constant 0 : index
    %c0_28 = arith.constant 0 : index
    %76 = vector.load %arg7[%c0_27, %c0_28] : memref<1x32xf32, #tpu.memory_space<vmem>>, vector<1x32xf32>
    %77 = vector.broadcast %76 : vector<1x32xf32> to vector<200x32xf32>
    %78 = arith.addf %75, %77 : vector<200x32xf32>
    %c0_29 = arith.constant 0 : index
    %c0_30 = arith.constant 0 : index
    %79 = vector.load %arg8[%c0_29, %c0_30] : memref<32x32xf32, #tpu.memory_space<vmem>>, vector<32x32xf32>
    %cst_31 = arith.constant dense<0.000000e+00> : vector<144x32xf32>
    %80 = tpu.matmul %1, %79, %cst_31 {dimension_numbers = #tpu.dot_dimension_numbers<[1], [0], [0], [1], [0, 0, 1, 1], [], []>} : vector<144x32xf32>, vector<32x32xf32>, vector<144x32xf32> -> vector<144x32xf32>
    %cst_32 = arith.constant 2.500000e-01 : f32
    %81 = vector.broadcast %cst_32 : f32 to vector<144x32xf32>
    %82 = arith.mulf %80, %81 : vector<144x32xf32>
    %c0_33 = arith.constant 0 : index
    %c0_34 = arith.constant 0 : index
    %83 = vector.load %arg9[%c0_33, %c0_34] : memref<32x32xf32, #tpu.memory_space<vmem>>, vector<32x32xf32>
    %cst_35 = arith.constant dense<0.000000e+00> : vector<200x32xf32>
    %84 = tpu.matmul %78, %83, %cst_35 {dimension_numbers = #tpu.dot_dimension_numbers<[1], [0], [0], [1], [0, 0, 1, 1], [], []>} : vector<200x32xf32>, vector<32x32xf32>, vector<200x32xf32> -> vector<200x32xf32>
    %c0_36 = arith.constant 0 : index
    %c0_37 = arith.constant 0 : index
    %85 = vector.load %arg10[%c0_36, %c0_37] : memref<32x32xf32, #tpu.memory_space<vmem>>, vector<32x32xf32>
    %cst_38 = arith.constant dense<0.000000e+00> : vector<200x32xf32>
    %86 = tpu.matmul %78, %85, %cst_38 {dimension_numbers = #tpu.dot_dimension_numbers<[1], [0], [0], [1], [0, 0, 1, 1], [], []>} : vector<200x32xf32>, vector<32x32xf32>, vector<200x32xf32> -> vector<200x32xf32>
    %87 = tpu.iota {dimensions = array<i32: 1>} : vector<1x32xi32>
    %cst_39 = arith.constant 0.000000e+00 : f32
    %88 = vector.broadcast %cst_39 : f32 to vector<144x32xf32>
    %c0_i32 = arith.constant 0 : i32
    %89 = vector.broadcast %c0_i32 : i32 to vector<1x32xi32>
    %90 = arith.cmpi sge, %87, %89 : vector<1x32xi32>
    %c16_i32 = arith.constant 16 : i32
    %91 = vector.broadcast %c16_i32 : i32 to vector<1x32xi32>
    %92 = arith.cmpi slt, %87, %91 : vector<1x32xi32>
    %93 = arith.andi %90, %92 : vector<1x32xi1>
    %cst_40 = arith.constant 0.000000e+00 : f32
    %94 = vector.shape_cast %93 : vector<1x32xi1> to vector<1x32xi1>
    %95 = vector.broadcast %94 : vector<1x32xi1> to vector<200x32xi1>
    %96 = vector.broadcast %cst_40 : f32 to vector<200x32xf32>
    %97 = arith.select %95, %84, %96 : vector<200x32xi1>, vector<200x32xf32>
    %cst_41 = arith.constant 0.000000e+00 : f32
    %98 = vector.shape_cast %93 : vector<1x32xi1> to vector<1x32xi1>
    %99 = vector.broadcast %98 : vector<1x32xi1> to vector<200x32xi1>
    %100 = vector.broadcast %cst_41 : f32 to vector<200x32xf32>
    %101 = arith.select %99, %86, %100 : vector<200x32xi1>, vector<200x32xf32>
    "tpu.trace_start"() <{level = 10 : i32, message = "nc,pc->np"}> : () -> ()
    %cst_42 = arith.constant dense<0.000000e+00> : vector<144x200xf32>
    %102 = tpu.matmul %82, %97, %cst_42 {dimension_numbers = #tpu.dot_dimension_numbers<[1], [1], [0], [0], [0, 0, 1, 0], [], []>} : vector<144x32xf32>, vector<200x32xf32>, vector<144x200xf32> -> vector<144x200xf32>
    "tpu.trace_stop"() : () -> ()
    %cst_43 = arith.constant dense<0xFF800000> : vector<144xf32>
    %103 = vector.multi_reduction <maximumf>, %102, %cst_43 [1] : vector<144x200xf32> to vector<144xf32>
    %104 = vector.shape_cast %103 : vector<144xf32> to vector<144x1xf32>
    %105 = vector.broadcast %104 : vector<144x1xf32> to vector<144x200xf32>
    %106 = arith.subf %102, %105 : vector<144x200xf32>
    %107 = math.exp %106 : vector<144x200xf32>
    %cst_44 = arith.constant dense<0.000000e+00> : vector<144xf32>
    %108 = vector.multi_reduction <add>, %107, %cst_44 [1] : vector<144x200xf32> to vector<144xf32>
    %109 = vector.shape_cast %108 : vector<144xf32> to vector<144x1xf32>
    %110 = tpu.reciprocal %109 {approx = true} : vector<144x1xf32> -> vector<144x1xf32>
    %111 = vector.broadcast %110 : vector<144x1xf32> to vector<144x200xf32>
    %112 = arith.mulf %107, %111 : vector<144x200xf32>
    %cst_45 = arith.constant dense<0.000000e+00> : vector<144x32xf32>
    %113 = tpu.matmul %112, %101, %cst_45 {dimension_numbers = #tpu.dot_dimension_numbers<[1], [0], [0], [1], [0, 0, 1, 1], [], []>} : vector<144x200xf32>, vector<200x32xf32>, vector<144x32xf32> -> vector<144x32xf32>
    %114 = arith.addf %88, %113 : vector<144x32xf32>
    %c16_i32_46 = arith.constant 16 : i32
    %115 = vector.broadcast %c16_i32_46 : i32 to vector<1x32xi32>
    %116 = arith.cmpi sge, %87, %115 : vector<1x32xi32>
    %c32_i32 = arith.constant 32 : i32
    %117 = vector.broadcast %c32_i32 : i32 to vector<1x32xi32>
    %118 = arith.cmpi slt, %87, %117 : vector<1x32xi32>
    %119 = arith.andi %116, %118 : vector<1x32xi1>
    %cst_47 = arith.constant 0.000000e+00 : f32
    %120 = vector.shape_cast %119 : vector<1x32xi1> to vector<1x32xi1>
    %121 = vector.broadcast %120 : vector<1x32xi1> to vector<200x32xi1>
    %122 = vector.broadcast %cst_47 : f32 to vector<200x32xf32>
    %123 = arith.select %121, %84, %122 : vector<200x32xi1>, vector<200x32xf32>
    %cst_48 = arith.constant 0.000000e+00 : f32
    %124 = vector.shape_cast %119 : vector<1x32xi1> to vector<1x32xi1>
    %125 = vector.broadcast %124 : vector<1x32xi1> to vector<200x32xi1>
    %126 = vector.broadcast %cst_48 : f32 to vector<200x32xf32>
    %127 = arith.select %125, %86, %126 : vector<200x32xi1>, vector<200x32xf32>
    "tpu.trace_start"() <{level = 10 : i32, message = "nc,pc->np"}> : () -> ()
    %cst_49 = arith.constant dense<0.000000e+00> : vector<144x200xf32>
    %128 = tpu.matmul %82, %123, %cst_49 {dimension_numbers = #tpu.dot_dimension_numbers<[1], [1], [0], [0], [0, 0, 1, 0], [], []>} : vector<144x32xf32>, vector<200x32xf32>, vector<144x200xf32> -> vector<144x200xf32>
    "tpu.trace_stop"() : () -> ()
    %cst_50 = arith.constant dense<0xFF800000> : vector<144xf32>
    %129 = vector.multi_reduction <maximumf>, %128, %cst_50 [1] : vector<144x200xf32> to vector<144xf32>
    %130 = vector.shape_cast %129 : vector<144xf32> to vector<144x1xf32>
    %131 = vector.broadcast %130 : vector<144x1xf32> to vector<144x200xf32>
    %132 = arith.subf %128, %131 : vector<144x200xf32>
    %133 = math.exp %132 : vector<144x200xf32>
    %cst_51 = arith.constant dense<0.000000e+00> : vector<144xf32>
    %134 = vector.multi_reduction <add>, %133, %cst_51 [1] : vector<144x200xf32> to vector<144xf32>
    %135 = vector.shape_cast %134 : vector<144xf32> to vector<144x1xf32>
    %136 = tpu.reciprocal %135 {approx = true} : vector<144x1xf32> -> vector<144x1xf32>
    %137 = vector.broadcast %136 : vector<144x1xf32> to vector<144x200xf32>
    %138 = arith.mulf %133, %137 : vector<144x200xf32>
    %cst_52 = arith.constant dense<0.000000e+00> : vector<144x32xf32>
    %139 = tpu.matmul %138, %127, %cst_52 {dimension_numbers = #tpu.dot_dimension_numbers<[1], [0], [0], [1], [0, 0, 1, 1], [], []>} : vector<144x200xf32>, vector<200x32xf32>, vector<144x32xf32> -> vector<144x32xf32>
    %140 = arith.addf %114, %139 : vector<144x32xf32>
    %c0_53 = arith.constant 0 : index
    %c0_54 = arith.constant 0 : index
    %141 = vector.load %arg11[%c0_53, %c0_54] : memref<32x32xf32, #tpu.memory_space<vmem>>, vector<32x32xf32>
    %cst_55 = arith.constant dense<0.000000e+00> : vector<144x32xf32>
    %142 = tpu.matmul %140, %141, %cst_55 {dimension_numbers = #tpu.dot_dimension_numbers<[1], [0], [0], [1], [0, 0, 1, 1], [], []>} : vector<144x32xf32>, vector<32x32xf32>, vector<144x32xf32> -> vector<144x32xf32>
    %c0_56 = arith.constant 0 : index
    %c0_57 = arith.constant 0 : index
    %143 = vector.load %arg12[%c0_56, %c0_57] : memref<1x32xf32, #tpu.memory_space<vmem>>, vector<1x32xf32>
    %144 = vector.broadcast %143 : vector<1x32xf32> to vector<144x32xf32>
    %145 = arith.addf %142, %144 : vector<144x32xf32>
    %c0_58 = arith.constant 0 : index
    %c0_59 = arith.constant 0 : index
    %c0_60 = arith.constant 0 : index
    %146 = vector.load %arg13[%c0_58, %c0_59, %c0_60] : memref<1x144x32xf32, #tpu.memory_space<vmem>>, vector<1x144x32xf32>
    %147 = vector.shape_cast %146 : vector<1x144x32xf32> to vector<144x32xf32>
    %148 = vector.shape_cast %145 : vector<144x32xf32> to vector<1x144x32xf32>
    tpu.vector_store %arg13[%c0_58, %c0_59, %c0_60], %148 {strides = array<i32>} : memref<1x144x32xf32, #tpu.memory_space<vmem>>, vector<1x144x32xf32>,
    return
  }
  func.func @transform_0(%arg0: i32) -> (i32, i32, i32) {
    %c0_i32 = arith.constant 0 : i32
    %c0_i32_0 = arith.constant 0 : i32
    %c0_i32_1 = arith.constant 0 : i32
    return %arg0, %c0_i32, %c0_i32_0 : i32, i32, i32
  }
  func.func @transform_1(%arg0: i32) -> (i32, i32) {
    %c0_i32 = arith.constant 0 : i32
    %c0_i32_0 = arith.constant 0 : i32
    %c0_i32_1 = arith.constant 0 : i32
    return %c0_i32, %c0_i32_0 : i32, i32
  }
  func.func @transform_2(%arg0: i32) -> (i32, i32) {
    %c0_i32 = arith.constant 0 : i32
    %c0_i32_0 = arith.constant 0 : i32
    %c0_i32_1 = arith.constant 0 : i32
    return %c0_i32, %c0_i32_0 : i32, i32
  }
  func.func @transform_3(%arg0: i32) -> (i32, i32) {
    %c0_i32 = arith.constant 0 : i32
    %c0_i32_0 = arith.constant 0 : i32
    %c0_i32_1 = arith.constant 0 : i32
    return %c0_i32, %c0_i32_0 : i32, i32
  }
  func.func @transform_4(%arg0: i32) -> (i32, i32) {
    %c0_i32 = arith.constant 0 : i32
    %c0_i32_0 = arith.constant 0 : i32
    %c0_i32_1 = arith.constant 0 : i32
    return %c0_i32, %c0_i32_0 : i32, i32
  }
  func.func @transform_5(%arg0: i32) -> (i32, i32) {
    %c0_i32 = arith.constant 0 : i32
    %c0_i32_0 = arith.constant 0 : i32
    %c0_i32_1 = arith.constant 0 : i32
    return %c0_i32, %c0_i32_0 : i32, i32
  }
  func.func @transform_6(%arg0: i32) -> (i32, i32) {
    %c0_i32 = arith.constant 0 : i32
    %c0_i32_0 = arith.constant 0 : i32
    %c0_i32_1 = arith.constant 0 : i32
    return %c0_i32, %c0_i32_0 : i32, i32
  }
  func.func @transform_7(%arg0: i32) -> (i32, i32) {
    %c0_i32 = arith.constant 0 : i32
    %c0_i32_0 = arith.constant 0 : i32
    %c0_i32_1 = arith.constant 0 : i32
    return %c0_i32, %c0_i32_0 : i32, i32
  }
  func.func @transform_8(%arg0: i32) -> (i32, i32) {
    %c0_i32 = arith.constant 0 : i32
    %c0_i32_0 = arith.constant 0 : i32
    %c0_i32_1 = arith.constant 0 : i32
    return %c0_i32, %c0_i32_0 : i32, i32
  }
  func.func @transform_9(%arg0: i32) -> (i32, i32) {
    %c0_i32 = arith.constant 0 : i32
    %c0_i32_0 = arith.constant 0 : i32
    %c0_i32_1 = arith.constant 0 : i32
    return %c0_i32, %c0_i32_0 : i32, i32
  }
  func.func @transform_10(%arg0: i32) -> (i32, i32) {
    %c0_i32 = arith.constant 0 : i32
    %c0_i32_0 = arith.constant 0 : i32
    %c0_i32_1 = arith.constant 0 : i32
    return %c0_i32, %c0_i32_0 : i32, i32
  }
  func.func @transform_11(%arg0: i32) -> (i32, i32) {
    %c0_i32 = arith.constant 0 : i32
    %c0_i32_0 = arith.constant 0 : i32
    %c0_i32_1 = arith.constant 0 : i32
    return %c0_i32, %c0_i32_0 : i32, i32
  }
  func.func @transform_12(%arg0: i32) -> (i32, i32, i32) {
    %c0_i32 = arith.constant 0 : i32
    %c0_i32_0 = arith.constant 0 : i32
    %c0_i32_1 = arith.constant 0 : i32
    return %arg0, %c0_i32, %c0_i32_0 : i32, i32, i32
  }
}

</mosaic_0001>

<llo_original>
// kernel: tpu_custom_call.1
$region0: #{tpu_custom_call.1}
  #allocation0 [shape = 'u32[]', space=smem, size = 0x4, offset = 0x4, fixed_abs, tag = 'smem constant byte address 0x4 - core index']
  #allocation1 [shape = 'u32[144,128]{1,0:T(1,128)}', space=vmem, size = 0x12000, scoped, tag = 'internal scratch']
  %s0 = inlined_call_operand.vmem [shape: f32[2,144,32], index: 0, kind: input, shape index: {}]
  %s1 = inlined_call_operand.vmem [shape: f32[1800,144], index: 1, kind: input, shape index: {}]
  %s2 = inlined_call_operand.vmem [shape: f32[200,8], index: 2, kind: input, shape index: {}]
  %s3 = inlined_call_operand.vmem [shape: f32[72,32], index: 3, kind: input, shape index: {}]
  %s4 = inlined_call_operand.vmem [shape: f32[8,32], index: 4, kind: input, shape index: {}]
  %s5 = inlined_call_operand.vmem [shape: f32[1,32], index: 5, kind: input, shape index: {}]
  %s6 = inlined_call_operand.vmem [shape: f32[1,32], index: 6, kind: input, shape index: {}]
  %s7 = inlined_call_operand.vmem [shape: f32[32,32], index: 7, kind: input, shape index: {}]
  %s8 = inlined_call_operand.vmem [shape: f32[32,32], index: 8, kind: input, shape index: {}]
  %s9 = inlined_call_operand.vmem [shape: f32[32,32], index: 9, kind: input, shape index: {}]
  %s10 = inlined_call_operand.vmem [shape: f32[32,32], index: 10, kind: input, shape index: {}]
  %s11 = inlined_call_operand.vmem [shape: f32[1,32], index: 11, kind: input, shape index: {}]
  %s12 = inlined_call_operand.vmem [shape: f32[2,144,32], index: 12, kind: output, shape index: {}]
  %s13 = sld [smem:[#allocation0]]
  $region81: #{tpu_custom_call.1} parent=0
    _
  %s15 = ssub.s32 1, %s13
  %s16 = scalar_select 0, %s15, %s13
  loop: start=0, step=1, limit=4
  $region2: #{tpu_custom_call.1} parent=0 // loop_pre_header
    _
  $region3: #{tpu_custom_call.1} parent=0 // loop_header
    %s18 = sphi 0, %s22
    %p19 = scmp.ge.s32.totalorder %s18, 4
    %s28 = sphi 0, %s30
    %s31 = sphi 0, %s28
    %s32 = sphi 0, %s31
    %s48 = sphi 0, %s32
    %s52 = sphi 0, %s52
    %s54 = sphi 0, %s52
    %s55 = sphi 0, %s54
    %s69 = sphi 0, %s55
    %s73 = sphi 0, %s73
    %s75 = sphi 0, %s73
    %s76 = sphi 0, %s75
    %s90 = sphi 0, %s76
    %s94 = sphi 0, %s94
    %s96 = sphi 0, %s94
    %s97 = sphi 0, %s96
    %s111 = sphi 0, %s97
    %s115 = sphi 0, %s115
    %s117 = sphi 0, %s115
    %s118 = sphi 0, %s117
    %s132 = sphi 0, %s118
    %s136 = sphi 0, %s136
    %s138 = sphi 0, %s136
    %s139 = sphi 0, %s138
    %s153 = sphi 0, %s139
    %s157 = sphi 0, %s157
    %s159 = sphi 0, %s157
    %s160 = sphi 0, %s159
    %s174 = sphi 0, %s160
    %s178 = sphi 0, %s178
    %s180 = sphi 0, %s178
    %s181 = sphi 0, %s180
    %s195 = sphi 0, %s181
    %s199 = sphi 0, %s199
    %s201 = sphi 0, %s199
    %s202 = sphi 0, %s201
    %s216 = sphi 0, %s202
    %s220 = sphi 0, %s220
    %s222 = sphi 0, %s220
    %s223 = sphi 0, %s222
    %s237 = sphi 0, %s223
    %s241 = sphi 0, %s241
    %s243 = sphi 0, %s241
    %s244 = sphi 0, %s243
    %s258 = sphi 0, %s244
    %s262 = sphi 0, %s262
    %s264 = sphi 0, %s262
    %s265 = sphi 0, %s264
    %s279 = sphi 0, %s265
    %s285 = sphi 0, %s287
    %s288 = sphi 0, %s285
    %s289 = sphi 0, %s288
    %s305 = sphi 0, %s289
  $region4: #{tpu_custom_call.1} parent=0 // loop_header_branch
    %21 = sbr.rel (%p19) target = $region8
  $region5: #{tpu_custom_call.1} parent=0 // loop_body
    %s23 = ssub.s32 %s18, 1
    %s24 = ssub.s32 %s18, 2
    %s25 = sadd.s32 %s18, 1
    %s26 = ssub.s32 %s18, %s25
    %p27 = scmp.eq.s32.totalorder %s26, 0
    %s29 = sadd.s32 %s28, 1
    %s30 = scalar_select %p27, %s28, %s29
    %p33 = pneg %p27
    %p34 = scmp.eq.s32.totalorder %s18, 1
    %p35 = por %p33, %p34
    %p36 = scmp.ne.s32.totalorder %s28, %s31
    %p37 = scmp.eq.s32.totalorder %s18, 0
    %p38 = por %p36, %p37
    %p39 = scmp.ne.s32.totalorder %s28, %s31
    %p40 = scmp.eq.s32.totalorder %s23, 1
    %p41 = por %p39, %p40
    %p42 = scmp.ne.s32.totalorder %s31, %s32
    %p43 = scmp.eq.s32.totalorder %s23, 0
    %p44 = por %p42, %p43
    %p45 = scmp.ne.s32.totalorder %s31, %s32
    %p46 = scmp.eq.s32.totalorder %s24, 1
    %p47 = por %p45, %p46
    %p49 = scmp.ne.s32.totalorder %s32, %s48
    %p50 = scmp.eq.s32.totalorder %s24, 0
    %p51 = por %p49, %p50
    %s53 = sadd.s32 %s52, 1
    %p56 = scmp.eq.s32.totalorder %s18, 1
    %p57 = scmp.ne.s32.totalorder %s52, %s54
    %p58 = scmp.eq.s32.totalorder %s18, 0
    %p59 = por %p57, %p58
    %p60 = scmp.ne.s32.totalorder %s52, %s54
    %p61 = scmp.eq.s32.totalorder %s23, 1
    %p62 = por %p60, %p61
    %p63 = scmp.ne.s32.totalorder %s54, %s55
    %p64 = scmp.eq.s32.totalorder %s23, 0
    %p65 = por %p63, %p64
    %p66 = scmp.ne.s32.totalorder %s54, %s55
    %p67 = scmp.eq.s32.totalorder %s24, 1
    %p68 = por %p66, %p67
    %p70 = scmp.ne.s32.totalorder %s55, %s69
    %p71 = scmp.eq.s32.totalorder %s24, 0
    %p72 = por %p70, %p71
    %s74 = sadd.s32 %s73, 1
    %p77 = scmp.eq.s32.totalorder %s18, 1
    %p78 = scmp.ne.s32.totalorder %s73, %s75
    %p79 = scmp.eq.s32.totalorder %s18, 0
    %p80 = por %p78, %p79
    %p81 = scmp.ne.s32.totalorder %s73, %s75
    %p82 = scmp.eq.s32.totalorder %s23, 1
    %p83 = por %p81, %p82
    %p84 = scmp.ne.s32.totalorder %s75, %s76
    %p85 = scmp.eq.s32.totalorder %s23, 0
    %p86 = por %p84, %p85
    %p87 = scmp.ne.s32.totalorder %s75, %s76
    %p88 = scmp.eq.s32.totalorder %s24, 1
    %p89 = por %p87, %p88
    %p91 = scmp.ne.s32.totalorder %s76, %s90
    %p92 = scmp.eq.s32.totalorder %s24, 0
    %p93 = por %p91, %p92
    %s95 = sadd.s32 %s94, 1
    %p98 = scmp.eq.s32.totalorder %s18, 1
    %p99 = scmp.ne.s32.totalorder %s94, %s96
    %p100 = scmp.eq.s32.totalorder %s18, 0
    %p101 = por %p99, %p100
    %p102 = scmp.ne.s32.totalorder %s94, %s96
    %p103 = scmp.eq.s32.totalorder %s23, 1
    %p104 = por %p102, %p103
    %p105 = scmp.ne.s32.totalorder %s96, %s97
    %p106 = scmp.eq.s32.totalorder %s23, 0
    %p107 = por %p105, %p106
    %p108 = scmp.ne.s32.totalorder %s96, %s97
    %p109 = scmp.eq.s32.totalorder %s24, 1
    %p110 = por %p108, %p109
    %p112 = scmp.ne.s32.totalorder %s97, %s111
    %p113 = scmp.eq.s32.totalorder %s24, 0
    %p114 = por %p112, %p113
    %s116 = sadd.s32 %s115, 1
    %p119 = scmp.eq.s32.totalorder %s18, 1
    %p120 = scmp.ne.s32.totalorder %s115, %s117
    %p121 = scmp.eq.s32.totalorder %s18, 0
    %p122 = por %p120, %p121
    %p123 = scmp.ne.s32.totalorder %s115, %s117
    %p124 = scmp.eq.s32.totalorder %s23, 1
    %p125 = por %p123, %p124
    %p126 = scmp.ne.s32.totalorder %s117, %s118
    %p127 = scmp.eq.s32.totalorder %s23, 0
    %p128 = por %p126, %p127
    %p129 = scmp.ne.s32.totalorder %s117, %s118
    %p130 = scmp.eq.s32.totalorder %s24, 1
    %p131 = por %p129, %p130
    %p133 = scmp.ne.s32.totalorder %s118, %s132
    %p134 = scmp.eq.s32.totalorder %s24, 0
    %p135 = por %p133, %p134
    %s137 = sadd.s32 %s136, 1
    %p140 = scmp.eq.s32.totalorder %s18, 1
    %p141 = scmp.ne.s32.totalorder %s136, %s138
    %p142 = scmp.eq.s32.totalorder %s18, 0
    %p143 = por %p141, %p142
    %p144 = scmp.ne.s32.totalorder %s136, %s138
    %p145 = scmp.eq.s32.totalorder %s23, 1
    %p146 = por %p144, %p145
    %p147 = scmp.ne.s32.totalorder %s138, %s139
    %p148 = scmp.eq.s32.totalorder %s23, 0
    %p149 = por %p147, %p148
    %p150 = scmp.ne.s32.totalorder %s138, %s139
    %p151 = scmp.eq.s32.totalorder %s24, 1
    %p152 = por %p150, %p151
    %p154 = scmp.ne.s32.totalorder %s139, %s153
    %p155 = scmp.eq.s32.totalorder %s24, 0
    %p156 = por %p154, %p155
    %s158 = sadd.s32 %s157, 1
    %p161 = scmp.eq.s32.totalorder %s18, 1
    %p162 = scmp.ne.s32.totalorder %s157, %s159
    %p163 = scmp.eq.s32.totalorder %s18, 0
    %p164 = por %p162, %p163
    %p165 = scmp.ne.s32.totalorder %s157, %s159
    %p166 = scmp.eq.s32.totalorder %s23, 1
    %p167 = por %p165, %p166
    %p168 = scmp.ne.s32.totalorder %s159, %s160
    %p169 = scmp.eq.s32.totalorder %s23, 0
    %p170 = por %p168, %p169
    %p171 = scmp.ne.s32.totalorder %s159, %s160
    %p172 = scmp.eq.s32.totalorder %s24, 1
    %p173 = por %p171, %p172
    %p175 = scmp.ne.s32.totalorder %s160, %s174
    %p176 = scmp.eq.s32.totalorder %s24, 0
    %p177 = por %p175, %p176
    %s179 = sadd.s32 %s178, 1
    %p182 = scmp.eq.s32.totalorder %s18, 1
    %p183 = scmp.ne.s32.totalorder %s178, %s180
    %p184 = scmp.eq.s32.totalorder %s18, 0
    %p185 = por %p183, %p184
    %p186 = scmp.ne.s32.totalorder %s178, %s180
    %p187 = scmp.eq.s32.totalorder %s23, 1
    %p188 = por %p186, %p187
    %p189 = scmp.ne.s32.totalorder %s180, %s181
    %p190 = scmp.eq.s32.totalorder %s23, 0
    %p191 = por %p189, %p190
    %p192 = scmp.ne.s32.totalorder %s180, %s181
    %p193 = scmp.eq.s32.totalorder %s24, 1
    %p194 = por %p192, %p193
    %p196 = scmp.ne.s32.totalorder %s181, %s195
    %p197 = scmp.eq.s32.totalorder %s24, 0
    %p198 = por %p196, %p197
    %s200 = sadd.s32 %s199, 1
    %p203 = scmp.eq.s32.totalorder %s18, 1
    %p204 = scmp.ne.s32.totalorder %s199, %s201
    %p205 = scmp.eq.s32.totalorder %s18, 0
    %p206 = por %p204, %p205
    %p207 = scmp.ne.s32.totalorder %s199, %s201
    %p208 = scmp.eq.s32.totalorder %s23, 1
    %p209 = por %p207, %p208
    %p210 = scmp.ne.s32.totalorder %s201, %s202
    %p211 = scmp.eq.s32.totalorder %s23, 0
    %p212 = por %p210, %p211
    %p213 = scmp.ne.s32.totalorder %s201, %s202
    %p214 = scmp.eq.s32.totalorder %s24, 1
    %p215 = por %p213, %p214
    %p217 = scmp.ne.s32.totalorder %s202, %s216
    %p218 = scmp.eq.s32.totalorder %s24, 0
    %p219 = por %p217, %p218
    %s221 = sadd.s32 %s220, 1
    %p224 = scmp.eq.s32.totalorder %s18, 1
    %p225 = scmp.ne.s32.totalorder %s220, %s222
    %p226 = scmp.eq.s32.totalorder %s18, 0
    %p227 = por %p225, %p226
    %p228 = scmp.ne.s32.totalorder %s220, %s222
    %p229 = scmp.eq.s32.totalorder %s23, 1
    %p230 = por %p228, %p229
    %p231 = scmp.ne.s32.totalorder %s222, %s223
    %p232 = scmp.eq.s32.totalorder %s23, 0
    %p233 = por %p231, %p232
    %p234 = scmp.ne.s32.totalorder %s222, %s223
    %p235 = scmp.eq.s32.totalorder %s24, 1
    %p236 = por %p234, %p235
    %p238 = scmp.ne.s32.totalorder %s223, %s237
    %p239 = scmp.eq.s32.totalorder %s24, 0
    %p240 = por %p238, %p239
    %s242 = sadd.s32 %s241, 1
    %p245 = scmp.eq.s32.totalorder %s18, 1
    %p246 = scmp.ne.s32.totalorder %s241, %s243
    %p247 = scmp.eq.s32.totalorder %s18, 0
    %p248 = por %p246, %p247
    %p249 = scmp.ne.s32.totalorder %s241, %s243
    %p250 = scmp.eq.s32.totalorder %s23, 1
    %p251 = por %p249, %p250
    %p252 = scmp.ne.s32.totalorder %s243, %s244
    %p253 = scmp.eq.s32.totalorder %s23, 0
    %p254 = por %p252, %p253
    %p255 = scmp.ne.s32.totalorder %s243, %s244
    %p256 = scmp.eq.s32.totalorder %s24, 1
    %p257 = por %p255, %p256
    %p259 = scmp.ne.s32.totalorder %s244, %s258
    %p260 = scmp.eq.s32.totalorder %s24, 0
    %p261 = por %p259, %p260
    %s263 = sadd.s32 %s262, 1
    %p266 = scmp.eq.s32.totalorder %s18, 1
    %p267 = scmp.ne.s32.totalorder %s262, %s264
    %p268 = scmp.eq.s32.totalorder %s18, 0
    %p269 = por %p267, %p268
    %p270 = scmp.ne.s32.totalorder %s262, %s264
    %p271 = scmp.eq.s32.totalorder %s23, 1
    %p272 = por %p270, %p271
    %p273 = scmp.ne.s32.totalorder %s264, %s265
    %p274 = scmp.eq.s32.totalorder %s23, 0
    %p275 = por %p273, %p274
    %p276 = scmp.ne.s32.totalorder %s264, %s265
    %p277 = scmp.eq.s32.totalorder %s24, 1
    %p278 = por %p276, %p277
    %p280 = scmp.ne.s32.totalorder %s265, %s279
    %p281 = scmp.eq.s32.totalorder %s24, 0
    %p282 = por %p280, %p281
    %s283 = ssub.s32 %s18, %s25
    %p284 = scmp.eq.s32.totalorder %s283, 0
    %s286 = sadd.s32 %s285, 1
    %s287 = scalar_select %p284, %s285, %s286
    %p290 = pneg %p284
    %p291 = scmp.eq.s32.totalorder %s18, 1
    %p292 = por %p290, %p291
    %p293 = scmp.ne.s32.totalorder %s285, %s288
    %p294 = scmp.eq.s32.totalorder %s18, 0
    %p295 = por %p293, %p294
    %p296 = scmp.ne.s32.totalorder %s285, %s288
    %p297 = scmp.eq.s32.totalorder %s23, 1
    %p298 = por %p296, %p297
    %p299 = scmp.ne.s32.totalorder %s288, %s289
    %p300 = scmp.eq.s32.totalorder %s23, 0
    %p301 = por %p299, %p300
    %p302 = scmp.ne.s32.totalorder %s288, %s289
    %p303 = scmp.eq.s32.totalorder %s24, 1
    %p304 = por %p302, %p303
    %p306 = scmp.ne.s32.totalorder %s289, %s305
    %p307 = scmp.eq.s32.totalorder %s24, 0
    %p308 = por %p306, %p307
    %p309 = scmp.le.s32.totalorder 1, %s18
    %p310 = scmp.lt.s32.totalorder %s18, 3
    %p311 = pnand %p309, %p310
    %p312 = pneg %p311
    // Predicated region
    $region9: #{tpu_custom_call.1} parent=5 // pred_check
      _
    $region10: #{tpu_custom_call.1} parent=5 // pred_check_branch
      %314 = sbr.rel (%p311) target = $region12
    $region11: #{tpu_custom_call.1} parent=5 // pred_region
      %s315 = ssub.s32 %s18, 1
      // Predicated region
      $region13: #{tpu_custom_call.1} parent=11 // pred_check
        %p316 = pneg %p65
      $region14: #{tpu_custom_call.1} parent=11 // pred_check_branch
        %318 = sbr.rel (%p316) target = $region16
      $region15: #{tpu_custom_call.1} parent=11 // pred_region
        _
      $region16: #{tpu_custom_call.1} parent=11 // pred_fallthru
        _
      // Predicated region
      $region17: #{tpu_custom_call.1} parent=11 // pred_check
        %p319 = pneg %p86
      $region18: #{tpu_custom_call.1} parent=11 // pred_check_branch
        %321 = sbr.rel (%p319) target = $region20
      $region19: #{tpu_custom_call.1} parent=11 // pred_region
        _
      $region20: #{tpu_custom_call.1} parent=11 // pred_fallthru
        _
      // Predicated region
      $region21: #{tpu_custom_call.1} parent=11 // pred_check
        %p322 = pneg %p107
      $region22: #{tpu_custom_call.1} parent=11 // pred_check_branch
        %324 = sbr.rel (%p322) target = $region24
      $region23: #{tpu_custom_call.1} parent=11 // pred_region
        _
      $region24: #{tpu_custom_call.1} parent=11 // pred_fallthru
        _
      // Predicated region
      $region25: #{tpu_custom_call.1} parent=11 // pred_check
        %p325 = pneg %p128
      $region26: #{tpu_custom_call.1} parent=11 // pred_check_branch
        %327 = sbr.rel (%p325) target = $region28
      $region27: #{tpu_custom_call.1} parent=11 // pred_region
        _
      $region28: #{tpu_custom_call.1} parent=11 // pred_fallthru
        _
      // Predicated region
      $region29: #{tpu_custom_call.1} parent=11 // pred_check
        %p328 = pneg %p149
      $region30: #{tpu_custom_call.1} parent=11 // pred_check_branch
        %330 = sbr.rel (%p328) target = $region32
      $region31: #{tpu_custom_call.1} parent=11 // pred_region
        _
      $region32: #{tpu_custom_call.1} parent=11 // pred_fallthru
        _
      // Predicated region
      $region33: #{tpu_custom_call.1} parent=11 // pred_check
        %p331 = pneg %p170
      $region34: #{tpu_custom_call.1} parent=11 // pred_check_branch
        %333 = sbr.rel (%p331) target = $region36
      $region35: #{tpu_custom_call.1} parent=11 // pred_region
        _
      $region36: #{tpu_custom_call.1} parent=11 // pred_fallthru
        _
      // Predicated region
      $region37: #{tpu_custom_call.1} parent=11 // pred_check
        %p334 = pneg %p191
      $region38: #{tpu_custom_call.1} parent=11 // pred_check_branch
        %336 = sbr.rel (%p334) target = $region40
      $region39: #{tpu_custom_call.1} parent=11 // pred_region
        _
      $region40: #{tpu_custom_call.1} parent=11 // pred_fallthru
        _
      // Predicated region
      $region41: #{tpu_custom_call.1} parent=11 // pred_check
        %p337 = pneg %p212
      $region42: #{tpu_custom_call.1} parent=11 // pred_check_branch
        %339 = sbr.rel (%p337) target = $region44
      $region43: #{tpu_custom_call.1} parent=11 // pred_region
        _
      $region44: #{tpu_custom_call.1} parent=11 // pred_fallthru
        _
      // Predicated region
      $region45: #{tpu_custom_call.1} parent=11 // pred_check
        %p340 = pneg %p233
      $region46: #{tpu_custom_call.1} parent=11 // pred_check_branch
        %342 = sbr.rel (%p340) target = $region48
      $region47: #{tpu_custom_call.1} parent=11 // pred_region
        _
      $region48: #{tpu_custom_call.1} parent=11 // pred_fallthru
        _
      // Predicated region
      $region49: #{tpu_custom_call.1} parent=11 // pred_check
        %p343 = pneg %p254
      $region50: #{tpu_custom_call.1} parent=11 // pred_check_branch
        %345 = sbr.rel (%p343) target = $region52
      $region51: #{tpu_custom_call.1} parent=11 // pred_region
        _
      $region52: #{tpu_custom_call.1} parent=11 // pred_fallthru
        _
      // Predicated region
      $region53: #{tpu_custom_call.1} parent=11 // pred_check
        %p346 = pneg %p275
      $region54: #{tpu_custom_call.1} parent=11 // pred_check_branch
        %348 = sbr.rel (%p346) target = $region56
      $region55: #{tpu_custom_call.1} parent=11 // pred_region
        _
      $region56: #{tpu_custom_call.1} parent=11 // pred_fallthru
        _
    $region12: #{tpu_custom_call.1} parent=5 // pred_fallthru
      _
    %p349 = scmp.lt.s32.totalorder %s18, 2
    // Predicated region
    $region57: #{tpu_custom_call.1} parent=5 // pred_check
      %p350 = pneg %p349
    $region58: #{tpu_custom_call.1} parent=5 // pred_check_branch
      %352 = sbr.rel (%p350) target = $region60
    $region59: #{tpu_custom_call.1} parent=5 // pred_region
      // Predicated region
      $region61: #{tpu_custom_call.1} parent=59 // pred_check
        %p353 = pneg %p38
      $region62: #{tpu_custom_call.1} parent=59 // pred_check_branch
        %355 = sbr.rel (%p353) target = $region64
      $region63: #{tpu_custom_call.1} parent=59 // pred_region
        %p356 = scmp.lt.s32.totalorder %s18, 1
        %s357 = scalar_select %p356, %s18, 1
        %s358 = smul.addr %s357, 18
        %s359 = smul.addr %s358, 8
        %s360 = scalar_lea.vmem %s0, %s359
      $region64: #{tpu_custom_call.1} parent=59 // pred_fallthru
        _
    $region60: #{tpu_custom_call.1} parent=5 // pred_fallthru
      _
    %p361 = scmp.le.s32.totalorder 1, %s18
    %p362 = scmp.lt.s32.totalorder %s18, 3
    %p363 = pnand %p361, %p362
    %p364 = pneg %p363
    // Predicated region
    $region65: #{tpu_custom_call.1} parent=5 // pred_check
      _
    $region66: #{tpu_custom_call.1} parent=5 // pred_check_branch
      %366 = sbr.rel (%p363) target = $region68
    $region67: #{tpu_custom_call.1} parent=5 // pred_region
      %s367 = ssub.s32 %s18, 1
      %p368 = scmp.lt.s32.totalorder %s23, 1
      %s369 = scalar_select %p368, %s23, 1
      %s370 = smul.addr %s369, 18
      %s371 = smul.addr %s370, 8
      %s372 = scalar_lea.vmem %s0, %s371
      %p373 = pneg %p44
      %p374 = pneg %p41
      %p375 = pneg %p65
      %p376 = pneg %p62
      %p377 = pneg %p86
      %p378 = pneg %p83
      %p379 = pneg %p107
      %p380 = pneg %p104
      %p381 = pneg %p128
      %p382 = pneg %p125
      %p383 = pneg %p149
      %p384 = pneg %p146
      %p385 = pneg %p170
      %p386 = pneg %p167
      %p387 = pneg %p191
      %p388 = pneg %p188
      %p389 = pneg %p212
      %p390 = pneg %p209
      %p391 = pneg %p233
      %p392 = pneg %p230
      %p393 = pneg %p254
      %p394 = pneg %p251
      %p395 = pneg %p275
      %p396 = pneg %p272
      %p397 = pneg %p301
      %p398 = pneg %p298
      %p399 = scmp.lt.s32.totalorder %s23, 1
      %s400 = scalar_select %p399, %s23, 1
      %s401 = smul.addr %s400, 18
      %s402 = smul.addr %s401, 8
      %s403 = scalar_lea.vmem %s12, %s402
      %p404 = scmp.lt.s32.totalorder %s23, 1
      %s405 = scalar_select %p404, %s23, 1
      %s406 = smul.addr %s405, 18
      %s407 = smul.addr %s406, 8
      %s408 = scalar_lea.vmem %s0, %s407
      %p409 = scmp.lt.s32.totalorder %s23, 1
      %s410 = scalar_select %p409, %s23, 1
      %s411 = smul.addr %s410, 18
      %s412 = smul.addr %s411, 8
      %s413 = scalar_lea.vmem %s12, %s412
      %v414 = vld [vmem:[%s408] sm:$0xff]
      %v415 = vld [vmem:[%s408 + $0x8] sm:$0xff]
      %v416 = vld [vmem:[%s408 + $0x10] sm:$0xff]
      %v417 = vld [vmem:[%s408 + $0x18] sm:$0xff]
      %v418 = vld [vmem:[%s408 + $0x20] sm:$0xff]
      %v419 = vld [vmem:[%s408 + $0x28] sm:$0xff]
      %v420 = vld [vmem:[%s408 + $0x30] sm:$0xff]
      %v421 = vld [vmem:[%s408 + $0x38] sm:$0xff]
      %v422 = vld [vmem:[%s408 + $0x40] sm:$0xff]
      %v423 = vld [vmem:[%s408 + $0x48] sm:$0xff]
      %v424 = vld [vmem:[%s408 + $0x50] sm:$0xff]
      %v425 = vld [vmem:[%s408 + $0x58] sm:$0xff]
      %v426 = vld [vmem:[%s408 + $0x60] sm:$0xff]
      %v427 = vld [vmem:[%s408 + $0x68] sm:$0xff]
      %v428 = vld [vmem:[%s408 + $0x70] sm:$0xff]
      %v429 = vld [vmem:[%s408 + $0x78] sm:$0xff]
      %v430 = vld [vmem:[%s408 + $0x80] sm:$0xff]
      %v431 = vld [vmem:[%s408 + $0x88] sm:$0xff]
      %v432 = vld [vmem:[%s1] sm:$0xff]
      %v433 = vld [vmem:[%s1 + $0x8] sm:$0xff]
      %v434 = vld [vmem:[%s1 + $0x10] sm:$0xff]
      %v435 = vld [vmem:[%s1 + $0x18] sm:$0xff]
      %v436 = vld [vmem:[%s1 + $0x20] sm:$0xff]
      %v437 = vld [vmem:[%s1 + $0x28] sm:$0xff]
      %v438 = vld [vmem:[%s1 + $0x30] sm:$0xff]
      %v439 = vld [vmem:[%s1 + $0x38] sm:$0xff]
      %v440 = vld [vmem:[%s1 + $0x40] sm:$0xff]
      %v441 = vld [vmem:[%s1 + $0x48] sm:$0xff]
      %v442 = vld [vmem:[%s1 + $0x50] sm:$0xff]
      %v443 = vld [vmem:[%s1 + $0x58] sm:$0xff]
      %v444 = vld [vmem:[%s1 + $0x60] sm:$0xff]
      %v445 = vld [vmem:[%s1 + $0x68] sm:$0xff]
      %v446 = vld [vmem:[%s1 + $0x70] sm:$0xff]
      %v447 = vld [vmem:[%s1 + $0x78] sm:$0xff]
      %v448 = vld [vmem:[%s1 + $0x80] sm:$0xff]
      %v449 = vld [vmem:[%s1 + $0x88] sm:$0xff]
      %v450 = vld [vmem:[%s1 + $0x90] sm:$0xff]
      %v451 = vld [vmem:[%s1 + $0x98] sm:$0xff]
      %v452 = vld [vmem:[%s1 + $0xa0] sm:$0xff]
      %v453 = vld [vmem:[%s1 + $0xa8] sm:$0xff]
      %v454 = vld [vmem:[%s1 + $0xb0] sm:$0xff]
      %v455 = vld [vmem:[%s1 + $0xb8] sm:$0xff]
      %v456 = vld [vmem:[%s1 + $0xc0] sm:$0xff]
      %v457 = vld [vmem:[%s1 + $0xc8] sm:$0xff]
      %v458 = vld [vmem:[%s1 + $0xd0] sm:$0xff]
      %v459 = vld [vmem:[%s1 + $0xd8] sm:$0xff]
      %v460 = vld [vmem:[%s1 + $0xe0] sm:$0xff]
      %v461 = vld [vmem:[%s1 + $0xe8] sm:$0xff]
      %v462 = vld [vmem:[%s1 + $0xf0] sm:$0xff]
      %v463 = vld [vmem:[%s1 + $0xf8] sm:$0xff]
      %v464 = vld [vmem:[%s1 + $0x100] sm:$0xff]
      %v465 = vld [vmem:[%s1 + $0x108] sm:$0xff]
      %v466 = vld [vmem:[%s1 + $0x110] sm:$0xff]
      %v467 = vld [vmem:[%s1 + $0x118] sm:$0xff]
      %v468 = vld [vmem:[%s1 + $0x120] sm:$0xff]
      %v469 = vld [vmem:[%s1 + $0x128] sm:$0xff]
      %v470 = vld [vmem:[%s1 + $0x130] sm:$0xff]
      %v471 = vld [vmem:[%s1 + $0x138] sm:$0xff]
      %v472 = vld [vmem:[%s1 + $0x140] sm:$0xff]
      %v473 = vld [vmem:[%s1 + $0x148] sm:$0xff]
      %v474 = vld [vmem:[%s1 + $0x150] sm:$0xff]
      %v475 = vld [vmem:[%s1 + $0x158] sm:$0xff]
      %v476 = vld [vmem:[%s1 + $0x160] sm:$0xff]
      %v477 = vld [vmem:[%s1 + $0x168] sm:$0xff]
      %v478 = vld [vmem:[%s1 + $0x170] sm:$0xff]
      %v479 = vld [vmem:[%s1 + $0x178] sm:$0xff]
      %v480 = vld [vmem:[%s1 + $0x180] sm:$0xff]
      %v481 = vld [vmem:[%s1 + $0x188] sm:$0xff]
      %v482 = vld [vmem:[%s1 + $0x190] sm:$0xff]
      %v483 = vld [vmem:[%s1 + $0x198] sm:$0xff]
      %v484 = vld [vmem:[%s1 + $0x1a0] sm:$0xff]
      %v485 = vld [vmem:[%s1 + $0x1a8] sm:$0xff]
      %v486 = vld [vmem:[%s1 + $0x1b0] sm:$0xff]
      %v487 = vld [vmem:[%s1 + $0x1b8] sm:$0xff]
      %v488 = vld [vmem:[%s1 + $0x1c0] sm:$0xff]
      %v489 = vld [vmem:[%s1 + $0x1c8] sm:$0xff]
      %v490 = vld [vmem:[%s1 + $0x1d0] sm:$0xff]
      %v491 = vld [vmem:[%s1 + $0x1d8] sm:$0xff]
      %v492 = vld [vmem:[%s1 + $0x1e0] sm:$0xff]
      %v493 = vld [vmem:[%s1 + $0x1e8] sm:$0xff]
      %v494 = vld [vmem:[%s1 + $0x1f0] sm:$0xff]
      %v495 = vld [vmem:[%s1 + $0x1f8] sm:$0xff]
      %v496 = vld [vmem:[%s1 + $0x200] sm:$0xff]
      %v497 = vld [vmem:[%s1 + $0x208] sm:$0xff]
      %v498 = vld [vmem:[%s1 + $0x210] sm:$0xff]
      %v499 = vld [vmem:[%s1 + $0x218] sm:$0xff]
      %v500 = vld [vmem:[%s1 + $0x220] sm:$0xff]
      %v501 = vld [vmem:[%s1 + $0x228] sm:$0xff]
      %v502 = vld [vmem:[%s1 + $0x230] sm:$0xff]
      %v503 = vld [vmem:[%s1 + $0x238] sm:$0xff]
      %v504 = vld [vmem:[%s1 + $0x240] sm:$0xff]
      %v505 = vld [vmem:[%s1 + $0x248] sm:$0xff]
      %v506 = vld [vmem:[%s1 + $0x250] sm:$0xff]
      %v507 = vld [vmem:[%s1 + $0x258] sm:$0xff]
      %v508 = vld [vmem:[%s1 + $0x260] sm:$0xff]
      %v509 = vld [vmem:[%s1 + $0x268] sm:$0xff]
      %v510 = vld [vmem:[%s1 + $0x270] sm:$0xff]
      %v511 = vld [vmem:[%s1 + $0x278] sm:$0xff]
      %v512 = vld [vmem:[%s1 + $0x280] sm:$0xff]
      %v513 = vld [vmem:[%s1 + $0x288] sm:$0xff]
      %v514 = vld [vmem:[%s1 + $0x290] sm:$0xff]
      %v515 = vld [vmem:[%s1 + $0x298] sm:$0xff]
      %v516 = vld [vmem:[%s1 + $0x2a0] sm:$0xff]
      %v517 = vld [vmem:[%s1 + $0x2a8] sm:$0xff]
      %v518 = vld [vmem:[%s1 + $0x2b0] sm:$0xff]
      %v519 = vld [vmem:[%s1 + $0x2b8] sm:$0xff]
      %v520 = vld [vmem:[%s1 + $0x2c0] sm:$0xff]
      %v521 = vld [vmem:[%s1 + $0x2c8] sm:$0xff]
      %v522 = vld [vmem:[%s1 + $0x2d0] sm:$0xff]
      %v523 = vld [vmem:[%s1 + $0x2d8] sm:$0xff]
      %v524 = vld [vmem:[%s1 + $0x2e0] sm:$0xff]
      %v525 = vld [vmem:[%s1 + $0x2e8] sm:$0xff]
      %v526 = vld [vmem:[%s1 + $0x2f0] sm:$0xff]
      %v527 = vld [vmem:[%s1 + $0x2f8] sm:$0xff]
      %v528 = vld [vmem:[%s1 + $0x300] sm:$0xff]
      %v529 = vld [vmem:[%s1 + $0x308] sm:$0xff]
      %v530 = vld [vmem:[%s1 + $0x310] sm:$0xff]
      %v531 = vld [vmem:[%s1 + $0x318] sm:$0xff]
      %v532 = vld [vmem:[%s1 + $0x320] sm:$0xff]
      %v533 = vld [vmem:[%s1 + $0x328] sm:$0xff]
      %v534 = vld [vmem:[%s1 + $0x330] sm:$0xff]
      %v535 = vld [vmem:[%s1 + $0x338] sm:$0xff]
      %v536 = vld [vmem:[%s1 + $0x340] sm:$0xff]
      %v537 = vld [vmem:[%s1 + $0x348] sm:$0xff]
      %v538 = vld [vmem:[%s1 + $0x350] sm:$0xff]
      %v539 = vld [vmem:[%s1 + $0x358] sm:$0xff]
      %v540 = vld [vmem:[%s1 + $0x360] sm:$0xff]
      %v541 = vld [vmem:[%s1 + $0x368] sm:$0xff]
      %v542 = vld [vmem:[%s1 + $0x370] sm:$0xff]
      %v543 = vld [vmem:[%s1 + $0x378] sm:$0xff]
      %v544 = vld [vmem:[%s1 + $0x380] sm:$0xff]
      %v545 = vld [vmem:[%s1 + $0x388] sm:$0xff]
      %v546 = vld [vmem:[%s1 + $0x390] sm:$0xff]
      %v547 = vld [vmem:[%s1 + $0x398] sm:$0xff]
      %v548 = vld [vmem:[%s1 + $0x3a0] sm:$0xff]
      %v549 = vld [vmem:[%s1 + $0x3a8] sm:$0xff]
      %v550 = vld [vmem:[%s1 + $0x3b0] sm:$0xff]
      %v551 = vld [vmem:[%s1 + $0x3b8] sm:$0xff]
      %v552 = vld [vmem:[%s1 + $0x3c0] sm:$0xff]
      %v553 = vld [vmem:[%s1 + $0x3c8] sm:$0xff]
      %v554 = vld [vmem:[%s1 + $0x3d0] sm:$0xff]
      %v555 = vld [vmem:[%s1 + $0x3d8] sm:$0xff]
      %v556 = vld [vmem:[%s1 + $0x3e0] sm:$0xff]
      %v557 = vld [vmem:[%s1 + $0x3e8] sm:$0xff]
      %v558 = vld [vmem:[%s1 + $0x3f0] sm:$0xff]
      %v559 = vld [vmem:[%s1 + $0x3f8] sm:$0xff]
      %v560 = vld [vmem:[%s1 + $0x400] sm:$0xff]
      %v561 = vld [vmem:[%s1 + $0x408] sm:$0xff]
      %v562 = vld [vmem:[%s1 + $0x410] sm:$0xff]
      %v563 = vld [vmem:[%s1 + $0x418] sm:$0xff]
      %v564 = vld [vmem:[%s1 + $0x420] sm:$0xff]
      %v565 = vld [vmem:[%s1 + $0x428] sm:$0xff]
      %v566 = vld [vmem:[%s1 + $0x430] sm:$0xff]
      %v567 = vld [vmem:[%s1 + $0x438] sm:$0xff]
      %v568 = vld [vmem:[%s1 + $0x440] sm:$0xff]
      %v569 = vld [vmem:[%s1 + $0x448] sm:$0xff]
      %v570 = vld [vmem:[%s1 + $0x450] sm:$0xff]
      %v571 = vld [vmem:[%s1 + $0x458] sm:$0xff]
      %v572 = vld [vmem:[%s1 + $0x460] sm:$0xff]
      %v573 = vld [vmem:[%s1 + $0x468] sm:$0xff]
      %v574 = vld [vmem:[%s1 + $0x470] sm:$0xff]
      %v575 = vld [vmem:[%s1 + $0x478] sm:$0xff]
      %v576 = vld [vmem:[%s1 + $0x480] sm:$0xff]
      %v577 = vld [vmem:[%s1 + $0x488] sm:$0xff]
      %v578 = vld [vmem:[%s1 + $0x490] sm:$0xff]
      %v579 = vld [vmem:[%s1 + $0x498] sm:$0xff]
      %v580 = vld [vmem:[%s1 + $0x4a0] sm:$0xff]
      %v581 = vld [vmem:[%s1 + $0x4a8] sm:$0xff]
      %v582 = vld [vmem:[%s1 + $0x4b0] sm:$0xff]
      %v583 = vld [vmem:[%s1 + $0x4b8] sm:$0xff]
      %v584 = vld [vmem:[%s1 + $0x4c0] sm:$0xff]
      %v585 = vld [vmem:[%s1 + $0x4c8] sm:$0xff]
      %v586 = vld [vmem:[%s1 + $0x4d0] sm:$0xff]
      %v587 = vld [vmem:[%s1 + $0x4d8] sm:$0xff]
      %v588 = vld [vmem:[%s1 + $0x4e0] sm:$0xff]
      %v589 = vld [vmem:[%s1 + $0x4e8] sm:$0xff]
      %v590 = vld [vmem:[%s1 + $0x4f0] sm:$0xff]
      %v591 = vld [vmem:[%s1 + $0x4f8] sm:$0xff]
      %v592 = vld [vmem:[%s1 + $0x500] sm:$0xff]
      %v593 = vld [vmem:[%s1 + $0x508] sm:$0xff]
      %v594 = vld [vmem:[%s1 + $0x510] sm:$0xff]
      %v595 = vld [vmem:[%s1 + $0x518] sm:$0xff]
      %v596 = vld [vmem:[%s1 + $0x520] sm:$0xff]
      %v597 = vld [vmem:[%s1 + $0x528] sm:$0xff]
      %v598 = vld [vmem:[%s1 + $0x530] sm:$0xff]
      %v599 = vld [vmem:[%s1 + $0x538] sm:$0xff]
      %v600 = vld [vmem:[%s1 + $0x540] sm:$0xff]
      %v601 = vld [vmem:[%s1 + $0x548] sm:$0xff]
      %v602 = vld [vmem:[%s1 + $0x550] sm:$0xff]
      %v603 = vld [vmem:[%s1 + $0x558] sm:$0xff]
      %v604 = vld [vmem:[%s1 + $0x560] sm:$0xff]
      %v605 = vld [vmem:[%s1 + $0x568] sm:$0xff]
      %v606 = vld [vmem:[%s1 + $0x570] sm:$0xff]
      %v607 = vld [vmem:[%s1 + $0x578] sm:$0xff]
      %v608 = vld [vmem:[%s1 + $0x580] sm:$0xff]
      %v609 = vld [vmem:[%s1 + $0x588] sm:$0xff]
      %v610 = vld [vmem:[%s1 + $0x590] sm:$0xff]
      %v611 = vld [vmem:[%s1 + $0x598] sm:$0xff]
      %v612 = vld [vmem:[%s1 + $0x5a0] sm:$0xff]
      %v613 = vld [vmem:[%s1 + $0x5a8] sm:$0xff]
      %v614 = vld [vmem:[%s1 + $0x5b0] sm:$0xff]
      %v615 = vld [vmem:[%s1 + $0x5b8] sm:$0xff]
      %v616 = vld [vmem:[%s1 + $0x5c0] sm:$0xff]
      %v617 = vld [vmem:[%s1 + $0x5c8] sm:$0xff]
      %v618 = vld [vmem:[%s1 + $0x5d0] sm:$0xff]
      %v619 = vld [vmem:[%s1 + $0x5d8] sm:$0xff]
      %v620 = vld [vmem:[%s1 + $0x5e0] sm:$0xff]
      %v621 = vld [vmem:[%s1 + $0x5e8] sm:$0xff]
      %v622 = vld [vmem:[%s1 + $0x5f0] sm:$0xff]
      %v623 = vld [vmem:[%s1 + $0x5f8] sm:$0xff]
      %v624 = vld [vmem:[%s1 + $0x600] sm:$0xff]
      %v625 = vld [vmem:[%s1 + $0x608] sm:$0xff]
      %v626 = vld [vmem:[%s1 + $0x610] sm:$0xff]
      %v627 = vld [vmem:[%s1 + $0x618] sm:$0xff]
      %v628 = vld [vmem:[%s1 + $0x620] sm:$0xff]
      %v629 = vld [vmem:[%s1 + $0x628] sm:$0xff]
      %v630 = vld [vmem:[%s1 + $0x630] sm:$0xff]
      %v631 = vld [vmem:[%s1 + $0x638] sm:$0xff]
      %v632 = vld [vmem:[%s1 + $0x640] sm:$0xff]
      %v633 = vld [vmem:[%s1 + $0x648] sm:$0xff]
      %v634 = vld [vmem:[%s1 + $0x650] sm:$0xff]
      %v635 = vld [vmem:[%s1 + $0x658] sm:$0xff]
      %v636 = vld [vmem:[%s1 + $0x660] sm:$0xff]
      %v637 = vld [vmem:[%s1 + $0x668] sm:$0xff]
      %v638 = vld [vmem:[%s1 + $0x670] sm:$0xff]
      %v639 = vld [vmem:[%s1 + $0x678] sm:$0xff]
      %v640 = vld [vmem:[%s1 + $0x680] sm:$0xff]
      %v641 = vld [vmem:[%s1 + $0x688] sm:$0xff]
      %v642 = vld [vmem:[%s1 + $0x690] sm:$0xff]
      %v643 = vld [vmem:[%s1 + $0x698] sm:$0xff]
      %v644 = vld [vmem:[%s1 + $0x6a0] sm:$0xff]
      %v645 = vld [vmem:[%s1 + $0x6a8] sm:$0xff]
      %v646 = vld [vmem:[%s1 + $0x6b0] sm:$0xff]
      %v647 = vld [vmem:[%s1 + $0x6b8] sm:$0xff]
      %v648 = vld [vmem:[%s1 + $0x6c0] sm:$0xff]
      %v649 = vld [vmem:[%s1 + $0x6c8] sm:$0xff]
      %v650 = vld [vmem:[%s1 + $0x6d0] sm:$0xff]
      %v651 = vld [vmem:[%s1 + $0x6d8] sm:$0xff]
      %v652 = vld [vmem:[%s1 + $0x6e0] sm:$0xff]
      %v653 = vld [vmem:[%s1 + $0x6e8] sm:$0xff]
      %v654 = vld [vmem:[%s1 + $0x6f0] sm:$0xff]
      %v655 = vld [vmem:[%s1 + $0x6f8] sm:$0xff]
      %v656 = vld [vmem:[%s1 + $0x700] sm:$0xff]
      %v657 = vld [vmem:[%s1 + $0x708] sm:$0xff]
      %v658 = vld [vmem:[%s1 + $0x710] sm:$0xff]
      %v659 = vld [vmem:[%s1 + $0x718] sm:$0xff]
      %v660 = vld [vmem:[%s1 + $0x720] sm:$0xff]
      %v661 = vld [vmem:[%s1 + $0x728] sm:$0xff]
      %v662 = vld [vmem:[%s1 + $0x730] sm:$0xff]
      %v663 = vld [vmem:[%s1 + $0x738] sm:$0xff]
      %v664 = vld [vmem:[%s1 + $0x740] sm:$0xff]
      %v665 = vld [vmem:[%s1 + $0x748] sm:$0xff]
      %v666 = vld [vmem:[%s1 + $0x750] sm:$0xff]
      %v667 = vld [vmem:[%s1 + $0x758] sm:$0xff]
      %v668 = vld [vmem:[%s1 + $0x760] sm:$0xff]
      %v669 = vld [vmem:[%s1 + $0x768] sm:$0xff]
      %v670 = vld [vmem:[%s1 + $0x770] sm:$0xff]
      %v671 = vld [vmem:[%s1 + $0x778] sm:$0xff]
      %v672 = vld [vmem:[%s1 + $0x780] sm:$0xff]
      %v673 = vld [vmem:[%s1 + $0x788] sm:$0xff]
      %v674 = vld [vmem:[%s1 + $0x790] sm:$0xff]
      %v675 = vld [vmem:[%s1 + $0x798] sm:$0xff]
      %v676 = vld [vmem:[%s1 + $0x7a0] sm:$0xff]
      %v677 = vld [vmem:[%s1 + $0x7a8] sm:$0xff]
      %v678 = vld [vmem:[%s1 + $0x7b0] sm:$0xff]
      %v679 = vld [vmem:[%s1 + $0x7b8] sm:$0xff]
      %v680 = vld [vmem:[%s1 + $0x7c0] sm:$0xff]
      %v681 = vld [vmem:[%s1 + $0x7c8] sm:$0xff]
      %v682 = vld [vmem:[%s1 + $0x7d0] sm:$0xff]
      %v683 = vld [vmem:[%s1 + $0x7d8] sm:$0xff]
      %v684 = vld [vmem:[%s1 + $0x7e0] sm:$0xff]
      %v685 = vld [vmem:[%s1 + $0x7e8] sm:$0xff]
      %v686 = vld [vmem:[%s1 + $0x7f0] sm:$0xff]
      %v687 = vld [vmem:[%s1 + $0x7f8] sm:$0xff]
      %v688 = vld [vmem:[%s1 + $0x800] sm:$0xff]
      %v689 = vld [vmem:[%s1 + $0x808] sm:$0xff]
      %v690 = vld [vmem:[%s1 + $0x810] sm:$0xff]
      %v691 = vld [vmem:[%s1 + $0x818] sm:$0xff]
      %v692 = vld [vmem:[%s1 + $0x820] sm:$0xff]
      %v693 = vld [vmem:[%s1 + $0x828] sm:$0xff]
      %v694 = vld [vmem:[%s1 + $0x830] sm:$0xff]
      %v695 = vld [vmem:[%s1 + $0x838] sm:$0xff]
      %v696 = vld [vmem:[%s1 + $0x840] sm:$0xff]
      %v697 = vld [vmem:[%s1 + $0x848] sm:$0xff]
      %v698 = vld [vmem:[%s1 + $0x850] sm:$0xff]
      %v699 = vld [vmem:[%s1 + $0x858] sm:$0xff]
      %v700 = vld [vmem:[%s1 + $0x860] sm:$0xff]
      %v701 = vld [vmem:[%s1 + $0x868] sm:$0xff]
      %v702 = vld [vmem:[%s1 + $0x870] sm:$0xff]
      %v703 = vld [vmem:[%s1 + $0x878] sm:$0xff]
      %v704 = vld [vmem:[%s1 + $0x880] sm:$0xff]
      %v705 = vld [vmem:[%s1 + $0x888] sm:$0xff]
      %v706 = vld [vmem:[%s1 + $0x890] sm:$0xff]
      %v707 = vld [vmem:[%s1 + $0x898] sm:$0xff]
      %v708 = vld [vmem:[%s1 + $0x8a0] sm:$0xff]
      %v709 = vld [vmem:[%s1 + $0x8a8] sm:$0xff]
      %v710 = vld [vmem:[%s1 + $0x8b0] sm:$0xff]
      %v711 = vld [vmem:[%s1 + $0x8b8] sm:$0xff]
      %v712 = vld [vmem:[%s1 + $0x8c0] sm:$0xff]
      %v713 = vld [vmem:[%s1 + $0x8c8] sm:$0xff]
      %v714 = vld [vmem:[%s1 + $0x8d0] sm:$0xff]
      %v715 = vld [vmem:[%s1 + $0x8d8] sm:$0xff]
      %v716 = vld [vmem:[%s1 + $0x8e0] sm:$0xff]
      %v717 = vld [vmem:[%s1 + $0x8e8] sm:$0xff]
      %v718 = vld [vmem:[%s1 + $0x8f0] sm:$0xff]
      %v719 = vld [vmem:[%s1 + $0x8f8] sm:$0xff]
      %v720 = vld [vmem:[%s1 + $0x900] sm:$0xff]
      %v721 = vld [vmem:[%s1 + $0x908] sm:$0xff]
      %v722 = vld [vmem:[%s1 + $0x910] sm:$0xff]
      %v723 = vld [vmem:[%s1 + $0x918] sm:$0xff]
      %v724 = vld [vmem:[%s1 + $0x920] sm:$0xff]
      %v725 = vld [vmem:[%s1 + $0x928] sm:$0xff]
      %v726 = vld [vmem:[%s1 + $0x930] sm:$0xff]
      %v727 = vld [vmem:[%s1 + $0x938] sm:$0xff]
      %v728 = vld [vmem:[%s1 + $0x940] sm:$0xff]
      %v729 = vld [vmem:[%s1 + $0x948] sm:$0xff]
      %v730 = vld [vmem:[%s1 + $0x950] sm:$0xff]
      %v731 = vld [vmem:[%s1 + $0x958] sm:$0xff]
      %v732 = vld [vmem:[%s1 + $0x960] sm:$0xff]
      %v733 = vld [vmem:[%s1 + $0x968] sm:$0xff]
      %v734 = vld [vmem:[%s1 + $0x970] sm:$0xff]
      %v735 = vld [vmem:[%s1 + $0x978] sm:$0xff]
      %v736 = vld [vmem:[%s1 + $0x980] sm:$0xff]
      %v737 = vld [vmem:[%s1 + $0x988] sm:$0xff]
      %v738 = vld [vmem:[%s1 + $0x990] sm:$0xff]
      %v739 = vld [vmem:[%s1 + $0x998] sm:$0xff]
      %v740 = vld [vmem:[%s1 + $0x9a0] sm:$0xff]
      %v741 = vld [vmem:[%s1 + $0x9a8] sm:$0xff]
      %v742 = vld [vmem:[%s1 + $0x9b0] sm:$0xff]
      %v743 = vld [vmem:[%s1 + $0x9b8] sm:$0xff]
      %v744 = vld [vmem:[%s1 + $0x9c0] sm:$0xff]
      %v745 = vld [vmem:[%s1 + $0x9c8] sm:$0xff]
      %v746 = vld [vmem:[%s1 + $0x9d0] sm:$0xff]
      %v747 = vld [vmem:[%s1 + $0x9d8] sm:$0xff]
      %v748 = vld [vmem:[%s1 + $0x9e0] sm:$0xff]
      %v749 = vld [vmem:[%s1 + $0x9e8] sm:$0xff]
      %v750 = vld [vmem:[%s1 + $0x9f0] sm:$0xff]
      %v751 = vld [vmem:[%s1 + $0x9f8] sm:$0xff]
      %v752 = vld [vmem:[%s1 + $0xa00] sm:$0xff]
      %v753 = vld [vmem:[%s1 + $0xa08] sm:$0xff]
      %v754 = vld [vmem:[%s1 + $0xa10] sm:$0xff]
      %v755 = vld [vmem:[%s1 + $0xa18] sm:$0xff]
      %v756 = vld [vmem:[%s1 + $0xa20] sm:$0xff]
      %v757 = vld [vmem:[%s1 + $0xa28] sm:$0xff]
      %v758 = vld [vmem:[%s1 + $0xa30] sm:$0xff]
      %v759 = vld [vmem:[%s1 + $0xa38] sm:$0xff]
      %v760 = vld [vmem:[%s1 + $0xa40] sm:$0xff]
      %v761 = vld [vmem:[%s1 + $0xa48] sm:$0xff]
      %v762 = vld [vmem:[%s1 + $0xa50] sm:$0xff]
      %v763 = vld [vmem:[%s1 + $0xa58] sm:$0xff]
      %v764 = vld [vmem:[%s1 + $0xa60] sm:$0xff]
      %v765 = vld [vmem:[%s1 + $0xa68] sm:$0xff]
      %v766 = vld [vmem:[%s1 + $0xa70] sm:$0xff]
      %v767 = vld [vmem:[%s1 + $0xa78] sm:$0xff]
      %v768 = vld [vmem:[%s1 + $0xa80] sm:$0xff]
      %v769 = vld [vmem:[%s1 + $0xa88] sm:$0xff]
      %v770 = vld [vmem:[%s1 + $0xa90] sm:$0xff]
      %v771 = vld [vmem:[%s1 + $0xa98] sm:$0xff]
      %v772 = vld [vmem:[%s1 + $0xaa0] sm:$0xff]
      %v773 = vld [vmem:[%s1 + $0xaa8] sm:$0xff]
      %v774 = vld [vmem:[%s1 + $0xab0] sm:$0xff]
      %v775 = vld [vmem:[%s1 + $0xab8] sm:$0xff]
      %v776 = vld [vmem:[%s1 + $0xac0] sm:$0xff]
      %v777 = vld [vmem:[%s1 + $0xac8] sm:$0xff]
      %v778 = vld [vmem:[%s1 + $0xad0] sm:$0xff]
      %v779 = vld [vmem:[%s1 + $0xad8] sm:$0xff]
      %v780 = vld [vmem:[%s1 + $0xae0] sm:$0xff]
      %v781 = vld [vmem:[%s1 + $0xae8] sm:$0xff]
      %v782 = vld [vmem:[%s1 + $0xaf0] sm:$0xff]
      %v783 = vld [vmem:[%s1 + $0xaf8] sm:$0xff]
      %v784 = vld [vmem:[%s1 + $0xb00] sm:$0xff]
      %v785 = vld [vmem:[%s1 + $0xb08] sm:$0xff]
      %v786 = vld [vmem:[%s1 + $0xb10] sm:$0xff]
      %v787 = vld [vmem:[%s1 + $0xb18] sm:$0xff]
      %v788 = vld [vmem:[%s1 + $0xb20] sm:$0xff]
      %v789 = vld [vmem:[%s1 + $0xb28] sm:$0xff]
      %v790 = vld [vmem:[%s1 + $0xb30] sm:$0xff]
      %v791 = vld [vmem:[%s1 + $0xb38] sm:$0xff]
      %v792 = vld [vmem:[%s1 + $0xb40] sm:$0xff]
      %v793 = vld [vmem:[%s1 + $0xb48] sm:$0xff]
      %v794 = vld [vmem:[%s1 + $0xb50] sm:$0xff]
      %v795 = vld [vmem:[%s1 + $0xb58] sm:$0xff]
      %v796 = vld [vmem:[%s1 + $0xb60] sm:$0xff]
      %v797 = vld [vmem:[%s1 + $0xb68] sm:$0xff]
      %v798 = vld [vmem:[%s1 + $0xb70] sm:$0xff]
      %v799 = vld [vmem:[%s1 + $0xb78] sm:$0xff]
      %v800 = vld [vmem:[%s1 + $0xb80] sm:$0xff]
      %v801 = vld [vmem:[%s1 + $0xb88] sm:$0xff]
      %v802 = vld [vmem:[%s1 + $0xb90] sm:$0xff]
      %v803 = vld [vmem:[%s1 + $0xb98] sm:$0xff]
      %v804 = vld [vmem:[%s1 + $0xba0] sm:$0xff]
      %v805 = vld [vmem:[%s1 + $0xba8] sm:$0xff]
      %v806 = vld [vmem:[%s1 + $0xbb0] sm:$0xff]
      %v807 = vld [vmem:[%s1 + $0xbb8] sm:$0xff]
      %v808 = vld [vmem:[%s1 + $0xbc0] sm:$0xff]
      %v809 = vld [vmem:[%s1 + $0xbc8] sm:$0xff]
      %v810 = vld [vmem:[%s1 + $0xbd0] sm:$0xff]
      %v811 = vld [vmem:[%s1 + $0xbd8] sm:$0xff]
      %v812 = vld [vmem:[%s1 + $0xbe0] sm:$0xff]
      %v813 = vld [vmem:[%s1 + $0xbe8] sm:$0xff]
      %v814 = vld [vmem:[%s1 + $0xbf0] sm:$0xff]
      %v815 = vld [vmem:[%s1 + $0xbf8] sm:$0xff]
      %v816 = vld [vmem:[%s1 + $0xc00] sm:$0xff]
      %v817 = vld [vmem:[%s1 + $0xc08] sm:$0xff]
      %v818 = vld [vmem:[%s1 + $0xc10] sm:$0xff]
      %v819 = vld [vmem:[%s1 + $0xc18] sm:$0xff]
      %v820 = vld [vmem:[%s1 + $0xc20] sm:$0xff]
      %v821 = vld [vmem:[%s1 + $0xc28] sm:$0xff]
      %v822 = vld [vmem:[%s1 + $0xc30] sm:$0xff]
      %v823 = vld [vmem:[%s1 + $0xc38] sm:$0xff]
      %v824 = vld [vmem:[%s1 + $0xc40] sm:$0xff]
      %v825 = vld [vmem:[%s1 + $0xc48] sm:$0xff]
      %v826 = vld [vmem:[%s1 + $0xc50] sm:$0xff]
      %v827 = vld [vmem:[%s1 + $0xc58] sm:$0xff]
      %v828 = vld [vmem:[%s1 + $0xc60] sm:$0xff]
      %v829 = vld [vmem:[%s1 + $0xc68] sm:$0xff]
      %v830 = vld [vmem:[%s1 + $0xc70] sm:$0xff]
      %v831 = vld [vmem:[%s1 + $0xc78] sm:$0xff]
      %v832 = vld [vmem:[%s1 + $0xc80] sm:$0xff]
      %v833 = vld [vmem:[%s1 + $0xc88] sm:$0xff]
      %v834 = vld [vmem:[%s1 + $0xc90] sm:$0xff]
      %v835 = vld [vmem:[%s1 + $0xc98] sm:$0xff]
      %v836 = vld [vmem:[%s1 + $0xca0] sm:$0xff]
      %v837 = vld [vmem:[%s1 + $0xca8] sm:$0xff]
      %v838 = vld [vmem:[%s1 + $0xcb0] sm:$0xff]
      %v839 = vld [vmem:[%s1 + $0xcb8] sm:$0xff]
      %v840 = vld [vmem:[%s1 + $0xcc0] sm:$0xff]
      %v841 = vld [vmem:[%s1 + $0xcc8] sm:$0xff]
      %v842 = vld [vmem:[%s1 + $0xcd0] sm:$0xff]
      %v843 = vld [vmem:[%s1 + $0xcd8] sm:$0xff]
      %v844 = vld [vmem:[%s1 + $0xce0] sm:$0xff]
      %v845 = vld [vmem:[%s1 + $0xce8] sm:$0xff]
      %v846 = vld [vmem:[%s1 + $0xcf0] sm:$0xff]
      %v847 = vld [vmem:[%s1 + $0xcf8] sm:$0xff]
      %v848 = vld [vmem:[%s1 + $0xd00] sm:$0xff]
      %v849 = vld [vmem:[%s1 + $0xd08] sm:$0xff]
      %v850 = vld [vmem:[%s1 + $0xd10] sm:$0xff]
      %v851 = vld [vmem:[%s1 + $0xd18] sm:$0xff]
      %v852 = vld [vmem:[%s1 + $0xd20] sm:$0xff]
      %v853 = vld [vmem:[%s1 + $0xd28] sm:$0xff]
      %v854 = vld [vmem:[%s1 + $0xd30] sm:$0xff]
      %v855 = vld [vmem:[%s1 + $0xd38] sm:$0xff]
      %v856 = vld [vmem:[%s1 + $0xd40] sm:$0xff]
      %v857 = vld [vmem:[%s1 + $0xd48] sm:$0xff]
      %v858 = vld [vmem:[%s1 + $0xd50] sm:$0xff]
      %v859 = vld [vmem:[%s1 + $0xd58] sm:$0xff]
      %v860 = vld [vmem:[%s1 + $0xd60] sm:$0xff]
      %v861 = vld [vmem:[%s1 + $0xd68] sm:$0xff]
      %v862 = vld [vmem:[%s1 + $0xd70] sm:$0xff]
      %v863 = vld [vmem:[%s1 + $0xd78] sm:$0xff]
      %v864 = vld [vmem:[%s1 + $0xd80] sm:$0xff]
      %v865 = vld [vmem:[%s1 + $0xd88] sm:$0xff]
      %v866 = vld [vmem:[%s1 + $0xd90] sm:$0xff]
      %v867 = vld [vmem:[%s1 + $0xd98] sm:$0xff]
      %v868 = vld [vmem:[%s1 + $0xda0] sm:$0xff]
      %v869 = vld [vmem:[%s1 + $0xda8] sm:$0xff]
      %v870 = vld [vmem:[%s1 + $0xdb0] sm:$0xff]
      %v871 = vld [vmem:[%s1 + $0xdb8] sm:$0xff]
      %v872 = vld [vmem:[%s1 + $0xdc0] sm:$0xff]
      %v873 = vld [vmem:[%s1 + $0xdc8] sm:$0xff]
      %v874 = vld [vmem:[%s1 + $0xdd0] sm:$0xff]
      %v875 = vld [vmem:[%s1 + $0xdd8] sm:$0xff]
      %v876 = vld [vmem:[%s1 + $0xde0] sm:$0xff]
      %v877 = vld [vmem:[%s1 + $0xde8] sm:$0xff]
      %v878 = vld [vmem:[%s1 + $0xdf0] sm:$0xff]
      %v879 = vld [vmem:[%s1 + $0xdf8] sm:$0xff]
      %v880 = vld [vmem:[%s1 + $0xe00] sm:$0xff]
      %v881 = vld [vmem:[%s1 + $0xe08] sm:$0xff]
      %vm882 = vcmask 130048
      %v884 = vsel %vm882, %v433, 0
      %v887 = vsel %vm882, %v435, 0
      %v890 = vsel %vm882, %v437, 0
      %v893 = vsel %vm882, %v439, 0
      %v896 = vsel %vm882, %v441, 0
      %v899 = vsel %vm882, %v443, 0
      %v902 = vsel %vm882, %v445, 0
      %v905 = vsel %vm882, %v447, 0
      %v908 = vsel %vm882, %v449, 0
      %v911 = vsel %vm882, %v451, 0
      %v914 = vsel %vm882, %v453, 0
      %v917 = vsel %vm882, %v455, 0
      %v920 = vsel %vm882, %v457, 0
      %v923 = vsel %vm882, %v459, 0
      %v926 = vsel %vm882, %v461, 0
      %v929 = vsel %vm882, %v463, 0
      %v932 = vsel %vm882, %v465, 0
      %v935 = vsel %vm882, %v467, 0
      %v938 = vsel %vm882, %v469, 0
      %v941 = vsel %vm882, %v471, 0
      %v944 = vsel %vm882, %v473, 0
      %v947 = vsel %vm882, %v475, 0
      %v950 = vsel %vm882, %v477, 0
      %v953 = vsel %vm882, %v479, 0
      %v956 = vsel %vm882, %v481, 0
      %v959 = vsel %vm882, %v483, 0
      %v962 = vsel %vm882, %v485, 0
      %v965 = vsel %vm882, %v487, 0
      %v968 = vsel %vm882, %v489, 0
      %v971 = vsel %vm882, %v491, 0
      %v974 = vsel %vm882, %v493, 0
      %v977 = vsel %vm882, %v495, 0
      %v980 = vsel %vm882, %v497, 0
      %v983 = vsel %vm882, %v499, 0
      %v986 = vsel %vm882, %v501, 0
      %v989 = vsel %vm882, %v503, 0
      %v992 = vsel %vm882, %v505, 0
      %v995 = vsel %vm882, %v507, 0
      %v998 = vsel %vm882, %v509, 0
      %v1001 = vsel %vm882, %v511, 0
      %v1004 = vsel %vm882, %v513, 0
      %v1007 = vsel %vm882, %v515, 0
      %v1010 = vsel %vm882, %v517, 0
      %v1013 = vsel %vm882, %v519, 0
      %v1016 = vsel %vm882, %v521, 0
      %v1019 = vsel %vm882, %v523, 0
      %v1022 = vsel %vm882, %v525, 0
      %v1025 = vsel %vm882, %v527, 0
      %v1028 = vsel %vm882, %v529, 0
      %v1031 = vsel %vm882, %v531, 0
      %v1034 = vsel %vm882, %v533, 0
      %v1037 = vsel %vm882, %v535, 0
      %v1040 = vsel %vm882, %v537, 0
      %v1043 = vsel %vm882, %v539, 0
      %v1046 = vsel %vm882, %v541, 0
      %v1049 = vsel %vm882, %v543, 0
      %v1052 = vsel %vm882, %v545, 0
      %v1055 = vsel %vm882, %v547, 0
      %v1058 = vsel %vm882, %v549, 0
      %v1061 = vsel %vm882, %v551, 0
      %v1064 = vsel %vm882, %v553, 0
      %v1067 = vsel %vm882, %v555, 0
      %v1070 = vsel %vm882, %v557, 0
      %v1073 = vsel %vm882, %v559, 0
      %v1076 = vsel %vm882, %v561, 0
      %v1079 = vsel %vm882, %v563, 0
      %v1082 = vsel %vm882, %v565, 0
      %v1085 = vsel %vm882, %v567, 0
      %v1088 = vsel %vm882, %v569, 0
      %v1091 = vsel %vm882, %v571, 0
      %v1094 = vsel %vm882, %v573, 0
      %v1097 = vsel %vm882, %v575, 0
      %v1100 = vsel %vm882, %v577, 0
      %v1103 = vsel %vm882, %v579, 0
      %v1106 = vsel %vm882, %v581, 0
      %v1109 = vsel %vm882, %v583, 0
      %v1112 = vsel %vm882, %v585, 0
      %v1115 = vsel %vm882, %v587, 0
      %v1118 = vsel %vm882, %v589, 0
      %v1121 = vsel %vm882, %v591, 0
      %v1124 = vsel %vm882, %v593, 0
      %v1127 = vsel %vm882, %v595, 0
      %v1130 = vsel %vm882, %v597, 0
      %v1133 = vsel %vm882, %v599, 0
      %v1136 = vsel %vm882, %v601, 0
      %v1139 = vsel %vm882, %v603, 0
      %v1142 = vsel %vm882, %v605, 0
      %v1145 = vsel %vm882, %v607, 0
      %v1148 = vsel %vm882, %v609, 0
      %v1151 = vsel %vm882, %v611, 0
      %v1154 = vsel %vm882, %v613, 0
      %v1157 = vsel %vm882, %v615, 0
      %v1160 = vsel %vm882, %v617, 0
      %v1163 = vsel %vm882, %v619, 0
      %v1166 = vsel %vm882, %v621, 0
      %v1169 = vsel %vm882, %v623, 0
      %v1172 = vsel %vm882, %v625, 0
      %v1175 = vsel %vm882, %v627, 0
      %v1178 = vsel %vm882, %v629, 0
      %v1181 = vsel %vm882, %v631, 0
      %v1184 = vsel %vm882, %v633, 0
      %v1187 = vsel %vm882, %v635, 0
      %v1190 = vsel %vm882, %v637, 0
      %v1193 = vsel %vm882, %v639, 0
      %v1196 = vsel %vm882, %v641, 0
      %v1199 = vsel %vm882, %v643, 0
      %v1202 = vsel %vm882, %v645, 0
      %v1205 = vsel %vm882, %v647, 0
      %v1208 = vsel %vm882, %v649, 0
      %v1211 = vsel %vm882, %v651, 0
      %v1214 = vsel %vm882, %v653, 0
      %v1217 = vsel %vm882, %v655, 0
      %v1220 = vsel %vm882, %v657, 0
      %v1223 = vsel %vm882, %v659, 0
      %v1226 = vsel %vm882, %v661, 0
      %v1229 = vsel %vm882, %v663, 0
      %v1232 = vsel %vm882, %v665, 0
      %v1235 = vsel %vm882, %v667, 0
      %v1238 = vsel %vm882, %v669, 0
      %v1241 = vsel %vm882, %v671, 0
      %v1244 = vsel %vm882, %v673, 0
      %v1247 = vsel %vm882, %v675, 0
      %v1250 = vsel %vm882, %v677, 0
      %v1253 = vsel %vm882, %v679, 0
      %v1256 = vsel %vm882, %v681, 0
      %v1259 = vsel %vm882, %v683, 0
      %v1262 = vsel %vm882, %v685, 0
      %v1265 = vsel %vm882, %v687, 0
      %v1268 = vsel %vm882, %v689, 0
      %v1271 = vsel %vm882, %v691, 0
      %v1274 = vsel %vm882, %v693, 0
      %v1277 = vsel %vm882, %v695, 0
      %v1280 = vsel %vm882, %v697, 0
      %v1283 = vsel %vm882, %v699, 0
      %v1286 = vsel %vm882, %v701, 0
      %v1289 = vsel %vm882, %v703, 0
      %v1292 = vsel %vm882, %v705, 0
      %v1295 = vsel %vm882, %v707, 0
      %v1298 = vsel %vm882, %v709, 0
      %v1301 = vsel %vm882, %v711, 0
      %v1304 = vsel %vm882, %v713, 0
      %v1307 = vsel %vm882, %v715, 0
      %v1310 = vsel %vm882, %v717, 0
      %v1313 = vsel %vm882, %v719, 0
      %v1316 = vsel %vm882, %v721, 0
      %v1319 = vsel %vm882, %v723, 0
      %v1322 = vsel %vm882, %v725, 0
      %v1325 = vsel %vm882, %v727, 0
      %v1328 = vsel %vm882, %v729, 0
      %v1331 = vsel %vm882, %v731, 0
      %v1334 = vsel %vm882, %v733, 0
      %v1337 = vsel %vm882, %v735, 0
      %v1340 = vsel %vm882, %v737, 0
      %v1343 = vsel %vm882, %v739, 0
      %v1346 = vsel %vm882, %v741, 0
      %v1349 = vsel %vm882, %v743, 0
      %v1352 = vsel %vm882, %v745, 0
      %v1355 = vsel %vm882, %v747, 0
      %v1358 = vsel %vm882, %v749, 0
      %v1361 = vsel %vm882, %v751, 0
      %v1364 = vsel %vm882, %v753, 0
      %v1367 = vsel %vm882, %v755, 0
      %v1370 = vsel %vm882, %v757, 0
      %v1373 = vsel %vm882, %v759, 0
      %v1376 = vsel %vm882, %v761, 0
      %v1379 = vsel %vm882, %v763, 0
      %v1382 = vsel %vm882, %v765, 0
      %v1385 = vsel %vm882, %v767, 0
      %v1388 = vsel %vm882, %v769, 0
      %v1391 = vsel %vm882, %v771, 0
      %v1394 = vsel %vm882, %v773, 0
      %v1397 = vsel %vm882, %v775, 0
      %v1400 = vsel %vm882, %v777, 0
      %v1403 = vsel %vm882, %v779, 0
      %v1406 = vsel %vm882, %v781, 0
      %v1409 = vsel %vm882, %v783, 0
      %v1412 = vsel %vm882, %v785, 0
      %v1415 = vsel %vm882, %v787, 0
      %v1418 = vsel %vm882, %v789, 0
      %v1421 = vsel %vm882, %v791, 0
      %v1424 = vsel %vm882, %v793, 0
      %v1427 = vsel %vm882, %v795, 0
      %v1430 = vsel %vm882, %v797, 0
      %v1433 = vsel %vm882, %v799, 0
      %v1436 = vsel %vm882, %v801, 0
      %v1439 = vsel %vm882, %v803, 0
      %v1442 = vsel %vm882, %v805, 0
      %v1445 = vsel %vm882, %v807, 0
      %v1448 = vsel %vm882, %v809, 0
      %v1451 = vsel %vm882, %v811, 0
      %v1454 = vsel %vm882, %v813, 0
      %v1457 = vsel %vm882, %v815, 0
      %v1460 = vsel %vm882, %v817, 0
      %v1463 = vsel %vm882, %v819, 0
      %v1466 = vsel %vm882, %v821, 0
      %v1469 = vsel %vm882, %v823, 0
      %v1472 = vsel %vm882, %v825, 0
      %v1475 = vsel %vm882, %v827, 0
      %v1478 = vsel %vm882, %v829, 0
      %v1481 = vsel %vm882, %v831, 0
      %v1484 = vsel %vm882, %v833, 0
      %v1487 = vsel %vm882, %v835, 0
      %v1490 = vsel %vm882, %v837, 0
      %v1493 = vsel %vm882, %v839, 0
      %v1496 = vsel %vm882, %v841, 0
      %v1499 = vsel %vm882, %v843, 0
      %v1502 = vsel %vm882, %v845, 0
      %v1505 = vsel %vm882, %v847, 0
      %v1508 = vsel %vm882, %v849, 0
      %v1511 = vsel %vm882, %v851, 0
      %v1514 = vsel %vm882, %v853, 0
      %v1517 = vsel %vm882, %v855, 0
      %v1520 = vsel %vm882, %v857, 0
      %v1523 = vsel %vm882, %v859, 0
      %v1526 = vsel %vm882, %v861, 0
      %v1529 = vsel %vm882, %v863, 0
      %v1532 = vsel %vm882, %v865, 0
      %v1535 = vsel %vm882, %v867, 0
      %v1538 = vsel %vm882, %v869, 0
      %v1541 = vsel %vm882, %v871, 0
      %v1544 = vsel %vm882, %v873, 0
      %v1547 = vsel %vm882, %v875, 0
      %v1550 = vsel %vm882, %v877, 0
      %v1553 = vsel %vm882, %v879, 0
      %v1556 = vsel %vm882, %v881, 0
      %1558 = vmatprep.subr.mxu0 0.0
      %1559 = vmatpush1.msra.mxu0 %v414
      %1560 = vmatprep.subr.mxu0 0.0
      %1561 = vmatpush1.msra.mxu0 %v415
      %1562 = vmatprep.subr.mxu0 0.0
      %1563 = vmatpush1.msra.mxu0 %v416
      %1564 = vmatprep.subr.mxu0 0.0
      %1565 = vmatpush1.msra.mxu0 %v417
      %1566 = vmatprep.subr.mxu0 0.0
      %1567 = vmatpush1.msra.mxu0 %v418
      %1568 = vmatprep.subr.mxu0 0.0
      %1569 = vmatpush1.msra.mxu0 %v419
      %1570 = vmatprep.subr.mxu0 0.0
      %1571 = vmatpush1.msra.mxu0 %v420
      %1572 = vmatprep.subr.mxu0 0.0
      %1573 = vmatpush1.msra.mxu0 %v421
      %1574 = vmatprep.subr.mxu0 0.0
      %1575 = vmatpush1.msra.mxu0 %v422
      %1576 = vmatprep.subr.mxu0 0.0
      %1577 = vmatpush1.msra.mxu0 %v423
      %1578 = vmatprep.subr.mxu0 0.0
      %1579 = vmatpush1.msra.mxu0 %v424
      %1580 = vmatprep.subr.mxu0 0.0
      %1581 = vmatpush1.msra.mxu0 %v425
      %1582 = vmatprep.subr.mxu0 0.0
      %1583 = vmatpush1.msra.mxu0 %v426
      %1584 = vmatprep.subr.mxu0 0.0
      %1585 = vmatpush1.msra.mxu0 %v427
      %1586 = vmatprep.subr.mxu0 0.0
      %1587 = vmatpush1.msra.mxu0 %v428
      %1588 = vmatprep.subr.mxu0 0.0
      %1589 = vmatpush1.msra.mxu0 %v429
      %1590 = vmatprep.subr.mxu0 0.0
      %1591 = vmatpush1.msra.mxu0 %v430
      %1592 = vmatprep.subr.mxu0 0.0
      %1593 = vmatpush1.msra.mxu0 %v431
      %1594 = vmatprep.subr.mxu0 0.0
      %1595 = vmatpush1.msra.mxu0 0.0
      %1596 = vmatprep.subr.mxu0 0.0
      %1597 = vmatpush1.msra.mxu0 0.0
      %1598 = vmatprep.subr.mxu0 0.0
      %1599 = vmatpush1.msra.mxu0 0.0
      %1600 = vmatprep.subr.mxu0 0.0
      %1601 = vmatpush1.msra.mxu0 0.0
      %1602 = vmatprep.subr.mxu0 0.0
      %1603 = vmatpush1.msra.mxu0 0.0
      %1604 = vmatprep.subr.mxu0 0.0
      %1605 = vmatpush1.msra.mxu0 0.0
      %1606 = vmatprep.subr.mxu0 0.0
      %1607 = vmatpush1.msra.mxu0 0.0
      %1608 = vmatprep.subr.mxu0 0.0
      %1609 = vmatpush1.msra.mxu0 0.0
      %1610 = vmatprep.subr.mxu0 0.0
      %1611 = vmatpush1.msra.mxu0 0.0
      %1612 = vmatprep.subr.mxu0 0.0
      %1613 = vmatpush1.msra.mxu0 0.0
      %1614 = vmatprep.subr.mxu0 0.0
      %1615 = vmatpush1.msra.mxu0 0.0
      %1616 = vmatprep.subr.mxu0 0.0
      %1617 = vmatpush1.msra.mxu0 0.0
      %1618 = vmatprep.subr.mxu0 0.0
      %1619 = vmatpush1.msra.mxu0 0.0
      %1620 = vmatprep.subr.mxu0 0.0
      %1621 = vmatpush1.msra.mxu0 0.0
      %1622 = vmatprep.mubr.f32.mxu0 %v884
      %1623 = vmatmul.mubr.f32.gmra.mrb[0].mxu0 %v432
      %v1624 = vpop.f32.mrb[0].mxu0
      %v1625 = vadd.f32 0.0, %v1624
      %v1626 = vpop.f32.mrb[0].mxu0
      %1627 = vmatprep.mubr.f32.mxu0 %v887
      %1628 = vmatmul.mubr.f32.gmra.mrb[0].mxu0 %v434
      %v1629 = vpop.f32.mrb[0].mxu0
      %v1630 = vadd.f32 0.0, %v1629
      %v1631 = vpop.f32.mrb[0].mxu0
      %1632 = vmatprep.mubr.f32.mxu0 %v890
      %1633 = vmatmul.mubr.f32.gmra.mrb[0].mxu0 %v436
      %v1634 = vpop.f32.mrb[0].mxu0
      %v1635 = vadd.f32 0.0, %v1634
      %v1636 = vpop.f32.mrb[0].mxu0
      %1637 = vmatprep.mubr.f32.mxu0 %v893
      %1638 = vmatmul.mubr.f32.gmra.mrb[0].mxu0 %v438
      %v1639 = vpop.f32.mrb[0].mxu0
      %v1640 = vadd.f32 0.0, %v1639
      %v1641 = vpop.f32.mrb[0].mxu0
      %1642 = vmatprep.mubr.f32.mxu0 %v896
      %1643 = vmatmul.mubr.f32.gmra.mrb[0].mxu0 %v440
      %v1644 = vpop.f32.mrb[0].mxu0
      %v1645 = vadd.f32 0.0, %v1644
      %v1646 = vpop.f32.mrb[0].mxu0
      %1647 = vmatprep.mubr.f32.mxu0 %v899
      %1648 = vmatmul.mubr.f32.gmra.mrb[0].mxu0 %v442
      %v1649 = vpop.f32.mrb[0].mxu0
      %v1650 = vadd.f32 0.0, %v1649
      %v1651 = vpop.f32.mrb[0].mxu0
      %1652 = vmatprep.mubr.f32.mxu0 %v902
      %1653 = vmatmul.mubr.f32.gmra.mrb[0].mxu0 %v444
      %v1654 = vpop.f32.mrb[0].mxu0
      %v1655 = vadd.f32 0.0, %v1654
      %v1656 = vpop.f32.mrb[0].mxu0
      %1657 = vmatprep.mubr.f32.mxu0 %v905
      %1658 = vmatmul.mubr.f32.gmra.mrb[0].mxu0 %v446
      %v1659 = vpop.f32.mrb[0].mxu0
      %v1660 = vadd.f32 0.0, %v1659
      %v1661 = vpop.f32.mrb[0].mxu0
      %1662 = vmatprep.mubr.f32.mxu0 %v908
      %1663 = vmatmul.mubr.f32.gmra.mrb[0].mxu0 %v448
      %v1664 = vpop.f32.mrb[0].mxu0
      %v1665 = vadd.f32 0.0, %v1664
      %v1666 = vpop.f32.mrb[0].mxu0
      %1667 = vmatprep.mubr.f32.mxu0 %v911
      %1668 = vmatmul.mubr.f32.gmra.mrb[0].mxu0 %v450
      %v1669 = vpop.f32.mrb[0].mxu0
      %v1670 = vadd.f32 0.0, %v1669
      %v1671 = vpop.f32.mrb[0].mxu0
      %1672 = vmatprep.mubr.f32.mxu0 %v914
      %1673 = vmatmul.mubr.f32.gmra.mrb[0].mxu0 %v452
      %v1674 = vpop.f32.mrb[0].mxu0
      %v1675 = vadd.f32 0.0, %v1674
      %v1676 = vpop.f32.mrb[0].mxu0
      %1677 = vmatprep.mubr.f32.mxu0 %v917
      %1678 = vmatmul.mubr.f32.gmra.mrb[0].mxu0 %v454
      %v1679 = vpop.f32.mrb[0].mxu0
      %v1680 = vadd.f32 0.0, %v1679
      %v1681 = vpop.f32.mrb[0].mxu0
      %1682 = vmatprep.mubr.f32.mxu0 %v920
      %1683 = vmatmul.mubr.f32.gmra.mrb[0].mxu0 %v456
      %v1684 = vpop.f32.mrb[0].mxu0
      %v1685 = vadd.f32 0.0, %v1684
      %v1686 = vpop.f32.mrb[0].mxu0
      %1687 = vmatprep.mubr.f32.mxu0 %v923
      %1688 = vmatmul.mubr.f32.gmra.mrb[0].mxu0 %v458
      %v1689 = vpop.f32.mrb[0].mxu0
      %v1690 = vadd.f32 0.0, %v1689
      %v1691 = vpop.f32.mrb[0].mxu0
      %1692 = vmatprep.mubr.f32.mxu0 %v926
      %1693 = vmatmul.mubr.f32.gmra.mrb[0].mxu0 %v460
      %v1694 = vpop.f32.mrb[0].mxu0
      %v1695 = vadd.f32 0.0, %v1694
      %v1696 = vpop.f32.mrb[0].mxu0
      %1697 = vmatprep.mubr.f32.mxu0 %v929
      %1698 = vmatmul.mubr.f32.gmra.mrb[0].mxu0 %v462
      %v1699 = vpop.f32.mrb[0].mxu0
      %v1700 = vadd.f32 0.0, %v1699
      %v1701 = vpop.f32.mrb[0].mxu0
      %1702 = vmatprep.mubr.f32.mxu0 %v932
      %1703 = vmatmul.mubr.f32.gmra.mrb[0].mxu0 %v464
      %v1704 = vpop.f32.mrb[0].mxu0
      %v1705 = vadd.f32 0.0, %v1704
      %v1706 = vpop.f32.mrb[0].mxu0
      %1707 = vmatprep.mubr.f32.mxu0 %v935
      %1708 = vmatmul.mubr.f32.gmra.mrb[0].mxu0 %v466
      %v1709 = vpop.f32.mrb[0].mxu0
      %v1710 = vadd.f32 0.0, %v1709
      %v1711 = vpop.f32.mrb[0].mxu0
      %1712 = vmatprep.mubr.f32.mxu0 %v938
      %1713 = vmatmul.mubr.f32.gmra.mrb[0].mxu0 %v468
      %v1714 = vpop.f32.mrb[0].mxu0
      %v1715 = vadd.f32 0.0, %v1714
      %v1716 = vpop.f32.mrb[0].mxu0
      %1717 = vmatprep.mubr.f32.mxu0 %v941
      %1718 = vmatmul.mubr.f32.gmra.mrb[0].mxu0 %v470
      %v1719 = vpop.f32.mrb[0].mxu0
      %v1720 = vadd.f32 0.0, %v1719
      %v1721 = vpop.f32.mrb[0].mxu0
      %1722 = vmatprep.mubr.f32.mxu0 %v944
      %1723 = vmatmul.mubr.f32.gmra.mrb[0].mxu0 %v472
      %v1724 = vpop.f32.mrb[0].mxu0
      %v1725 = vadd.f32 0.0, %v1724
      %v1726 = vpop.f32.mrb[0].mxu0
      %1727 = vmatprep.mubr.f32.mxu0 %v947
      %1728 = vmatmul.mubr.f32.gmra.mrb[0].mxu0 %v474
      %v1729 = vpop.f32.mrb[0].mxu0
      %v1730 = vadd.f32 0.0, %v1729
      %v1731 = vpop.f32.mrb[0].mxu0
      %1732 = vmatprep.mubr.f32.mxu0 %v950
      %1733 = vmatmul.mubr.f32.gmra.mrb[0].mxu0 %v476
      %v1734 = vpop.f32.mrb[0].mxu0
      %v1735 = vadd.f32 0.0, %v1734
      %v1736 = vpop.f32.mrb[0].mxu0
      %1737 = vmatprep.mubr.f32.mxu0 %v953
      %1738 = vmatmul.mubr.f32.gmra.mrb[0].mxu0 %v478
      %v1739 = vpop.f32.mrb[0].mxu0
      %v1740 = vadd.f32 0.0, %v1739
      %v1741 = vpop.f32.mrb[0].mxu0
      %1742 = vmatprep.mubr.f32.mxu0 %v956
      %1743 = vmatmul.mubr.f32.gmra.mrb[0].mxu0 %v480
      %v1744 = vpop.f32.mrb[0].mxu0
      %v1745 = vadd.f32 0.0, %v1744
      %v1746 = vpop.f32.mrb[0].mxu0
      %1747 = vmatprep.mubr.f32.mxu0 %v959
      %1748 = vmatmul.mubr.f32.gmra.mrb[0].mxu0 %v482
      %v1749 = vpop.f32.mrb[0].mxu0
      %v1750 = vadd.f32 0.0, %v1749
      %v1751 = vpop.f32.mrb[0].mxu0
      %1752 = vmatprep.mubr.f32.mxu0 %v962
      %1753 = vmatmul.mubr.f32.gmra.mrb[0].mxu0 %v484
      %v1754 = vpop.f32.mrb[0].mxu0
      %v1755 = vadd.f32 0.0, %v1754
      %v1756 = vpop.f32.mrb[0].mxu0
      %1757 = vmatprep.mubr.f32.mxu0 %v965
      %1758 = vmatmul.mubr.f32.gmra.mrb[0].mxu0 %v486
      %v1759 = vpop.f32.mrb[0].mxu0
      %v1760 = vadd.f32 0.0, %v1759
      %v1761 = vpop.f32.mrb[0].mxu0
      %1762 = vmatprep.mubr.f32.mxu0 %v968
      %1763 = vmatmul.mubr.f32.gmra.mrb[0].mxu0 %v488
      %v1764 = vpop.f32.mrb[0].mxu0
      %v1765 = vadd.f32 0.0, %v1764
      %v1766 = vpop.f32.mrb[0].mxu0
      %1767 = vmatprep.mubr.f32.mxu0 %v971
      %1768 = vmatmul.mubr.f32.gmra.mrb[0].mxu0 %v490
      %v1769 = vpop.f32.mrb[0].mxu0
      %v1770 = vadd.f32 0.0, %v1769
      %v1771 = vpop.f32.mrb[0].mxu0
      %1772 = vmatprep.mubr.f32.mxu0 %v974
      %1773 = vmatmul.mubr.f32.gmra.mrb[0].mxu0 %v492
      %v1774 = vpop.f32.mrb[0].mxu0
      %v1775 = vadd.f32 0.0, %v1774
      %v1776 = vpop.f32.mrb[0].mxu0
      %1777 = vmatprep.mubr.f32.mxu0 %v977
      %1778 = vmatmul.mubr.f32.gmra.mrb[0].mxu0 %v494
      %v1779 = vpop.f32.mrb[0].mxu0
      %v1780 = vadd.f32 0.0, %v1779
      %v1781 = vpop.f32.mrb[0].mxu0
      %1782 = vmatprep.mubr.f32.mxu0 %v980
      %1783 = vmatmul.mubr.f32.gmra.mrb[0].mxu0 %v496
      %v1784 = vpop.f32.mrb[0].mxu0
      %v1785 = vadd.f32 0.0, %v1784
      %v1786 = vpop.f32.mrb[0].mxu0
      %1787 = vmatprep.mubr.f32.mxu0 %v983
      %1788 = vmatmul.mubr.f32.gmra.mrb[0].mxu0 %v498
      %v1789 = vpop.f32.mrb[0].mxu0
      %v1790 = vadd.f32 0.0, %v1789
      %v1791 = vpop.f32.mrb[0].mxu0
      %1792 = vmatprep.mubr.f32.mxu0 %v986
      %1793 = vmatmul.mubr.f32.gmra.mrb[0].mxu0 %v500
      %v1794 = vpop.f32.mrb[0].mxu0
      %v1795 = vadd.f32 0.0, %v1794
      %v1796 = vpop.f32.mrb[0].mxu0
      %1797 = vmatprep.mubr.f32.mxu0 %v989
      %1798 = vmatmul.mubr.f32.gmra.mrb[0].mxu0 %v502
      %v1799 = vpop.f32.mrb[0].mxu0
      %v1800 = vadd.f32 0.0, %v1799
      %v1801 = vpop.f32.mrb[0].mxu0
      %1802 = vmatprep.mubr.f32.mxu0 %v992
      %1803 = vmatmul.mubr.f32.gmra.mrb[0].mxu0 %v504
      %v1804 = vpop.f32.mrb[0].mxu0
      %v1805 = vadd.f32 0.0, %v1804
      %v1806 = vpop.f32.mrb[0].mxu0
      %1807 = vmatprep.mubr.f32.mxu0 %v995
      %1808 = vmatmul.mubr.f32.gmra.mrb[0].mxu0 %v506
      %v1809 = vpop.f32.mrb[0].mxu0
      %v1810 = vadd.f32 0.0, %v1809
      %v1811 = vpop.f32.mrb[0].mxu0
      %1812 = vmatprep.mubr.f32.mxu0 %v998
      %1813 = vmatmul.mubr.f32.gmra.mrb[0].mxu0 %v508
      %v1814 = vpop.f32.mrb[0].mxu0
      %v1815 = vadd.f32 0.0, %v1814
      %v1816 = vpop.f32.mrb[0].mxu0
      %1817 = vmatprep.mubr.f32.mxu0 %v1001
      %1818 = vmatmul.mubr.f32.gmra.mrb[0].mxu0 %v510
      %v1819 = vpop.f32.mrb[0].mxu0
      %v1820 = vadd.f32 0.0, %v1819
      %v1821 = vpop.f32.mrb[0].mxu0
      %1822 = vmatprep.mubr.f32.mxu0 %v1004
      %1823 = vmatmul.mubr.f32.gmra.mrb[0].mxu0 %v512
      %v1824 = vpop.f32.mrb[0].mxu0
      %v1825 = vadd.f32 0.0, %v1824
      %v1826 = vpop.f32.mrb[0].mxu0
      %1827 = vmatprep.mubr.f32.mxu0 %v1007
      %1828 = vmatmul.mubr.f32.gmra.mrb[0].mxu0 %v514
      %v1829 = vpop.f32.mrb[0].mxu0
      %v1830 = vadd.f32 0.0, %v1829
      %v1831 = vpop.f32.mrb[0].mxu0
      %1832 = vmatprep.mubr.f32.mxu0 %v1010
      %1833 = vmatmul.mubr.f32.gmra.mrb[0].mxu0 %v516
      %v1834 = vpop.f32.mrb[0].mxu0
      %v1835 = vadd.f32 0.0, %v1834
      %v1836 = vpop.f32.mrb[0].mxu0
      %1837 = vmatprep.mubr.f32.mxu0 %v1013
      %1838 = vmatmul.mubr.f32.gmra.mrb[0].mxu0 %v518
      %v1839 = vpop.f32.mrb[0].mxu0
      %v1840 = vadd.f32 0.0, %v1839
      %v1841 = vpop.f32.mrb[0].mxu0
      %1842 = vmatprep.mubr.f32.mxu0 %v1016
      %1843 = vmatmul.mubr.f32.gmra.mrb[0].mxu0 %v520
      %v1844 = vpop.f32.mrb[0].mxu0
      %v1845 = vadd.f32 0.0, %v1844
      %v1846 = vpop.f32.mrb[0].mxu0
      %1847 = vmatprep.mubr.f32.mxu0 %v1019
      %1848 = vmatmul.mubr.f32.gmra.mrb[0].mxu0 %v522
      %v1849 = vpop.f32.mrb[0].mxu0
      %v1850 = vadd.f32 0.0, %v1849
      %v1851 = vpop.f32.mrb[0].mxu0
      %1852 = vmatprep.mubr.f32.mxu0 %v1022
      %1853 = vmatmul.mubr.f32.gmra.mrb[0].mxu0 %v524
      %v1854 = vpop.f32.mrb[0].mxu0
      %v1855 = vadd.f32 0.0, %v1854
      %v1856 = vpop.f32.mrb[0].mxu0
      %1857 = vmatprep.mubr.f32.mxu0 %v1025
      %1858 = vmatmul.mubr.f32.gmra.mrb[0].mxu0 %v526
      %v1859 = vpop.f32.mrb[0].mxu0
      %v1860 = vadd.f32 0.0, %v1859
      %v1861 = vpop.f32.mrb[0].mxu0
      %1862 = vmatprep.mubr.f32.mxu0 %v1028
      %1863 = vmatmul.mubr.f32.gmra.mrb[0].mxu0 %v528
      %v1864 = vpop.f32.mrb[0].mxu0
      %v1865 = vadd.f32 0.0, %v1864
      %v1866 = vpop.f32.mrb[0].mxu0
      %1867 = vmatprep.mubr.f32.mxu0 %v1031
      %1868 = vmatmul.mubr.f32.gmra.mrb[0].mxu0 %v530
      %v1869 = vpop.f32.mrb[0].mxu0
      %v1870 = vadd.f32 0.0, %v1869
      %v1871 = vpop.f32.mrb[0].mxu0
      %1872 = vmatprep.mubr.f32.mxu0 %v1034
      %1873 = vmatmul.mubr.f32.gmra.mrb[0].mxu0 %v532
      %v1874 = vpop.f32.mrb[0].mxu0
      %v1875 = vadd.f32 0.0, %v1874
      %v1876 = vpop.f32.mrb[0].mxu0
      %1877 = vmatprep.mubr.f32.mxu0 %v1037
      %1878 = vmatmul.mubr.f32.gmra.mrb[0].mxu0 %v534
      %v1879 = vpop.f32.mrb[0].mxu0
      %v1880 = vadd.f32 0.0, %v1879
      %v1881 = vpop.f32.mrb[0].mxu0
      %1882 = vmatprep.mubr.f32.mxu0 %v1040
      %1883 = vmatmul.mubr.f32.gmra.mrb[0].mxu0 %v536
      %v1884 = vpop.f32.mrb[0].mxu0
      %v1885 = vadd.f32 0.0, %v1884
      %v1886 = vpop.f32.mrb[0].mxu0
      %1887 = vmatprep.mubr.f32.mxu0 %v1043
      %1888 = vmatmul.mubr.f32.gmra.mrb[0].mxu0 %v538
      %v1889 = vpop.f32.mrb[0].mxu0
      %v1890 = vadd.f32 0.0, %v1889
      %v1891 = vpop.f32.mrb[0].mxu0
      %1892 = vmatprep.mubr.f32.mxu0 %v1046
      %1893 = vmatmul.mubr.f32.gmra.mrb[0].mxu0 %v540
      %v1894 = vpop.f32.mrb[0].mxu0
      %v1895 = vadd.f32 0.0, %v1894
      %v1896 = vpop.f32.mrb[0].mxu0
      %1897 = vmatprep.mubr.f32.mxu0 %v1049
      %1898 = vmatmul.mubr.f32.gmra.mrb[0].mxu0 %v542
      %v1899 = vpop.f32.mrb[0].mxu0
      %v1900 = vadd.f32 0.0, %v1899
      %v1901 = vpop.f32.mrb[0].mxu0
      %1902 = vmatprep.mubr.f32.mxu0 %v1052
      %1903 = vmatmul.mubr.f32.gmra.mrb[0].mxu0 %v544
      %v1904 = vpop.f32.mrb[0].mxu0
      %v1905 = vadd.f32 0.0, %v1904
      %v1906 = vpop.f32.mrb[0].mxu0
      %1907 = vmatprep.mubr.f32.mxu0 %v1055
      %1908 = vmatmul.mubr.f32.gmra.mrb[0].mxu0 %v546
      %v1909 = vpop.f32.mrb[0].mxu0
      %v1910 = vadd.f32 0.0, %v1909
      %v1911 = vpop.f32.mrb[0].mxu0
      %1912 = vmatprep.mubr.f32.mxu0 %v1058
      %1913 = vmatmul.mubr.f32.gmra.mrb[0].mxu0 %v548
      %v1914 = vpop.f32.mrb[0].mxu0
      %v1915 = vadd.f32 0.0, %v1914
      %v1916 = vpop.f32.mrb[0].mxu0
      %1917 = vmatprep.mubr.f32.mxu0 %v1061
      %1918 = vmatmul.mubr.f32.gmra.mrb[0].mxu0 %v550
      %v1919 = vpop.f32.mrb[0].mxu0
      %v1920 = vadd.f32 0.0, %v1919
      %v1921 = vpop.f32.mrb[0].mxu0
      %1922 = vmatprep.mubr.f32.mxu0 %v1064
      %1923 = vmatmul.mubr.f32.gmra.mrb[0].mxu0 %v552
      %v1924 = vpop.f32.mrb[0].mxu0
      %v1925 = vadd.f32 0.0, %v1924
      %v1926 = vpop.f32.mrb[0].mxu0
      %1927 = vmatprep.mubr.f32.mxu0 %v1067
      %1928 = vmatmul.mubr.f32.gmra.mrb[0].mxu0 %v554
      %v1929 = vpop.f32.mrb[0].mxu0
      %v1930 = vadd.f32 0.0, %v1929
      %v1931 = vpop.f32.mrb[0].mxu0
      %1932 = vmatprep.mubr.f32.mxu0 %v1070
      %1933 = vmatmul.mubr.f32.gmra.mrb[0].mxu0 %v556
      %v1934 = vpop.f32.mrb[0].mxu0
      %v1935 = vadd.f32 0.0, %v1934
      %v1936 = vpop.f32.mrb[0].mxu0
      %1937 = vmatprep.mubr.f32.mxu0 %v1073
      %1938 = vmatmul.mubr.f32.gmra.mrb[0].mxu0 %v558
      %v1939 = vpop.f32.mrb[0].mxu0
      %v1940 = vadd.f32 0.0, %v1939
      %v1941 = vpop.f32.mrb[0].mxu0
      %1942 = vmatprep.mubr.f32.mxu0 %v1076
      %1943 = vmatmul.mubr.f32.gmra.mrb[0].mxu0 %v560
      %v1944 = vpop.f32.mrb[0].mxu0
      %v1945 = vadd.f32 0.0, %v1944
      %v1946 = vpop.f32.mrb[0].mxu0
      %1947 = vmatprep.mubr.f32.mxu0 %v1079
      %1948 = vmatmul.mubr.f32.gmra.mrb[0].mxu0 %v562
      %v1949 = vpop.f32.mrb[0].mxu0
      %v1950 = vadd.f32 0.0, %v1949
      %v1951 = vpop.f32.mrb[0].mxu0
      %1952 = vmatprep.mubr.f32.mxu0 %v1082
      %1953 = vmatmul.mubr.f32.gmra.mrb[0].mxu0 %v564
      %v1954 = vpop.f32.mrb[0].mxu0
      %v1955 = vadd.f32 0.0, %v1954
      %v1956 = vpop.f32.mrb[0].mxu0
      %1957 = vmatprep.mubr.f32.mxu0 %v1085
      %1958 = vmatmul.mubr.f32.gmra.mrb[0].mxu0 %v566
      %v1959 = vpop.f32.mrb[0].mxu0
      %v1960 = vadd.f32 0.0, %v1959
      %v1961 = vpop.f32.mrb[0].mxu0
      %1962 = vmatprep.mubr.f32.mxu0 %v1088
      %1963 = vmatmul.mubr.f32.gmra.mrb[0].mxu0 %v568
      %v1964 = vpop.f32.mrb[0].mxu0
      %v1965 = vadd.f32 0.0, %v1964
      %v1966 = vpop.f32.mrb[0].mxu0
      %1967 = vmatprep.mubr.f32.mxu0 %v1091
      %1968 = vmatmul.mubr.f32.gmra.mrb[0].mxu0 %v570
      %v1969 = vpop.f32.mrb[0].mxu0
      %v1970 = vadd.f32 0.0, %v1969
      %v1971 = vpop.f32.mrb[0].mxu0
      %1972 = vmatprep.mubr.f32.mxu0 %v1094
      %1973 = vmatmul.mubr.f32.gmra.mrb[0].mxu0 %v572
      %v1974 = vpop.f32.mrb[0].mxu0
      %v1975 = vadd.f32 0.0, %v1974
      %v1976 = vpop.f32.mrb[0].mxu0
      %1977 = vmatprep.mubr.f32.mxu0 %v1097
      %1978 = vmatmul.mubr.f32.gmra.mrb[0].mxu0 %v574
      %v1979 = vpop.f32.mrb[0].mxu0
      %v1980 = vadd.f32 0.0, %v1979
      %v1981 = vpop.f32.mrb[0].mxu0
      %1982 = vmatprep.mubr.f32.mxu0 %v1100
      %1983 = vmatmul.mubr.f32.gmra.mrb[0].mxu0 %v576
      %v1984 = vpop.f32.mrb[0].mxu0
      %v1985 = vadd.f32 0.0, %v1984
      %v1986 = vpop.f32.mrb[0].mxu0
      %1987 = vmatprep.mubr.f32.mxu0 %v1103
      %1988 = vmatmul.mubr.f32.gmra.mrb[0].mxu0 %v578
      %v1989 = vpop.f32.mrb[0].mxu0
      %v1990 = vadd.f32 0.0, %v1989
      %v1991 = vpop.f32.mrb[0].mxu0
      %1992 = vmatprep.mubr.f32.mxu0 %v1106
      %1993 = vmatmul.mubr.f32.gmra.mrb[0].mxu0 %v580
      %v1994 = vpop.f32.mrb[0].mxu0
      %v1995 = vadd.f32 0.0, %v1994
      %v1996 = vpop.f32.mrb[0].mxu0
      %1997 = vmatprep.mubr.f32.mxu0 %v1109
      %1998 = vmatmul.mubr.f32.gmra.mrb[0].mxu0 %v582
      %v1999 = vpop.f32.mrb[0].mxu0
      %v2000 = vadd.f32 0.0, %v1999
      %v2001 = vpop.f32.mrb[0].mxu0
      %2002 = vmatprep.mubr.f32.mxu0 %v1112
      %2003 = vmatmul.mubr.f32.gmra.mrb[0].mxu0 %v584
      %v2004 = vpop.f32.mrb[0].mxu0
      %v2005 = vadd.f32 0.0, %v2004
      %v2006 = vpop.f32.mrb[0].mxu0
      %2007 = vmatprep.mubr.f32.mxu0 %v1115
      %2008 = vmatmul.mubr.f32.gmra.mrb[0].mxu0 %v586
      %v2009 = vpop.f32.mrb[0].mxu0
      %v2010 = vadd.f32 0.0, %v2009
      %v2011 = vpop.f32.mrb[0].mxu0
      %2012 = vmatprep.mubr.f32.mxu0 %v1118
      %2013 = vmatmul.mubr.f32.gmra.mrb[0].mxu0 %v588
      %v2014 = vpop.f32.mrb[0].mxu0
      %v2015 = vadd.f32 0.0, %v2014
      %v2016 = vpop.f32.mrb[0].mxu0
      %2017 = vmatprep.mubr.f32.mxu0 %v1121
      %2018 = vmatmul.mubr.f32.gmra.mrb[0].mxu0 %v590
      %v2019 = vpop.f32.mrb[0].mxu0
      %v2020 = vadd.f32 0.0, %v2019
      %v2021 = vpop.f32.mrb[0].mxu0
      %2022 = vmatprep.mubr.f32.mxu0 %v1124
      %2023 = vmatmul.mubr.f32.gmra.mrb[0].mxu0 %v592
      %v2024 = vpop.f32.mrb[0].mxu0
      %v2025 = vadd.f32 0.0, %v2024
      %v2026 = vpop.f32.mrb[0].mxu0
      %2027 = vmatprep.mubr.f32.mxu0 %v1127
      %2028 = vmatmul.mubr.f32.gmra.mrb[0].mxu0 %v594
      %v2029 = vpop.f32.mrb[0].mxu0
      %v2030 = vadd.f32 0.0, %v2029
      %v2031 = vpop.f32.mrb[0].mxu0
      %2032 = vmatprep.mubr.f32.mxu0 %v1130
      %2033 = vmatmul.mubr.f32.gmra.mrb[0].mxu0 %v596
      %v2034 = vpop.f32.mrb[0].mxu0
      %v2035 = vadd.f32 0.0, %v2034
      %v2036 = vpop.f32.mrb[0].mxu0
      %2037 = vmatprep.mubr.f32.mxu0 %v1133
      %2038 = vmatmul.mubr.f32.gmra.mrb[0].mxu0 %v598
      %v2039 = vpop.f32.mrb[0].mxu0
      %v2040 = vadd.f32 0.0, %v2039
      %v2041 = vpop.f32.mrb[0].mxu0
      %2042 = vmatprep.mubr.f32.mxu0 %v1136
      %2043 = vmatmul.mubr.f32.gmra.mrb[0].mxu0 %v600
      %v2044 = vpop.f32.mrb[0].mxu0
      %v2045 = vadd.f32 0.0, %v2044
      %v2046 = vpop.f32.mrb[0].mxu0
      %2047 = vmatprep.mubr.f32.mxu0 %v1139
      %2048 = vmatmul.mubr.f32.gmra.mrb[0].mxu0 %v602
      %v2049 = vpop.f32.mrb[0].mxu0
      %v2050 = vadd.f32 0.0, %v2049
      %v2051 = vpop.f32.mrb[0].mxu0
      %2052 = vmatprep.mubr.f32.mxu0 %v1142
      %2053 = vmatmul.mubr.f32.gmra.mrb[0].mxu0 %v604
      %v2054 = vpop.f32.mrb[0].mxu0
      %v2055 = vadd.f32 0.0, %v2054
      %v2056 = vpop.f32.mrb[0].mxu0
      %2057 = vmatprep.mubr.f32.mxu0 %v1145
      %2058 = vmatmul.mubr.f32.gmra.mrb[0].mxu0 %v606
      %v2059 = vpop.f32.mrb[0].mxu0
      %v2060 = vadd.f32 0.0, %v2059
      %v2061 = vpop.f32.mrb[0].mxu0
      %2062 = vmatprep.mubr.f32.mxu0 %v1148
      %2063 = vmatmul.mubr.f32.gmra.mrb[0].mxu0 %v608
      %v2064 = vpop.f32.mrb[0].mxu0
      %v2065 = vadd.f32 0.0, %v2064
      %v2066 = vpop.f32.mrb[0].mxu0
      %2067 = vmatprep.mubr.f32.mxu0 %v1151
      %2068 = vmatmul.mubr.f32.gmra.mrb[0].mxu0 %v610
      %v2069 = vpop.f32.mrb[0].mxu0
      %v2070 = vadd.f32 0.0, %v2069
      %v2071 = vpop.f32.mrb[0].mxu0
      %2072 = vmatprep.mubr.f32.mxu0 %v1154
      %2073 = vmatmul.mubr.f32.gmra.mrb[0].mxu0 %v612
      %v2074 = vpop.f32.mrb[0].mxu0
      %v2075 = vadd.f32 0.0, %v2074
      %v2076 = vpop.f32.mrb[0].mxu0
      %2077 = vmatprep.mubr.f32.mxu0 %v1157
      %2078 = vmatmul.mubr.f32.gmra.mrb[0].mxu0 %v614
      %v2079 = vpop.f32.mrb[0].mxu0
      %v2080 = vadd.f32 0.0, %v2079
      %v2081 = vpop.f32.mrb[0].mxu0
      %2082 = vmatprep.mubr.f32.mxu0 %v1160
      %2083 = vmatmul.mubr.f32.gmra.mrb[0].mxu0 %v616
      %v2084 = vpop.f32.mrb[0].mxu0
      %v2085 = vadd.f32 0.0, %v2084
      %v2086 = vpop.f32.mrb[0].mxu0
      %2087 = vmatprep.mubr.f32.mxu0 %v1163
      %2088 = vmatmul.mubr.f32.gmra.mrb[0].mxu0 %v618
      %v2089 = vpop.f32.mrb[0].mxu0
      %v2090 = vadd.f32 0.0, %v2089
      %v2091 = vpop.f32.mrb[0].mxu0
      %2092 = vmatprep.mubr.f32.mxu0 %v1166
      %2093 = vmatmul.mubr.f32.gmra.mrb[0].mxu0 %v620
      %v2094 = vpop.f32.mrb[0].mxu0
      %v2095 = vadd.f32 0.0, %v2094
      %v2096 = vpop.f32.mrb[0].mxu0
      %2097 = vmatprep.mubr.f32.mxu0 %v1169
      %2098 = vmatmul.mubr.f32.gmra.mrb[0].mxu0 %v622
      %v2099 = vpop.f32.mrb[0].mxu0
      %v2100 = vadd.f32 0.0, %v2099
      %v2101 = vpop.f32.mrb[0].mxu0
      %2102 = vmatprep.mubr.f32.mxu0 %v1172
      %2103 = vmatmul.mubr.f32.gmra.mrb[0].mxu0 %v624
      %v2104 = vpop.f32.mrb[0].mxu0
      %v2105 = vadd.f32 0.0, %v2104
      %v2106 = vpop.f32.mrb[0].mxu0
      %2107 = vmatprep.mubr.f32.mxu0 %v1175
      %2108 = vmatmul.mubr.f32.gmra.mrb[0].mxu0 %v626
      %v2109 = vpop.f32.mrb[0].mxu0
      %v2110 = vadd.f32 0.0, %v2109
      %v2111 = vpop.f32.mrb[0].mxu0
      %2112 = vmatprep.mubr.f32.mxu0 %v1178
      %2113 = vmatmul.mubr.f32.gmra.mrb[0].mxu0 %v628
      %v2114 = vpop.f32.mrb[0].mxu0
      %v2115 = vadd.f32 0.0, %v2114
      %v2116 = vpop.f32.mrb[0].mxu0
      %2117 = vmatprep.mubr.f32.mxu0 %v1181
      %2118 = vmatmul.mubr.f32.gmra.mrb[0].mxu0 %v630
      %v2119 = vpop.f32.mrb[0].mxu0
      %v2120 = vadd.f32 0.0, %v2119
      %v2121 = vpop.f32.mrb[0].mxu0
      %2122 = vmatprep.mubr.f32.mxu0 %v1184
      %2123 = vmatmul.mubr.f32.gmra.mrb[0].mxu0 %v632
      %v2124 = vpop.f32.mrb[0].mxu0
      %v2125 = vadd.f32 0.0, %v2124
      %v2126 = vpop.f32.mrb[0].mxu0
      %2127 = vmatprep.mubr.f32.mxu0 %v1187
      %2128 = vmatmul.mubr.f32.gmra.mrb[0].mxu0 %v634
      %v2129 = vpop.f32.mrb[0].mxu0
      %v2130 = vadd.f32 0.0, %v2129
      %v2131 = vpop.f32.mrb[0].mxu0
      %2132 = vmatprep.mubr.f32.mxu0 %v1190
      %2133 = vmatmul.mubr.f32.gmra.mrb[0].mxu0 %v636
      %v2134 = vpop.f32.mrb[0].mxu0
      %v2135 = vadd.f32 0.0, %v2134
      %v2136 = vpop.f32.mrb[0].mxu0
      %2137 = vmatprep.mubr.f32.mxu0 %v1193
      %2138 = vmatmul.mubr.f32.gmra.mrb[0].mxu0 %v638
      %v2139 = vpop.f32.mrb[0].mxu0
      %v2140 = vadd.f32 0.0, %v2139
      %v2141 = vpop.f32.mrb[0].mxu0
      %2142 = vmatprep.mubr.f32.mxu0 %v1196
      %2143 = vmatmul.mubr.f32.gmra.mrb[0].mxu0 %v640
      %v2144 = vpop.f32.mrb[0].mxu0
      %v2145 = vadd.f32 0.0, %v2144
      %v2146 = vpop.f32.mrb[0].mxu0
      %2147 = vmatprep.mubr.f32.mxu0 %v1199
      %2148 = vmatmul.mubr.f32.gmra.mrb[0].mxu0 %v642
      %v2149 = vpop.f32.mrb[0].mxu0
      %v2150 = vadd.f32 0.0, %v2149
      %v2151 = vpop.f32.mrb[0].mxu0
      %2152 = vmatprep.mubr.f32.mxu0 %v1202
      %2153 = vmatmul.mubr.f32.gmra.mrb[0].mxu0 %v644
      %v2154 = vpop.f32.mrb[0].mxu0
      %v2155 = vadd.f32 0.0, %v2154
      %v2156 = vpop.f32.mrb[0].mxu0
      %2157 = vmatprep.mubr.f32.mxu0 %v1205
      %2158 = vmatmul.mubr.f32.gmra.mrb[0].mxu0 %v646
      %v2159 = vpop.f32.mrb[0].mxu0
      %v2160 = vadd.f32 0.0, %v2159
      %v2161 = vpop.f32.mrb[0].mxu0
      %2162 = vmatprep.mubr.f32.mxu0 %v1208
      %2163 = vmatmul.mubr.f32.gmra.mrb[0].mxu0 %v648
      %v2164 = vpop.f32.mrb[0].mxu0
      %v2165 = vadd.f32 0.0, %v2164
      %v2166 = vpop.f32.mrb[0].mxu0
      %2167 = vmatprep.mubr.f32.mxu0 %v1211
      %2168 = vmatmul.mubr.f32.gmra.mrb[0].mxu0 %v650
      %v2169 = vpop.f32.mrb[0].mxu0
      %v2170 = vadd.f32 0.0, %v2169
      %v2171 = vpop.f32.mrb[0].mxu0
      %2172 = vmatprep.mubr.f32.mxu0 %v1214
      %2173 = vmatmul.mubr.f32.gmra.mrb[0].mxu0 %v652
      %v2174 = vpop.f32.mrb[0].mxu0
      %v2175 = vadd.f32 0.0, %v2174
      %v2176 = vpop.f32.mrb[0].mxu0
      %2177 = vmatprep.mubr.f32.mxu0 %v1217
      %2178 = vmatmul.mubr.f32.gmra.mrb[0].mxu0 %v654
      %v2179 = vpop.f32.mrb[0].mxu0
      %v2180 = vadd.f32 0.0, %v2179
      %v2181 = vpop.f32.mrb[0].mxu0
      %2182 = vmatprep.mubr.f32.mxu0 %v1220
      %2183 = vmatmul.mubr.f32.gmra.mrb[0].mxu0 %v656
      %v2184 = vpop.f32.mrb[0].mxu0
      %v2185 = vadd.f32 0.0, %v2184
      %v2186 = vpop.f32.mrb[0].mxu0
      %2187 = vmatprep.mubr.f32.mxu0 %v1223
      %2188 = vmatmul.mubr.f32.gmra.mrb[0].mxu0 %v658
      %v2189 = vpop.f32.mrb[0].mxu0
      %v2190 = vadd.f32 0.0, %v2189
      %v2191 = vpop.f32.mrb[0].mxu0
      %2192 = vmatprep.mubr.f32.mxu0 %v1226
      %2193 = vmatmul.mubr.f32.gmra.mrb[0].mxu0 %v660
      %v2194 = vpop.f32.mrb[0].mxu0
      %v2195 = vadd.f32 0.0, %v2194
      %v2196 = vpop.f32.mrb[0].mxu0
      %2197 = vmatprep.mubr.f32.mxu0 %v1229
      %2198 = vmatmul.mubr.f32.gmra.mrb[0].mxu0 %v662
      %v2199 = vpop.f32.mrb[0].mxu0
      %v2200 = vadd.f32 0.0, %v2199
      %v2201 = vpop.f32.mrb[0].mxu0
      %2202 = vmatprep.mubr.f32.mxu0 %v1232
      %2203 = vmatmul.mubr.f32.gmra.mrb[0].mxu0 %v664
      %v2204 = vpop.f32.mrb[0].mxu0
      %v2205 = vadd.f32 0.0, %v2204
      %v2206 = vpop.f32.mrb[0].mxu0
      %2207 = vmatprep.mubr.f32.mxu0 %v1235
      %2208 = vmatmul.mubr.f32.gmra.mrb[0].mxu0 %v666
      %v2209 = vpop.f32.mrb[0].mxu0
      %v2210 = vadd.f32 0.0, %v2209
      %v2211 = vpop.f32.mrb[0].mxu0
      %2212 = vmatprep.mubr.f32.mxu0 %v1238
      %2213 = vmatmul.mubr.f32.gmra.mrb[0].mxu0 %v668
      %v2214 = vpop.f32.mrb[0].mxu0
      %v2215 = vadd.f32 0.0, %v2214
      %v2216 = vpop.f32.mrb[0].mxu0
      %2217 = vmatprep.mubr.f32.mxu0 %v1241
      %2218 = vmatmul.mubr.f32.gmra.mrb[0].mxu0 %v670
      %v2219 = vpop.f32.mrb[0].mxu0
      %v2220 = vadd.f32 0.0, %v2219
      %v2221 = vpop.f32.mrb[0].mxu0
      %2222 = vmatprep.mubr.f32.mxu0 %v1244
      %2223 = vmatmul.mubr.f32.gmra.mrb[0].mxu0 %v672
      %v2224 = vpop.f32.mrb[0].mxu0
      %v2225 = vadd.f32 0.0, %v2224
      %v2226 = vpop.f32.mrb[0].mxu0
      %2227 = vmatprep.mubr.f32.mxu0 %v1247
      %2228 = vmatmul.mubr.f32.gmra.mrb[0].mxu0 %v674
      %v2229 = vpop.f32.mrb[0].mxu0
      %v2230 = vadd.f32 0.0, %v2229
      %v2231 = vpop.f32.mrb[0].mxu0
      %2232 = vmatprep.mubr.f32.mxu0 %v1250
      %2233 = vmatmul.mubr.f32.gmra.mrb[0].mxu0 %v676
      %v2234 = vpop.f32.mrb[0].mxu0
      %v2235 = vadd.f32 0.0, %v2234
      %v2236 = vpop.f32.mrb[0].mxu0
      %2237 = vmatprep.mubr.f32.mxu0 %v1253
      %2238 = vmatmul.mubr.f32.gmra.mrb[0].mxu0 %v678
      %v2239 = vpop.f32.mrb[0].mxu0
      %v2240 = vadd.f32 0.0, %v2239
      %v2241 = vpop.f32.mrb[0].mxu0
      %2242 = vmatprep.mubr.f32.mxu0 %v1256
      %2243 = vmatmul.mubr.f32.gmra.mrb[0].mxu0 %v680
      %v2244 = vpop.f32.mrb[0].mxu0
      %v2245 = vadd.f32 0.0, %v2244
      %v2246 = vpop.f32.mrb[0].mxu0
      %2247 = vmatprep.mubr.f32.mxu0 %v1259
      %2248 = vmatmul.mubr.f32.gmra.mrb[0].mxu0 %v682
      %v2249 = vpop.f32.mrb[0].mxu0
      %v2250 = vadd.f32 0.0, %v2249
      %v2251 = vpop.f32.mrb[0].mxu0
      %2252 = vmatprep.mubr.f32.mxu0 %v1262
      %2253 = vmatmul.mubr.f32.gmra.mrb[0].mxu0 %v684
      %v2254 = vpop.f32.mrb[0].mxu0
      %v2255 = vadd.f32 0.0, %v2254
      %v2256 = vpop.f32.mrb[0].mxu0
      %2257 = vmatprep.mubr.f32.mxu0 %v1265
      %2258 = vmatmul.mubr.f32.gmra.mrb[0].mxu0 %v686
      %v2259 = vpop.f32.mrb[0].mxu0
      %v2260 = vadd.f32 0.0, %v2259
      %v2261 = vpop.f32.mrb[0].mxu0
      %2262 = vmatprep.mubr.f32.mxu0 %v1268
      %2263 = vmatmul.mubr.f32.gmra.mrb[0].mxu0 %v688
      %v2264 = vpop.f32.mrb[0].mxu0
      %v2265 = vadd.f32 0.0, %v2264
      %v2266 = vpop.f32.mrb[0].mxu0
      %2267 = vmatprep.mubr.f32.mxu0 %v1271
      %2268 = vmatmul.mubr.f32.gmra.mrb[0].mxu0 %v690
      %v2269 = vpop.f32.mrb[0].mxu0
      %v2270 = vadd.f32 0.0, %v2269
      %v2271 = vpop.f32.mrb[0].mxu0
      %2272 = vmatprep.mubr.f32.mxu0 %v1274
      %2273 = vmatmul.mubr.f32.gmra.mrb[0].mxu0 %v692
      %v2274 = vpop.f32.mrb[0].mxu0
      %v2275 = vadd.f32 0.0, %v2274
      %v2276 = vpop.f32.mrb[0].mxu0
      %2277 = vmatprep.mubr.f32.mxu0 %v1277
      %2278 = vmatmul.mubr.f32.gmra.mrb[0].mxu0 %v694
      %v2279 = vpop.f32.mrb[0].mxu0
      %v2280 = vadd.f32 0.0, %v2279
      %v2281 = vpop.f32.mrb[0].mxu0
      %2282 = vmatprep.mubr.f32.mxu0 %v1280
      %2283 = vmatmul.mubr.f32.gmra.mrb[0].mxu0 %v696
      %v2284 = vpop.f32.mrb[0].mxu0
      %v2285 = vadd.f32 0.0, %v2284
      %v2286 = vpop.f32.mrb[0].mxu0
      %2287 = vmatprep.mubr.f32.mxu0 %v1283
      %2288 = vmatmul.mubr.f32.gmra.mrb[0].mxu0 %v698
      %v2289 = vpop.f32.mrb[0].mxu0
      %v2290 = vadd.f32 0.0, %v2289
      %v2291 = vpop.f32.mrb[0].mxu0
      %2292 = vmatprep.mubr.f32.mxu0 %v1286
      %2293 = vmatmul.mubr.f32.gmra.mrb[0].mxu0 %v700
      %v2294 = vpop.f32.mrb[0].mxu0
      %v2295 = vadd.f32 0.0, %v2294
      %v2296 = vpop.f32.mrb[0].mxu0
      %2297 = vmatprep.mubr.f32.mxu0 %v1289
      %2298 = vmatmul.mubr.f32.gmra.mrb[0].mxu0 %v702
      %v2299 = vpop.f32.mrb[0].mxu0
      %v2300 = vadd.f32 0.0, %v2299
      %v2301 = vpop.f32.mrb[0].mxu0
      %2302 = vmatprep.mubr.f32.mxu0 %v1292
      %2303 = vmatmul.mubr.f32.gmra.mrb[0].mxu0 %v704
      %v2304 = vpop.f32.mrb[0].mxu0
      %v2305 = vadd.f32 0.0, %v2304
      %v2306 = vpop.f32.mrb[0].mxu0
      %2307 = vmatprep.mubr.f32.mxu0 %v1295
      %2308 = vmatmul.mubr.f32.gmra.mrb[0].mxu0 %v706
      %v2309 = vpop.f32.mrb[0].mxu0
      %v2310 = vadd.f32 0.0, %v2309
      %v2311 = vpop.f32.mrb[0].mxu0
      %2312 = vmatprep.mubr.f32.mxu0 %v1298
      %2313 = vmatmul.mubr.f32.gmra.mrb[0].mxu0 %v708
      %v2314 = vpop.f32.mrb[0].mxu0
      %v2315 = vadd.f32 0.0, %v2314
      %v2316 = vpop.f32.mrb[0].mxu0
      %2317 = vmatprep.mubr.f32.mxu0 %v1301
      %2318 = vmatmul.mubr.f32.gmra.mrb[0].mxu0 %v710
      %v2319 = vpop.f32.mrb[0].mxu0
      %v2320 = vadd.f32 0.0, %v2319
      %v2321 = vpop.f32.mrb[0].mxu0
      %2322 = vmatprep.mubr.f32.mxu0 %v1304
      %2323 = vmatmul.mubr.f32.gmra.mrb[0].mxu0 %v712
      %v2324 = vpop.f32.mrb[0].mxu0
      %v2325 = vadd.f32 0.0, %v2324
      %v2326 = vpop.f32.mrb[0].mxu0
      %2327 = vmatprep.mubr.f32.mxu0 %v1307
      %2328 = vmatmul.mubr.f32.gmra.mrb[0].mxu0 %v714
      %v2329 = vpop.f32.mrb[0].mxu0
      %v2330 = vadd.f32 0.0, %v2329
      %v2331 = vpop.f32.mrb[0].mxu0
      %2332 = vmatprep.mubr.f32.mxu0 %v1310
      %2333 = vmatmul.mubr.f32.gmra.mrb[0].mxu0 %v716
      %v2334 = vpop.f32.mrb[0].mxu0
      %v2335 = vadd.f32 0.0, %v2334
      %v2336 = vpop.f32.mrb[0].mxu0
      %2337 = vmatprep.mubr.f32.mxu0 %v1313
      %2338 = vmatmul.mubr.f32.gmra.mrb[0].mxu0 %v718
      %v2339 = vpop.f32.mrb[0].mxu0
      %v2340 = vadd.f32 0.0, %v2339
      %v2341 = vpop.f32.mrb[0].mxu0
      %2342 = vmatprep.mubr.f32.mxu0 %v1316
      %2343 = vmatmul.mubr.f32.gmra.mrb[0].mxu0 %v720
      %v2344 = vpop.f32.mrb[0].mxu0
      %v2345 = vadd.f32 0.0, %v2344
      %v2346 = vpop.f32.mrb[0].mxu0
      %2347 = vmatprep.mubr.f32.mxu0 %v1319
      %2348 = vmatmul.mubr.f32.gmra.mrb[0].mxu0 %v722
      %v2349 = vpop.f32.mrb[0].mxu0
      %v2350 = vadd.f32 0.0, %v2349
      %v2351 = vpop.f32.mrb[0].mxu0
      %2352 = vmatprep.mubr.f32.mxu0 %v1322
      %2353 = vmatmul.mubr.f32.gmra.mrb[0].mxu0 %v724
      %v2354 = vpop.f32.mrb[0].mxu0
      %v2355 = vadd.f32 0.0, %v2354
      %v2356 = vpop.f32.mrb[0].mxu0
      %2357 = vmatprep.mubr.f32.mxu0 %v1325
      %2358 = vmatmul.mubr.f32.gmra.mrb[0].mxu0 %v726
      %v2359 = vpop.f32.mrb[0].mxu0
      %v2360 = vadd.f32 0.0, %v2359
      %v2361 = vpop.f32.mrb[0].mxu0
      %2362 = vmatprep.mubr.f32.mxu0 %v1328
      %2363 = vmatmul.mubr.f32.gmra.mrb[0].mxu0 %v728
      %v2364 = vpop.f32.mrb[0].mxu0
      %v2365 = vadd.f32 0.0, %v2364
      %v2366 = vpop.f32.mrb[0].mxu0
      %2367 = vmatprep.mubr.f32.mxu0 %v1331
      %2368 = vmatmul.mubr.f32.gmra.mrb[0].mxu0 %v730
      %v2369 = vpop.f32.mrb[0].mxu0
      %v2370 = vadd.f32 0.0, %v2369
      %v2371 = vpop.f32.mrb[0].mxu0
      %2372 = vmatprep.mubr.f32.mxu0 %v1334
      %2373 = vmatmul.mubr.f32.gmra.mrb[0].mxu0 %v732
      %v2374 = vpop.f32.mrb[0].mxu0
      %v2375 = vadd.f32 0.0, %v2374
      %v2376 = vpop.f32.mrb[0].mxu0
      %2377 = vmatprep.mubr.f32.mxu0 %v1337
      %2378 = vmatmul.mubr.f32.gmra.mrb[0].mxu0 %v734
      %v2379 = vpop.f32.mrb[0].mxu0
      %v2380 = vadd.f32 0.0, %v2379
      %v2381 = vpop.f32.mrb[0].mxu0
      %2382 = vmatprep.mubr.f32.mxu0 %v1340
      %2383 = vmatmul.mubr.f32.gmra.mrb[0].mxu0 %v736
      %v2384 = vpop.f32.mrb[0].mxu0
      %v2385 = vadd.f32 0.0, %v2384
      %v2386 = vpop.f32.mrb[0].mxu0
      %2387 = vmatprep.mubr.f32.mxu0 %v1343
      %2388 = vmatmul.mubr.f32.gmra.mrb[0].mxu0 %v738
      %v2389 = vpop.f32.mrb[0].mxu0
      %v2390 = vadd.f32 0.0, %v2389
      %v2391 = vpop.f32.mrb[0].mxu0
      %2392 = vmatprep.mubr.f32.mxu0 %v1346
      %2393 = vmatmul.mubr.f32.gmra.mrb[0].mxu0 %v740
      %v2394 = vpop.f32.mrb[0].mxu0
      %v2395 = vadd.f32 0.0, %v2394
      %v2396 = vpop.f32.mrb[0].mxu0
      %2397 = vmatprep.mubr.f32.mxu0 %v1349
      %2398 = vmatmul.mubr.f32.gmra.mrb[0].mxu0 %v742
      %v2399 = vpop.f32.mrb[0].mxu0
      %v2400 = vadd.f32 0.0, %v2399
      %v2401 = vpop.f32.mrb[0].mxu0
      %2402 = vmatprep.mubr.f32.mxu0 %v1352
      %2403 = vmatmul.mubr.f32.gmra.mrb[0].mxu0 %v744
      %v2404 = vpop.f32.mrb[0].mxu0
      %v2405 = vadd.f32 0.0, %v2404
      %v2406 = vpop.f32.mrb[0].mxu0
      %2407 = vmatprep.mubr.f32.mxu0 %v1355
      %2408 = vmatmul.mubr.f32.gmra.mrb[0].mxu0 %v746
      %v2409 = vpop.f32.mrb[0].mxu0
      %v2410 = vadd.f32 0.0, %v2409
      %v2411 = vpop.f32.mrb[0].mxu0
      %2412 = vmatprep.mubr.f32.mxu0 %v1358
      %2413 = vmatmul.mubr.f32.gmra.mrb[0].mxu0 %v748
      %v2414 = vpop.f32.mrb[0].mxu0
      %v2415 = vadd.f32 0.0, %v2414
      %v2416 = vpop.f32.mrb[0].mxu0
      %2417 = vmatprep.mubr.f32.mxu0 %v1361
      %2418 = vmatmul.mubr.f32.gmra.mrb[0].mxu0 %v750
      %v2419 = vpop.f32.mrb[0].mxu0
      %v2420 = vadd.f32 0.0, %v2419
      %v2421 = vpop.f32.mrb[0].mxu0
      %2422 = vmatprep.mubr.f32.mxu0 %v1364
      %2423 = vmatmul.mubr.f32.gmra.mrb[0].mxu0 %v752
      %v2424 = vpop.f32.mrb[0].mxu0
      %v2425 = vadd.f32 0.0, %v2424
      %v2426 = vpop.f32.mrb[0].mxu0
      %2427 = vmatprep.mubr.f32.mxu0 %v1367
      %2428 = vmatmul.mubr.f32.gmra.mrb[0].mxu0 %v754
      %v2429 = vpop.f32.mrb[0].mxu0
      %v2430 = vadd.f32 0.0, %v2429
      %v2431 = vpop.f32.mrb[0].mxu0
      %2432 = vmatprep.mubr.f32.mxu0 %v1370
      %2433 = vmatmul.mubr.f32.gmra.mrb[0].mxu0 %v756
      %v2434 = vpop.f32.mrb[0].mxu0
      %v2435 = vadd.f32 0.0, %v2434
      %v2436 = vpop.f32.mrb[0].mxu0
      %2437 = vmatprep.mubr.f32.mxu0 %v1373
      %2438 = vmatmul.mubr.f32.gmra.mrb[0].mxu0 %v758
      %v2439 = vpop.f32.mrb[0].mxu0
      %v2440 = vadd.f32 0.0, %v2439
      %v2441 = vpop.f32.mrb[0].mxu0
      %2442 = vmatprep.mubr.f32.mxu0 %v1376
      %2443 = vmatmul.mubr.f32.gmra.mrb[0].mxu0 %v760
      %v2444 = vpop.f32.mrb[0].mxu0
      %v2445 = vadd.f32 0.0, %v2444
      %v2446 = vpop.f32.mrb[0].mxu0
      %2447 = vmatprep.mubr.f32.mxu0 %v1379
      %2448 = vmatmul.mubr.f32.gmra.mrb[0].mxu0 %v762
      %v2449 = vpop.f32.mrb[0].mxu0
      %v2450 = vadd.f32 0.0, %v2449
      %v2451 = vpop.f32.mrb[0].mxu0
      %2452 = vmatprep.mubr.f32.mxu0 %v1382
      %2453 = vmatmul.mubr.f32.gmra.mrb[0].mxu0 %v764
      %v2454 = vpop.f32.mrb[0].mxu0
      %v2455 = vadd.f32 0.0, %v2454
      %v2456 = vpop.f32.mrb[0].mxu0
      %2457 = vmatprep.mubr.f32.mxu0 %v1385
      %2458 = vmatmul.mubr.f32.gmra.mrb[0].mxu0 %v766
      %v2459 = vpop.f32.mrb[0].mxu0
      %v2460 = vadd.f32 0.0, %v2459
      %v2461 = vpop.f32.mrb[0].mxu0
      %2462 = vmatprep.mubr.f32.mxu0 %v1388
      %2463 = vmatmul.mubr.f32.gmra.mrb[0].mxu0 %v768
      %v2464 = vpop.f32.mrb[0].mxu0
      %v2465 = vadd.f32 0.0, %v2464
      %v2466 = vpop.f32.mrb[0].mxu0
      %2467 = vmatprep.mubr.f32.mxu0 %v1391
      %2468 = vmatmul.mubr.f32.gmra.mrb[0].mxu0 %v770
      %v2469 = vpop.f32.mrb[0].mxu0
      %v2470 = vadd.f32 0.0, %v2469
      %v2471 = vpop.f32.mrb[0].mxu0
      %2472 = vmatprep.mubr.f32.mxu0 %v1394
      %2473 = vmatmul.mubr.f32.gmra.mrb[0].mxu0 %v772
      %v2474 = vpop.f32.mrb[0].mxu0
      %v2475 = vadd.f32 0.0, %v2474
      %v2476 = vpop.f32.mrb[0].mxu0
      %2477 = vmatprep.mubr.f32.mxu0 %v1397
      %2478 = vmatmul.mubr.f32.gmra.mrb[0].mxu0 %v774
      %v2479 = vpop.f32.mrb[0].mxu0
      %v2480 = vadd.f32 0.0, %v2479
      %v2481 = vpop.f32.mrb[0].mxu0
      %2482 = vmatprep.mubr.f32.mxu0 %v1400
      %2483 = vmatmul.mubr.f32.gmra.mrb[0].mxu0 %v776
      %v2484 = vpop.f32.mrb[0].mxu0
      %v2485 = vadd.f32 0.0, %v2484
      %v2486 = vpop.f32.mrb[0].mxu0
      %2487 = vmatprep.mubr.f32.mxu0 %v1403
      %2488 = vmatmul.mubr.f32.gmra.mrb[0].mxu0 %v778
      %v2489 = vpop.f32.mrb[0].mxu0
      %v2490 = vadd.f32 0.0, %v2489
      %v2491 = vpop.f32.mrb[0].mxu0
      %2492 = vmatprep.mubr.f32.mxu0 %v1406
      %2493 = vmatmul.mubr.f32.gmra.mrb[0].mxu0 %v780
      %v2494 = vpop.f32.mrb[0].mxu0
      %v2495 = vadd.f32 0.0, %v2494
      %v2496 = vpop.f32.mrb[0].mxu0
      %2497 = vmatprep.mubr.f32.mxu0 %v1409
      %2498 = vmatmul.mubr.f32.gmra.mrb[0].mxu0 %v782
      %v2499 = vpop.f32.mrb[0].mxu0
      %v2500 = vadd.f32 0.0, %v2499
      %v2501 = vpop.f32.mrb[0].mxu0
      %2502 = vmatprep.mubr.f32.mxu0 %v1412
      %2503 = vmatmul.mubr.f32.gmra.mrb[0].mxu0 %v784
      %v2504 = vpop.f32.mrb[0].mxu0
      %v2505 = vadd.f32 0.0, %v2504
      %v2506 = vpop.f32.mrb[0].mxu0
      %2507 = vmatprep.mubr.f32.mxu0 %v1415
      %2508 = vmatmul.mubr.f32.gmra.mrb[0].mxu0 %v786
      %v2509 = vpop.f32.mrb[0].mxu0
      %v2510 = vadd.f32 0.0, %v2509
      %v2511 = vpop.f32.mrb[0].mxu0
      %2512 = vmatprep.mubr.f32.mxu0 %v1418
      %2513 = vmatmul.mubr.f32.gmra.mrb[0].mxu0 %v788
      %v2514 = vpop.f32.mrb[0].mxu0
      %v2515 = vadd.f32 0.0, %v2514
      %v2516 = vpop.f32.mrb[0].mxu0
      %2517 = vmatprep.mubr.f32.mxu0 %v1421
      %2518 = vmatmul.mubr.f32.gmra.mrb[0].mxu0 %v790
      %v2519 = vpop.f32.mrb[0].mxu0
      %v2520 = vadd.f32 0.0, %v2519
      %v2521 = vpop.f32.mrb[0].mxu0
      %2522 = vmatprep.mubr.f32.mxu0 %v1424
      %2523 = vmatmul.mubr.f32.gmra.mrb[0].mxu0 %v792
      %v2524 = vpop.f32.mrb[0].mxu0
      %v2525 = vadd.f32 0.0, %v2524
      %v2526 = vpop.f32.mrb[0].mxu0
      %2527 = vmatprep.mubr.f32.mxu0 %v1427
      %2528 = vmatmul.mubr.f32.gmra.mrb[0].mxu0 %v794
      %v2529 = vpop.f32.mrb[0].mxu0
      %v2530 = vadd.f32 0.0, %v2529
      %v2531 = vpop.f32.mrb[0].mxu0
      %2532 = vmatprep.mubr.f32.mxu0 %v1430
      %2533 = vmatmul.mubr.f32.gmra.mrb[0].mxu0 %v796
      %v2534 = vpop.f32.mrb[0].mxu0
      %v2535 = vadd.f32 0.0, %v2534
      %v2536 = vpop.f32.mrb[0].mxu0
      %2537 = vmatprep.mubr.f32.mxu0 %v1433
      %2538 = vmatmul.mubr.f32.gmra.mrb[0].mxu0 %v798
      %v2539 = vpop.f32.mrb[0].mxu0
      %v2540 = vadd.f32 0.0, %v2539
      %v2541 = vpop.f32.mrb[0].mxu0
      %2542 = vmatprep.mubr.f32.mxu0 %v1436
      %2543 = vmatmul.mubr.f32.gmra.mrb[0].mxu0 %v800
      %v2544 = vpop.f32.mrb[0].mxu0
      %v2545 = vadd.f32 0.0, %v2544
      %v2546 = vpop.f32.mrb[0].mxu0
      %2547 = vmatprep.mubr.f32.mxu0 %v1439
      %2548 = vmatmul.mubr.f32.gmra.mrb[0].mxu0 %v802
      %v2549 = vpop.f32.mrb[0].mxu0
      %v2550 = vadd.f32 0.0, %v2549
      %v2551 = vpop.f32.mrb[0].mxu0
      %2552 = vmatprep.mubr.f32.mxu0 %v1442
      %2553 = vmatmul.mubr.f32.gmra.mrb[0].mxu0 %v804
      %v2554 = vpop.f32.mrb[0].mxu0
      %v2555 = vadd.f32 0.0, %v2554
      %v2556 = vpop.f32.mrb[0].mxu0
      %2557 = vmatprep.mubr.f32.mxu0 %v1445
      %2558 = vmatmul.mubr.f32.gmra.mrb[0].mxu0 %v806
      %v2559 = vpop.f32.mrb[0].mxu0
      %v2560 = vadd.f32 0.0, %v2559
      %v2561 = vpop.f32.mrb[0].mxu0
      %2562 = vmatprep.mubr.f32.mxu0 %v1448
      %2563 = vmatmul.mubr.f32.gmra.mrb[0].mxu0 %v808
      %v2564 = vpop.f32.mrb[0].mxu0
      %v2565 = vadd.f32 0.0, %v2564
      %v2566 = vpop.f32.mrb[0].mxu0
      %2567 = vmatprep.mubr.f32.mxu0 %v1451
      %2568 = vmatmul.mubr.f32.gmra.mrb[0].mxu0 %v810
      %v2569 = vpop.f32.mrb[0].mxu0
      %v2570 = vadd.f32 0.0, %v2569
      %v2571 = vpop.f32.mrb[0].mxu0
      %2572 = vmatprep.mubr.f32.mxu0 %v1454
      %2573 = vmatmul.mubr.f32.gmra.mrb[0].mxu0 %v812
      %v2574 = vpop.f32.mrb[0].mxu0
      %v2575 = vadd.f32 0.0, %v2574
      %v2576 = vpop.f32.mrb[0].mxu0
      %2577 = vmatprep.mubr.f32.mxu0 %v1457
      %2578 = vmatmul.mubr.f32.gmra.mrb[0].mxu0 %v814
      %v2579 = vpop.f32.mrb[0].mxu0
      %v2580 = vadd.f32 0.0, %v2579
      %v2581 = vpop.f32.mrb[0].mxu0
      %2582 = vmatprep.mubr.f32.mxu0 %v1460
      %2583 = vmatmul.mubr.f32.gmra.mrb[0].mxu0 %v816
      %v2584 = vpop.f32.mrb[0].mxu0
      %v2585 = vadd.f32 0.0, %v2584
      %v2586 = vpop.f32.mrb[0].mxu0
      %2587 = vmatprep.mubr.f32.mxu0 %v1463
      %2588 = vmatmul.mubr.f32.gmra.mrb[0].mxu0 %v818
      %v2589 = vpop.f32.mrb[0].mxu0
      %v2590 = vadd.f32 0.0, %v2589
      %v2591 = vpop.f32.mrb[0].mxu0
      %2592 = vmatprep.mubr.f32.mxu0 %v1466
      %2593 = vmatmul.mubr.f32.gmra.mrb[0].mxu0 %v820
      %v2594 = vpop.f32.mrb[0].mxu0
      %v2595 = vadd.f32 0.0, %v2594
      %v2596 = vpop.f32.mrb[0].mxu0
      %2597 = vmatprep.mubr.f32.mxu0 %v1469
      %2598 = vmatmul.mubr.f32.gmra.mrb[0].mxu0 %v822
      %v2599 = vpop.f32.mrb[0].mxu0
      %v2600 = vadd.f32 0.0, %v2599
      %v2601 = vpop.f32.mrb[0].mxu0
      %2602 = vmatprep.mubr.f32.mxu0 %v1472
      %2603 = vmatmul.mubr.f32.gmra.mrb[0].mxu0 %v824
      %v2604 = vpop.f32.mrb[0].mxu0
      %v2605 = vadd.f32 0.0, %v2604
      %v2606 = vpop.f32.mrb[0].mxu0
      %2607 = vmatprep.mubr.f32.mxu0 %v1475
      %2608 = vmatmul.mubr.f32.gmra.mrb[0].mxu0 %v826
      %v2609 = vpop.f32.mrb[0].mxu0
      %v2610 = vadd.f32 0.0, %v2609
      %v2611 = vpop.f32.mrb[0].mxu0
      %2612 = vmatprep.mubr.f32.mxu0 %v1478
      %2613 = vmatmul.mubr.f32.gmra.mrb[0].mxu0 %v828
      %v2614 = vpop.f32.mrb[0].mxu0
      %v2615 = vadd.f32 0.0, %v2614
      %v2616 = vpop.f32.mrb[0].mxu0
      %2617 = vmatprep.mubr.f32.mxu0 %v1481
      %2618 = vmatmul.mubr.f32.gmra.mrb[0].mxu0 %v830
      %v2619 = vpop.f32.mrb[0].mxu0
      %v2620 = vadd.f32 0.0, %v2619
      %v2621 = vpop.f32.mrb[0].mxu0
      %2622 = vmatprep.mubr.f32.mxu0 %v1484
      %2623 = vmatmul.mubr.f32.gmra.mrb[0].mxu0 %v832
      %v2624 = vpop.f32.mrb[0].mxu0
      %v2625 = vadd.f32 0.0, %v2624
      %v2626 = vpop.f32.mrb[0].mxu0
      %2627 = vmatprep.mubr.f32.mxu0 %v1487
      %2628 = vmatmul.mubr.f32.gmra.mrb[0].mxu0 %v834
      %v2629 = vpop.f32.mrb[0].mxu0
      %v2630 = vadd.f32 0.0, %v2629
      %v2631 = vpop.f32.mrb[0].mxu0
      %2632 = vmatprep.mubr.f32.mxu0 %v1490
      %2633 = vmatmul.mubr.f32.gmra.mrb[0].mxu0 %v836
      %v2634 = vpop.f32.mrb[0].mxu0
      %v2635 = vadd.f32 0.0, %v2634
      %v2636 = vpop.f32.mrb[0].mxu0
      %2637 = vmatprep.mubr.f32.mxu0 %v1493
      %2638 = vmatmul.mubr.f32.gmra.mrb[0].mxu0 %v838
      %v2639 = vpop.f32.mrb[0].mxu0
      %v2640 = vadd.f32 0.0, %v2639
      %v2641 = vpop.f32.mrb[0].mxu0
      %2642 = vmatprep.mubr.f32.mxu0 %v1496
      %2643 = vmatmul.mubr.f32.gmra.mrb[0].mxu0 %v840
      %v2644 = vpop.f32.mrb[0].mxu0
      %v2645 = vadd.f32 0.0, %v2644
      %v2646 = vpop.f32.mrb[0].mxu0
      %2647 = vmatprep.mubr.f32.mxu0 %v1499
      %2648 = vmatmul.mubr.f32.gmra.mrb[0].mxu0 %v842
      %v2649 = vpop.f32.mrb[0].mxu0
      %v2650 = vadd.f32 0.0, %v2649
      %v2651 = vpop.f32.mrb[0].mxu0
      %2652 = vmatprep.mubr.f32.mxu0 %v1502
      %2653 = vmatmul.mubr.f32.gmra.mrb[0].mxu0 %v844
      %v2654 = vpop.f32.mrb[0].mxu0
      %v2655 = vadd.f32 0.0, %v2654
      %v2656 = vpop.f32.mrb[0].mxu0
      %2657 = vmatprep.mubr.f32.mxu0 %v1505
      %2658 = vmatmul.mubr.f32.gmra.mrb[0].mxu0 %v846
      %v2659 = vpop.f32.mrb[0].mxu0
      %v2660 = vadd.f32 0.0, %v2659
      %v2661 = vpop.f32.mrb[0].mxu0
      %2662 = vmatprep.mubr.f32.mxu0 %v1508
      %2663 = vmatmul.mubr.f32.gmra.mrb[0].mxu0 %v848
      %v2664 = vpop.f32.mrb[0].mxu0
      %v2665 = vadd.f32 0.0, %v2664
      %v2666 = vpop.f32.mrb[0].mxu0
      %2667 = vmatprep.mubr.f32.mxu0 %v1511
      %2668 = vmatmul.mubr.f32.gmra.mrb[0].mxu0 %v850
      %v2669 = vpop.f32.mrb[0].mxu0
      %v2670 = vadd.f32 0.0, %v2669
      %v2671 = vpop.f32.mrb[0].mxu0
      %2672 = vmatprep.mubr.f32.mxu0 %v1514
      %2673 = vmatmul.mubr.f32.gmra.mrb[0].mxu0 %v852
      %v2674 = vpop.f32.mrb[0].mxu0
      %v2675 = vadd.f32 0.0, %v2674
      %v2676 = vpop.f32.mrb[0].mxu0
      %2677 = vmatprep.mubr.f32.mxu0 %v1517
      %2678 = vmatmul.mubr.f32.gmra.mrb[0].mxu0 %v854
      %v2679 = vpop.f32.mrb[0].mxu0
      %v2680 = vadd.f32 0.0, %v2679
      %v2681 = vpop.f32.mrb[0].mxu0
      %2682 = vmatprep.mubr.f32.mxu0 %v1520
      %2683 = vmatmul.mubr.f32.gmra.mrb[0].mxu0 %v856
      %v2684 = vpop.f32.mrb[0].mxu0
      %v2685 = vadd.f32 0.0, %v2684
      %v2686 = vpop.f32.mrb[0].mxu0
      %2687 = vmatprep.mubr.f32.mxu0 %v1523
      %2688 = vmatmul.mubr.f32.gmra.mrb[0].mxu0 %v858
      %v2689 = vpop.f32.mrb[0].mxu0
      %v2690 = vadd.f32 0.0, %v2689
      %v2691 = vpop.f32.mrb[0].mxu0
      %2692 = vmatprep.mubr.f32.mxu0 %v1526
      %2693 = vmatmul.mubr.f32.gmra.mrb[0].mxu0 %v860
      %v2694 = vpop.f32.mrb[0].mxu0
      %v2695 = vadd.f32 0.0, %v2694
      %v2696 = vpop.f32.mrb[0].mxu0
      %2697 = vmatprep.mubr.f32.mxu0 %v1529
      %2698 = vmatmul.mubr.f32.gmra.mrb[0].mxu0 %v862
      %v2699 = vpop.f32.mrb[0].mxu0
      %v2700 = vadd.f32 0.0, %v2699
      %v2701 = vpop.f32.mrb[0].mxu0
      %2702 = vmatprep.mubr.f32.mxu0 %v1532
      %2703 = vmatmul.mubr.f32.gmra.mrb[0].mxu0 %v864
      %v2704 = vpop.f32.mrb[0].mxu0
      %v2705 = vadd.f32 0.0, %v2704
      %v2706 = vpop.f32.mrb[0].mxu0
      %2707 = vmatprep.mubr.f32.mxu0 %v1535
      %2708 = vmatmul.mubr.f32.gmra.mrb[0].mxu0 %v866
      %v2709 = vpop.f32.mrb[0].mxu0
      %v2710 = vadd.f32 0.0, %v2709
      %v2711 = vpop.f32.mrb[0].mxu0
      %2712 = vmatprep.mubr.f32.mxu0 %v1538
      %2713 = vmatmul.mubr.f32.gmra.mrb[0].mxu0 %v868
      %v2714 = vpop.f32.mrb[0].mxu0
      %v2715 = vadd.f32 0.0, %v2714
      %v2716 = vpop.f32.mrb[0].mxu0
      %2717 = vmatprep.mubr.f32.mxu0 %v1541
      %2718 = vmatmul.mubr.f32.gmra.mrb[0].mxu0 %v870
      %v2719 = vpop.f32.mrb[0].mxu0
      %v2720 = vadd.f32 0.0, %v2719
      %v2721 = vpop.f32.mrb[0].mxu0
      %2722 = vmatprep.mubr.f32.mxu0 %v1544
      %2723 = vmatmul.mubr.f32.gmra.mrb[0].mxu0 %v872
      %v2724 = vpop.f32.mrb[0].mxu0
      %v2725 = vadd.f32 0.0, %v2724
      %v2726 = vpop.f32.mrb[0].mxu0
      %2727 = vmatprep.mubr.f32.mxu0 %v1547
      %2728 = vmatmul.mubr.f32.gmra.mrb[0].mxu0 %v874
      %v2729 = vpop.f32.mrb[0].mxu0
      %v2730 = vadd.f32 0.0, %v2729
      %v2731 = vpop.f32.mrb[0].mxu0
      %2732 = vmatprep.mubr.f32.mxu0 %v1550
      %2733 = vmatmul.mubr.f32.gmra.mrb[0].mxu0 %v876
      %v2734 = vpop.f32.mrb[0].mxu0
      %v2735 = vadd.f32 0.0, %v2734
      %v2736 = vpop.f32.mrb[0].mxu0
      %2737 = vmatprep.mubr.f32.mxu0 %v1553
      %2738 = vmatmul.mubr.f32.gmra.mrb[0].mxu0 %v878
      %v2739 = vpop.f32.mrb[0].mxu0
      %v2740 = vadd.f32 0.0, %v2739
      %v2741 = vpop.f32.mrb[0].mxu0
      %2742 = vmatprep.mubr.f32.mxu0 %v1556
      %2743 = vmatmul.mubr.f32.gmra.mrb[0].mxu0 %v880
      %v2744 = vpop.f32.mrb[0].mxu0
      %v2745 = vadd.f32 0.0, %v2744
      %v2746 = vpop.f32.mrb[0].mxu0
      %2747 = vdwg.mxu0
      %v2748 = vld [vmem:[%s2] sm:$0xff]
      %v2749 = vld [vmem:[%s2 + $0x8] sm:$0xff]
      %v2750 = vld [vmem:[%s2 + $0x10] sm:$0xff]
      %v2751 = vld [vmem:[%s2 + $0x18] sm:$0xff]
      %v2752 = vld [vmem:[%s2 + $0x20] sm:$0xff]
      %v2753 = vld [vmem:[%s2 + $0x28] sm:$0xff]
      %v2754 = vld [vmem:[%s2 + $0x30] sm:$0xff]
      %v2755 = vld [vmem:[%s2 + $0x38] sm:$0xff]
      %v2756 = vld [vmem:[%s2 + $0x40] sm:$0xff]
      %v2757 = vld [vmem:[%s2 + $0x48] sm:$0xff]
      %v2758 = vld [vmem:[%s2 + $0x50] sm:$0xff]
      %v2759 = vld [vmem:[%s2 + $0x58] sm:$0xff]
      %v2760 = vld [vmem:[%s2 + $0x60] sm:$0xff]
      %v2761 = vld [vmem:[%s2 + $0x68] sm:$0xff]
      %v2762 = vld [vmem:[%s2 + $0x70] sm:$0xff]
      %v2763 = vld [vmem:[%s2 + $0x78] sm:$0xff]
      %v2764 = vld [vmem:[%s2 + $0x80] sm:$0xff]
      %v2765 = vld [vmem:[%s2 + $0x88] sm:$0xff]
      %v2766 = vld [vmem:[%s2 + $0x90] sm:$0xff]
      %v2767 = vld [vmem:[%s2 + $0x98] sm:$0xff]
      %v2768 = vld [vmem:[%s2 + $0xa0] sm:$0xff]
      %v2769 = vld [vmem:[%s2 + $0xa8] sm:$0xff]
      %v2770 = vld [vmem:[%s2 + $0xb0] sm:$0xff]
      %v2771 = vld [vmem:[%s2 + $0xb8] sm:$0xff]
      %v2772 = vld [vmem:[%s2 + $0xc0] sm:$0xff]
      %v2773 = vld [vmem:[%s3] sm:$0xff]
      %v2774 = vld [vmem:[%s3 + $0x8] sm:$0xff]
      %v2775 = vld [vmem:[%s3 + $0x10] sm:$0xff]
      %v2776 = vld [vmem:[%s3 + $0x18] sm:$0xff]
      %v2777 = vld [vmem:[%s3 + $0x20] sm:$0xff]
      %v2778 = vld [vmem:[%s3 + $0x28] sm:$0xff]
      %v2779 = vld [vmem:[%s3 + $0x30] sm:$0xff]
      %v2780 = vld [vmem:[%s3 + $0x38] sm:$0xff]
      %v2781 = vld [vmem:[%s3 + $0x40] sm:$0xff]
      %v2782 = vld [vmem:[%s4] sm:$0xff]
      %vm2783 = vcmask 64512
      %v2785 = vsel %vm2783, %v2748, 0
      %v2788 = vsel %vm2783, %v2749, 0
      %v2791 = vsel %vm2783, %v2750, 0
      %v2794 = vsel %vm2783, %v2751, 0
      %v2797 = vsel %vm2783, %v2752, 0
      %v2800 = vsel %vm2783, %v2753, 0
      %v2803 = vsel %vm2783, %v2754, 0
      %v2806 = vsel %vm2783, %v2755, 0
      %v2809 = vsel %vm2783, %v2756, 0
      %v2812 = vsel %vm2783, %v2757, 0
      %v2815 = vsel %vm2783, %v2758, 0
      %v2818 = vsel %vm2783, %v2759, 0
      %v2821 = vsel %vm2783, %v2760, 0
      %v2824 = vsel %vm2783, %v2761, 0
      %v2827 = vsel %vm2783, %v2762, 0
      %v2830 = vsel %vm2783, %v2763, 0
      %v2833 = vsel %vm2783, %v2764, 0
      %v2836 = vsel %vm2783, %v2765, 0
      %v2839 = vsel %vm2783, %v2766, 0
      %v2842 = vsel %vm2783, %v2767, 0
      %v2845 = vsel %vm2783, %v2768, 0
      %v2848 = vsel %vm2783, %v2769, 0
      %v2851 = vsel %vm2783, %v2770, 0
      %v2854 = vsel %vm2783, %v2771, 0
      %v2857 = vsel %vm2783, %v2772, 0
      %2859 = vmatprep.subr.mxu0 0.0
      %2860 = vmatpush1.msra.mxu0 %v2782
      %2861 = vmatprep.subr.mxu0 0.0
      %2862 = vmatpush1.msra.mxu0 0.0
      %2863 = vmatprep.subr.mxu0 0.0
      %2864 = vmatpush1.msra.mxu0 0.0
      %2865 = vmatprep.subr.mxu0 0.0
      %2866 = vmatpush1.msra.mxu0 0.0
      %2867 = vmatprep.subr.mxu0 0.0
      %2868 = vmatpush1.msra.mxu0 0.0
      %2869 = vmatprep.subr.mxu0 0.0
      %2870 = vmatpush1.msra.mxu0 0.0
      %2871 = vmatprep.subr.mxu0 0.0
      %2872 = vmatpush1.msra.mxu0 0.0
      %2873 = vmatprep.subr.mxu0 0.0
      %2874 = vmatpush1.msra.mxu0 0.0
      %2875 = vmatprep.subr.mxu0 0.0
      %2876 = vmatpush1.msra.mxu0 0.0
      %2877 = vmatprep.subr.mxu0 0.0
      %2878 = vmatpush1.msra.mxu0 0.0
      %2879 = vmatprep.subr.mxu0 0.0
      %2880 = vmatpush1.msra.mxu0 0.0
      %2881 = vmatprep.subr.mxu0 0.0
      %2882 = vmatpush1.msra.mxu0 0.0
      %2883 = vmatprep.subr.mxu0 0.0
      %2884 = vmatpush1.msra.mxu0 0.0
      %2885 = vmatprep.subr.mxu0 0.0
      %2886 = vmatpush1.msra.mxu0 0.0
      %2887 = vmatprep.subr.mxu0 0.0
      %2888 = vmatpush1.msra.mxu0 0.0
      %2889 = vmatprep.subr.mxu0 0.0
      %2890 = vmatpush1.msra.mxu0 0.0
      %2891 = vmatprep.subr.mxu0 0.0
      %2892 = vmatpush1.msra.mxu0 0.0
      %2893 = vmatprep.subr.mxu0 0.0
      %2894 = vmatpush1.msra.mxu0 0.0
      %2895 = vmatprep.subr.mxu0 0.0
      %2896 = vmatpush1.msra.mxu0 0.0
      %2897 = vmatprep.subr.mxu0 0.0
      %2898 = vmatpush1.msra.mxu0 0.0
      %2899 = vmatprep.subr.mxu0 0.0
      %2900 = vmatpush1.msra.mxu0 0.0
      %2901 = vmatprep.subr.mxu0 0.0
      %2902 = vmatpush1.msra.mxu0 0.0
      %2903 = vmatprep.subr.mxu0 0.0
      %2904 = vmatpush1.msra.mxu0 0.0
      %2905 = vmatprep.subr.mxu0 0.0
      %2906 = vmatpush1.msra.mxu0 0.0
      %2907 = vmatprep.subr.mxu0 0.0
      %2908 = vmatpush1.msra.mxu0 0.0
      %2909 = vmatprep.subr.mxu0 0.0
      %2910 = vmatpush1.msra.mxu0 0.0
      %2911 = vmatprep.subr.mxu0 0.0
      %2912 = vmatpush1.msra.mxu0 0.0
      %2913 = vmatprep.subr.mxu0 0.0
      %2914 = vmatpush1.msra.mxu0 0.0
      %2915 = vmatprep.subr.mxu0 0.0
      %2916 = vmatpush1.msra.mxu0 0.0
      %2917 = vmatprep.subr.mxu0 0.0
      %2918 = vmatpush1.msra.mxu0 0.0
      %2919 = vmatprep.subr.mxu0 0.0
      %2920 = vmatpush1.msra.mxu0 0.0
      %2921 = vmatprep.subr.mxu0 0.0
      %2922 = vmatpush1.msra.mxu0 0.0
      %2923 = vmatprep.mubr.f32.mxu0 0.0
      %2924 = vmatmul.mubr.f32.gmra.mrb[0].mxu0 %v2785
      %v2925 = vpop.f32.mrb[0].mxu0
      %v2926 = vadd.f32 0.0, %v2925
      %v2927 = vpop.f32.mrb[0].mxu0
      %2928 = vmatprep.mubr.f32.mxu0 0.0
      %2929 = vmatmul.mubr.f32.gmra.mrb[0].mxu0 %v2788
      %v2930 = vpop.f32.mrb[0].mxu0
      %v2931 = vadd.f32 0.0, %v2930
      %v2932 = vpop.f32.mrb[0].mxu0
      %2933 = vmatprep.mubr.f32.mxu0 0.0
      %2934 = vmatmul.mubr.f32.gmra.mrb[0].mxu0 %v2791
      %v2935 = vpop.f32.mrb[0].mxu0
      %v2936 = vadd.f32 0.0, %v2935
      %v2937 = vpop.f32.mrb[0].mxu0
      %2938 = vmatprep.mubr.f32.mxu0 0.0
      %2939 = vmatmul.mubr.f32.gmra.mrb[0].mxu0 %v2794
      %v2940 = vpop.f32.mrb[0].mxu0
      %v2941 = vadd.f32 0.0, %v2940
      %v2942 = vpop.f32.mrb[0].mxu0
      %2943 = vmatprep.mubr.f32.mxu0 0.0
      %2944 = vmatmul.mubr.f32.gmra.mrb[0].mxu0 %v2797
      %v2945 = vpop.f32.mrb[0].mxu0
      %v2946 = vadd.f32 0.0, %v2945
      %v2947 = vpop.f32.mrb[0].mxu0
      %2948 = vmatprep.mubr.f32.mxu0 0.0
      %2949 = vmatmul.mubr.f32.gmra.mrb[0].mxu0 %v2800
      %v2950 = vpop.f32.mrb[0].mxu0
      %v2951 = vadd.f32 0.0, %v2950
      %v2952 = vpop.f32.mrb[0].mxu0
      %2953 = vmatprep.mubr.f32.mxu0 0.0
      %2954 = vmatmul.mubr.f32.gmra.mrb[0].mxu0 %v2803
      %v2955 = vpop.f32.mrb[0].mxu0
      %v2956 = vadd.f32 0.0, %v2955
      %v2957 = vpop.f32.mrb[0].mxu0
      %2958 = vmatprep.mubr.f32.mxu0 0.0
      %2959 = vmatmul.mubr.f32.gmra.mrb[0].mxu0 %v2806
      %v2960 = vpop.f32.mrb[0].mxu0
      %v2961 = vadd.f32 0.0, %v2960
      %v2962 = vpop.f32.mrb[0].mxu0
      %2963 = vmatprep.mubr.f32.mxu0 0.0
      %2964 = vmatmul.mubr.f32.gmra.mrb[0].mxu0 %v2809
      %v2965 = vpop.f32.mrb[0].mxu0
      %v2966 = vadd.f32 0.0, %v2965
      %v2967 = vpop.f32.mrb[0].mxu0
      %2968 = vmatprep.mubr.f32.mxu0 0.0
      %2969 = vmatmul.mubr.f32.gmra.mrb[0].mxu0 %v2812
      %v2970 = vpop.f32.mrb[0].mxu0
      %v2971 = vadd.f32 0.0, %v2970
      %v2972 = vpop.f32.mrb[0].mxu0
      %2973 = vmatprep.mubr.f32.mxu0 0.0
      %2974 = vmatmul.mubr.f32.gmra.mrb[0].mxu0 %v2815
      %v2975 = vpop.f32.mrb[0].mxu0
      %v2976 = vadd.f32 0.0, %v2975
      %v2977 = vpop.f32.mrb[0].mxu0
      %2978 = vmatprep.mubr.f32.mxu0 0.0
      %2979 = vmatmul.mubr.f32.gmra.mrb[0].mxu0 %v2818
      %v2980 = vpop.f32.mrb[0].mxu0
      %v2981 = vadd.f32 0.0, %v2980
      %v2982 = vpop.f32.mrb[0].mxu0
      %2983 = vmatprep.mubr.f32.mxu0 0.0
      %2984 = vmatmul.mubr.f32.gmra.mrb[0].mxu0 %v2821
      %v2985 = vpop.f32.mrb[0].mxu0
      %v2986 = vadd.f32 0.0, %v2985
      %v2987 = vpop.f32.mrb[0].mxu0
      %2988 = vmatprep.mubr.f32.mxu0 0.0
      %2989 = vmatmul.mubr.f32.gmra.mrb[0].mxu0 %v2824
      %v2990 = vpop.f32.mrb[0].mxu0
      %v2991 = vadd.f32 0.0, %v2990
      %v2992 = vpop.f32.mrb[0].mxu0
      %2993 = vmatprep.mubr.f32.mxu0 0.0
      %2994 = vmatmul.mubr.f32.gmra.mrb[0].mxu0 %v2827
      %v2995 = vpop.f32.mrb[0].mxu0
      %v2996 = vadd.f32 0.0, %v2995
      %v2997 = vpop.f32.mrb[0].mxu0
      %2998 = vmatprep.mubr.f32.mxu0 0.0
      %2999 = vmatmul.mubr.f32.gmra.mrb[0].mxu0 %v2830
      %v3000 = vpop.f32.mrb[0].mxu0
      %v3001 = vadd.f32 0.0, %v3000
      %v3002 = vpop.f32.mrb[0].mxu0
      %3003 = vmatprep.mubr.f32.mxu0 0.0
      %3004 = vmatmul.mubr.f32.gmra.mrb[0].mxu0 %v2833
      %v3005 = vpop.f32.mrb[0].mxu0
      %v3006 = vadd.f32 0.0, %v3005
      %v3007 = vpop.f32.mrb[0].mxu0
      %3008 = vmatprep.mubr.f32.mxu0 0.0
      %3009 = vmatmul.mubr.f32.gmra.mrb[0].mxu0 %v2836
      %v3010 = vpop.f32.mrb[0].mxu0
      %v3011 = vadd.f32 0.0, %v3010
      %v3012 = vpop.f32.mrb[0].mxu0
      %3013 = vmatprep.mubr.f32.mxu0 0.0
      %3014 = vmatmul.mubr.f32.gmra.mrb[0].mxu0 %v2839
      %v3015 = vpop.f32.mrb[0].mxu0
      %v3016 = vadd.f32 0.0, %v3015
      %v3017 = vpop.f32.mrb[0].mxu0
      %3018 = vmatprep.mubr.f32.mxu0 0.0
      %3019 = vmatmul.mubr.f32.gmra.mrb[0].mxu0 %v2842
      %v3020 = vpop.f32.mrb[0].mxu0
      %v3021 = vadd.f32 0.0, %v3020
      %v3022 = vpop.f32.mrb[0].mxu0
      %3023 = vmatprep.mubr.f32.mxu0 0.0
      %3024 = vmatmul.mubr.f32.gmra.mrb[0].mxu0 %v2845
      %v3025 = vpop.f32.mrb[0].mxu0
      %v3026 = vadd.f32 0.0, %v3025
      %v3027 = vpop.f32.mrb[0].mxu0
      %3028 = vmatprep.mubr.f32.mxu0 0.0
      %3029 = vmatmul.mubr.f32.gmra.mrb[0].mxu0 %v2848
      %v3030 = vpop.f32.mrb[0].mxu0
      %v3031 = vadd.f32 0.0, %v3030
      %v3032 = vpop.f32.mrb[0].mxu0
      %3033 = vmatprep.mubr.f32.mxu0 0.0
      %3034 = vmatmul.mubr.f32.gmra.mrb[0].mxu0 %v2851
      %v3035 = vpop.f32.mrb[0].mxu0
      %v3036 = vadd.f32 0.0, %v3035
      %v3037 = vpop.f32.mrb[0].mxu0
      %3038 = vmatprep.mubr.f32.mxu0 0.0
      %3039 = vmatmul.mubr.f32.gmra.mrb[0].mxu0 %v2854
      %v3040 = vpop.f32.mrb[0].mxu0
      %v3041 = vadd.f32 0.0, %v3040
      %v3042 = vpop.f32.mrb[0].mxu0
      %3043 = vmatprep.mubr.f32.mxu0 0.0
      %3044 = vmatmul.mubr.f32.gmra.mrb[0].mxu0 %v2857
      %v3045 = vpop.f32.mrb[0].mxu0
      %v3046 = vadd.f32 0.0, %v3045
      %v3047 = vpop.f32.mrb[0].mxu0
      %3048 = vdwg.mxu0
      %v3049 = vadd.f32 %v2125, %v2926
      %v3050 = vadd.f32 %v2130, %v2931
      %v3051 = vadd.f32 %v2135, %v2936
      %v3052 = vadd.f32 %v2140, %v2941
      %v3053 = vadd.f32 %v2145, %v2946
      %v3054 = vadd.f32 %v2150, %v2951
      %v3055 = vadd.f32 %v2155, %v2956
      %v3056 = vadd.f32 %v2160, %v2961
      %v3057 = vadd.f32 %v2165, %v2966
      %v3058 = vadd.f32 %v2170, %v2971
      %v3059 = vadd.f32 %v2175, %v2976
      %v3060 = vadd.f32 %v2180, %v2981
      %v3061 = vadd.f32 %v2185, %v2986
      %v3062 = vadd.f32 %v2190, %v2991
      %v3063 = vadd.f32 %v2195, %v2996
      %v3064 = vadd.f32 %v2200, %v3001
      %v3065 = vadd.f32 %v2205, %v3006
      %v3066 = vadd.f32 %v2210, %v3011
      %v3067 = vadd.f32 %v2215, %v3016
      %v3068 = vadd.f32 %v2220, %v3021
      %v3069 = vadd.f32 %v2225, %v3026
      %v3070 = vadd.f32 %v2230, %v3031
      %v3071 = vadd.f32 %v2235, %v3036
      %v3072 = vadd.f32 %v2240, %v3041
      %v3073 = vadd.f32 %v2245, %v3046
      %3074 = vmatprep.subr.mxu0 0.0
      %3075 = vmatpush1.msra.mxu0 %v2773
      %3076 = vmatprep.subr.mxu0 0.0
      %3077 = vmatpush1.msra.mxu0 0.0
      %3078 = vmatprep.subr.mxu0 0.0
      %3079 = vmatpush1.msra.mxu0 0.0
      %3080 = vmatprep.subr.mxu0 0.0
      %3081 = vmatpush1.msra.mxu0 0.0
      %3082 = vmatprep.subr.mxu0 0.0
      %3083 = vmatpush1.msra.mxu0 0.0
      %3084 = vmatprep.subr.mxu0 0.0
      %3085 = vmatpush1.msra.mxu0 0.0
      %3086 = vmatprep.subr.mxu0 0.0
      %3087 = vmatpush1.msra.mxu0 0.0
      %3088 = vmatprep.subr.mxu0 0.0
      %3089 = vmatpush1.msra.mxu0 0.0
      %3090 = vmatprep.subr.mxu0 0.0
      %3091 = vmatpush1.msra.mxu0 0.0
      %3092 = vmatprep.subr.mxu0 0.0
      %3093 = vmatpush1.msra.mxu0 0.0
      %3094 = vmatprep.subr.mxu0 0.0
      %3095 = vmatpush1.msra.mxu0 0.0
      %3096 = vmatprep.subr.mxu0 0.0
      %3097 = vmatpush1.msra.mxu0 0.0
      %3098 = vmatprep.subr.mxu0 0.0
      %3099 = vmatpush1.msra.mxu0 0.0
      %3100 = vmatprep.subr.mxu0 0.0
      %3101 = vmatpush1.msra.mxu0 0.0
      %3102 = vmatprep.subr.mxu0 0.0
      %3103 = vmatpush1.msra.mxu0 0.0
      %3104 = vmatprep.subr.mxu0 0.0
      %3105 = vmatpush1.msra.mxu0 0.0
      %3106 = vmatprep.subr.mxu0 0.0
      %3107 = vmatpush1.msra.mxu0 0.0
      %3108 = vmatprep.subr.mxu0 0.0
      %3109 = vmatpush1.msra.mxu0 0.0
      %3110 = vmatprep.subr.mxu0 0.0
      %3111 = vmatpush1.msra.mxu0 0.0
      %3112 = vmatprep.subr.mxu0 0.0
      %3113 = vmatpush1.msra.mxu0 0.0
      %3114 = vmatprep.subr.mxu0 0.0
      %3115 = vmatpush1.msra.mxu0 0.0
      %3116 = vmatprep.subr.mxu0 0.0
      %3117 = vmatpush1.msra.mxu0 0.0
      %3118 = vmatprep.subr.mxu0 0.0
      %3119 = vmatpush1.msra.mxu0 0.0
      %3120 = vmatprep.subr.mxu0 0.0
      %3121 = vmatpush1.msra.mxu0 0.0
      %3122 = vmatprep.subr.mxu0 0.0
      %3123 = vmatpush1.msra.mxu0 0.0
      %3124 = vmatprep.subr.mxu0 0.0
      %3125 = vmatpush1.msra.mxu0 0.0
      %3126 = vmatprep.subr.mxu0 0.0
      %3127 = vmatpush1.msra.mxu0 0.0
      %3128 = vmatprep.subr.mxu0 0.0
      %3129 = vmatpush1.msra.mxu0 0.0
      %3130 = vmatprep.subr.mxu0 0.0
      %3131 = vmatpush1.msra.mxu0 0.0
      %3132 = vmatprep.subr.mxu0 0.0
      %3133 = vmatpush1.msra.mxu0 0.0
      %3134 = vmatprep.subr.mxu0 0.0
      %3135 = vmatpush1.msra.mxu0 0.0
      %3136 = vmatprep.subr.mxu0 0.0
      %3137 = vmatpush1.msra.mxu0 0.0
      %3138 = vmatprep.mubr.f32.mxu0 0.0
      %3139 = vmatmul.mubr.f32.gmra.mrb[0].mxu0 %v2785
      %v3140 = vpop.f32.mrb[0].mxu0
      %v3141 = vadd.f32 0.0, %v3140
      %v3142 = vpop.f32.mrb[0].mxu0
      %3143 = vmatprep.mubr.f32.mxu0 0.0
      %3144 = vmatmul.mubr.f32.gmra.mrb[0].mxu0 %v2788
      %v3145 = vpop.f32.mrb[0].mxu0
      %v3146 = vadd.f32 0.0, %v3145
      %v3147 = vpop.f32.mrb[0].mxu0
      %3148 = vmatprep.mubr.f32.mxu0 0.0
      %3149 = vmatmul.mubr.f32.gmra.mrb[0].mxu0 %v2791
      %v3150 = vpop.f32.mrb[0].mxu0
      %v3151 = vadd.f32 0.0, %v3150
      %v3152 = vpop.f32.mrb[0].mxu0
      %3153 = vmatprep.mubr.f32.mxu0 0.0
      %3154 = vmatmul.mubr.f32.gmra.mrb[0].mxu0 %v2794
      %v3155 = vpop.f32.mrb[0].mxu0
      %v3156 = vadd.f32 0.0, %v3155
      %v3157 = vpop.f32.mrb[0].mxu0
      %3158 = vmatprep.mubr.f32.mxu0 0.0
      %3159 = vmatmul.mubr.f32.gmra.mrb[0].mxu0 %v2797
      %v3160 = vpop.f32.mrb[0].mxu0
      %v3161 = vadd.f32 0.0, %v3160
      %v3162 = vpop.f32.mrb[0].mxu0
      %3163 = vmatprep.mubr.f32.mxu0 0.0
      %3164 = vmatmul.mubr.f32.gmra.mrb[0].mxu0 %v2800
      %v3165 = vpop.f32.mrb[0].mxu0
      %v3166 = vadd.f32 0.0, %v3165
      %v3167 = vpop.f32.mrb[0].mxu0
      %3168 = vmatprep.mubr.f32.mxu0 0.0
      %3169 = vmatmul.mubr.f32.gmra.mrb[0].mxu0 %v2803
      %v3170 = vpop.f32.mrb[0].mxu0
      %v3171 = vadd.f32 0.0, %v3170
      %v3172 = vpop.f32.mrb[0].mxu0
      %3173 = vmatprep.mubr.f32.mxu0 0.0
      %3174 = vmatmul.mubr.f32.gmra.mrb[0].mxu0 %v2806
      %v3175 = vpop.f32.mrb[0].mxu0
      %v3176 = vadd.f32 0.0, %v3175
      %v3177 = vpop.f32.mrb[0].mxu0
      %3178 = vmatprep.mubr.f32.mxu0 0.0
      %3179 = vmatmul.mubr.f32.gmra.mrb[0].mxu0 %v2809
      %v3180 = vpop.f32.mrb[0].mxu0
      %v3181 = vadd.f32 0.0, %v3180
      %v3182 = vpop.f32.mrb[0].mxu0
      %3183 = vmatprep.mubr.f32.mxu0 0.0
      %3184 = vmatmul.mubr.f32.gmra.mrb[0].mxu0 %v2812
      %v3185 = vpop.f32.mrb[0].mxu0
      %v3186 = vadd.f32 0.0, %v3185
      %v3187 = vpop.f32.mrb[0].mxu0
      %3188 = vmatprep.mubr.f32.mxu0 0.0
      %3189 = vmatmul.mubr.f32.gmra.mrb[0].mxu0 %v2815
      %v3190 = vpop.f32.mrb[0].mxu0
      %v3191 = vadd.f32 0.0, %v3190
      %v3192 = vpop.f32.mrb[0].mxu0
      %3193 = vmatprep.mubr.f32.mxu0 0.0
      %3194 = vmatmul.mubr.f32.gmra.mrb[0].mxu0 %v2818
      %v3195 = vpop.f32.mrb[0].mxu0
      %v3196 = vadd.f32 0.0, %v3195
      %v3197 = vpop.f32.mrb[0].mxu0
      %3198 = vmatprep.mubr.f32.mxu0 0.0
      %3199 = vmatmul.mubr.f32.gmra.mrb[0].mxu0 %v2821
      %v3200 = vpop.f32.mrb[0].mxu0
      %v3201 = vadd.f32 0.0, %v3200
      %v3202 = vpop.f32.mrb[0].mxu0
      %3203 = vmatprep.mubr.f32.mxu0 0.0
      %3204 = vmatmul.mubr.f32.gmra.mrb[0].mxu0 %v2824
      %v3205 = vpop.f32.mrb[0].mxu0
      %v3206 = vadd.f32 0.0, %v3205
      %v3207 = vpop.f32.mrb[0].mxu0
      %3208 = vmatprep.mubr.f32.mxu0 0.0
      %3209 = vmatmul.mubr.f32.gmra.mrb[0].mxu0 %v2827
      %v3210 = vpop.f32.mrb[0].mxu0
      %v3211 = vadd.f32 0.0, %v3210
      %v3212 = vpop.f32.mrb[0].mxu0
      %3213 = vmatprep.mubr.f32.mxu0 0.0
      %3214 = vmatmul.mubr.f32.gmra.mrb[0].mxu0 %v2830
      %v3215 = vpop.f32.mrb[0].mxu0
      %v3216 = vadd.f32 0.0, %v3215
      %v3217 = vpop.f32.mrb[0].mxu0
      %3218 = vmatprep.mubr.f32.mxu0 0.0
      %3219 = vmatmul.mubr.f32.gmra.mrb[0].mxu0 %v2833
      %v3220 = vpop.f32.mrb[0].mxu0
      %v3221 = vadd.f32 0.0, %v3220
      %v3222 = vpop.f32.mrb[0].mxu0
      %3223 = vmatprep.mubr.f32.mxu0 0.0
      %3224 = vmatmul.mubr.f32.gmra.mrb[0].mxu0 %v2836
      %v3225 = vpop.f32.mrb[0].mxu0
      %v3226 = vadd.f32 0.0, %v3225
      %v3227 = vpop.f32.mrb[0].mxu0
      %3228 = vmatprep.mubr.f32.mxu0 0.0
      %3229 = vmatmul.mubr.f32.gmra.mrb[0].mxu0 %v2839
      %v3230 = vpop.f32.mrb[0].mxu0
      %v3231 = vadd.f32 0.0, %v3230
      %v3232 = vpop.f32.mrb[0].mxu0
      %3233 = vmatprep.mubr.f32.mxu0 0.0
      %3234 = vmatmul.mubr.f32.gmra.mrb[0].mxu0 %v2842
      %v3235 = vpop.f32.mrb[0].mxu0
      %v3236 = vadd.f32 0.0, %v3235
      %v3237 = vpop.f32.mrb[0].mxu0
      %3238 = vmatprep.mubr.f32.mxu0 0.0
      %3239 = vmatmul.mubr.f32.gmra.mrb[0].mxu0 %v2845
      %v3240 = vpop.f32.mrb[0].mxu0
      %v3241 = vadd.f32 0.0, %v3240
      %v3242 = vpop.f32.mrb[0].mxu0
      %3243 = vmatprep.mubr.f32.mxu0 0.0
      %3244 = vmatmul.mubr.f32.gmra.mrb[0].mxu0 %v2848
      %v3245 = vpop.f32.mrb[0].mxu0
      %v3246 = vadd.f32 0.0, %v3245
      %v3247 = vpop.f32.mrb[0].mxu0
      %3248 = vmatprep.mubr.f32.mxu0 0.0
      %3249 = vmatmul.mubr.f32.gmra.mrb[0].mxu0 %v2851
      %v3250 = vpop.f32.mrb[0].mxu0
      %v3251 = vadd.f32 0.0, %v3250
      %v3252 = vpop.f32.mrb[0].mxu0
      %3253 = vmatprep.mubr.f32.mxu0 0.0
      %3254 = vmatmul.mubr.f32.gmra.mrb[0].mxu0 %v2854
      %v3255 = vpop.f32.mrb[0].mxu0
      %v3256 = vadd.f32 0.0, %v3255
      %v3257 = vpop.f32.mrb[0].mxu0
      %3258 = vmatprep.mubr.f32.mxu0 0.0
      %3259 = vmatmul.mubr.f32.gmra.mrb[0].mxu0 %v2857
      %v3260 = vpop.f32.mrb[0].mxu0
      %v3261 = vadd.f32 0.0, %v3260
      %v3262 = vpop.f32.mrb[0].mxu0
      %3263 = vdwg.mxu0
      %v3264 = vmul.f32 %v1625, %v3141
      %v3265 = vmul.f32 %v1630, %v3146
      %v3266 = vmul.f32 %v1635, %v3151
      %v3267 = vmul.f32 %v1640, %v3156
      %v3268 = vmul.f32 %v1645, %v3161
      %v3269 = vmul.f32 %v1650, %v3166
      %v3270 = vmul.f32 %v1655, %v3171
      %v3271 = vmul.f32 %v1660, %v3176
      %v3272 = vmul.f32 %v1665, %v3181
      %v3273 = vmul.f32 %v1670, %v3186
      %v3274 = vmul.f32 %v1675, %v3191
      %v3275 = vmul.f32 %v1680, %v3196
      %v3276 = vmul.f32 %v1685, %v3201
      %v3277 = vmul.f32 %v1690, %v3206
      %v3278 = vmul.f32 %v1695, %v3211
      %v3279 = vmul.f32 %v1700, %v3216
      %v3280 = vmul.f32 %v1705, %v3221
      %v3281 = vmul.f32 %v1710, %v3226
      %v3282 = vmul.f32 %v1715, %v3231
      %v3283 = vmul.f32 %v1720, %v3236
      %v3284 = vmul.f32 %v1725, %v3241
      %v3285 = vmul.f32 %v1730, %v3246
      %v3286 = vmul.f32 %v1735, %v3251
      %v3287 = vmul.f32 %v1740, %v3256
      %v3288 = vmul.f32 %v1745, %v3261
      %v3289 = vadd.f32 %v3049, %v3264
      %v3290 = vadd.f32 %v3050, %v3265
      %v3291 = vadd.f32 %v3051, %v3266
      %v3292 = vadd.f32 %v3052, %v3267
      %v3293 = vadd.f32 %v3053, %v3268
      %v3294 = vadd.f32 %v3054, %v3269
      %v3295 = vadd.f32 %v3055, %v3270
      %v3296 = vadd.f32 %v3056, %v3271
      %v3297 = vadd.f32 %v3057, %v3272
      %v3298 = vadd.f32 %v3058, %v3273
      %v3299 = vadd.f32 %v3059, %v3274
      %v3300 = vadd.f32 %v3060, %v3275
      %v3301 = vadd.f32 %v3061, %v3276
      %v3302 = vadd.f32 %v3062, %v3277
      %v3303 = vadd.f32 %v3063, %v3278
      %v3304 = vadd.f32 %v3064, %v3279
      %v3305 = vadd.f32 %v3065, %v3280
      %v3306 = vadd.f32 %v3066, %v3281
      %v3307 = vadd.f32 %v3067, %v3282
      %v3308 = vadd.f32 %v3068, %v3283
      %v3309 = vadd.f32 %v3069, %v3284
      %v3310 = vadd.f32 %v3070, %v3285
      %v3311 = vadd.f32 %v3071, %v3286
      %v3312 = vadd.f32 %v3072, %v3287
      %v3313 = vadd.f32 %v3073, %v3288
      %3314 = vmatprep.subr.mxu0 0.0
      %3315 = vmatpush1.msra.mxu0 %v2774
      %3316 = vmatprep.subr.mxu0 0.0
      %3317 = vmatpush1.msra.mxu0 0.0
      %3318 = vmatprep.subr.mxu0 0.0
      %3319 = vmatpush1.msra.mxu0 0.0
      %3320 = vmatprep.subr.mxu0 0.0
      %3321 = vmatpush1.msra.mxu0 0.0
      %3322 = vmatprep.subr.mxu0 0.0
      %3323 = vmatpush1.msra.mxu0 0.0
      %3324 = vmatprep.subr.mxu0 0.0
      %3325 = vmatpush1.msra.mxu0 0.0
      %3326 = vmatprep.subr.mxu0 0.0
      %3327 = vmatpush1.msra.mxu0 0.0
      %3328 = vmatprep.subr.mxu0 0.0
      %3329 = vmatpush1.msra.mxu0 0.0
      %3330 = vmatprep.subr.mxu0 0.0
      %3331 = vmatpush1.msra.mxu0 0.0
      %3332 = vmatprep.subr.mxu0 0.0
      %3333 = vmatpush1.msra.mxu0 0.0
      %3334 = vmatprep.subr.mxu0 0.0
      %3335 = vmatpush1.msra.mxu0 0.0
      %3336 = vmatprep.subr.mxu0 0.0
      %3337 = vmatpush1.msra.mxu0 0.0
      %3338 = vmatprep.subr.mxu0 0.0
      %3339 = vmatpush1.msra.mxu0 0.0
      %3340 = vmatprep.subr.mxu0 0.0
      %3341 = vmatpush1.msra.mxu0 0.0
      %3342 = vmatprep.subr.mxu0 0.0
      %3343 = vmatpush1.msra.mxu0 0.0
      %3344 = vmatprep.subr.mxu0 0.0
      %3345 = vmatpush1.msra.mxu0 0.0
      %3346 = vmatprep.subr.mxu0 0.0
      %3347 = vmatpush1.msra.mxu0 0.0
      %3348 = vmatprep.subr.mxu0 0.0
      %3349 = vmatpush1.msra.mxu0 0.0
      %3350 = vmatprep.subr.mxu0 0.0
      %3351 = vmatpush1.msra.mxu0 0.0
      %3352 = vmatprep.subr.mxu0 0.0
      %3353 = vmatpush1.msra.mxu0 0.0
      %3354 = vmatprep.subr.mxu0 0.0
      %3355 = vmatpush1.msra.mxu0 0.0
      %3356 = vmatprep.subr.mxu0 0.0
      %3357 = vmatpush1.msra.mxu0 0.0
      %3358 = vmatprep.subr.mxu0 0.0
      %3359 = vmatpush1.msra.mxu0 0.0
      %3360 = vmatprep.subr.mxu0 0.0
      %3361 = vmatpush1.msra.mxu0 0.0
      %3362 = vmatprep.subr.mxu0 0.0
      %3363 = vmatpush1.msra.mxu0 0.0
      %3364 = vmatprep.subr.mxu0 0.0
      %3365 = vmatpush1.msra.mxu0 0.0
      %3366 = vmatprep.subr.mxu0 0.0
      %3367 = vmatpush1.msra.mxu0 0.0
      %3368 = vmatprep.subr.mxu0 0.0
      %3369 = vmatpush1.msra.mxu0 0.0
      %3370 = vmatprep.subr.mxu0 0.0
      %3371 = vmatpush1.msra.mxu0 0.0
      %3372 = vmatprep.subr.mxu0 0.0
      %3373 = vmatpush1.msra.mxu0 0.0
      %3374 = vmatprep.subr.mxu0 0.0
      %3375 = vmatpush1.msra.mxu0 0.0
      %3376 = vmatprep.subr.mxu0 0.0
      %3377 = vmatpush1.msra.mxu0 0.0
      %3378 = vmatprep.mubr.f32.mxu0 0.0
      %3379 = vmatmul.mubr.f32.gmra.mrb[0].mxu0 %v2785
      %v3380 = vpop.f32.mrb[0].mxu0
      %v3381 = vadd.f32 0.0, %v3380
      %v3382 = vpop.f32.mrb[0].mxu0
      %3383 = vmatprep.mubr.f32.mxu0 0.0
      %3384 = vmatmul.mubr.f32.gmra.mrb[0].mxu0 %v2788
      %v3385 = vpop.f32.mrb[0].mxu0
      %v3386 = vadd.f32 0.0, %v3385
      %v3387 = vpop.f32.mrb[0].mxu0
      %3388 = vmatprep.mubr.f32.mxu0 0.0
      %3389 = vmatmul.mubr.f32.gmra.mrb[0].mxu0 %v2791
      %v3390 = vpop.f32.mrb[0].mxu0
      %v3391 = vadd.f32 0.0, %v3390
      %v3392 = vpop.f32.mrb[0].mxu0
      %3393 = vmatprep.mubr.f32.mxu0 0.0
      %3394 = vmatmul.mubr.f32.gmra.mrb[0].mxu0 %v2794
      %v3395 = vpop.f32.mrb[0].mxu0
      %v3396 = vadd.f32 0.0, %v3395
      %v3397 = vpop.f32.mrb[0].mxu0
      %3398 = vmatprep.mubr.f32.mxu0 0.0
      %3399 = vmatmul.mubr.f32.gmra.mrb[0].mxu0 %v2797
      %v3400 = vpop.f32.mrb[0].mxu0
      %v3401 = vadd.f32 0.0, %v3400
      %v3402 = vpop.f32.mrb[0].mxu0
      %3403 = vmatprep.mubr.f32.mxu0 0.0
      %3404 = vmatmul.mubr.f32.gmra.mrb[0].mxu0 %v2800
      %v3405 = vpop.f32.mrb[0].mxu0
      %v3406 = vadd.f32 0.0, %v3405
      %v3407 = vpop.f32.mrb[0].mxu0
      %3408 = vmatprep.mubr.f32.mxu0 0.0
      %3409 = vmatmul.mubr.f32.gmra.mrb[0].mxu0 %v2803
      %v3410 = vpop.f32.mrb[0].mxu0
      %v3411 = vadd.f32 0.0, %v3410
      %v3412 = vpop.f32.mrb[0].mxu0
      %3413 = vmatprep.mubr.f32.mxu0 0.0
      %3414 = vmatmul.mubr.f32.gmra.mrb[0].mxu0 %v2806
      %v3415 = vpop.f32.mrb[0].mxu0
      %v3416 = vadd.f32 0.0, %v3415
      %v3417 = vpop.f32.mrb[0].mxu0
      %3418 = vmatprep.mubr.f32.mxu0 0.0
      %3419 = vmatmul.mubr.f32.gmra.mrb[0].mxu0 %v2809
      %v3420 = vpop.f32.mrb[0].mxu0
      %v3421 = vadd.f32 0.0, %v3420
      %v3422 = vpop.f32.mrb[0].mxu0
      %3423 = vmatprep.mubr.f32.mxu0 0.0
      %3424 = vmatmul.mubr.f32.gmra.mrb[0].mxu0 %v2812
      %v3425 = vpop.f32.mrb[0].mxu0
      %v3426 = vadd.f32 0.0, %v3425
      %v3427 = vpop.f32.mrb[0].mxu0
      %3428 = vmatprep.mubr.f32.mxu0 0.0
      %3429 = vmatmul.mubr.f32.gmra.mrb[0].mxu0 %v2815
      %v3430 = vpop.f32.mrb[0].mxu0
      %v3431 = vadd.f32 0.0, %v3430
      %v3432 = vpop.f32.mrb[0].mxu0
      %3433 = vmatprep.mubr.f32.mxu0 0.0
      %3434 = vmatmul.mubr.f32.gmra.mrb[0].mxu0 %v2818
      %v3435 = vpop.f32.mrb[0].mxu0
      %v3436 = vadd.f32 0.0, %v3435
      %v3437 = vpop.f32.mrb[0].mxu0
      %3438 = vmatprep.mubr.f32.mxu0 0.0
      %3439 = vmatmul.mubr.f32.gmra.mrb[0].mxu0 %v2821
      %v3440 = vpop.f32.mrb[0].mxu0
      %v3441 = vadd.f32 0.0, %v3440
      %v3442 = vpop.f32.mrb[0].mxu0
      %3443 = vmatprep.mubr.f32.mxu0 0.0
      %3444 = vmatmul.mubr.f32.gmra.mrb[0].mxu0 %v2824
      %v3445 = vpop.f32.mrb[0].mxu0
      %v3446 = vadd.f32 0.0, %v3445
      %v3447 = vpop.f32.mrb[0].mxu0
      %3448 = vmatprep.mubr.f32.mxu0 0.0
      %3449 = vmatmul.mubr.f32.gmra.mrb[0].mxu0 %v2827
      %v3450 = vpop.f32.mrb[0].mxu0
      %v3451 = vadd.f32 0.0, %v3450
      %v3452 = vpop.f32.mrb[0].mxu0
      %3453 = vmatprep.mubr.f32.mxu0 0.0
      %3454 = vmatmul.mubr.f32.gmra.mrb[0].mxu0 %v2830
      %v3455 = vpop.f32.mrb[0].mxu0
      %v3456 = vadd.f32 0.0, %v3455
      %v3457 = vpop.f32.mrb[0].mxu0
      %3458 = vmatprep.mubr.f32.mxu0 0.0
      %3459 = vmatmul.mubr.f32.gmra.mrb[0].mxu0 %v2833
      %v3460 = vpop.f32.mrb[0].mxu0
      %v3461 = vadd.f32 0.0, %v3460
      %v3462 = vpop.f32.mrb[0].mxu0
      %3463 = vmatprep.mubr.f32.mxu0 0.0
      %3464 = vmatmul.mubr.f32.gmra.mrb[0].mxu0 %v2836
      %v3465 = vpop.f32.mrb[0].mxu0
      %v3466 = vadd.f32 0.0, %v3465
      %v3467 = vpop.f32.mrb[0].mxu0
      %3468 = vmatprep.mubr.f32.mxu0 0.0
      %3469 = vmatmul.mubr.f32.gmra.mrb[0].mxu0 %v2839
      %v3470 = vpop.f32.mrb[0].mxu0
      %v3471 = vadd.f32 0.0, %v3470
      %v3472 = vpop.f32.mrb[0].mxu0
      %3473 = vmatprep.mubr.f32.mxu0 0.0
      %3474 = vmatmul.mubr.f32.gmra.mrb[0].mxu0 %v2842
      %v3475 = vpop.f32.mrb[0].mxu0
      %v3476 = vadd.f32 0.0, %v3475
      %v3477 = vpop.f32.mrb[0].mxu0
      %3478 = vmatprep.mubr.f32.mxu0 0.0
      %3479 = vmatmul.mubr.f32.gmra.mrb[0].mxu0 %v2845
      %v3480 = vpop.f32.mrb[0].mxu0
      %v3481 = vadd.f32 0.0, %v3480
      %v3482 = vpop.f32.mrb[0].mxu0
      %3483 = vmatprep.mubr.f32.mxu0 0.0
      %3484 = vmatmul.mubr.f32.gmra.mrb[0].mxu0 %v2848
      %v3485 = vpop.f32.mrb[0].mxu0
      %v3486 = vadd.f32 0.0, %v3485
      %v3487 = vpop.f32.mrb[0].mxu0
      %3488 = vmatprep.mubr.f32.mxu0 0.0
      %3489 = vmatmul.mubr.f32.gmra.mrb[0].mxu0 %v2851
      %v3490 = vpop.f32.mrb[0].mxu0
      %v3491 = vadd.f32 0.0, %v3490
      %v3492 = vpop.f32.mrb[0].mxu0
      %3493 = vmatprep.mubr.f32.mxu0 0.0
      %3494 = vmatmul.mubr.f32.gmra.mrb[0].mxu0 %v2854
      %v3495 = vpop.f32.mrb[0].mxu0
      %v3496 = vadd.f32 0.0, %v3495
      %v3497 = vpop.f32.mrb[0].mxu0
      %3498 = vmatprep.mubr.f32.mxu0 0.0
      %3499 = vmatmul.mubr.f32.gmra.mrb[0].mxu0 %v2857
      %v3500 = vpop.f32.mrb[0].mxu0
      %v3501 = vadd.f32 0.0, %v3500
      %v3502 = vpop.f32.mrb[0].mxu0
      %3503 = vdwg.mxu0
      %v3504 = vmul.f32 %v1750, %v3381
      %v3505 = vmul.f32 %v1755, %v3386
      %v3506 = vmul.f32 %v1760, %v3391
      %v3507 = vmul.f32 %v1765, %v3396
      %v3508 = vmul.f32 %v1770, %v3401
      %v3509 = vmul.f32 %v1775, %v3406
      %v3510 = vmul.f32 %v1780, %v3411
      %v3511 = vmul.f32 %v1785, %v3416
      %v3512 = vmul.f32 %v1790, %v3421
      %v3513 = vmul.f32 %v1795, %v3426
      %v3514 = vmul.f32 %v1800, %v3431
      %v3515 = vmul.f32 %v1805, %v3436
      %v3516 = vmul.f32 %v1810, %v3441
      %v3517 = vmul.f32 %v1815, %v3446
      %v3518 = vmul.f32 %v1820, %v3451
      %v3519 = vmul.f32 %v1825, %v3456
      %v3520 = vmul.f32 %v1830, %v3461
      %v3521 = vmul.f32 %v1835, %v3466
      %v3522 = vmul.f32 %v1840, %v3471
      %v3523 = vmul.f32 %v1845, %v3476
      %v3524 = vmul.f32 %v1850, %v3481
      %v3525 = vmul.f32 %v1855, %v3486
      %v3526 = vmul.f32 %v1860, %v3491
      %v3527 = vmul.f32 %v1865, %v3496
      %v3528 = vmul.f32 %v1870, %v3501
      %v3529 = vadd.f32 %v3289, %v3504
      %v3530 = vadd.f32 %v3290, %v3505
      %v3531 = vadd.f32 %v3291, %v3506
      %v3532 = vadd.f32 %v3292, %v3507
      %v3533 = vadd.f32 %v3293, %v3508
      %v3534 = vadd.f32 %v3294, %v3509
      %v3535 = vadd.f32 %v3295, %v3510
      %v3536 = vadd.f32 %v3296, %v3511
      %v3537 = vadd.f32 %v3297, %v3512
      %v3538 = vadd.f32 %v3298, %v3513
      %v3539 = vadd.f32 %v3299, %v3514
      %v3540 = vadd.f32 %v3300, %v3515
      %v3541 = vadd.f32 %v3301, %v3516
      %v3542 = vadd.f32 %v3302, %v3517
      %v3543 = vadd.f32 %v3303, %v3518
      %v3544 = vadd.f32 %v3304, %v3519
      %v3545 = vadd.f32 %v3305, %v3520
      %v3546 = vadd.f32 %v3306, %v3521
      %v3547 = vadd.f32 %v3307, %v3522
      %v3548 = vadd.f32 %v3308, %v3523
      %v3549 = vadd.f32 %v3309, %v3524
      %v3550 = vadd.f32 %v3310, %v3525
      %v3551 = vadd.f32 %v3311, %v3526
      %v3552 = vadd.f32 %v3312, %v3527
      %v3553 = vadd.f32 %v3313, %v3528
      %3554 = vmatprep.subr.mxu0 0.0
      %3555 = vmatpush1.msra.mxu0 %v2775
      %3556 = vmatprep.subr.mxu0 0.0
      %3557 = vmatpush1.msra.mxu0 0.0
      %3558 = vmatprep.subr.mxu0 0.0
      %3559 = vmatpush1.msra.mxu0 0.0
      %3560 = vmatprep.subr.mxu0 0.0
      %3561 = vmatpush1.msra.mxu0 0.0
      %3562 = vmatprep.subr.mxu0 0.0
      %3563 = vmatpush1.msra.mxu0 0.0
      %3564 = vmatprep.subr.mxu0 0.0
      %3565 = vmatpush1.msra.mxu0 0.0
      %3566 = vmatprep.subr.mxu0 0.0
      %3567 = vmatpush1.msra.mxu0 0.0
      %3568 = vmatprep.subr.mxu0 0.0
      %3569 = vmatpush1.msra.mxu0 0.0
      %3570 = vmatprep.subr.mxu0 0.0
      %3571 = vmatpush1.msra.mxu0 0.0
      %3572 = vmatprep.subr.mxu0 0.0
      %3573 = vmatpush1.msra.mxu0 0.0
      %3574 = vmatprep.subr.mxu0 0.0
      %3575 = vmatpush1.msra.mxu0 0.0
      %3576 = vmatprep.subr.mxu0 0.0
      %3577 = vmatpush1.msra.mxu0 0.0
      %3578 = vmatprep.subr.mxu0 0.0
      %3579 = vmatpush1.msra.mxu0 0.0
      %3580 = vmatprep.subr.mxu0 0.0
      %3581 = vmatpush1.msra.mxu0 0.0
      %3582 = vmatprep.subr.mxu0 0.0
      %3583 = vmatpush1.msra.mxu0 0.0
      %3584 = vmatprep.subr.mxu0 0.0
      %3585 = vmatpush1.msra.mxu0 0.0
      %3586 = vmatprep.subr.mxu0 0.0
      %3587 = vmatpush1.msra.mxu0 0.0
      %3588 = vmatprep.subr.mxu0 0.0
      %3589 = vmatpush1.msra.mxu0 0.0
      %3590 = vmatprep.subr.mxu0 0.0
      %3591 = vmatpush1.msra.mxu0 0.0
      %3592 = vmatprep.subr.mxu0 0.0
      %3593 = vmatpush1.msra.mxu0 0.0
      %3594 = vmatprep.subr.mxu0 0.0
      %3595 = vmatpush1.msra.mxu0 0.0
      %3596 = vmatprep.subr.mxu0 0.0
      %3597 = vmatpush1.msra.mxu0 0.0
      %3598 = vmatprep.subr.mxu0 0.0
      %3599 = vmatpush1.msra.mxu0 0.0
      %3600 = vmatprep.subr.mxu0 0.0
      %3601 = vmatpush1.msra.mxu0 0.0
      %3602 = vmatprep.subr.mxu0 0.0
      %3603 = vmatpush1.msra.mxu0 0.0
      %3604 = vmatprep.subr.mxu0 0.0
      %3605 = vmatpush1.msra.mxu0 0.0
      %3606 = vmatprep.subr.mxu0 0.0
      %3607 = vmatpush1.msra.mxu0 0.0
      %3608 = vmatprep.subr.mxu0 0.0
      %3609 = vmatpush1.msra.mxu0 0.0
      %3610 = vmatprep.subr.mxu0 0.0
      %3611 = vmatpush1.msra.mxu0 0.0
      %3612 = vmatprep.subr.mxu0 0.0
      %3613 = vmatpush1.msra.mxu0 0.0
      %3614 = vmatprep.subr.mxu0 0.0
      %3615 = vmatpush1.msra.mxu0 0.0
      %3616 = vmatprep.subr.mxu0 0.0
      %3617 = vmatpush1.msra.mxu0 0.0
      %3618 = vmatprep.mubr.f32.mxu0 0.0
      %3619 = vmatmul.mubr.f32.gmra.mrb[0].mxu0 %v2785
      %v3620 = vpop.f32.mrb[0].mxu0
      %v3621 = vadd.f32 0.0, %v3620
      %v3622 = vpop.f32.mrb[0].mxu0
      %3623 = vmatprep.mubr.f32.mxu0 0.0
      %3624 = vmatmul.mubr.f32.gmra.mrb[0].mxu0 %v2788
      %v3625 = vpop.f32.mrb[0].mxu0
      %v3626 = vadd.f32 0.0, %v3625
      %v3627 = vpop.f32.mrb[0].mxu0
      %3628 = vmatprep.mubr.f32.mxu0 0.0
      %3629 = vmatmul.mubr.f32.gmra.mrb[0].mxu0 %v2791
      %v3630 = vpop.f32.mrb[0].mxu0
      %v3631 = vadd.f32 0.0, %v3630
      %v3632 = vpop.f32.mrb[0].mxu0
      %3633 = vmatprep.mubr.f32.mxu0 0.0
      %3634 = vmatmul.mubr.f32.gmra.mrb[0].mxu0 %v2794
      %v3635 = vpop.f32.mrb[0].mxu0
      %v3636 = vadd.f32 0.0, %v3635
      %v3637 = vpop.f32.mrb[0].mxu0
      %3638 = vmatprep.mubr.f32.mxu0 0.0
      %3639 = vmatmul.mubr.f32.gmra.mrb[0].mxu0 %v2797
      %v3640 = vpop.f32.mrb[0].mxu0
      %v3641 = vadd.f32 0.0, %v3640
      %v3642 = vpop.f32.mrb[0].mxu0
      %3643 = vmatprep.mubr.f32.mxu0 0.0
      %3644 = vmatmul.mubr.f32.gmra.mrb[0].mxu0 %v2800
      %v3645 = vpop.f32.mrb[0].mxu0
      %v3646 = vadd.f32 0.0, %v3645
      %v3647 = vpop.f32.mrb[0].mxu0
      %3648 = vmatprep.mubr.f32.mxu0 0.0
      %3649 = vmatmul.mubr.f32.gmra.mrb[0].mxu0 %v2803
      %v3650 = vpop.f32.mrb[0].mxu0
      %v3651 = vadd.f32 0.0, %v3650
      %v3652 = vpop.f32.mrb[0].mxu0
      %3653 = vmatprep.mubr.f32.mxu0 0.0
      %3654 = vmatmul.mubr.f32.gmra.mrb[0].mxu0 %v2806
      %v3655 = vpop.f32.mrb[0].mxu0
      %v3656 = vadd.f32 0.0, %v3655
      %v3657 = vpop.f32.mrb[0].mxu0
      %3658 = vmatprep.mubr.f32.mxu0 0.0
      %3659 = vmatmul.mubr.f32.gmra.mrb[0].mxu0 %v2809
      %v3660 = vpop.f32.mrb[0].mxu0
      %v3661 = vadd.f32 0.0, %v3660
      %v3662 = vpop.f32.mrb[0].mxu0
      %3663 = vmatprep.mubr.f32.mxu0 0.0
      %3664 = vmatmul.mubr.f32.gmra.mrb[0].mxu0 %v2812
      %v3665 = vpop.f32.mrb[0].mxu0
      %v3666 = vadd.f32 0.0, %v3665
      %v3667 = vpop.f32.mrb[0].mxu0
      %3668 = vmatprep.mubr.f32.mxu0 0.0
      %3669 = vmatmul.mubr.f32.gmra.mrb[0].mxu0 %v2815
      %v3670 = vpop.f32.mrb[0].mxu0
      %v3671 = vadd.f32 0.0, %v3670
      %v3672 = vpop.f32.mrb[0].mxu0
      %3673 = vmatprep.mubr.f32.mxu0 0.0
      %3674 = vmatmul.mubr.f32.gmra.mrb[0].mxu0 %v2818
      %v3675 = vpop.f32.mrb[0].mxu0
      %v3676 = vadd.f32 0.0, %v3675
      %v3677 = vpop.f32.mrb[0].mxu0
      %3678 = vmatprep.mubr.f32.mxu0 0.0
      %3679 = vmatmul.mubr.f32.gmra.mrb[0].mxu0 %v2821
      %v3680 = vpop.f32.mrb[0].mxu0
      %v3681 = vadd.f32 0.0, %v3680
      %v3682 = vpop.f32.mrb[0].mxu0
      %3683 = vmatprep.mubr.f32.mxu0 0.0
      %3684 = vmatmul.mubr.f32.gmra.mrb[0].mxu0 %v2824
      %v3685 = vpop.f32.mrb[0].mxu0
      %v3686 = vadd.f32 0.0, %v3685
      %v3687 = vpop.f32.mrb[0].mxu0
      %3688 = vmatprep.mubr.f32.mxu0 0.0
      %3689 = vmatmul.mubr.f32.gmra.mrb[0].mxu0 %v2827
      %v3690 = vpop.f32.mrb[0].mxu0
      %v3691 = vadd.f32 0.0, %v3690
      %v3692 = vpop.f32.mrb[0].mxu0
      %3693 = vmatprep.mubr.f32.mxu0 0.0
      %3694 = vmatmul.mubr.f32.gmra.mrb[0].mxu0 %v2830
      %v3695 = vpop.f32.mrb[0].mxu0
      %v3696 = vadd.f32 0.0, %v3695
      %v3697 = vpop.f32.mrb[0].mxu0
      %3698 = vmatprep.mubr.f32.mxu0 0.0
      %3699 = vmatmul.mubr.f32.gmra.mrb[0].mxu0 %v2833
      %v3700 = vpop.f32.mrb[0].mxu0
      %v3701 = vadd.f32 0.0, %v3700
      %v3702 = vpop.f32.mrb[0].mxu0
      %3703 = vmatprep.mubr.f32.mxu0 0.0
      %3704 = vmatmul.mubr.f32.gmra.mrb[0].mxu0 %v2836
      %v3705 = vpop.f32.mrb[0].mxu0
      %v3706 = vadd.f32 0.0, %v3705
      %v3707 = vpop.f32.mrb[0].mxu0
      %3708 = vmatprep.mubr.f32.mxu0 0.0
      %3709 = vmatmul.mubr.f32.gmra.mrb[0].mxu0 %v2839
      %v3710 = vpop.f32.mrb[0].mxu0
      %v3711 = vadd.f32 0.0, %v3710
      %v3712 = vpop.f32.mrb[0].mxu0
      %3713 = vmatprep.mubr.f32.mxu0 0.0
      %3714 = vmatmul.mubr.f32.gmra.mrb[0].mxu0 %v2842
      %v3715 = vpop.f32.mrb[0].mxu0
      %v3716 = vadd.f32 0.0, %v3715
      %v3717 = vpop.f32.mrb[0].mxu0
      %3718 = vmatprep.mubr.f32.mxu0 0.0
      %3719 = vmatmul.mubr.f32.gmra.mrb[0].mxu0 %v2845
      %v3720 = vpop.f32.mrb[0].mxu0
      %v3721 = vadd.f32 0.0, %v3720
      %v3722 = vpop.f32.mrb[0].mxu0
      %3723 = vmatprep.mubr.f32.mxu0 0.0
      %3724 = vmatmul.mubr.f32.gmra.mrb[0].mxu0 %v2848
      %v3725 = vpop.f32.mrb[0].mxu0
      %v3726 = vadd.f32 0.0, %v3725
      %v3727 = vpop.f32.mrb[0].mxu0
      %3728 = vmatprep.mubr.f32.mxu0 0.0
      %3729 = vmatmul.mubr.f32.gmra.mrb[0].mxu0 %v2851
      %v3730 = vpop.f32.mrb[0].mxu0
      %v3731 = vadd.f32 0.0, %v3730
      %v3732 = vpop.f32.mrb[0].mxu0
      %3733 = vmatprep.mubr.f32.mxu0 0.0
      %3734 = vmatmul.mubr.f32.gmra.mrb[0].mxu0 %v2854
      %v3735 = vpop.f32.mrb[0].mxu0
      %v3736 = vadd.f32 0.0, %v3735
      %v3737 = vpop.f32.mrb[0].mxu0
      %3738 = vmatprep.mubr.f32.mxu0 0.0
      %3739 = vmatmul.mubr.f32.gmra.mrb[0].mxu0 %v2857
      %v3740 = vpop.f32.mrb[0].mxu0
      %v3741 = vadd.f32 0.0, %v3740
      %v3742 = vpop.f32.mrb[0].mxu0
      %3743 = vdwg.mxu0
      %v3744 = vmul.f32 %v1875, %v3621
      %v3745 = vmul.f32 %v1880, %v3626
      %v3746 = vmul.f32 %v1885, %v3631
      %v3747 = vmul.f32 %v1890, %v3636
      %v3748 = vmul.f32 %v1895, %v3641
      %v3749 = vmul.f32 %v1900, %v3646
      %v3750 = vmul.f32 %v1905, %v3651
      %v3751 = vmul.f32 %v1910, %v3656
      %v3752 = vmul.f32 %v1915, %v3661
      %v3753 = vmul.f32 %v1920, %v3666
      %v3754 = vmul.f32 %v1925, %v3671
      %v3755 = vmul.f32 %v1930, %v3676
      %v3756 = vmul.f32 %v1935, %v3681
      %v3757 = vmul.f32 %v1940, %v3686
      %v3758 = vmul.f32 %v1945, %v3691
      %v3759 = vmul.f32 %v1950, %v3696
      %v3760 = vmul.f32 %v1955, %v3701
      %v3761 = vmul.f32 %v1960, %v3706
      %v3762 = vmul.f32 %v1965, %v3711
      %v3763 = vmul.f32 %v1970, %v3716
      %v3764 = vmul.f32 %v1975, %v3721
      %v3765 = vmul.f32 %v1980, %v3726
      %v3766 = vmul.f32 %v1985, %v3731
      %v3767 = vmul.f32 %v1990, %v3736
      %v3768 = vmul.f32 %v1995, %v3741
      %v3769 = vadd.f32 %v3529, %v3744
      %v3770 = vadd.f32 %v3530, %v3745
      %v3771 = vadd.f32 %v3531, %v3746
      %v3772 = vadd.f32 %v3532, %v3747
      %v3773 = vadd.f32 %v3533, %v3748
      %v3774 = vadd.f32 %v3534, %v3749
      %v3775 = vadd.f32 %v3535, %v3750
      %v3776 = vadd.f32 %v3536, %v3751
      %v3777 = vadd.f32 %v3537, %v3752
      %v3778 = vadd.f32 %v3538, %v3753
      %v3779 = vadd.f32 %v3539, %v3754
      %v3780 = vadd.f32 %v3540, %v3755
      %v3781 = vadd.f32 %v3541, %v3756
      %v3782 = vadd.f32 %v3542, %v3757
      %v3783 = vadd.f32 %v3543, %v3758
      %v3784 = vadd.f32 %v3544, %v3759
      %v3785 = vadd.f32 %v3545, %v3760
      %v3786 = vadd.f32 %v3546, %v3761
      %v3787 = vadd.f32 %v3547, %v3762
      %v3788 = vadd.f32 %v3548, %v3763
      %v3789 = vadd.f32 %v3549, %v3764
      %v3790 = vadd.f32 %v3550, %v3765
      %v3791 = vadd.f32 %v3551, %v3766
      %v3792 = vadd.f32 %v3552, %v3767
      %v3793 = vadd.f32 %v3553, %v3768
      %3794 = vmatprep.subr.mxu0 0.0
      %3795 = vmatpush1.msra.mxu0 %v2776
      %3796 = vmatprep.subr.mxu0 0.0
      %3797 = vmatpush1.msra.mxu0 0.0
      %3798 = vmatprep.subr.mxu0 0.0
      %3799 = vmatpush1.msra.mxu0 0.0
      %3800 = vmatprep.subr.mxu0 0.0
      %3801 = vmatpush1.msra.mxu0 0.0
      %3802 = vmatprep.subr.mxu0 0.0
      %3803 = vmatpush1.msra.mxu0 0.0
      %3804 = vmatprep.subr.mxu0 0.0
      %3805 = vmatpush1.msra.mxu0 0.0
      %3806 = vmatprep.subr.mxu0 0.0
      %3807 = vmatpush1.msra.mxu0 0.0
      %3808 = vmatprep.subr.mxu0 0.0
      %3809 = vmatpush1.msra.mxu0 0.0
      %3810 = vmatprep.subr.mxu0 0.0
      %3811 = vmatpush1.msra.mxu0 0.0
      %3812 = vmatprep.subr.mxu0 0.0
      %3813 = vmatpush1.msra.mxu0 0.0
      %3814 = vmatprep.subr.mxu0 0.0
      %3815 = vmatpush1.msra.mxu0 0.0
      %3816 = vmatprep.subr.mxu0 0.0
      %3817 = vmatpush1.msra.mxu0 0.0
      %3818 = vmatprep.subr.mxu0 0.0
      %3819 = vmatpush1.msra.mxu0 0.0
      %3820 = vmatprep.subr.mxu0 0.0
      %3821 = vmatpush1.msra.mxu0 0.0
      %3822 = vmatprep.subr.mxu0 0.0
      %3823 = vmatpush1.msra.mxu0 0.0
      %3824 = vmatprep.subr.mxu0 0.0
      %3825 = vmatpush1.msra.mxu0 0.0
      %3826 = vmatprep.subr.mxu0 0.0
      %3827 = vmatpush1.msra.mxu0 0.0
      %3828 = vmatprep.subr.mxu0 0.0
      %3829 = vmatpush1.msra.mxu0 0.0
      %3830 = vmatprep.subr.mxu0 0.0
      %3831 = vmatpush1.msra.mxu0 0.0
      %3832 = vmatprep.subr.mxu0 0.0
      %3833 = vmatpush1.msra.mxu0 0.0
      %3834 = vmatprep.subr.mxu0 0.0
      %3835 = vmatpush1.msra.mxu0 0.0
      %3836 = vmatprep.subr.mxu0 0.0
      %3837 = vmatpush1.msra.mxu0 0.0
      %3838 = vmatprep.subr.mxu0 0.0
      %3839 = vmatpush1.msra.mxu0 0.0
      %3840 = vmatprep.subr.mxu0 0.0
      %3841 = vmatpush1.msra.mxu0 0.0
      %3842 = vmatprep.subr.mxu0 0.0
      %3843 = vmatpush1.msra.mxu0 0.0
      %3844 = vmatprep.subr.mxu0 0.0
      %3845 = vmatpush1.msra.mxu0 0.0
      %3846 = vmatprep.subr.mxu0 0.0
      %3847 = vmatpush1.msra.mxu0 0.0
      %3848 = vmatprep.subr.mxu0 0.0
      %3849 = vmatpush1.msra.mxu0 0.0
      %3850 = vmatprep.subr.mxu0 0.0
      %3851 = vmatpush1.msra.mxu0 0.0
      %3852 = vmatprep.subr.mxu0 0.0
      %3853 = vmatpush1.msra.mxu0 0.0
      %3854 = vmatprep.subr.mxu0 0.0
      %3855 = vmatpush1.msra.mxu0 0.0
      %3856 = vmatprep.subr.mxu0 0.0
      %3857 = vmatpush1.msra.mxu0 0.0
      %3858 = vmatprep.mubr.f32.mxu0 0.0
      %3859 = vmatmul.mubr.f32.gmra.mrb[0].mxu0 %v2785
      %v3860 = vpop.f32.mrb[0].mxu0
      %v3861 = vadd.f32 0.0, %v3860
      %v3862 = vpop.f32.mrb[0].mxu0
      %3863 = vmatprep.mubr.f32.mxu0 0.0
      %3864 = vmatmul.mubr.f32.gmra.mrb[0].mxu0 %v2788
      %v3865 = vpop.f32.mrb[0].mxu0
      %v3866 = vadd.f32 0.0, %v3865
      %v3867 = vpop.f32.mrb[0].mxu0
      %3868 = vmatprep.mubr.f32.mxu0 0.0
      %3869 = vmatmul.mubr.f32.gmra.mrb[0].mxu0 %v2791
      %v3870 = vpop.f32.mrb[0].mxu0
      %v3871 = vadd.f32 0.0, %v3870
      %v3872 = vpop.f32.mrb[0].mxu0
      %3873 = vmatprep.mubr.f32.mxu0 0.0
      %3874 = vmatmul.mubr.f32.gmra.mrb[0].mxu0 %v2794
      %v3875 = vpop.f32.mrb[0].mxu0
      %v3876 = vadd.f32 0.0, %v3875
      %v3877 = vpop.f32.mrb[0].mxu0
      %3878 = vmatprep.mubr.f32.mxu0 0.0
      %3879 = vmatmul.mubr.f32.gmra.mrb[0].mxu0 %v2797
      %v3880 = vpop.f32.mrb[0].mxu0
      %v3881 = vadd.f32 0.0, %v3880
      %v3882 = vpop.f32.mrb[0].mxu0
      %3883 = vmatprep.mubr.f32.mxu0 0.0
      %3884 = vmatmul.mubr.f32.gmra.mrb[0].mxu0 %v2800
      %v3885 = vpop.f32.mrb[0].mxu0
      %v3886 = vadd.f32 0.0, %v3885
      %v3887 = vpop.f32.mrb[0].mxu0
      %3888 = vmatprep.mubr.f32.mxu0 0.0
      %3889 = vmatmul.mubr.f32.gmra.mrb[0].mxu0 %v2803
      %v3890 = vpop.f32.mrb[0].mxu0
      %v3891 = vadd.f32 0.0, %v3890
      %v3892 = vpop.f32.mrb[0].mxu0
      %3893 = vmatprep.mubr.f32.mxu0 0.0
      %3894 = vmatmul.mubr.f32.gmra.mrb[0].mxu0 %v2806
      %v3895 = vpop.f32.mrb[0].mxu0
      %v3896 = vadd.f32 0.0, %v3895
      %v3897 = vpop.f32.mrb[0].mxu0
      %3898 = vmatprep.mubr.f32.mxu0 0.0
      %3899 = vmatmul.mubr.f32.gmra.mrb[0].mxu0 %v2809
      %v3900 = vpop.f32.mrb[0].mxu0
      %v3901 = vadd.f32 0.0, %v3900
      %v3902 = vpop.f32.mrb[0].mxu0
      %3903 = vmatprep.mubr.f32.mxu0 0.0
      %3904 = vmatmul.mubr.f32.gmra.mrb[0].mxu0 %v2812
      %v3905 = vpop.f32.mrb[0].mxu0
      %v3906 = vadd.f32 0.0, %v3905
      %v3907 = vpop.f32.mrb[0].mxu0
      %3908 = vmatprep.mubr.f32.mxu0 0.0
      %3909 = vmatmul.mubr.f32.gmra.mrb[0].mxu0 %v2815
      %v3910 = vpop.f32.mrb[0].mxu0
      %v3911 = vadd.f32 0.0, %v3910
      %v3912 = vpop.f32.mrb[0].mxu0
      %3913 = vmatprep.mubr.f32.mxu0 0.0
      %3914 = vmatmul.mubr.f32.gmra.mrb[0].mxu0 %v2818
      %v3915 = vpop.f32.mrb[0].mxu0
      %v3916 = vadd.f32 0.0, %v3915
      %v3917 = vpop.f32.mrb[0].mxu0
      %3918 = vmatprep.mubr.f32.mxu0 0.0
      %3919 = vmatmul.mubr.f32.gmra.mrb[0].mxu0 %v2821
      %v3920 = vpop.f32.mrb[0].mxu0
      %v3921 = vadd.f32 0.0, %v3920
      %v3922 = vpop.f32.mrb[0].mxu0
      %3923 = vmatprep.mubr.f32.mxu0 0.0
      %3924 = vmatmul.mubr.f32.gmra.mrb[0].mxu0 %v2824
      %v3925 = vpop.f32.mrb[0].mxu0
      %v3926 = vadd.f32 0.0, %v3925
      %v3927 = vpop.f32.mrb[0].mxu0
      %3928 = vmatprep.mubr.f32.mxu0 0.0
      %3929 = vmatmul.mubr.f32.gmra.mrb[0].mxu0 %v2827
      %v3930 = vpop.f32.mrb[0].mxu0
      %v3931 = vadd.f32 0.0, %v3930
      %v3932 = vpop.f32.mrb[0].mxu0
      %3933 = vmatprep.mubr.f32.mxu0 0.0
      %3934 = vmatmul.mubr.f32.gmra.mrb[0].mxu0 %v2830
      %v3935 = vpop.f32.mrb[0].mxu0
      %v3936 = vadd.f32 0.0, %v3935
      %v3937 = vpop.f32.mrb[0].mxu0
      %3938 = vmatprep.mubr.f32.mxu0 0.0
      %3939 = vmatmul.mubr.f32.gmra.mrb[0].mxu0 %v2833
      %v3940 = vpop.f32.mrb[0].mxu0
      %v3941 = vadd.f32 0.0, %v3940
      %v3942 = vpop.f32.mrb[0].mxu0
      %3943 = vmatprep.mubr.f32.mxu0 0.0
      %3944 = vmatmul.mubr.f32.gmra.mrb[0].mxu0 %v2836
      %v3945 = vpop.f32.mrb[0].mxu0
      %v3946 = vadd.f32 0.0, %v3945
      %v3947 = vpop.f32.mrb[0].mxu0
      %3948 = vmatprep.mubr.f32.mxu0 0.0
      %3949 = vmatmul.mubr.f32.gmra.mrb[0].mxu0 %v2839
      %v3950 = vpop.f32.mrb[0].mxu0
      %v3951 = vadd.f32 0.0, %v3950
      %v3952 = vpop.f32.mrb[0].mxu0
      %3953 = vmatprep.mubr.f32.mxu0 0.0
      %3954 = vmatmul.mubr.f32.gmra.mrb[0].mxu0 %v2842
      %v3955 = vpop.f32.mrb[0].mxu0
      %v3956 = vadd.f32 0.0, %v3955
      %v3957 = vpop.f32.mrb[0].mxu0
      %3958 = vmatprep.mubr.f32.mxu0 0.0
      %3959 = vmatmul.mubr.f32.gmra.mrb[0].mxu0 %v2845
      %v3960 = vpop.f32.mrb[0].mxu0
      %v3961 = vadd.f32 0.0, %v3960
      %v3962 = vpop.f32.mrb[0].mxu0
      %3963 = vmatprep.mubr.f32.mxu0 0.0
      %3964 = vmatmul.mubr.f32.gmra.mrb[0].mxu0 %v2848
      %v3965 = vpop.f32.mrb[0].mxu0
      %v3966 = vadd.f32 0.0, %v3965
      %v3967 = vpop.f32.mrb[0].mxu0
      %3968 = vmatprep.mubr.f32.mxu0 0.0
      %3969 = vmatmul.mubr.f32.gmra.mrb[0].mxu0 %v2851
      %v3970 = vpop.f32.mrb[0].mxu0
      %v3971 = vadd.f32 0.0, %v3970
      %v3972 = vpop.f32.mrb[0].mxu0
      %3973 = vmatprep.mubr.f32.mxu0 0.0
      %3974 = vmatmul.mubr.f32.gmra.mrb[0].mxu0 %v2854
      %v3975 = vpop.f32.mrb[0].mxu0
      %v3976 = vadd.f32 0.0, %v3975
      %v3977 = vpop.f32.mrb[0].mxu0
      %3978 = vmatprep.mubr.f32.mxu0 0.0
      %3979 = vmatmul.mubr.f32.gmra.mrb[0].mxu0 %v2857
      %v3980 = vpop.f32.mrb[0].mxu0
      %v3981 = vadd.f32 0.0, %v3980
      %v3982 = vpop.f32.mrb[0].mxu0
      %3983 = vdwg.mxu0
      %v3984 = vmul.f32 %v2000, %v3861
      %v3985 = vmul.f32 %v2005, %v3866
      %v3986 = vmul.f32 %v2010, %v3871
      %v3987 = vmul.f32 %v2015, %v3876
      %v3988 = vmul.f32 %v2020, %v3881
      %v3989 = vmul.f32 %v2025, %v3886
      %v3990 = vmul.f32 %v2030, %v3891
      %v3991 = vmul.f32 %v2035, %v3896
      %v3992 = vmul.f32 %v2040, %v3901
      %v3993 = vmul.f32 %v2045, %v3906
      %v3994 = vmul.f32 %v2050, %v3911
      %v3995 = vmul.f32 %v2055, %v3916
      %v3996 = vmul.f32 %v2060, %v3921
      %v3997 = vmul.f32 %v2065, %v3926
      %v3998 = vmul.f32 %v2070, %v3931
      %v3999 = vmul.f32 %v2075, %v3936
      %v4000 = vmul.f32 %v2080, %v3941
      %v4001 = vmul.f32 %v2085, %v3946
      %v4002 = vmul.f32 %v2090, %v3951
      %v4003 = vmul.f32 %v2095, %v3956
      %v4004 = vmul.f32 %v2100, %v3961
      %v4005 = vmul.f32 %v2105, %v3966
      %v4006 = vmul.f32 %v2110, %v3971
      %v4007 = vmul.f32 %v2115, %v3976
      %v4008 = vmul.f32 %v2120, %v3981
      %v4009 = vadd.f32 %v3769, %v3984
      %v4010 = vadd.f32 %v3770, %v3985
      %v4011 = vadd.f32 %v3771, %v3986
      %v4012 = vadd.f32 %v3772, %v3987
      %v4013 = vadd.f32 %v3773, %v3988
      %v4014 = vadd.f32 %v3774, %v3989
      %v4015 = vadd.f32 %v3775, %v3990
      %v4016 = vadd.f32 %v3776, %v3991
      %v4017 = vadd.f32 %v3777, %v3992
      %v4018 = vadd.f32 %v3778, %v3993
      %v4019 = vadd.f32 %v3779, %v3994
      %v4020 = vadd.f32 %v3780, %v3995
      %v4021 = vadd.f32 %v3781, %v3996
      %v4022 = vadd.f32 %v3782, %v3997
      %v4023 = vadd.f32 %v3783, %v3998
      %v4024 = vadd.f32 %v3784, %v3999
      %v4025 = vadd.f32 %v3785, %v4000
      %v4026 = vadd.f32 %v3786, %v4001
      %v4027 = vadd.f32 %v3787, %v4002
      %v4028 = vadd.f32 %v3788, %v4003
      %v4029 = vadd.f32 %v3789, %v4004
      %v4030 = vadd.f32 %v3790, %v4005
      %v4031 = vadd.f32 %v3791, %v4006
      %v4032 = vadd.f32 %v3792, %v4007
      %v4033 = vadd.f32 %v3793, %v4008
      %4034 = vmatprep.subr.mxu0 0.0
      %4035 = vmatpush1.msra.mxu0 %v2777
      %4036 = vmatprep.subr.mxu0 0.0
      %4037 = vmatpush1.msra.mxu0 0.0
      %4038 = vmatprep.subr.mxu0 0.0
      %4039 = vmatpush1.msra.mxu0 0.0
      %4040 = vmatprep.subr.mxu0 0.0
      %4041 = vmatpush1.msra.mxu0 0.0
      %4042 = vmatprep.subr.mxu0 0.0
      %4043 = vmatpush1.msra.mxu0 0.0
      %4044 = vmatprep.subr.mxu0 0.0
      %4045 = vmatpush1.msra.mxu0 0.0
      %4046 = vmatprep.subr.mxu0 0.0
      %4047 = vmatpush1.msra.mxu0 0.0
      %4048 = vmatprep.subr.mxu0 0.0
      %4049 = vmatpush1.msra.mxu0 0.0
      %4050 = vmatprep.subr.mxu0 0.0
      %4051 = vmatpush1.msra.mxu0 0.0
      %4052 = vmatprep.subr.mxu0 0.0
      %4053 = vmatpush1.msra.mxu0 0.0
      %4054 = vmatprep.subr.mxu0 0.0
      %4055 = vmatpush1.msra.mxu0 0.0
      %4056 = vmatprep.subr.mxu0 0.0
      %4057 = vmatpush1.msra.mxu0 0.0
      %4058 = vmatprep.subr.mxu0 0.0
      %4059 = vmatpush1.msra.mxu0 0.0
      %4060 = vmatprep.subr.mxu0 0.0
      %4061 = vmatpush1.msra.mxu0 0.0
      %4062 = vmatprep.subr.mxu0 0.0
      %4063 = vmatpush1.msra.mxu0 0.0
      %4064 = vmatprep.subr.mxu0 0.0
      %4065 = vmatpush1.msra.mxu0 0.0
      %4066 = vmatprep.subr.mxu0 0.0
      %4067 = vmatpush1.msra.mxu0 0.0
      %4068 = vmatprep.subr.mxu0 0.0
      %4069 = vmatpush1.msra.mxu0 0.0
      %4070 = vmatprep.subr.mxu0 0.0
      %4071 = vmatpush1.msra.mxu0 0.0
      %4072 = vmatprep.subr.mxu0 0.0
      %4073 = vmatpush1.msra.mxu0 0.0
      %4074 = vmatprep.subr.mxu0 0.0
      %4075 = vmatpush1.msra.mxu0 0.0
      %4076 = vmatprep.subr.mxu0 0.0
      %4077 = vmatpush1.msra.mxu0 0.0
      %4078 = vmatprep.subr.mxu0 0.0
      %4079 = vmatpush1.msra.mxu0 0.0
      %4080 = vmatprep.subr.mxu0 0.0
      %4081 = vmatpush1.msra.mxu0 0.0
      %4082 = vmatprep.subr.mxu0 0.0
      %4083 = vmatpush1.msra.mxu0 0.0
      %4084 = vmatprep.subr.mxu0 0.0
      %4085 = vmatpush1.msra.mxu0 0.0
      %4086 = vmatprep.subr.mxu0 0.0
      %4087 = vmatpush1.msra.mxu0 0.0
      %4088 = vmatprep.subr.mxu0 0.0
      %4089 = vmatpush1.msra.mxu0 0.0
      %4090 = vmatprep.subr.mxu0 0.0
      %4091 = vmatpush1.msra.mxu0 0.0
      %4092 = vmatprep.subr.mxu0 0.0
      %4093 = vmatpush1.msra.mxu0 0.0
      %4094 = vmatprep.subr.mxu0 0.0
      %4095 = vmatpush1.msra.mxu0 0.0
      %4096 = vmatprep.subr.mxu0 0.0
      %4097 = vmatpush1.msra.mxu0 0.0
      %4098 = vmatprep.mubr.f32.mxu0 0.0
      %4099 = vmatmul.mubr.f32.gmra.mrb[0].mxu0 %v2785
      %v4100 = vpop.f32.mrb[0].mxu0
      %v4101 = vadd.f32 0.0, %v4100
      %v4102 = vpop.f32.mrb[0].mxu0
      %4103 = vmatprep.mubr.f32.mxu0 0.0
      %4104 = vmatmul.mubr.f32.gmra.mrb[0].mxu0 %v2788
      %v4105 = vpop.f32.mrb[0].mxu0
      %v4106 = vadd.f32 0.0, %v4105
      %v4107 = vpop.f32.mrb[0].mxu0
      %4108 = vmatprep.mubr.f32.mxu0 0.0
      %4109 = vmatmul.mubr.f32.gmra.mrb[0].mxu0 %v2791
      %v4110 = vpop.f32.mrb[0].mxu0
      %v4111 = vadd.f32 0.0, %v4110
      %v4112 = vpop.f32.mrb[0].mxu0
      %4113 = vmatprep.mubr.f32.mxu0 0.0
      %4114 = vmatmul.mubr.f32.gmra.mrb[0].mxu0 %v2794
      %v4115 = vpop.f32.mrb[0].mxu0
      %v4116 = vadd.f32 0.0, %v4115
      %v4117 = vpop.f32.mrb[0].mxu0
      %4118 = vmatprep.mubr.f32.mxu0 0.0
      %4119 = vmatmul.mubr.f32.gmra.mrb[0].mxu0 %v2797
      %v4120 = vpop.f32.mrb[0].mxu0
      %v4121 = vadd.f32 0.0, %v4120
      %v4122 = vpop.f32.mrb[0].mxu0
      %4123 = vmatprep.mubr.f32.mxu0 0.0
      %4124 = vmatmul.mubr.f32.gmra.mrb[0].mxu0 %v2800
      %v4125 = vpop.f32.mrb[0].mxu0
      %v4126 = vadd.f32 0.0, %v4125
      %v4127 = vpop.f32.mrb[0].mxu0
      %4128 = vmatprep.mubr.f32.mxu0 0.0
      %4129 = vmatmul.mubr.f32.gmra.mrb[0].mxu0 %v2803
      %v4130 = vpop.f32.mrb[0].mxu0
      %v4131 = vadd.f32 0.0, %v4130
      %v4132 = vpop.f32.mrb[0].mxu0
      %4133 = vmatprep.mubr.f32.mxu0 0.0
      %4134 = vmatmul.mubr.f32.gmra.mrb[0].mxu0 %v2806
      %v4135 = vpop.f32.mrb[0].mxu0
      %v4136 = vadd.f32 0.0, %v4135
      %v4137 = vpop.f32.mrb[0].mxu0
      %4138 = vmatprep.mubr.f32.mxu0 0.0
      %4139 = vmatmul.mubr.f32.gmra.mrb[0].mxu0 %v2809
      %v4140 = vpop.f32.mrb[0].mxu0
      %v4141 = vadd.f32 0.0, %v4140
      %v4142 = vpop.f32.mrb[0].mxu0
      %4143 = vmatprep.mubr.f32.mxu0 0.0
      %4144 = vmatmul.mubr.f32.gmra.mrb[0].mxu0 %v2812
      %v4145 = vpop.f32.mrb[0].mxu0
      %v4146 = vadd.f32 0.0, %v4145
      %v4147 = vpop.f32.mrb[0].mxu0
      %4148 = vmatprep.mubr.f32.mxu0 0.0
      %4149 = vmatmul.mubr.f32.gmra.mrb[0].mxu0 %v2815
      %v4150 = vpop.f32.mrb[0].mxu0
      %v4151 = vadd.f32 0.0, %v4150
      %v4152 = vpop.f32.mrb[0].mxu0
      %4153 = vmatprep.mubr.f32.mxu0 0.0
      %4154 = vmatmul.mubr.f32.gmra.mrb[0].mxu0 %v2818
      %v4155 = vpop.f32.mrb[0].mxu0
      %v4156 = vadd.f32 0.0, %v4155
      %v4157 = vpop.f32.mrb[0].mxu0
      %4158 = vmatprep.mubr.f32.mxu0 0.0
      %4159 = vmatmul.mubr.f32.gmra.mrb[0].mxu0 %v2821
      %v4160 = vpop.f32.mrb[0].mxu0
      %v4161 = vadd.f32 0.0, %v4160
      %v4162 = vpop.f32.mrb[0].mxu0
      %4163 = vmatprep.mubr.f32.mxu0 0.0
      %4164 = vmatmul.mubr.f32.gmra.mrb[0].mxu0 %v2824
      %v4165 = vpop.f32.mrb[0].mxu0
      %v4166 = vadd.f32 0.0, %v4165
      %v4167 = vpop.f32.mrb[0].mxu0
      %4168 = vmatprep.mubr.f32.mxu0 0.0
      %4169 = vmatmul.mubr.f32.gmra.mrb[0].mxu0 %v2827
      %v4170 = vpop.f32.mrb[0].mxu0
      %v4171 = vadd.f32 0.0, %v4170
      %v4172 = vpop.f32.mrb[0].mxu0
      %4173 = vmatprep.mubr.f32.mxu0 0.0
      %4174 = vmatmul.mubr.f32.gmra.mrb[0].mxu0 %v2830
      %v4175 = vpop.f32.mrb[0].mxu0
      %v4176 = vadd.f32 0.0, %v4175
      %v4177 = vpop.f32.mrb[0].mxu0
      %4178 = vmatprep.mubr.f32.mxu0 0.0
      %4179 = vmatmul.mubr.f32.gmra.mrb[0].mxu0 %v2833
      %v4180 = vpop.f32.mrb[0].mxu0
      %v4181 = vadd.f32 0.0, %v4180
      %v4182 = vpop.f32.mrb[0].mxu0
      %4183 = vmatprep.mubr.f32.mxu0 0.0
      %4184 = vmatmul.mubr.f32.gmra.mrb[0].mxu0 %v2836
      %v4185 = vpop.f32.mrb[0].mxu0
      %v4186 = vadd.f32 0.0, %v4185
      %v4187 = vpop.f32.mrb[0].mxu0
      %4188 = vmatprep.mubr.f32.mxu0 0.0
      %4189 = vmatmul.mubr.f32.gmra.mrb[0].mxu0 %v2839
      %v4190 = vpop.f32.mrb[0].mxu0
      %v4191 = vadd.f32 0.0, %v4190
      %v4192 = vpop.f32.mrb[0].mxu0
      %4193 = vmatprep.mubr.f32.mxu0 0.0
      %4194 = vmatmul.mubr.f32.gmra.mrb[0].mxu0 %v2842
      %v4195 = vpop.f32.mrb[0].mxu0
      %v4196 = vadd.f32 0.0, %v4195
      %v4197 = vpop.f32.mrb[0].mxu0
      %4198 = vmatprep.mubr.f32.mxu0 0.0
      %4199 = vmatmul.mubr.f32.gmra.mrb[0].mxu0 %v2845
      %v4200 = vpop.f32.mrb[0].mxu0
      %v4201 = vadd.f32 0.0, %v4200
      %v4202 = vpop.f32.mrb[0].mxu0
      %4203 = vmatprep.mubr.f32.mxu0 0.0
      %4204 = vmatmul.mubr.f32.gmra.mrb[0].mxu0 %v2848
      %v4205 = vpop.f32.mrb[0].mxu0
      %v4206 = vadd.f32 0.0, %v4205
      %v4207 = vpop.f32.mrb[0].mxu0
      %4208 = vmatprep.mubr.f32.mxu0 0.0
      %4209 = vmatmul.mubr.f32.gmra.mrb[0].mxu0 %v2851
      %v4210 = vpop.f32.mrb[0].mxu0
      %v4211 = vadd.f32 0.0, %v4210
      %v4212 = vpop.f32.mrb[0].mxu0
      %4213 = vmatprep.mubr.f32.mxu0 0.0
      %4214 = vmatmul.mubr.f32.gmra.mrb[0].mxu0 %v2854
      %v4215 = vpop.f32.mrb[0].mxu0
      %v4216 = vadd.f32 0.0, %v4215
      %v4217 = vpop.f32.mrb[0].mxu0
      %4218 = vmatprep.mubr.f32.mxu0 0.0
      %4219 = vmatmul.mubr.f32.gmra.mrb[0].mxu0 %v2857
      %v4220 = vpop.f32.mrb[0].mxu0
      %v4221 = vadd.f32 0.0, %v4220
      %v4222 = vpop.f32.mrb[0].mxu0
      %4223 = vdwg.mxu0
      %v4224 = vmul.f32 %v2125, %v4101
      %v4225 = vmul.f32 %v2130, %v4106
      %v4226 = vmul.f32 %v2135, %v4111
      %v4227 = vmul.f32 %v2140, %v4116
      %v4228 = vmul.f32 %v2145, %v4121
      %v4229 = vmul.f32 %v2150, %v4126
      %v4230 = vmul.f32 %v2155, %v4131
      %v4231 = vmul.f32 %v2160, %v4136
      %v4232 = vmul.f32 %v2165, %v4141
      %v4233 = vmul.f32 %v2170, %v4146
      %v4234 = vmul.f32 %v2175, %v4151
      %v4235 = vmul.f32 %v2180, %v4156
      %v4236 = vmul.f32 %v2185, %v4161
      %v4237 = vmul.f32 %v2190, %v4166
      %v4238 = vmul.f32 %v2195, %v4171
      %v4239 = vmul.f32 %v2200, %v4176
      %v4240 = vmul.f32 %v2205, %v4181
      %v4241 = vmul.f32 %v2210, %v4186
      %v4242 = vmul.f32 %v2215, %v4191
      %v4243 = vmul.f32 %v2220, %v4196
      %v4244 = vmul.f32 %v2225, %v4201
      %v4245 = vmul.f32 %v2230, %v4206
      %v4246 = vmul.f32 %v2235, %v4211
      %v4247 = vmul.f32 %v2240, %v4216
      %v4248 = vmul.f32 %v2245, %v4221
      %v4249 = vadd.f32 %v4009, %v4224
      %v4250 = vadd.f32 %v4010, %v4225
      %v4251 = vadd.f32 %v4011, %v4226
      %v4252 = vadd.f32 %v4012, %v4227
      %v4253 = vadd.f32 %v4013, %v4228
      %v4254 = vadd.f32 %v4014, %v4229
      %v4255 = vadd.f32 %v4015, %v4230
      %v4256 = vadd.f32 %v4016, %v4231
      %v4257 = vadd.f32 %v4017, %v4232
      %v4258 = vadd.f32 %v4018, %v4233
      %v4259 = vadd.f32 %v4019, %v4234
      %v4260 = vadd.f32 %v4020, %v4235
      %v4261 = vadd.f32 %v4021, %v4236
      %v4262 = vadd.f32 %v4022, %v4237
      %v4263 = vadd.f32 %v4023, %v4238
      %v4264 = vadd.f32 %v4024, %v4239
      %v4265 = vadd.f32 %v4025, %v4240
      %v4266 = vadd.f32 %v4026, %v4241
      %v4267 = vadd.f32 %v4027, %v4242
      %v4268 = vadd.f32 %v4028, %v4243
      %v4269 = vadd.f32 %v4029, %v4244
      %v4270 = vadd.f32 %v4030, %v4245
      %v4271 = vadd.f32 %v4031, %v4246
      %v4272 = vadd.f32 %v4032, %v4247
      %v4273 = vadd.f32 %v4033, %v4248
      %4274 = vmatprep.subr.mxu0 0.0
      %4275 = vmatpush1.msra.mxu0 %v2778
      %4276 = vmatprep.subr.mxu0 0.0
      %4277 = vmatpush1.msra.mxu0 0.0
      %4278 = vmatprep.subr.mxu0 0.0
      %4279 = vmatpush1.msra.mxu0 0.0
      %4280 = vmatprep.subr.mxu0 0.0
      %4281 = vmatpush1.msra.mxu0 0.0
      %4282 = vmatprep.subr.mxu0 0.0
      %4283 = vmatpush1.msra.mxu0 0.0
      %4284 = vmatprep.subr.mxu0 0.0
      %4285 = vmatpush1.msra.mxu0 0.0
      %4286 = vmatprep.subr.mxu0 0.0
      %4287 = vmatpush1.msra.mxu0 0.0
      %4288 = vmatprep.subr.mxu0 0.0
      %4289 = vmatpush1.msra.mxu0 0.0
      %4290 = vmatprep.subr.mxu0 0.0
      %4291 = vmatpush1.msra.mxu0 0.0
      %4292 = vmatprep.subr.mxu0 0.0
      %4293 = vmatpush1.msra.mxu0 0.0
      %4294 = vmatprep.subr.mxu0 0.0
      %4295 = vmatpush1.msra.mxu0 0.0
      %4296 = vmatprep.subr.mxu0 0.0
      %4297 = vmatpush1.msra.mxu0 0.0
      %4298 = vmatprep.subr.mxu0 0.0
      %4299 = vmatpush1.msra.mxu0 0.0
      %4300 = vmatprep.subr.mxu0 0.0
      %4301 = vmatpush1.msra.mxu0 0.0
      %4302 = vmatprep.subr.mxu0 0.0
      %4303 = vmatpush1.msra.mxu0 0.0
      %4304 = vmatprep.subr.mxu0 0.0
      %4305 = vmatpush1.msra.mxu0 0.0
      %4306 = vmatprep.subr.mxu0 0.0
      %4307 = vmatpush1.msra.mxu0 0.0
      %4308 = vmatprep.subr.mxu0 0.0
      %4309 = vmatpush1.msra.mxu0 0.0
      %4310 = vmatprep.subr.mxu0 0.0
      %4311 = vmatpush1.msra.mxu0 0.0
      %4312 = vmatprep.subr.mxu0 0.0
      %4313 = vmatpush1.msra.mxu0 0.0
      %4314 = vmatprep.subr.mxu0 0.0
      %4315 = vmatpush1.msra.mxu0 0.0
      %4316 = vmatprep.subr.mxu0 0.0
      %4317 = vmatpush1.msra.mxu0 0.0
      %4318 = vmatprep.subr.mxu0 0.0
      %4319 = vmatpush1.msra.mxu0 0.0
      %4320 = vmatprep.subr.mxu0 0.0
      %4321 = vmatpush1.msra.mxu0 0.0
      %4322 = vmatprep.subr.mxu0 0.0
      %4323 = vmatpush1.msra.mxu0 0.0
      %4324 = vmatprep.subr.mxu0 0.0
      %4325 = vmatpush1.msra.mxu0 0.0
      %4326 = vmatprep.subr.mxu0 0.0
      %4327 = vmatpush1.msra.mxu0 0.0
      %4328 = vmatprep.subr.mxu0 0.0
      %4329 = vmatpush1.msra.mxu0 0.0
      %4330 = vmatprep.subr.mxu0 0.0
      %4331 = vmatpush1.msra.mxu0 0.0
      %4332 = vmatprep.subr.mxu0 0.0
      %4333 = vmatpush1.msra.mxu0 0.0
      %4334 = vmatprep.subr.mxu0 0.0
      %4335 = vmatpush1.msra.mxu0 0.0
      %4336 = vmatprep.subr.mxu0 0.0
      %4337 = vmatpush1.msra.mxu0 0.0
      %4338 = vmatprep.mubr.f32.mxu0 0.0
      %4339 = vmatmul.mubr.f32.gmra.mrb[0].mxu0 %v2785
      %v4340 = vpop.f32.mrb[0].mxu0
      %v4341 = vadd.f32 0.0, %v4340
      %v4342 = vpop.f32.mrb[0].mxu0
      %4343 = vmatprep.mubr.f32.mxu0 0.0
      %4344 = vmatmul.mubr.f32.gmra.mrb[0].mxu0 %v2788
      %v4345 = vpop.f32.mrb[0].mxu0
      %v4346 = vadd.f32 0.0, %v4345
      %v4347 = vpop.f32.mrb[0].mxu0
      %4348 = vmatprep.mubr.f32.mxu0 0.0
      %4349 = vmatmul.mubr.f32.gmra.mrb[0].mxu0 %v2791
      %v4350 = vpop.f32.mrb[0].mxu0
      %v4351 = vadd.f32 0.0, %v4350
      %v4352 = vpop.f32.mrb[0].mxu0
      %4353 = vmatprep.mubr.f32.mxu0 0.0
      %4354 = vmatmul.mubr.f32.gmra.mrb[0].mxu0 %v2794
      %v4355 = vpop.f32.mrb[0].mxu0
      %v4356 = vadd.f32 0.0, %v4355
      %v4357 = vpop.f32.mrb[0].mxu0
      %4358 = vmatprep.mubr.f32.mxu0 0.0
      %4359 = vmatmul.mubr.f32.gmra.mrb[0].mxu0 %v2797
      %v4360 = vpop.f32.mrb[0].mxu0
      %v4361 = vadd.f32 0.0, %v4360
      %v4362 = vpop.f32.mrb[0].mxu0
      %4363 = vmatprep.mubr.f32.mxu0 0.0
      %4364 = vmatmul.mubr.f32.gmra.mrb[0].mxu0 %v2800
      %v4365 = vpop.f32.mrb[0].mxu0
      %v4366 = vadd.f32 0.0, %v4365
      %v4367 = vpop.f32.mrb[0].mxu0
      %4368 = vmatprep.mubr.f32.mxu0 0.0
      %4369 = vmatmul.mubr.f32.gmra.mrb[0].mxu0 %v2803
      %v4370 = vpop.f32.mrb[0].mxu0
      %v4371 = vadd.f32 0.0, %v4370
      %v4372 = vpop.f32.mrb[0].mxu0
      %4373 = vmatprep.mubr.f32.mxu0 0.0
      %4374 = vmatmul.mubr.f32.gmra.mrb[0].mxu0 %v2806
      %v4375 = vpop.f32.mrb[0].mxu0
      %v4376 = vadd.f32 0.0, %v4375
      %v4377 = vpop.f32.mrb[0].mxu0
      %4378 = vmatprep.mubr.f32.mxu0 0.0
      %4379 = vmatmul.mubr.f32.gmra.mrb[0].mxu0 %v2809
      %v4380 = vpop.f32.mrb[0].mxu0
      %v4381 = vadd.f32 0.0, %v4380
      %v4382 = vpop.f32.mrb[0].mxu0
      %4383 = vmatprep.mubr.f32.mxu0 0.0
      %4384 = vmatmul.mubr.f32.gmra.mrb[0].mxu0 %v2812
      %v4385 = vpop.f32.mrb[0].mxu0
      %v4386 = vadd.f32 0.0, %v4385
      %v4387 = vpop.f32.mrb[0].mxu0
      %4388 = vmatprep.mubr.f32.mxu0 0.0
      %4389 = vmatmul.mubr.f32.gmra.mrb[0].mxu0 %v2815
      %v4390 = vpop.f32.mrb[0].mxu0
      %v4391 = vadd.f32 0.0, %v4390
      %v4392 = vpop.f32.mrb[0].mxu0
      %4393 = vmatprep.mubr.f32.mxu0 0.0
      %4394 = vmatmul.mubr.f32.gmra.mrb[0].mxu0 %v2818
      %v4395 = vpop.f32.mrb[0].mxu0
      %v4396 = vadd.f32 0.0, %v4395
      %v4397 = vpop.f32.mrb[0].mxu0
      %4398 = vmatprep.mubr.f32.mxu0 0.0
      %4399 = vmatmul.mubr.f32.gmra.mrb[0].mxu0 %v2821
      %v4400 = vpop.f32.mrb[0].mxu0
      %v4401 = vadd.f32 0.0, %v4400
      %v4402 = vpop.f32.mrb[0].mxu0
      %4403 = vmatprep.mubr.f32.mxu0 0.0
      %4404 = vmatmul.mubr.f32.gmra.mrb[0].mxu0 %v2824
      %v4405 = vpop.f32.mrb[0].mxu0
      %v4406 = vadd.f32 0.0, %v4405
      %v4407 = vpop.f32.mrb[0].mxu0
      %4408 = vmatprep.mubr.f32.mxu0 0.0
      %4409 = vmatmul.mubr.f32.gmra.mrb[0].mxu0 %v2827
      %v4410 = vpop.f32.mrb[0].mxu0
      %v4411 = vadd.f32 0.0, %v4410
      %v4412 = vpop.f32.mrb[0].mxu0
      %4413 = vmatprep.mubr.f32.mxu0 0.0
      %4414 = vmatmul.mubr.f32.gmra.mrb[0].mxu0 %v2830
      %v4415 = vpop.f32.mrb[0].mxu0
      %v4416 = vadd.f32 0.0, %v4415
      %v4417 = vpop.f32.mrb[0].mxu0
      %4418 = vmatprep.mubr.f32.mxu0 0.0
      %4419 = vmatmul.mubr.f32.gmra.mrb[0].mxu0 %v2833
      %v4420 = vpop.f32.mrb[0].mxu0
      %v4421 = vadd.f32 0.0, %v4420
      %v4422 = vpop.f32.mrb[0].mxu0
      %4423 = vmatprep.mubr.f32.mxu0 0.0
      %4424 = vmatmul.mubr.f32.gmra.mrb[0].mxu0 %v2836
      %v4425 = vpop.f32.mrb[0].mxu0
      %v4426 = vadd.f32 0.0, %v4425
      %v4427 = vpop.f32.mrb[0].mxu0
      %4428 = vmatprep.mubr.f32.mxu0 0.0
      %4429 = vmatmul.mubr.f32.gmra.mrb[0].mxu0 %v2839
      %v4430 = vpop.f32.mrb[0].mxu0
      %v4431 = vadd.f32 0.0, %v4430
      %v4432 = vpop.f32.mrb[0].mxu0
      %4433 = vmatprep.mubr.f32.mxu0 0.0
      %4434 = vmatmul.mubr.f32.gmra.mrb[0].mxu0 %v2842
      %v4435 = vpop.f32.mrb[0].mxu0
      %v4436 = vadd.f32 0.0, %v4435
      %v4437 = vpop.f32.mrb[0].mxu0
      %4438 = vmatprep.mubr.f32.mxu0 0.0
      %4439 = vmatmul.mubr.f32.gmra.mrb[0].mxu0 %v2845
      %v4440 = vpop.f32.mrb[0].mxu0
      %v4441 = vadd.f32 0.0, %v4440
      %v4442 = vpop.f32.mrb[0].mxu0
      %4443 = vmatprep.mubr.f32.mxu0 0.0
      %4444 = vmatmul.mubr.f32.gmra.mrb[0].mxu0 %v2848
      %v4445 = vpop.f32.mrb[0].mxu0
      %v4446 = vadd.f32 0.0, %v4445
      %v4447 = vpop.f32.mrb[0].mxu0
      %4448 = vmatprep.mubr.f32.mxu0 0.0
      %4449 = vmatmul.mubr.f32.gmra.mrb[0].mxu0 %v2851
      %v4450 = vpop.f32.mrb[0].mxu0
      %v4451 = vadd.f32 0.0, %v4450
      %v4452 = vpop.f32.mrb[0].mxu0
      %4453 = vmatprep.mubr.f32.mxu0 0.0
      %4454 = vmatmul.mubr.f32.gmra.mrb[0].mxu0 %v2854
      %v4455 = vpop.f32.mrb[0].mxu0
      %v4456 = vadd.f32 0.0, %v4455
      %v4457 = vpop.f32.mrb[0].mxu0
      %4458 = vmatprep.mubr.f32.mxu0 0.0
      %4459 = vmatmul.mubr.f32.gmra.mrb[0].mxu0 %v2857
      %v4460 = vpop.f32.mrb[0].mxu0
      %v4461 = vadd.f32 0.0, %v4460
      %v4462 = vpop.f32.mrb[0].mxu0
      %4463 = vdwg.mxu0
      %v4464 = vmul.f32 %v2250, %v4341
      %v4465 = vmul.f32 %v2255, %v4346
      %v4466 = vmul.f32 %v2260, %v4351
      %v4467 = vmul.f32 %v2265, %v4356
      %v4468 = vmul.f32 %v2270, %v4361
      %v4469 = vmul.f32 %v2275, %v4366
      %v4470 = vmul.f32 %v2280, %v4371
      %v4471 = vmul.f32 %v2285, %v4376
      %v4472 = vmul.f32 %v2290, %v4381
      %v4473 = vmul.f32 %v2295, %v4386
      %v4474 = vmul.f32 %v2300, %v4391
      %v4475 = vmul.f32 %v2305, %v4396
      %v4476 = vmul.f32 %v2310, %v4401
      %v4477 = vmul.f32 %v2315, %v4406
      %v4478 = vmul.f32 %v2320, %v4411
      %v4479 = vmul.f32 %v2325, %v4416
      %v4480 = vmul.f32 %v2330, %v4421
      %v4481 = vmul.f32 %v2335, %v4426
      %v4482 = vmul.f32 %v2340, %v4431
      %v4483 = vmul.f32 %v2345, %v4436
      %v4484 = vmul.f32 %v2350, %v4441
      %v4485 = vmul.f32 %v2355, %v4446
      %v4486 = vmul.f32 %v2360, %v4451
      %v4487 = vmul.f32 %v2365, %v4456
      %v4488 = vmul.f32 %v2370, %v4461
      %v4489 = vadd.f32 %v4249, %v4464
      %v4490 = vadd.f32 %v4250, %v4465
      %v4491 = vadd.f32 %v4251, %v4466
      %v4492 = vadd.f32 %v4252, %v4467
      %v4493 = vadd.f32 %v4253, %v4468
      %v4494 = vadd.f32 %v4254, %v4469
      %v4495 = vadd.f32 %v4255, %v4470
      %v4496 = vadd.f32 %v4256, %v4471
      %v4497 = vadd.f32 %v4257, %v4472
      %v4498 = vadd.f32 %v4258, %v4473
      %v4499 = vadd.f32 %v4259, %v4474
      %v4500 = vadd.f32 %v4260, %v4475
      %v4501 = vadd.f32 %v4261, %v4476
      %v4502 = vadd.f32 %v4262, %v4477
      %v4503 = vadd.f32 %v4263, %v4478
      %v4504 = vadd.f32 %v4264, %v4479
      %v4505 = vadd.f32 %v4265, %v4480
      %v4506 = vadd.f32 %v4266, %v4481
      %v4507 = vadd.f32 %v4267, %v4482
      %v4508 = vadd.f32 %v4268, %v4483
      %v4509 = vadd.f32 %v4269, %v4484
      %v4510 = vadd.f32 %v4270, %v4485
      %v4511 = vadd.f32 %v4271, %v4486
      %v4512 = vadd.f32 %v4272, %v4487
      %v4513 = vadd.f32 %v4273, %v4488
      %4514 = vmatprep.subr.mxu0 0.0
      %4515 = vmatpush1.msra.mxu0 %v2779
      %4516 = vmatprep.subr.mxu0 0.0
      %4517 = vmatpush1.msra.mxu0 0.0
      %4518 = vmatprep.subr.mxu0 0.0
      %4519 = vmatpush1.msra.mxu0 0.0
      %4520 = vmatprep.subr.mxu0 0.0
      %4521 = vmatpush1.msra.mxu0 0.0
      %4522 = vmatprep.subr.mxu0 0.0
      %4523 = vmatpush1.msra.mxu0 0.0
      %4524 = vmatprep.subr.mxu0 0.0
      %4525 = vmatpush1.msra.mxu0 0.0
      %4526 = vmatprep.subr.mxu0 0.0
      %4527 = vmatpush1.msra.mxu0 0.0
      %4528 = vmatprep.subr.mxu0 0.0
      %4529 = vmatpush1.msra.mxu0 0.0
      %4530 = vmatprep.subr.mxu0 0.0
      %4531 = vmatpush1.msra.mxu0 0.0
      %4532 = vmatprep.subr.mxu0 0.0
      %4533 = vmatpush1.msra.mxu0 0.0
      %4534 = vmatprep.subr.mxu0 0.0
      %4535 = vmatpush1.msra.mxu0 0.0
      %4536 = vmatprep.subr.mxu0 0.0
      %4537 = vmatpush1.msra.mxu0 0.0
      %4538 = vmatprep.subr.mxu0 0.0
      %4539 = vmatpush1.msra.mxu0 0.0
      %4540 = vmatprep.subr.mxu0 0.0
      %4541 = vmatpush1.msra.mxu0 0.0
      %4542 = vmatprep.subr.mxu0 0.0
      %4543 = vmatpush1.msra.mxu0 0.0
      %4544 = vmatprep.subr.mxu0 0.0
      %4545 = vmatpush1.msra.mxu0 0.0
      %4546 = vmatprep.subr.mxu0 0.0
      %4547 = vmatpush1.msra.mxu0 0.0
      %4548 = vmatprep.subr.mxu0 0.0
      %4549 = vmatpush1.msra.mxu0 0.0
      %4550 = vmatprep.subr.mxu0 0.0
      %4551 = vmatpush1.msra.mxu0 0.0
      %4552 = vmatprep.subr.mxu0 0.0
      %4553 = vmatpush1.msra.mxu0 0.0
      %4554 = vmatprep.subr.mxu0 0.0
      %4555 = vmatpush1.msra.mxu0 0.0
      %4556 = vmatprep.subr.mxu0 0.0
      %4557 = vmatpush1.msra.mxu0 0.0
      %4558 = vmatprep.subr.mxu0 0.0
      %4559 = vmatpush1.msra.mxu0 0.0
      %4560 = vmatprep.subr.mxu0 0.0
      %4561 = vmatpush1.msra.mxu0 0.0
      %4562 = vmatprep.subr.mxu0 0.0
      %4563 = vmatpush1.msra.mxu0 0.0
      %4564 = vmatprep.subr.mxu0 0.0
      %4565 = vmatpush1.msra.mxu0 0.0
      %4566 = vmatprep.subr.mxu0 0.0
      %4567 = vmatpush1.msra.mxu0 0.0
      %4568 = vmatprep.subr.mxu0 0.0
      %4569 = vmatpush1.msra.mxu0 0.0
      %4570 = vmatprep.subr.mxu0 0.0
      %4571 = vmatpush1.msra.mxu0 0.0
      %4572 = vmatprep.subr.mxu0 0.0
      %4573 = vmatpush1.msra.mxu0 0.0
      %4574 = vmatprep.subr.mxu0 0.0
      %4575 = vmatpush1.msra.mxu0 0.0
      %4576 = vmatprep.subr.mxu0 0.0
      %4577 = vmatpush1.msra.mxu0 0.0
      %4578 = vmatprep.mubr.f32.mxu0 0.0
      %4579 = vmatmul.mubr.f32.gmra.mrb[0].mxu0 %v2785
      %v4580 = vpop.f32.mrb[0].mxu0
      %v4581 = vadd.f32 0.0, %v4580
      %v4582 = vpop.f32.mrb[0].mxu0
      %4583 = vmatprep.mubr.f32.mxu0 0.0
      %4584 = vmatmul.mubr.f32.gmra.mrb[0].mxu0 %v2788
      %v4585 = vpop.f32.mrb[0].mxu0
      %v4586 = vadd.f32 0.0, %v4585
      %v4587 = vpop.f32.mrb[0].mxu0
      %4588 = vmatprep.mubr.f32.mxu0 0.0
      %4589 = vmatmul.mubr.f32.gmra.mrb[0].mxu0 %v2791
      %v4590 = vpop.f32.mrb[0].mxu0
      %v4591 = vadd.f32 0.0, %v4590
      %v4592 = vpop.f32.mrb[0].mxu0
      %4593 = vmatprep.mubr.f32.mxu0 0.0
      %4594 = vmatmul.mubr.f32.gmra.mrb[0].mxu0 %v2794
      %v4595 = vpop.f32.mrb[0].mxu0
      %v4596 = vadd.f32 0.0, %v4595
      %v4597 = vpop.f32.mrb[0].mxu0
      %4598 = vmatprep.mubr.f32.mxu0 0.0
      %4599 = vmatmul.mubr.f32.gmra.mrb[0].mxu0 %v2797
      %v4600 = vpop.f32.mrb[0].mxu0
      %v4601 = vadd.f32 0.0, %v4600
      %v4602 = vpop.f32.mrb[0].mxu0
      %4603 = vmatprep.mubr.f32.mxu0 0.0
      %4604 = vmatmul.mubr.f32.gmra.mrb[0].mxu0 %v2800
      %v4605 = vpop.f32.mrb[0].mxu0
      %v4606 = vadd.f32 0.0, %v4605
      %v4607 = vpop.f32.mrb[0].mxu0
      %4608 = vmatprep.mubr.f32.mxu0 0.0
      %4609 = vmatmul.mubr.f32.gmra.mrb[0].mxu0 %v2803
      %v4610 = vpop.f32.mrb[0].mxu0
      %v4611 = vadd.f32 0.0, %v4610
      %v4612 = vpop.f32.mrb[0].mxu0
      %4613 = vmatprep.mubr.f32.mxu0 0.0
      %4614 = vmatmul.mubr.f32.gmra.mrb[0].mxu0 %v2806
      %v4615 = vpop.f32.mrb[0].mxu0
      %v4616 = vadd.f32 0.0, %v4615
      %v4617 = vpop.f32.mrb[0].mxu0
      %4618 = vmatprep.mubr.f32.mxu0 0.0
      %4619 = vmatmul.mubr.f32.gmra.mrb[0].mxu0 %v2809
      %v4620 = vpop.f32.mrb[0].mxu0
      %v4621 = vadd.f32 0.0, %v4620
      %v4622 = vpop.f32.mrb[0].mxu0
      %4623 = vmatprep.mubr.f32.mxu0 0.0
      %4624 = vmatmul.mubr.f32.gmra.mrb[0].mxu0 %v2812
      %v4625 = vpop.f32.mrb[0].mxu0
      %v4626 = vadd.f32 0.0, %v4625
      %v4627 = vpop.f32.mrb[0].mxu0
      %4628 = vmatprep.mubr.f32.mxu0 0.0
      %4629 = vmatmul.mubr.f32.gmra.mrb[0].mxu0 %v2815
      %v4630 = vpop.f32.mrb[0].mxu0
      %v4631 = vadd.f32 0.0, %v4630
      %v4632 = vpop.f32.mrb[0].mxu0
      %4633 = vmatprep.mubr.f32.mxu0 0.0
      %4634 = vmatmul.mubr.f32.gmra.mrb[0].mxu0 %v2818
      %v4635 = vpop.f32.mrb[0].mxu0
      %v4636 = vadd.f32 0.0, %v4635
      %v4637 = vpop.f32.mrb[0].mxu0
      %4638 = vmatprep.mubr.f32.mxu0 0.0
      %4639 = vmatmul.mubr.f32.gmra.mrb[0].mxu0 %v2821
      %v4640 = vpop.f32.mrb[0].mxu0
      %v4641 = vadd.f32 0.0, %v4640
      %v4642 = vpop.f32.mrb[0].mxu0
      %4643 = vmatprep.mubr.f32.mxu0 0.0
      %4644 = vmatmul.mubr.f32.gmra.mrb[0].mxu0 %v2824
      %v4645 = vpop.f32.mrb[0].mxu0
      %v4646 = vadd.f32 0.0, %v4645
      %v4647 = vpop.f32.mrb[0].mxu0
      %4648 = vmatprep.mubr.f32.mxu0 0.0
      %4649 = vmatmul.mubr.f32.gmra.mrb[0].mxu0 %v2827
      %v4650 = vpop.f32.mrb[0].mxu0
      %v4651 = vadd.f32 0.0, %v4650
      %v4652 = vpop.f32.mrb[0].mxu0
      %4653 = vmatprep.mubr.f32.mxu0 0.0
      %4654 = vmatmul.mubr.f32.gmra.mrb[0].mxu0 %v2830
      %v4655 = vpop.f32.mrb[0].mxu0
      %v4656 = vadd.f32 0.0, %v4655
      %v4657 = vpop.f32.mrb[0].mxu0
      %4658 = vmatprep.mubr.f32.mxu0 0.0
      %4659 = vmatmul.mubr.f32.gmra.mrb[0].mxu0 %v2833
      %v4660 = vpop.f32.mrb[0].mxu0
      %v4661 = vadd.f32 0.0, %v4660
      %v4662 = vpop.f32.mrb[0].mxu0
      %4663 = vmatprep.mubr.f32.mxu0 0.0
      %4664 = vmatmul.mubr.f32.gmra.mrb[0].mxu0 %v2836
      %v4665 = vpop.f32.mrb[0].mxu0
      %v4666 = vadd.f32 0.0, %v4665
      %v4667 = vpop.f32.mrb[0].mxu0
      %4668 = vmatprep.mubr.f32.mxu0 0.0
      %4669 = vmatmul.mubr.f32.gmra.mrb[0].mxu0 %v2839
      %v4670 = vpop.f32.mrb[0].mxu0
      %v4671 = vadd.f32 0.0, %v4670
      %v4672 = vpop.f32.mrb[0].mxu0
      %4673 = vmatprep.mubr.f32.mxu0 0.0
      %4674 = vmatmul.mubr.f32.gmra.mrb[0].mxu0 %v2842
      %v4675 = vpop.f32.mrb[0].mxu0
      %v4676 = vadd.f32 0.0, %v4675
      %v4677 = vpop.f32.mrb[0].mxu0
      %4678 = vmatprep.mubr.f32.mxu0 0.0
      %4679 = vmatmul.mubr.f32.gmra.mrb[0].mxu0 %v2845
      %v4680 = vpop.f32.mrb[0].mxu0
      %v4681 = vadd.f32 0.0, %v4680
      %v4682 = vpop.f32.mrb[0].mxu0
      %4683 = vmatprep.mubr.f32.mxu0 0.0
      %4684 = vmatmul.mubr.f32.gmra.mrb[0].mxu0 %v2848
      %v4685 = vpop.f32.mrb[0].mxu0
      %v4686 = vadd.f32 0.0, %v4685
      %v4687 = vpop.f32.mrb[0].mxu0
      %4688 = vmatprep.mubr.f32.mxu0 0.0
      %4689 = vmatmul.mubr.f32.gmra.mrb[0].mxu0 %v2851
      %v4690 = vpop.f32.mrb[0].mxu0
      %v4691 = vadd.f32 0.0, %v4690
      %v4692 = vpop.f32.mrb[0].mxu0
      %4693 = vmatprep.mubr.f32.mxu0 0.0
      %4694 = vmatmul.mubr.f32.gmra.mrb[0].mxu0 %v2854
      %v4695 = vpop.f32.mrb[0].mxu0
      %v4696 = vadd.f32 0.0, %v4695
      %v4697 = vpop.f32.mrb[0].mxu0
      %4698 = vmatprep.mubr.f32.mxu0 0.0
      %4699 = vmatmul.mubr.f32.gmra.mrb[0].mxu0 %v2857
      %v4700 = vpop.f32.mrb[0].mxu0
      %v4701 = vadd.f32 0.0, %v4700
      %v4702 = vpop.f32.mrb[0].mxu0
      %4703 = vdwg.mxu0
      %v4704 = vmul.f32 %v2375, %v4581
      %v4705 = vmul.f32 %v2380, %v4586
      %v4706 = vmul.f32 %v2385, %v4591
      %v4707 = vmul.f32 %v2390, %v4596
      %v4708 = vmul.f32 %v2395, %v4601
      %v4709 = vmul.f32 %v2400, %v4606
      %v4710 = vmul.f32 %v2405, %v4611
      %v4711 = vmul.f32 %v2410, %v4616
      %v4712 = vmul.f32 %v2415, %v4621
      %v4713 = vmul.f32 %v2420, %v4626
      %v4714 = vmul.f32 %v2425, %v4631
      %v4715 = vmul.f32 %v2430, %v4636
      %v4716 = vmul.f32 %v2435, %v4641
      %v4717 = vmul.f32 %v2440, %v4646
      %v4718 = vmul.f32 %v2445, %v4651
      %v4719 = vmul.f32 %v2450, %v4656
      %v4720 = vmul.f32 %v2455, %v4661
      %v4721 = vmul.f32 %v2460, %v4666
      %v4722 = vmul.f32 %v2465, %v4671
      %v4723 = vmul.f32 %v2470, %v4676
      %v4724 = vmul.f32 %v2475, %v4681
      %v4725 = vmul.f32 %v2480, %v4686
      %v4726 = vmul.f32 %v2485, %v4691
      %v4727 = vmul.f32 %v2490, %v4696
      %v4728 = vmul.f32 %v2495, %v4701
      %v4729 = vadd.f32 %v4489, %v4704
      %v4730 = vadd.f32 %v4490, %v4705
      %v4731 = vadd.f32 %v4491, %v4706
      %v4732 = vadd.f32 %v4492, %v4707
      %v4733 = vadd.f32 %v4493, %v4708
      %v4734 = vadd.f32 %v4494, %v4709
      %v4735 = vadd.f32 %v4495, %v4710
      %v4736 = vadd.f32 %v4496, %v4711
      %v4737 = vadd.f32 %v4497, %v4712
      %v4738 = vadd.f32 %v4498, %v4713
      %v4739 = vadd.f32 %v4499, %v4714
      %v4740 = vadd.f32 %v4500, %v4715
      %v4741 = vadd.f32 %v4501, %v4716
      %v4742 = vadd.f32 %v4502, %v4717
      %v4743 = vadd.f32 %v4503, %v4718
      %v4744 = vadd.f32 %v4504, %v4719
      %v4745 = vadd.f32 %v4505, %v4720
      %v4746 = vadd.f32 %v4506, %v4721
      %v4747 = vadd.f32 %v4507, %v4722
      %v4748 = vadd.f32 %v4508, %v4723
      %v4749 = vadd.f32 %v4509, %v4724
      %v4750 = vadd.f32 %v4510, %v4725
      %v4751 = vadd.f32 %v4511, %v4726
      %v4752 = vadd.f32 %v4512, %v4727
      %v4753 = vadd.f32 %v4513, %v4728
      %4754 = vmatprep.subr.mxu0 0.0
      %4755 = vmatpush1.msra.mxu0 %v2780
      %4756 = vmatprep.subr.mxu0 0.0
      %4757 = vmatpush1.msra.mxu0 0.0
      %4758 = vmatprep.subr.mxu0 0.0
      %4759 = vmatpush1.msra.mxu0 0.0
      %4760 = vmatprep.subr.mxu0 0.0
      %4761 = vmatpush1.msra.mxu0 0.0
      %4762 = vmatprep.subr.mxu0 0.0
      %4763 = vmatpush1.msra.mxu0 0.0
      %4764 = vmatprep.subr.mxu0 0.0
      %4765 = vmatpush1.msra.mxu0 0.0
      %4766 = vmatprep.subr.mxu0 0.0
      %4767 = vmatpush1.msra.mxu0 0.0
      %4768 = vmatprep.subr.mxu0 0.0
      %4769 = vmatpush1.msra.mxu0 0.0
      %4770 = vmatprep.subr.mxu0 0.0
      %4771 = vmatpush1.msra.mxu0 0.0
      %4772 = vmatprep.subr.mxu0 0.0
      %4773 = vmatpush1.msra.mxu0 0.0
      %4774 = vmatprep.subr.mxu0 0.0
      %4775 = vmatpush1.msra.mxu0 0.0
      %4776 = vmatprep.subr.mxu0 0.0
      %4777 = vmatpush1.msra.mxu0 0.0
      %4778 = vmatprep.subr.mxu0 0.0
      %4779 = vmatpush1.msra.mxu0 0.0
      %4780 = vmatprep.subr.mxu0 0.0
      %4781 = vmatpush1.msra.mxu0 0.0
      %4782 = vmatprep.subr.mxu0 0.0
      %4783 = vmatpush1.msra.mxu0 0.0
      %4784 = vmatprep.subr.mxu0 0.0
      %4785 = vmatpush1.msra.mxu0 0.0
      %4786 = vmatprep.subr.mxu0 0.0
      %4787 = vmatpush1.msra.mxu0 0.0
      %4788 = vmatprep.subr.mxu0 0.0
      %4789 = vmatpush1.msra.mxu0 0.0
      %4790 = vmatprep.subr.mxu0 0.0
      %4791 = vmatpush1.msra.mxu0 0.0
      %4792 = vmatprep.subr.mxu0 0.0
      %4793 = vmatpush1.msra.mxu0 0.0
      %4794 = vmatprep.subr.mxu0 0.0
      %4795 = vmatpush1.msra.mxu0 0.0
      %4796 = vmatprep.subr.mxu0 0.0
      %4797 = vmatpush1.msra.mxu0 0.0
      %4798 = vmatprep.subr.mxu0 0.0
      %4799 = vmatpush1.msra.mxu0 0.0
      %4800 = vmatprep.subr.mxu0 0.0
      %4801 = vmatpush1.msra.mxu0 0.0
      %4802 = vmatprep.subr.mxu0 0.0
      %4803 = vmatpush1.msra.mxu0 0.0
      %4804 = vmatprep.subr.mxu0 0.0
      %4805 = vmatpush1.msra.mxu0 0.0
      %4806 = vmatprep.subr.mxu0 0.0
      %4807 = vmatpush1.msra.mxu0 0.0
      %4808 = vmatprep.subr.mxu0 0.0
      %4809 = vmatpush1.msra.mxu0 0.0
      %4810 = vmatprep.subr.mxu0 0.0
      %4811 = vmatpush1.msra.mxu0 0.0
      %4812 = vmatprep.subr.mxu0 0.0
      %4813 = vmatpush1.msra.mxu0 0.0
      %4814 = vmatprep.subr.mxu0 0.0
      %4815 = vmatpush1.msra.mxu0 0.0
      %4816 = vmatprep.subr.mxu0 0.0
      %4817 = vmatpush1.msra.mxu0 0.0
      %4818 = vmatprep.mubr.f32.mxu0 0.0
      %4819 = vmatmul.mubr.f32.gmra.mrb[0].mxu0 %v2785
      %v4820 = vpop.f32.mrb[0].mxu0
      %v4821 = vadd.f32 0.0, %v4820
      %v4822 = vpop.f32.mrb[0].mxu0
      %4823 = vmatprep.mubr.f32.mxu0 0.0
      %4824 = vmatmul.mubr.f32.gmra.mrb[0].mxu0 %v2788
      %v4825 = vpop.f32.mrb[0].mxu0
      %v4826 = vadd.f32 0.0, %v4825
      %v4827 = vpop.f32.mrb[0].mxu0
      %4828 = vmatprep.mubr.f32.mxu0 0.0
      %4829 = vmatmul.mubr.f32.gmra.mrb[0].mxu0 %v2791
      %v4830 = vpop.f32.mrb[0].mxu0
      %v4831 = vadd.f32 0.0, %v4830
      %v4832 = vpop.f32.mrb[0].mxu0
      %4833 = vmatprep.mubr.f32.mxu0 0.0
      %4834 = vmatmul.mubr.f32.gmra.mrb[0].mxu0 %v2794
      %v4835 = vpop.f32.mrb[0].mxu0
      %v4836 = vadd.f32 0.0, %v4835
      %v4837 = vpop.f32.mrb[0].mxu0
      %4838 = vmatprep.mubr.f32.mxu0 0.0
      %4839 = vmatmul.mubr.f32.gmra.mrb[0].mxu0 %v2797
      %v4840 = vpop.f32.mrb[0].mxu0
      %v4841 = vadd.f32 0.0, %v4840
      %v4842 = vpop.f32.mrb[0].mxu0
      %4843 = vmatprep.mubr.f32.mxu0 0.0
      %4844 = vmatmul.mubr.f32.gmra.mrb[0].mxu0 %v2800
      %v4845 = vpop.f32.mrb[0].mxu0
      %v4846 = vadd.f32 0.0, %v4845
      %v4847 = vpop.f32.mrb[0].mxu0
      %4848 = vmatprep.mubr.f32.mxu0 0.0
      %4849 = vmatmul.mubr.f32.gmra.mrb[0].mxu0 %v2803
      %v4850 = vpop.f32.mrb[0].mxu0
      %v4851 = vadd.f32 0.0, %v4850
      %v4852 = vpop.f32.mrb[0].mxu0
      %4853 = vmatprep.mubr.f32.mxu0 0.0
      %4854 = vmatmul.mubr.f32.gmra.mrb[0].mxu0 %v2806
      %v4855 = vpop.f32.mrb[0].mxu0
      %v4856 = vadd.f32 0.0, %v4855
      %v4857 = vpop.f32.mrb[0].mxu0
      %4858 = vmatprep.mubr.f32.mxu0 0.0
      %4859 = vmatmul.mubr.f32.gmra.mrb[0].mxu0 %v2809
      %v4860 = vpop.f32.mrb[0].mxu0
      %v4861 = vadd.f32 0.0, %v4860
      %v4862 = vpop.f32.mrb[0].mxu0
      %4863 = vmatprep.mubr.f32.mxu0 0.0
      %4864 = vmatmul.mubr.f32.gmra.mrb[0].mxu0 %v2812
      %v4865 = vpop.f32.mrb[0].mxu0
      %v4866 = vadd.f32 0.0, %v4865
      %v4867 = vpop.f32.mrb[0].mxu0
      %4868 = vmatprep.mubr.f32.mxu0 0.0
      %4869 = vmatmul.mubr.f32.gmra.mrb[0].mxu0 %v2815
      %v4870 = vpop.f32.mrb[0].mxu0
      %v4871 = vadd.f32 0.0, %v4870
      %v4872 = vpop.f32.mrb[0].mxu0
      %4873 = vmatprep.mubr.f32.mxu0 0.0
      %4874 = vmatmul.mubr.f32.gmra.mrb[0].mxu0 %v2818
      %v4875 = vpop.f32.mrb[0].mxu0
      %v4876 = vadd.f32 0.0, %v4875
      %v4877 = vpop.f32.mrb[0].mxu0
      %4878 = vmatprep.mubr.f32.mxu0 0.0
      %4879 = vmatmul.mubr.f32.gmra.mrb[0].mxu0 %v2821
      %v4880 = vpop.f32.mrb[0].mxu0
      %v4881 = vadd.f32 0.0, %v4880
      %v4882 = vpop.f32.mrb[0].mxu0
      %4883 = vmatprep.mubr.f32.mxu0 0.0
      %4884 = vmatmul.mubr.f32.gmra.mrb[0].mxu0 %v2824
      %v4885 = vpop.f32.mrb[0].mxu0
      %v4886 = vadd.f32 0.0, %v4885
      %v4887 = vpop.f32.mrb[0].mxu0
      %4888 = vmatprep.mubr.f32.mxu0 0.0
      %4889 = vmatmul.mubr.f32.gmra.mrb[0].mxu0 %v2827
      %v4890 = vpop.f32.mrb[0].mxu0
      %v4891 = vadd.f32 0.0, %v4890
      %v4892 = vpop.f32.mrb[0].mxu0
      %4893 = vmatprep.mubr.f32.mxu0 0.0
      %4894 = vmatmul.mubr.f32.gmra.mrb[0].mxu0 %v2830
      %v4895 = vpop.f32.mrb[0].mxu0
      %v4896 = vadd.f32 0.0, %v4895
      %v4897 = vpop.f32.mrb[0].mxu0
      %4898 = vmatprep.mubr.f32.mxu0 0.0
      %4899 = vmatmul.mubr.f32.gmra.mrb[0].mxu0 %v2833
      %v4900 = vpop.f32.mrb[0].mxu0
      %v4901 = vadd.f32 0.0, %v4900
      %v4902 = vpop.f32.mrb[0].mxu0
      %4903 = vmatprep.mubr.f32.mxu0 0.0
      %4904 = vmatmul.mubr.f32.gmra.mrb[0].mxu0 %v2836
      %v4905 = vpop.f32.mrb[0].mxu0
      %v4906 = vadd.f32 0.0, %v4905
      %v4907 = vpop.f32.mrb[0].mxu0
      %4908 = vmatprep.mubr.f32.mxu0 0.0
      %4909 = vmatmul.mubr.f32.gmra.mrb[0].mxu0 %v2839
      %v4910 = vpop.f32.mrb[0].mxu0
      %v4911 = vadd.f32 0.0, %v4910
      %v4912 = vpop.f32.mrb[0].mxu0
      %4913 = vmatprep.mubr.f32.mxu0 0.0
      %4914 = vmatmul.mubr.f32.gmra.mrb[0].mxu0 %v2842
      %v4915 = vpop.f32.mrb[0].mxu0
      %v4916 = vadd.f32 0.0, %v4915
      %v4917 = vpop.f32.mrb[0].mxu0
      %4918 = vmatprep.mubr.f32.mxu0 0.0
      %4919 = vmatmul.mubr.f32.gmra.mrb[0].mxu0 %v2845
      %v4920 = vpop.f32.mrb[0].mxu0
      %v4921 = vadd.f32 0.0, %v4920
      %v4922 = vpop.f32.mrb[0].mxu0
      %4923 = vmatprep.mubr.f32.mxu0 0.0
      %4924 = vmatmul.mubr.f32.gmra.mrb[0].mxu0 %v2848
      %v4925 = vpop.f32.mrb[0].mxu0
      %v4926 = vadd.f32 0.0, %v4925
      %v4927 = vpop.f32.mrb[0].mxu0
      %4928 = vmatprep.mubr.f32.mxu0 0.0
      %4929 = vmatmul.mubr.f32.gmra.mrb[0].mxu0 %v2851
      %v4930 = vpop.f32.mrb[0].mxu0
      %v4931 = vadd.f32 0.0, %v4930
      %v4932 = vpop.f32.mrb[0].mxu0
      %4933 = vmatprep.mubr.f32.mxu0 0.0
      %4934 = vmatmul.mubr.f32.gmra.mrb[0].mxu0 %v2854
      %v4935 = vpop.f32.mrb[0].mxu0
      %v4936 = vadd.f32 0.0, %v4935
      %v4937 = vpop.f32.mrb[0].mxu0
      %4938 = vmatprep.mubr.f32.mxu0 0.0
      %4939 = vmatmul.mubr.f32.gmra.mrb[0].mxu0 %v2857
      %v4940 = vpop.f32.mrb[0].mxu0
      %v4941 = vadd.f32 0.0, %v4940
      %v4942 = vpop.f32.mrb[0].mxu0
      %4943 = vdwg.mxu0
      %v4944 = vmul.f32 %v2500, %v4821
      %v4945 = vmul.f32 %v2505, %v4826
      %v4946 = vmul.f32 %v2510, %v4831
      %v4947 = vmul.f32 %v2515, %v4836
      %v4948 = vmul.f32 %v2520, %v4841
      %v4949 = vmul.f32 %v2525, %v4846
      %v4950 = vmul.f32 %v2530, %v4851
      %v4951 = vmul.f32 %v2535, %v4856
      %v4952 = vmul.f32 %v2540, %v4861
      %v4953 = vmul.f32 %v2545, %v4866
      %v4954 = vmul.f32 %v2550, %v4871
      %v4955 = vmul.f32 %v2555, %v4876
      %v4956 = vmul.f32 %v2560, %v4881
      %v4957 = vmul.f32 %v2565, %v4886
      %v4958 = vmul.f32 %v2570, %v4891
      %v4959 = vmul.f32 %v2575, %v4896
      %v4960 = vmul.f32 %v2580, %v4901
      %v4961 = vmul.f32 %v2585, %v4906
      %v4962 = vmul.f32 %v2590, %v4911
      %v4963 = vmul.f32 %v2595, %v4916
      %v4964 = vmul.f32 %v2600, %v4921
      %v4965 = vmul.f32 %v2605, %v4926
      %v4966 = vmul.f32 %v2610, %v4931
      %v4967 = vmul.f32 %v2615, %v4936
      %v4968 = vmul.f32 %v2620, %v4941
      %v4969 = vadd.f32 %v4729, %v4944
      %v4970 = vadd.f32 %v4730, %v4945
      %v4971 = vadd.f32 %v4731, %v4946
      %v4972 = vadd.f32 %v4732, %v4947
      %v4973 = vadd.f32 %v4733, %v4948
      %v4974 = vadd.f32 %v4734, %v4949
      %v4975 = vadd.f32 %v4735, %v4950
      %v4976 = vadd.f32 %v4736, %v4951
      %v4977 = vadd.f32 %v4737, %v4952
      %v4978 = vadd.f32 %v4738, %v4953
      %v4979 = vadd.f32 %v4739, %v4954
      %v4980 = vadd.f32 %v4740, %v4955
      %v4981 = vadd.f32 %v4741, %v4956
      %v4982 = vadd.f32 %v4742, %v4957
      %v4983 = vadd.f32 %v4743, %v4958
      %v4984 = vadd.f32 %v4744, %v4959
      %v4985 = vadd.f32 %v4745, %v4960
      %v4986 = vadd.f32 %v4746, %v4961
      %v4987 = vadd.f32 %v4747, %v4962
      %v4988 = vadd.f32 %v4748, %v4963
      %v4989 = vadd.f32 %v4749, %v4964
      %v4990 = vadd.f32 %v4750, %v4965
      %v4991 = vadd.f32 %v4751, %v4966
      %v4992 = vadd.f32 %v4752, %v4967
      %v4993 = vadd.f32 %v4753, %v4968
      %4994 = vmatprep.subr.mxu0 0.0
      %4995 = vmatpush1.msra.mxu0 %v2781
      %4996 = vmatprep.subr.mxu0 0.0
      %4997 = vmatpush1.msra.mxu0 0.0
      %4998 = vmatprep.subr.mxu0 0.0
      %4999 = vmatpush1.msra.mxu0 0.0
      %5000 = vmatprep.subr.mxu0 0.0
      %5001 = vmatpush1.msra.mxu0 0.0
      %5002 = vmatprep.subr.mxu0 0.0
      %5003 = vmatpush1.msra.mxu0 0.0
      %5004 = vmatprep.subr.mxu0 0.0
      %5005 = vmatpush1.msra.mxu0 0.0
      %5006 = vmatprep.subr.mxu0 0.0
      %5007 = vmatpush1.msra.mxu0 0.0
      %5008 = vmatprep.subr.mxu0 0.0
      %5009 = vmatpush1.msra.mxu0 0.0
      %5010 = vmatprep.subr.mxu0 0.0
      %5011 = vmatpush1.msra.mxu0 0.0
      %5012 = vmatprep.subr.mxu0 0.0
      %5013 = vmatpush1.msra.mxu0 0.0
      %5014 = vmatprep.subr.mxu0 0.0
      %5015 = vmatpush1.msra.mxu0 0.0
      %5016 = vmatprep.subr.mxu0 0.0
      %5017 = vmatpush1.msra.mxu0 0.0
      %5018 = vmatprep.subr.mxu0 0.0
      %5019 = vmatpush1.msra.mxu0 0.0
      %5020 = vmatprep.subr.mxu0 0.0
      %5021 = vmatpush1.msra.mxu0 0.0
      %5022 = vmatprep.subr.mxu0 0.0
      %5023 = vmatpush1.msra.mxu0 0.0
      %5024 = vmatprep.subr.mxu0 0.0
      %5025 = vmatpush1.msra.mxu0 0.0
      %5026 = vmatprep.subr.mxu0 0.0
      %5027 = vmatpush1.msra.mxu0 0.0
      %5028 = vmatprep.subr.mxu0 0.0
      %5029 = vmatpush1.msra.mxu0 0.0
      %5030 = vmatprep.subr.mxu0 0.0
      %5031 = vmatpush1.msra.mxu0 0.0
      %5032 = vmatprep.subr.mxu0 0.0
      %5033 = vmatpush1.msra.mxu0 0.0
      %5034 = vmatprep.subr.mxu0 0.0
      %5035 = vmatpush1.msra.mxu0 0.0
      %5036 = vmatprep.subr.mxu0 0.0
      %5037 = vmatpush1.msra.mxu0 0.0
      %5038 = vmatprep.subr.mxu0 0.0
      %5039 = vmatpush1.msra.mxu0 0.0
      %5040 = vmatprep.subr.mxu0 0.0
      %5041 = vmatpush1.msra.mxu0 0.0
      %5042 = vmatprep.subr.mxu0 0.0
      %5043 = vmatpush1.msra.mxu0 0.0
      %5044 = vmatprep.subr.mxu0 0.0
      %5045 = vmatpush1.msra.mxu0 0.0
      %5046 = vmatprep.subr.mxu0 0.0
      %5047 = vmatpush1.msra.mxu0 0.0
      %5048 = vmatprep.subr.mxu0 0.0
      %5049 = vmatpush1.msra.mxu0 0.0
      %5050 = vmatprep.subr.mxu0 0.0
      %5051 = vmatpush1.msra.mxu0 0.0
      %5052 = vmatprep.subr.mxu0 0.0
      %5053 = vmatpush1.msra.mxu0 0.0
      %5054 = vmatprep.subr.mxu0 0.0
      %5055 = vmatpush1.msra.mxu0 0.0
      %5056 = vmatprep.subr.mxu0 0.0
      %5057 = vmatpush1.msra.mxu0 0.0
      %5058 = vmatprep.mubr.f32.mxu0 0.0
      %5059 = vmatmul.mubr.f32.gmra.mrb[0].mxu0 %v2785
      %v5060 = vpop.f32.mrb[0].mxu0
      %v5061 = vadd.f32 0.0, %v5060
      %v5062 = vpop.f32.mrb[0].mxu0
      %5063 = vmatprep.mubr.f32.mxu0 0.0
      %5064 = vmatmul.mubr.f32.gmra.mrb[0].mxu0 %v2788
      %v5065 = vpop.f32.mrb[0].mxu0
      %v5066 = vadd.f32 0.0, %v5065
      %v5067 = vpop.f32.mrb[0].mxu0
      %5068 = vmatprep.mubr.f32.mxu0 0.0
      %5069 = vmatmul.mubr.f32.gmra.mrb[0].mxu0 %v2791
      %v5070 = vpop.f32.mrb[0].mxu0
      %v5071 = vadd.f32 0.0, %v5070
      %v5072 = vpop.f32.mrb[0].mxu0
      %5073 = vmatprep.mubr.f32.mxu0 0.0
      %5074 = vmatmul.mubr.f32.gmra.mrb[0].mxu0 %v2794
      %v5075 = vpop.f32.mrb[0].mxu0
      %v5076 = vadd.f32 0.0, %v5075
      %v5077 = vpop.f32.mrb[0].mxu0
      %5078 = vmatprep.mubr.f32.mxu0 0.0
      %5079 = vmatmul.mubr.f32.gmra.mrb[0].mxu0 %v2797
      %v5080 = vpop.f32.mrb[0].mxu0
      %v5081 = vadd.f32 0.0, %v5080
      %v5082 = vpop.f32.mrb[0].mxu0
      %5083 = vmatprep.mubr.f32.mxu0 0.0
      %5084 = vmatmul.mubr.f32.gmra.mrb[0].mxu0 %v2800
      %v5085 = vpop.f32.mrb[0].mxu0
      %v5086 = vadd.f32 0.0, %v5085
      %v5087 = vpop.f32.mrb[0].mxu0
      %5088 = vmatprep.mubr.f32.mxu0 0.0
      %5089 = vmatmul.mubr.f32.gmra.mrb[0].mxu0 %v2803
      %v5090 = vpop.f32.mrb[0].mxu0
      %v5091 = vadd.f32 0.0, %v5090
      %v5092 = vpop.f32.mrb[0].mxu0
      %5093 = vmatprep.mubr.f32.mxu0 0.0
      %5094 = vmatmul.mubr.f32.gmra.mrb[0].mxu0 %v2806
      %v5095 = vpop.f32.mrb[0].mxu0
      %v5096 = vadd.f32 0.0, %v5095
      %v5097 = vpop.f32.mrb[0].mxu0
      %5098 = vmatprep.mubr.f32.mxu0 0.0
      %5099 = vmatmul.mubr.f32.gmra.mrb[0].mxu0 %v2809
      %v5100 = vpop.f32.mrb[0].mxu0
      %v5101 = vadd.f32 0.0, %v5100
      %v5102 = vpop.f32.mrb[0].mxu0
      %5103 = vmatprep.mubr.f32.mxu0 0.0
      %5104 = vmatmul.mubr.f32.gmra.mrb[0].mxu0 %v2812
      %v5105 = vpop.f32.mrb[0].mxu0
      %v5106 = vadd.f32 0.0, %v5105
      %v5107 = vpop.f32.mrb[0].mxu0
      %5108 = vmatprep.mubr.f32.mxu0 0.0
      %5109 = vmatmul.mubr.f32.gmra.mrb[0].mxu0 %v2815
      %v5110 = vpop.f32.mrb[0].mxu0
      %v5111 = vadd.f32 0.0, %v5110
      %v5112 = vpop.f32.mrb[0].mxu0
      %5113 = vmatprep.mubr.f32.mxu0 0.0
      %5114 = vmatmul.mubr.f32.gmra.mrb[0].mxu0 %v2818
      %v5115 = vpop.f32.mrb[0].mxu0
      %v5116 = vadd.f32 0.0, %v5115
      %v5117 = vpop.f32.mrb[0].mxu0
      %5118 = vmatprep.mubr.f32.mxu0 0.0
      %5119 = vmatmul.mubr.f32.gmra.mrb[0].mxu0 %v2821
      %v5120 = vpop.f32.mrb[0].mxu0
      %v5121 = vadd.f32 0.0, %v5120
      %v5122 = vpop.f32.mrb[0].mxu0
      %5123 = vmatprep.mubr.f32.mxu0 0.0
      %5124 = vmatmul.mubr.f32.gmra.mrb[0].mxu0 %v2824
      %v5125 = vpop.f32.mrb[0].mxu0
      %v5126 = vadd.f32 0.0, %v5125
      %v5127 = vpop.f32.mrb[0].mxu0
      %5128 = vmatprep.mubr.f32.mxu0 0.0
      %5129 = vmatmul.mubr.f32.gmra.mrb[0].mxu0 %v2827
      %v5130 = vpop.f32.mrb[0].mxu0
      %v5131 = vadd.f32 0.0, %v5130
      %v5132 = vpop.f32.mrb[0].mxu0
      %5133 = vmatprep.mubr.f32.mxu0 0.0
      %5134 = vmatmul.mubr.f32.gmra.mrb[0].mxu0 %v2830
      %v5135 = vpop.f32.mrb[0].mxu0
      %v5136 = vadd.f32 0.0, %v5135
      %v5137 = vpop.f32.mrb[0].mxu0
      %5138 = vmatprep.mubr.f32.mxu0 0.0
      %5139 = vmatmul.mubr.f32.gmra.mrb[0].mxu0 %v2833
      %v5140 = vpop.f32.mrb[0].mxu0
      %v5141 = vadd.f32 0.0, %v5140
      %v5142 = vpop.f32.mrb[0].mxu0
      %5143 = vmatprep.mubr.f32.mxu0 0.0
      %5144 = vmatmul.mubr.f32.gmra.mrb[0].mxu0 %v2836
      %v5145 = vpop.f32.mrb[0].mxu0
      %v5146 = vadd.f32 0.0, %v5145
      %v5147 = vpop.f32.mrb[0].mxu0
      %5148 = vmatprep.mubr.f32.mxu0 0.0
      %5149 = vmatmul.mubr.f32.gmra.mrb[0].mxu0 %v2839
      %v5150 = vpop.f32.mrb[0].mxu0
      %v5151 = vadd.f32 0.0, %v5150
      %v5152 = vpop.f32.mrb[0].mxu0
      %5153 = vmatprep.mubr.f32.mxu0 0.0
      %5154 = vmatmul.mubr.f32.gmra.mrb[0].mxu0 %v2842
      %v5155 = vpop.f32.mrb[0].mxu0
      %v5156 = vadd.f32 0.0, %v5155
      %v5157 = vpop.f32.mrb[0].mxu0
      %5158 = vmatprep.mubr.f32.mxu0 0.0
      %5159 = vmatmul.mubr.f32.gmra.mrb[0].mxu0 %v2845
      %v5160 = vpop.f32.mrb[0].mxu0
      %v5161 = vadd.f32 0.0, %v5160
      %v5162 = vpop.f32.mrb[0].mxu0
      %5163 = vmatprep.mubr.f32.mxu0 0.0
      %5164 = vmatmul.mubr.f32.gmra.mrb[0].mxu0 %v2848
      %v5165 = vpop.f32.mrb[0].mxu0
      %v5166 = vadd.f32 0.0, %v5165
      %v5167 = vpop.f32.mrb[0].mxu0
      %5168 = vmatprep.mubr.f32.mxu0 0.0
      %5169 = vmatmul.mubr.f32.gmra.mrb[0].mxu0 %v2851
      %v5170 = vpop.f32.mrb[0].mxu0
      %v5171 = vadd.f32 0.0, %v5170
      %v5172 = vpop.f32.mrb[0].mxu0
      %5173 = vmatprep.mubr.f32.mxu0 0.0
      %5174 = vmatmul.mubr.f32.gmra.mrb[0].mxu0 %v2854
      %v5175 = vpop.f32.mrb[0].mxu0
      %v5176 = vadd.f32 0.0, %v5175
      %v5177 = vpop.f32.mrb[0].mxu0
      %5178 = vmatprep.mubr.f32.mxu0 0.0
      %5179 = vmatmul.mubr.f32.gmra.mrb[0].mxu0 %v2857
      %v5180 = vpop.f32.mrb[0].mxu0
      %v5181 = vadd.f32 0.0, %v5180
      %v5182 = vpop.f32.mrb[0].mxu0
      %5183 = vdwg.mxu0
      %v5184 = vmul.f32 %v2625, %v5061
      %v5185 = vmul.f32 %v2630, %v5066
      %v5186 = vmul.f32 %v2635, %v5071
      %v5187 = vmul.f32 %v2640, %v5076
      %v5188 = vmul.f32 %v2645, %v5081
      %v5189 = vmul.f32 %v2650, %v5086
      %v5190 = vmul.f32 %v2655, %v5091
      %v5191 = vmul.f32 %v2660, %v5096
      %v5192 = vmul.f32 %v2665, %v5101
      %v5193 = vmul.f32 %v2670, %v5106
      %v5194 = vmul.f32 %v2675, %v5111
      %v5195 = vmul.f32 %v2680, %v5116
      %v5196 = vmul.f32 %v2685, %v5121
      %v5197 = vmul.f32 %v2690, %v5126
      %v5198 = vmul.f32 %v2695, %v5131
      %v5199 = vmul.f32 %v2700, %v5136
      %v5200 = vmul.f32 %v2705, %v5141
      %v5201 = vmul.f32 %v2710, %v5146
      %v5202 = vmul.f32 %v2715, %v5151
      %v5203 = vmul.f32 %v2720, %v5156
      %v5204 = vmul.f32 %v2725, %v5161
      %v5205 = vmul.f32 %v2730, %v5166
      %v5206 = vmul.f32 %v2735, %v5171
      %v5207 = vmul.f32 %v2740, %v5176
      %v5208 = vmul.f32 %v2745, %v5181
      %v5209 = vadd.f32 %v4969, %v5184
      %v5210 = vadd.f32 %v4970, %v5185
      %v5211 = vadd.f32 %v4971, %v5186
      %v5212 = vadd.f32 %v4972, %v5187
      %v5213 = vadd.f32 %v4973, %v5188
      %v5214 = vadd.f32 %v4974, %v5189
      %v5215 = vadd.f32 %v4975, %v5190
      %v5216 = vadd.f32 %v4976, %v5191
      %v5217 = vadd.f32 %v4977, %v5192
      %v5218 = vadd.f32 %v4978, %v5193
      %v5219 = vadd.f32 %v4979, %v5194
      %v5220 = vadd.f32 %v4980, %v5195
      %v5221 = vadd.f32 %v4981, %v5196
      %v5222 = vadd.f32 %v4982, %v5197
      %v5223 = vadd.f32 %v4983, %v5198
      %v5224 = vadd.f32 %v4984, %v5199
      %v5225 = vadd.f32 %v4985, %v5200
      %v5226 = vadd.f32 %v4986, %v5201
      %v5227 = vadd.f32 %v4987, %v5202
      %v5228 = vadd.f32 %v4988, %v5203
      %v5229 = vadd.f32 %v4989, %v5204
      %v5230 = vadd.f32 %v4990, %v5205
      %v5231 = vadd.f32 %v4991, %v5206
      %v5232 = vadd.f32 %v4992, %v5207
      %v5233 = vadd.f32 %v4993, %v5208
      %vm5234 = vcmask 261120
      %v5235 = vsel %vm5234, %v5209, 0.0
      %5236 = vadd.xlane.f32.xlu0 %v5235
      %v5237 = vpop.xlane.xlu0 %5236
      %v5238 = vsel %vm5234, %v5210, 0.0
      %5239 = vadd.xlane.f32.xlu0 %v5238
      %v5240 = vpop.xlane.xlu0 %5239
      %v5241 = vsel %vm5234, %v5211, 0.0
      %5242 = vadd.xlane.f32.xlu0 %v5241
      %v5243 = vpop.xlane.xlu0 %5242
      %v5244 = vsel %vm5234, %v5212, 0.0
      %5245 = vadd.xlane.f32.xlu0 %v5244
      %v5246 = vpop.xlane.xlu0 %5245
      %v5247 = vsel %vm5234, %v5213, 0.0
      %5248 = vadd.xlane.f32.xlu0 %v5247
      %v5249 = vpop.xlane.xlu0 %5248
      %v5250 = vsel %vm5234, %v5214, 0.0
      %5251 = vadd.xlane.f32.xlu0 %v5250
      %v5252 = vpop.xlane.xlu0 %5251
      %v5253 = vsel %vm5234, %v5215, 0.0
      %5254 = vadd.xlane.f32.xlu0 %v5253
      %v5255 = vpop.xlane.xlu0 %5254
      %v5256 = vsel %vm5234, %v5216, 0.0
      %5257 = vadd.xlane.f32.xlu0 %v5256
      %v5258 = vpop.xlane.xlu0 %5257
      %v5259 = vsel %vm5234, %v5217, 0.0
      %5260 = vadd.xlane.f32.xlu0 %v5259
      %v5261 = vpop.xlane.xlu0 %5260
      %v5262 = vsel %vm5234, %v5218, 0.0
      %5263 = vadd.xlane.f32.xlu0 %v5262
      %v5264 = vpop.xlane.xlu0 %5263
      %v5265 = vsel %vm5234, %v5219, 0.0
      %5266 = vadd.xlane.f32.xlu0 %v5265
      %v5267 = vpop.xlane.xlu0 %5266
      %v5268 = vsel %vm5234, %v5220, 0.0
      %5269 = vadd.xlane.f32.xlu0 %v5268
      %v5270 = vpop.xlane.xlu0 %5269
      %v5271 = vsel %vm5234, %v5221, 0.0
      %5272 = vadd.xlane.f32.xlu0 %v5271
      %v5273 = vpop.xlane.xlu0 %5272
      %v5274 = vsel %vm5234, %v5222, 0.0
      %5275 = vadd.xlane.f32.xlu0 %v5274
      %v5276 = vpop.xlane.xlu0 %5275
      %v5277 = vsel %vm5234, %v5223, 0.0
      %5278 = vadd.xlane.f32.xlu0 %v5277
      %v5279 = vpop.xlane.xlu0 %5278
      %v5280 = vsel %vm5234, %v5224, 0.0
      %5281 = vadd.xlane.f32.xlu0 %v5280
      %v5282 = vpop.xlane.xlu0 %5281
      %v5283 = vsel %vm5234, %v5225, 0.0
      %5284 = vadd.xlane.f32.xlu0 %v5283
      %v5285 = vpop.xlane.xlu0 %5284
      %v5286 = vsel %vm5234, %v5226, 0.0
      %5287 = vadd.xlane.f32.xlu0 %v5286
      %v5288 = vpop.xlane.xlu0 %5287
      %v5289 = vsel %vm5234, %v5227, 0.0
      %5290 = vadd.xlane.f32.xlu0 %v5289
      %v5291 = vpop.xlane.xlu0 %5290
      %v5292 = vsel %vm5234, %v5228, 0.0
      %5293 = vadd.xlane.f32.xlu0 %v5292
      %v5294 = vpop.xlane.xlu0 %5293
      %v5295 = vsel %vm5234, %v5229, 0.0
      %5296 = vadd.xlane.f32.xlu0 %v5295
      %v5297 = vpop.xlane.xlu0 %5296
      %v5298 = vsel %vm5234, %v5230, 0.0
      %5299 = vadd.xlane.f32.xlu0 %v5298
      %v5300 = vpop.xlane.xlu0 %5299
      %v5301 = vsel %vm5234, %v5231, 0.0
      %5302 = vadd.xlane.f32.xlu0 %v5301
      %v5303 = vpop.xlane.xlu0 %5302
      %v5304 = vsel %vm5234, %v5232, 0.0
      %5305 = vadd.xlane.f32.xlu0 %v5304
      %v5306 = vpop.xlane.xlu0 %5305
      %v5307 = vsel %vm5234, %v5233, 0.0
      %5308 = vadd.xlane.f32.xlu0 %v5307
      %v5309 = vpop.xlane.xlu0 %5308
      %v5310 = vrcp.pop 32.0
      %v5311 = vmul.f32 %v5237, %v5310
      %v5312 = vmul.f32 %v5240, %v5310
      %v5313 = vmul.f32 %v5243, %v5310
      %v5314 = vmul.f32 %v5246, %v5310
      %v5315 = vmul.f32 %v5249, %v5310
      %v5316 = vmul.f32 %v5252, %v5310
      %v5317 = vmul.f32 %v5255, %v5310
      %v5318 = vmul.f32 %v5258, %v5310
      %v5319 = vmul.f32 %v5261, %v5310
      %v5320 = vmul.f32 %v5264, %v5310
      %v5321 = vmul.f32 %v5267, %v5310
      %v5322 = vmul.f32 %v5270, %v5310
      %v5323 = vmul.f32 %v5273, %v5310
      %v5324 = vmul.f32 %v5276, %v5310
      %v5325 = vmul.f32 %v5279, %v5310
      %v5326 = vmul.f32 %v5282, %v5310
      %v5327 = vmul.f32 %v5285, %v5310
      %v5328 = vmul.f32 %v5288, %v5310
      %v5329 = vmul.f32 %v5291, %v5310
      %v5330 = vmul.f32 %v5294, %v5310
      %v5331 = vmul.f32 %v5297, %v5310
      %v5332 = vmul.f32 %v5300, %v5310
      %v5333 = vmul.f32 %v5303, %v5310
      %v5334 = vmul.f32 %v5306, %v5310
      %v5335 = vmul.f32 %v5309, %v5310
      %v5336 = vsub.f32 %v5209, %v5311
      %v5337 = vsub.f32 %v5210, %v5312
      %v5338 = vsub.f32 %v5211, %v5313
      %v5339 = vsub.f32 %v5212, %v5314
      %v5340 = vsub.f32 %v5213, %v5315
      %v5341 = vsub.f32 %v5214, %v5316
      %v5342 = vsub.f32 %v5215, %v5317
      %v5343 = vsub.f32 %v5216, %v5318
      %v5344 = vsub.f32 %v5217, %v5319
      %v5345 = vsub.f32 %v5218, %v5320
      %v5346 = vsub.f32 %v5219, %v5321
      %v5347 = vsub.f32 %v5220, %v5322
      %v5348 = vsub.f32 %v5221, %v5323
      %v5349 = vsub.f32 %v5222, %v5324
      %v5350 = vsub.f32 %v5223, %v5325
      %v5351 = vsub.f32 %v5224, %v5326
      %v5352 = vsub.f32 %v5225, %v5327
      %v5353 = vsub.f32 %v5226, %v5328
      %v5354 = vsub.f32 %v5227, %v5329
      %v5355 = vsub.f32 %v5228, %v5330
      %v5356 = vsub.f32 %v5229, %v5331
      %v5357 = vsub.f32 %v5230, %v5332
      %v5358 = vsub.f32 %v5231, %v5333
      %v5359 = vsub.f32 %v5232, %v5334
      %v5360 = vsub.f32 %v5233, %v5335
      %v5361 = vmul.f32 %v5336, %v5336
      %v5362 = vmul.f32 %v5337, %v5337
      %v5363 = vmul.f32 %v5338, %v5338
      %v5364 = vmul.f32 %v5339, %v5339
      %v5365 = vmul.f32 %v5340, %v5340
      %v5366 = vmul.f32 %v5341, %v5341
      %v5367 = vmul.f32 %v5342, %v5342
      %v5368 = vmul.f32 %v5343, %v5343
      %v5369 = vmul.f32 %v5344, %v5344
      %v5370 = vmul.f32 %v5345, %v5345
      %v5371 = vmul.f32 %v5346, %v5346
      %v5372 = vmul.f32 %v5347, %v5347
      %v5373 = vmul.f32 %v5348, %v5348
      %v5374 = vmul.f32 %v5349, %v5349
      %v5375 = vmul.f32 %v5350, %v5350
      %v5376 = vmul.f32 %v5351, %v5351
      %v5377 = vmul.f32 %v5352, %v5352
      %v5378 = vmul.f32 %v5353, %v5353
      %v5379 = vmul.f32 %v5354, %v5354
      %v5380 = vmul.f32 %v5355, %v5355
      %v5381 = vmul.f32 %v5356, %v5356
      %v5382 = vmul.f32 %v5357, %v5357
      %v5383 = vmul.f32 %v5358, %v5358
      %v5384 = vmul.f32 %v5359, %v5359
      %v5385 = vmul.f32 %v5360, %v5360
      %v5386 = vsel %vm5234, %v5361, 0.0
      %5387 = vadd.xlane.f32.xlu0 %v5386
      %v5388 = vpop.xlane.xlu0 %5387
      %v5389 = vsel %vm5234, %v5362, 0.0
      %5390 = vadd.xlane.f32.xlu0 %v5389
      %v5391 = vpop.xlane.xlu0 %5390
      %v5392 = vsel %vm5234, %v5363, 0.0
      %5393 = vadd.xlane.f32.xlu0 %v5392
      %v5394 = vpop.xlane.xlu0 %5393
      %v5395 = vsel %vm5234, %v5364, 0.0
      %5396 = vadd.xlane.f32.xlu0 %v5395
      %v5397 = vpop.xlane.xlu0 %5396
      %v5398 = vsel %vm5234, %v5365, 0.0
      %5399 = vadd.xlane.f32.xlu0 %v5398
      %v5400 = vpop.xlane.xlu0 %5399
      %v5401 = vsel %vm5234, %v5366, 0.0
      %5402 = vadd.xlane.f32.xlu0 %v5401
      %v5403 = vpop.xlane.xlu0 %5402
      %v5404 = vsel %vm5234, %v5367, 0.0
      %5405 = vadd.xlane.f32.xlu0 %v5404
      %v5406 = vpop.xlane.xlu0 %5405
      %v5407 = vsel %vm5234, %v5368, 0.0
      %5408 = vadd.xlane.f32.xlu0 %v5407
      %v5409 = vpop.xlane.xlu0 %5408
      %v5410 = vsel %vm5234, %v5369, 0.0
      %5411 = vadd.xlane.f32.xlu0 %v5410
      %v5412 = vpop.xlane.xlu0 %5411
      %v5413 = vsel %vm5234, %v5370, 0.0
      %5414 = vadd.xlane.f32.xlu0 %v5413
      %v5415 = vpop.xlane.xlu0 %5414
      %v5416 = vsel %vm5234, %v5371, 0.0
      %5417 = vadd.xlane.f32.xlu0 %v5416
      %v5418 = vpop.xlane.xlu0 %5417
      %v5419 = vsel %vm5234, %v5372, 0.0
      %5420 = vadd.xlane.f32.xlu0 %v5419
      %v5421 = vpop.xlane.xlu0 %5420
      %v5422 = vsel %vm5234, %v5373, 0.0
      %5423 = vadd.xlane.f32.xlu0 %v5422
      %v5424 = vpop.xlane.xlu0 %5423
      %v5425 = vsel %vm5234, %v5374, 0.0
      %5426 = vadd.xlane.f32.xlu0 %v5425
      %v5427 = vpop.xlane.xlu0 %5426
      %v5428 = vsel %vm5234, %v5375, 0.0
      %5429 = vadd.xlane.f32.xlu0 %v5428
      %v5430 = vpop.xlane.xlu0 %5429
      %v5431 = vsel %vm5234, %v5376, 0.0
      %5432 = vadd.xlane.f32.xlu0 %v5431
      %v5433 = vpop.xlane.xlu0 %5432
      %v5434 = vsel %vm5234, %v5377, 0.0
      %5435 = vadd.xlane.f32.xlu0 %v5434
      %v5436 = vpop.xlane.xlu0 %5435
      %v5437 = vsel %vm5234, %v5378, 0.0
      %5438 = vadd.xlane.f32.xlu0 %v5437
      %v5439 = vpop.xlane.xlu0 %5438
      %v5440 = vsel %vm5234, %v5379, 0.0
      %5441 = vadd.xlane.f32.xlu0 %v5440
      %v5442 = vpop.xlane.xlu0 %5441
      %v5443 = vsel %vm5234, %v5380, 0.0
      %5444 = vadd.xlane.f32.xlu0 %v5443
      %v5445 = vpop.xlane.xlu0 %5444
      %v5446 = vsel %vm5234, %v5381, 0.0
      %5447 = vadd.xlane.f32.xlu0 %v5446
      %v5448 = vpop.xlane.xlu0 %5447
      %v5449 = vsel %vm5234, %v5382, 0.0
      %5450 = vadd.xlane.f32.xlu0 %v5449
      %v5451 = vpop.xlane.xlu0 %5450
      %v5452 = vsel %vm5234, %v5383, 0.0
      %5453 = vadd.xlane.f32.xlu0 %v5452
      %v5454 = vpop.xlane.xlu0 %5453
      %v5455 = vsel %vm5234, %v5384, 0.0
      %5456 = vadd.xlane.f32.xlu0 %v5455
      %v5457 = vpop.xlane.xlu0 %5456
      %v5458 = vsel %vm5234, %v5385, 0.0
      %5459 = vadd.xlane.f32.xlu0 %v5458
      %v5460 = vpop.xlane.xlu0 %5459
      %v5461 = vmul.f32 %v5388, %v5310
      %v5462 = vmul.f32 %v5391, %v5310
      %v5463 = vmul.f32 %v5394, %v5310
      %v5464 = vmul.f32 %v5397, %v5310
      %v5465 = vmul.f32 %v5400, %v5310
      %v5466 = vmul.f32 %v5403, %v5310
      %v5467 = vmul.f32 %v5406, %v5310
      %v5468 = vmul.f32 %v5409, %v5310
      %v5469 = vmul.f32 %v5412, %v5310
      %v5470 = vmul.f32 %v5415, %v5310
      %v5471 = vmul.f32 %v5418, %v5310
      %v5472 = vmul.f32 %v5421, %v5310
      %v5473 = vmul.f32 %v5424, %v5310
      %v5474 = vmul.f32 %v5427, %v5310
      %v5475 = vmul.f32 %v5430, %v5310
      %v5476 = vmul.f32 %v5433, %v5310
      %v5477 = vmul.f32 %v5436, %v5310
      %v5478 = vmul.f32 %v5439, %v5310
      %v5479 = vmul.f32 %v5442, %v5310
      %v5480 = vmul.f32 %v5445, %v5310
      %v5481 = vmul.f32 %v5448, %v5310
      %v5482 = vmul.f32 %v5451, %v5310
      %v5483 = vmul.f32 %v5454, %v5310
      %v5484 = vmul.f32 %v5457, %v5310
      %v5485 = vmul.f32 %v5460, %v5310
      %v5486 = vadd.f32 %v5461, 1e-05
      %v5487 = vadd.f32 %v5462, 1e-05
      %v5488 = vadd.f32 %v5463, 1e-05
      %v5489 = vadd.f32 %v5464, 1e-05
      %v5490 = vadd.f32 %v5465, 1e-05
      %v5491 = vadd.f32 %v5466, 1e-05
      %v5492 = vadd.f32 %v5467, 1e-05
      %v5493 = vadd.f32 %v5468, 1e-05
      %v5494 = vadd.f32 %v5469, 1e-05
      %v5495 = vadd.f32 %v5470, 1e-05
      %v5496 = vadd.f32 %v5471, 1e-05
      %v5497 = vadd.f32 %v5472, 1e-05
      %v5498 = vadd.f32 %v5473, 1e-05
      %v5499 = vadd.f32 %v5474, 1e-05
      %v5500 = vadd.f32 %v5475, 1e-05
      %v5501 = vadd.f32 %v5476, 1e-05
      %v5502 = vadd.f32 %v5477, 1e-05
      %v5503 = vadd.f32 %v5478, 1e-05
      %v5504 = vadd.f32 %v5479, 1e-05
      %v5505 = vadd.f32 %v5480, 1e-05
      %v5506 = vadd.f32 %v5481, 1e-05
      %v5507 = vadd.f32 %v5482, 1e-05
      %v5508 = vadd.f32 %v5483, 1e-05
      %v5509 = vadd.f32 %v5484, 1e-05
      %v5510 = vadd.f32 %v5485, 1e-05
      %v5511 = vrsqrt.pop %v5486
      %v5512 = vrsqrt.pop %v5487
      %v5513 = vrsqrt.pop %v5488
      %v5514 = vrsqrt.pop %v5489
      %v5515 = vrsqrt.pop %v5490
      %v5516 = vrsqrt.pop %v5491
      %v5517 = vrsqrt.pop %v5492
      %v5518 = vrsqrt.pop %v5493
      %v5519 = vrsqrt.pop %v5494
      %v5520 = vrsqrt.pop %v5495
      %v5521 = vrsqrt.pop %v5496
      %v5522 = vrsqrt.pop %v5497
      %v5523 = vrsqrt.pop %v5498
      %v5524 = vrsqrt.pop %v5499
      %v5525 = vrsqrt.pop %v5500
      %v5526 = vrsqrt.pop %v5501
      %v5527 = vrsqrt.pop %v5502
      %v5528 = vrsqrt.pop %v5503
      %v5529 = vrsqrt.pop %v5504
      %v5530 = vrsqrt.pop %v5505
      %v5531 = vrsqrt.pop %v5506
      %v5532 = vrsqrt.pop %v5507
      %v5533 = vrsqrt.pop %v5508
      %v5534 = vrsqrt.pop %v5509
      %v5535 = vrsqrt.pop %v5510
      %v5536 = vmul.f32 %v5336, %v5511
      %v5537 = vmul.f32 %v5337, %v5512
      %v5538 = vmul.f32 %v5338, %v5513
      %v5539 = vmul.f32 %v5339, %v5514
      %v5540 = vmul.f32 %v5340, %v5515
      %v5541 = vmul.f32 %v5341, %v5516
      %v5542 = vmul.f32 %v5342, %v5517
      %v5543 = vmul.f32 %v5343, %v5518
      %v5544 = vmul.f32 %v5344, %v5519
      %v5545 = vmul.f32 %v5345, %v5520
      %v5546 = vmul.f32 %v5346, %v5521
      %v5547 = vmul.f32 %v5347, %v5522
      %v5548 = vmul.f32 %v5348, %v5523
      %v5549 = vmul.f32 %v5349, %v5524
      %v5550 = vmul.f32 %v5350, %v5525
      %v5551 = vmul.f32 %v5351, %v5526
      %v5552 = vmul.f32 %v5352, %v5527
      %v5553 = vmul.f32 %v5353, %v5528
      %v5554 = vmul.f32 %v5354, %v5529
      %v5555 = vmul.f32 %v5355, %v5530
      %v5556 = vmul.f32 %v5356, %v5531
      %v5557 = vmul.f32 %v5357, %v5532
      %v5558 = vmul.f32 %v5358, %v5533
      %v5559 = vmul.f32 %v5359, %v5534
      %v5560 = vmul.f32 %v5360, %v5535
      %v5561 = vld [vmem:[%s5] sm:$0x1]
      %v5563 = vlaneseq
      %v5564 = vshrl.u32 %v5563, 7
      %v5565 = vsub.s32 0, %v5564
      %v5566 = vrot.slane %v5561, %v5565
      %v5568 = vmul.f32 %v5536, %v5566
      %v5569 = vmul.f32 %v5537, %v5566
      %v5570 = vmul.f32 %v5538, %v5566
      %v5571 = vmul.f32 %v5539, %v5566
      %v5572 = vmul.f32 %v5540, %v5566
      %v5573 = vmul.f32 %v5541, %v5566
      %v5574 = vmul.f32 %v5542, %v5566
      %v5575 = vmul.f32 %v5543, %v5566
      %v5576 = vmul.f32 %v5544, %v5566
      %v5577 = vmul.f32 %v5545, %v5566
      %v5578 = vmul.f32 %v5546, %v5566
      %v5579 = vmul.f32 %v5547, %v5566
      %v5580 = vmul.f32 %v5548, %v5566
      %v5581 = vmul.f32 %v5549, %v5566
      %v5582 = vmul.f32 %v5550, %v5566
      %v5583 = vmul.f32 %v5551, %v5566
      %v5584 = vmul.f32 %v5552, %v5566
      %v5585 = vmul.f32 %v5553, %v5566
      %v5586 = vmul.f32 %v5554, %v5566
      %v5587 = vmul.f32 %v5555, %v5566
      %v5588 = vmul.f32 %v5556, %v5566
      %v5589 = vmul.f32 %v5557, %v5566
      %v5590 = vmul.f32 %v5558, %v5566
      %v5591 = vmul.f32 %v5559, %v5566
      %v5592 = vmul.f32 %v5560, %v5566
      %v5593 = vld [vmem:[%s6] sm:$0x1]
      %v5595 = vlaneseq
      %v5596 = vshrl.u32 %v5595, 7
      %v5597 = vsub.s32 0, %v5596
      %v5598 = vrot.slane %v5593, %v5597
      %v5600 = vadd.f32 %v5568, %v5598
      %v5601 = vadd.f32 %v5569, %v5598
      %v5602 = vadd.f32 %v5570, %v5598
      %v5603 = vadd.f32 %v5571, %v5598
      %v5604 = vadd.f32 %v5572, %v5598
      %v5605 = vadd.f32 %v5573, %v5598
      %v5606 = vadd.f32 %v5574, %v5598
      %v5607 = vadd.f32 %v5575, %v5598
      %v5608 = vadd.f32 %v5576, %v5598
      %v5609 = vadd.f32 %v5577, %v5598
      %v5610 = vadd.f32 %v5578, %v5598
      %v5611 = vadd.f32 %v5579, %v5598
      %v5612 = vadd.f32 %v5580, %v5598
      %v5613 = vadd.f32 %v5581, %v5598
      %v5614 = vadd.f32 %v5582, %v5598
      %v5615 = vadd.f32 %v5583, %v5598
      %v5616 = vadd.f32 %v5584, %v5598
      %v5617 = vadd.f32 %v5585, %v5598
      %v5618 = vadd.f32 %v5586, %v5598
      %v5619 = vadd.f32 %v5587, %v5598
      %v5620 = vadd.f32 %v5588, %v5598
      %v5621 = vadd.f32 %v5589, %v5598
      %v5622 = vadd.f32 %v5590, %v5598
      %v5623 = vadd.f32 %v5591, %v5598
      %v5624 = vadd.f32 %v5592, %v5598
      %v5625 = vld [vmem:[%s7] sm:$0xff]
      %v5626 = vld [vmem:[%s7 + $0x8] sm:$0xff]
      %v5627 = vld [vmem:[%s7 + $0x10] sm:$0xff]
      %v5628 = vld [vmem:[%s7 + $0x18] sm:$0xff]
      %v5630 = vsel %vm5234, %v414, 0
      %v5633 = vsel %vm5234, %v415, 0
      %v5636 = vsel %vm5234, %v416, 0
      %v5639 = vsel %vm5234, %v417, 0
      %v5642 = vsel %vm5234, %v418, 0
      %v5645 = vsel %vm5234, %v419, 0
      %v5648 = vsel %vm5234, %v420, 0
      %v5651 = vsel %vm5234, %v421, 0
      %v5654 = vsel %vm5234, %v422, 0
      %v5657 = vsel %vm5234, %v423, 0
      %v5660 = vsel %vm5234, %v424, 0
      %v5663 = vsel %vm5234, %v425, 0
      %v5666 = vsel %vm5234, %v426, 0
      %v5669 = vsel %vm5234, %v427, 0
      %v5672 = vsel %vm5234, %v428, 0
      %v5675 = vsel %vm5234, %v429, 0
      %v5678 = vsel %vm5234, %v430, 0
      %v5681 = vsel %vm5234, %v431, 0
      %5683 = vmatprep.subr.mxu0 0.0
      %5684 = vmatpush1.msra.mxu0 %v5625
      %5685 = vmatprep.subr.mxu0 0.0
      %5686 = vmatpush1.msra.mxu0 %v5626
      %5687 = vmatprep.subr.mxu0 0.0
      %5688 = vmatpush1.msra.mxu0 %v5627
      %5689 = vmatprep.subr.mxu0 0.0
      %5690 = vmatpush1.msra.mxu0 %v5628
      %5691 = vmatprep.subr.mxu0 0.0
      %5692 = vmatpush1.msra.mxu0 0.0
      %5693 = vmatprep.subr.mxu0 0.0
      %5694 = vmatpush1.msra.mxu0 0.0
      %5695 = vmatprep.subr.mxu0 0.0
      %5696 = vmatpush1.msra.mxu0 0.0
      %5697 = vmatprep.subr.mxu0 0.0
      %5698 = vmatpush1.msra.mxu0 0.0
      %5699 = vmatprep.subr.mxu0 0.0
      %5700 = vmatpush1.msra.mxu0 0.0
      %5701 = vmatprep.subr.mxu0 0.0
      %5702 = vmatpush1.msra.mxu0 0.0
      %5703 = vmatprep.subr.mxu0 0.0
      %5704 = vmatpush1.msra.mxu0 0.0
      %5705 = vmatprep.subr.mxu0 0.0
      %5706 = vmatpush1.msra.mxu0 0.0
      %5707 = vmatprep.subr.mxu0 0.0
      %5708 = vmatpush1.msra.mxu0 0.0
      %5709 = vmatprep.subr.mxu0 0.0
      %5710 = vmatpush1.msra.mxu0 0.0
      %5711 = vmatprep.subr.mxu0 0.0
      %5712 = vmatpush1.msra.mxu0 0.0
      %5713 = vmatprep.subr.mxu0 0.0
      %5714 = vmatpush1.msra.mxu0 0.0
      %5715 = vmatprep.subr.mxu0 0.0
      %5716 = vmatpush1.msra.mxu0 0.0
      %5717 = vmatprep.subr.mxu0 0.0
      %5718 = vmatpush1.msra.mxu0 0.0
      %5719 = vmatprep.subr.mxu0 0.0
      %5720 = vmatpush1.msra.mxu0 0.0
      %5721 = vmatprep.subr.mxu0 0.0
      %5722 = vmatpush1.msra.mxu0 0.0
      %5723 = vmatprep.subr.mxu0 0.0
      %5724 = vmatpush1.msra.mxu0 0.0
      %5725 = vmatprep.subr.mxu0 0.0
      %5726 = vmatpush1.msra.mxu0 0.0
      %5727 = vmatprep.subr.mxu0 0.0
      %5728 = vmatpush1.msra.mxu0 0.0
      %5729 = vmatprep.subr.mxu0 0.0
      %5730 = vmatpush1.msra.mxu0 0.0
      %5731 = vmatprep.subr.mxu0 0.0
      %5732 = vmatpush1.msra.mxu0 0.0
      %5733 = vmatprep.subr.mxu0 0.0
      %5734 = vmatpush1.msra.mxu0 0.0
      %5735 = vmatprep.subr.mxu0 0.0
      %5736 = vmatpush1.msra.mxu0 0.0
      %5737 = vmatprep.subr.mxu0 0.0
      %5738 = vmatpush1.msra.mxu0 0.0
      %5739 = vmatprep.subr.mxu0 0.0
      %5740 = vmatpush1.msra.mxu0 0.0
      %5741 = vmatprep.subr.mxu0 0.0
      %5742 = vmatpush1.msra.mxu0 0.0
      %5743 = vmatprep.subr.mxu0 0.0
      %5744 = vmatpush1.msra.mxu0 0.0
      %5745 = vmatprep.subr.mxu0 0.0
      %5746 = vmatpush1.msra.mxu0 0.0
      %5747 = vmatprep.mubr.f32.mxu0 0.0
      %5748 = vmatmul.mubr.f32.gmra.mrb[0].mxu0 %v5630
      %v5749 = vpop.f32.mrb[0].mxu0
      %v5750 = vadd.f32 0.0, %v5749
      %v5751 = vpop.f32.mrb[0].mxu0
      %5752 = vmatprep.mubr.f32.mxu0 0.0
      %5753 = vmatmul.mubr.f32.gmra.mrb[0].mxu0 %v5633
      %v5754 = vpop.f32.mrb[0].mxu0
      %v5755 = vadd.f32 0.0, %v5754
      %v5756 = vpop.f32.mrb[0].mxu0
      %5757 = vmatprep.mubr.f32.mxu0 0.0
      %5758 = vmatmul.mubr.f32.gmra.mrb[0].mxu0 %v5636
      %v5759 = vpop.f32.mrb[0].mxu0
      %v5760 = vadd.f32 0.0, %v5759
      %v5761 = vpop.f32.mrb[0].mxu0
      %5762 = vmatprep.mubr.f32.mxu0 0.0
      %5763 = vmatmul.mubr.f32.gmra.mrb[0].mxu0 %v5639
      %v5764 = vpop.f32.mrb[0].mxu0
      %v5765 = vadd.f32 0.0, %v5764
      %v5766 = vpop.f32.mrb[0].mxu0
      %5767 = vmatprep.mubr.f32.mxu0 0.0
      %5768 = vmatmul.mubr.f32.gmra.mrb[0].mxu0 %v5642
      %v5769 = vpop.f32.mrb[0].mxu0
      %v5770 = vadd.f32 0.0, %v5769
      %v5771 = vpop.f32.mrb[0].mxu0
      %5772 = vmatprep.mubr.f32.mxu0 0.0
      %5773 = vmatmul.mubr.f32.gmra.mrb[0].mxu0 %v5645
      %v5774 = vpop.f32.mrb[0].mxu0
      %v5775 = vadd.f32 0.0, %v5774
      %v5776 = vpop.f32.mrb[0].mxu0
      %5777 = vmatprep.mubr.f32.mxu0 0.0
      %5778 = vmatmul.mubr.f32.gmra.mrb[0].mxu0 %v5648
      %v5779 = vpop.f32.mrb[0].mxu0
      %v5780 = vadd.f32 0.0, %v5779
      %v5781 = vpop.f32.mrb[0].mxu0
      %5782 = vmatprep.mubr.f32.mxu0 0.0
      %5783 = vmatmul.mubr.f32.gmra.mrb[0].mxu0 %v5651
      %v5784 = vpop.f32.mrb[0].mxu0
      %v5785 = vadd.f32 0.0, %v5784
      %v5786 = vpop.f32.mrb[0].mxu0
      %5787 = vmatprep.mubr.f32.mxu0 0.0
      %5788 = vmatmul.mubr.f32.gmra.mrb[0].mxu0 %v5654
      %v5789 = vpop.f32.mrb[0].mxu0
      %v5790 = vadd.f32 0.0, %v5789
      %v5791 = vpop.f32.mrb[0].mxu0
      %5792 = vmatprep.mubr.f32.mxu0 0.0
      %5793 = vmatmul.mubr.f32.gmra.mrb[0].mxu0 %v5657
      %v5794 = vpop.f32.mrb[0].mxu0
      %v5795 = vadd.f32 0.0, %v5794
      %v5796 = vpop.f32.mrb[0].mxu0
      %5797 = vmatprep.mubr.f32.mxu0 0.0
      %5798 = vmatmul.mubr.f32.gmra.mrb[0].mxu0 %v5660
      %v5799 = vpop.f32.mrb[0].mxu0
      %v5800 = vadd.f32 0.0, %v5799
      %v5801 = vpop.f32.mrb[0].mxu0
      %5802 = vmatprep.mubr.f32.mxu0 0.0
      %5803 = vmatmul.mubr.f32.gmra.mrb[0].mxu0 %v5663
      %v5804 = vpop.f32.mrb[0].mxu0
      %v5805 = vadd.f32 0.0, %v5804
      %v5806 = vpop.f32.mrb[0].mxu0
      %5807 = vmatprep.mubr.f32.mxu0 0.0
      %5808 = vmatmul.mubr.f32.gmra.mrb[0].mxu0 %v5666
      %v5809 = vpop.f32.mrb[0].mxu0
      %v5810 = vadd.f32 0.0, %v5809
      %v5811 = vpop.f32.mrb[0].mxu0
      %5812 = vmatprep.mubr.f32.mxu0 0.0
      %5813 = vmatmul.mubr.f32.gmra.mrb[0].mxu0 %v5669
      %v5814 = vpop.f32.mrb[0].mxu0
      %v5815 = vadd.f32 0.0, %v5814
      %v5816 = vpop.f32.mrb[0].mxu0
      %5817 = vmatprep.mubr.f32.mxu0 0.0
      %5818 = vmatmul.mubr.f32.gmra.mrb[0].mxu0 %v5672
      %v5819 = vpop.f32.mrb[0].mxu0
      %v5820 = vadd.f32 0.0, %v5819
      %v5821 = vpop.f32.mrb[0].mxu0
      %5822 = vmatprep.mubr.f32.mxu0 0.0
      %5823 = vmatmul.mubr.f32.gmra.mrb[0].mxu0 %v5675
      %v5824 = vpop.f32.mrb[0].mxu0
      %v5825 = vadd.f32 0.0, %v5824
      %v5826 = vpop.f32.mrb[0].mxu0
      %5827 = vmatprep.mubr.f32.mxu0 0.0
      %5828 = vmatmul.mubr.f32.gmra.mrb[0].mxu0 %v5678
      %v5829 = vpop.f32.mrb[0].mxu0
      %v5830 = vadd.f32 0.0, %v5829
      %v5831 = vpop.f32.mrb[0].mxu0
      %5832 = vmatprep.mubr.f32.mxu0 0.0
      %5833 = vmatmul.mubr.f32.gmra.mrb[0].mxu0 %v5681
      %v5834 = vpop.f32.mrb[0].mxu0
      %v5835 = vadd.f32 0.0, %v5834
      %v5836 = vpop.f32.mrb[0].mxu0
      %5837 = vdwg.mxu0
      %v5838 = vmul.f32 %v5750, 0.25
      %v5839 = vmul.f32 %v5755, 0.25
      %v5840 = vmul.f32 %v5760, 0.25
      %v5841 = vmul.f32 %v5765, 0.25
      %v5842 = vmul.f32 %v5770, 0.25
      %v5843 = vmul.f32 %v5775, 0.25
      %v5844 = vmul.f32 %v5780, 0.25
      %v5845 = vmul.f32 %v5785, 0.25
      %v5846 = vmul.f32 %v5790, 0.25
      %v5847 = vmul.f32 %v5795, 0.25
      %v5848 = vmul.f32 %v5800, 0.25
      %v5849 = vmul.f32 %v5805, 0.25
      %v5850 = vmul.f32 %v5810, 0.25
      %v5851 = vmul.f32 %v5815, 0.25
      %v5852 = vmul.f32 %v5820, 0.25
      %v5853 = vmul.f32 %v5825, 0.25
      %v5854 = vmul.f32 %v5830, 0.25
      %v5855 = vmul.f32 %v5835, 0.25
      %v5856 = vld [vmem:[%s8] sm:$0xff]
      %v5857 = vld [vmem:[%s8 + $0x8] sm:$0xff]
      %v5858 = vld [vmem:[%s8 + $0x10] sm:$0xff]
      %v5859 = vld [vmem:[%s8 + $0x18] sm:$0xff]
      %v5861 = vsel %vm5234, %v5600, 0
      %v5864 = vsel %vm5234, %v5601, 0
      %v5867 = vsel %vm5234, %v5602, 0
      %v5870 = vsel %vm5234, %v5603, 0
      %v5873 = vsel %vm5234, %v5604, 0
      %v5876 = vsel %vm5234, %v5605, 0
      %v5879 = vsel %vm5234, %v5606, 0
      %v5882 = vsel %vm5234, %v5607, 0
      %v5885 = vsel %vm5234, %v5608, 0
      %v5888 = vsel %vm5234, %v5609, 0
      %v5891 = vsel %vm5234, %v5610, 0
      %v5894 = vsel %vm5234, %v5611, 0
      %v5897 = vsel %vm5234, %v5612, 0
      %v5900 = vsel %vm5234, %v5613, 0
      %v5903 = vsel %vm5234, %v5614, 0
      %v5906 = vsel %vm5234, %v5615, 0
      %v5909 = vsel %vm5234, %v5616, 0
      %v5912 = vsel %vm5234, %v5617, 0
      %v5915 = vsel %vm5234, %v5618, 0
      %v5918 = vsel %vm5234, %v5619, 0
      %v5921 = vsel %vm5234, %v5620, 0
      %v5924 = vsel %vm5234, %v5621, 0
      %v5927 = vsel %vm5234, %v5622, 0
      %v5930 = vsel %vm5234, %v5623, 0
      %v5933 = vsel %vm5234, %v5624, 0
      %5935 = vmatprep.subr.mxu0 0.0
      %5936 = vmatpush1.msra.mxu0 %v5856
      %5937 = vmatprep.subr.mxu0 0.0
      %5938 = vmatpush1.msra.mxu0 %v5857
      %5939 = vmatprep.subr.mxu0 0.0
      %5940 = vmatpush1.msra.mxu0 %v5858
      %5941 = vmatprep.subr.mxu0 0.0
      %5942 = vmatpush1.msra.mxu0 %v5859
      %5943 = vmatprep.subr.mxu0 0.0
      %5944 = vmatpush1.msra.mxu0 0.0
      %5945 = vmatprep.subr.mxu0 0.0
      %5946 = vmatpush1.msra.mxu0 0.0
      %5947 = vmatprep.subr.mxu0 0.0
      %5948 = vmatpush1.msra.mxu0 0.0
      %5949 = vmatprep.subr.mxu0 0.0
      %5950 = vmatpush1.msra.mxu0 0.0
      %5951 = vmatprep.subr.mxu0 0.0
      %5952 = vmatpush1.msra.mxu0 0.0
      %5953 = vmatprep.subr.mxu0 0.0
      %5954 = vmatpush1.msra.mxu0 0.0
      %5955 = vmatprep.subr.mxu0 0.0
      %5956 = vmatpush1.msra.mxu0 0.0
      %5957 = vmatprep.subr.mxu0 0.0
      %5958 = vmatpush1.msra.mxu0 0.0
      %5959 = vmatprep.subr.mxu0 0.0
      %5960 = vmatpush1.msra.mxu0 0.0
      %5961 = vmatprep.subr.mxu0 0.0
      %5962 = vmatpush1.msra.mxu0 0.0
      %5963 = vmatprep.subr.mxu0 0.0
      %5964 = vmatpush1.msra.mxu0 0.0
      %5965 = vmatprep.subr.mxu0 0.0
      %5966 = vmatpush1.msra.mxu0 0.0
      %5967 = vmatprep.subr.mxu0 0.0
      %5968 = vmatpush1.msra.mxu0 0.0
      %5969 = vmatprep.subr.mxu0 0.0
      %5970 = vmatpush1.msra.mxu0 0.0
      %5971 = vmatprep.subr.mxu0 0.0
      %5972 = vmatpush1.msra.mxu0 0.0
      %5973 = vmatprep.subr.mxu0 0.0
      %5974 = vmatpush1.msra.mxu0 0.0
      %5975 = vmatprep.subr.mxu0 0.0
      %5976 = vmatpush1.msra.mxu0 0.0
      %5977 = vmatprep.subr.mxu0 0.0
      %5978 = vmatpush1.msra.mxu0 0.0
      %5979 = vmatprep.subr.mxu0 0.0
      %5980 = vmatpush1.msra.mxu0 0.0
      %5981 = vmatprep.subr.mxu0 0.0
      %5982 = vmatpush1.msra.mxu0 0.0
      %5983 = vmatprep.subr.mxu0 0.0
      %5984 = vmatpush1.msra.mxu0 0.0
      %5985 = vmatprep.subr.mxu0 0.0
      %5986 = vmatpush1.msra.mxu0 0.0
      %5987 = vmatprep.subr.mxu0 0.0
      %5988 = vmatpush1.msra.mxu0 0.0
      %5989 = vmatprep.subr.mxu0 0.0
      %5990 = vmatpush1.msra.mxu0 0.0
      %5991 = vmatprep.subr.mxu0 0.0
      %5992 = vmatpush1.msra.mxu0 0.0
      %5993 = vmatprep.subr.mxu0 0.0
      %5994 = vmatpush1.msra.mxu0 0.0
      %5995 = vmatprep.subr.mxu0 0.0
      %5996 = vmatpush1.msra.mxu0 0.0
      %5997 = vmatprep.subr.mxu0 0.0
      %5998 = vmatpush1.msra.mxu0 0.0
      %5999 = vmatprep.mubr.f32.mxu0 0.0
      %6000 = vmatmul.mubr.f32.gmra.mrb[0].mxu0 %v5861
      %v6001 = vpop.f32.mrb[0].mxu0
      %v6002 = vadd.f32 0.0, %v6001
      %v6003 = vpop.f32.mrb[0].mxu0
      %6004 = vmatprep.mubr.f32.mxu0 0.0
      %6005 = vmatmul.mubr.f32.gmra.mrb[0].mxu0 %v5864
      %v6006 = vpop.f32.mrb[0].mxu0
      %v6007 = vadd.f32 0.0, %v6006
      %v6008 = vpop.f32.mrb[0].mxu0
      %6009 = vmatprep.mubr.f32.mxu0 0.0
      %6010 = vmatmul.mubr.f32.gmra.mrb[0].mxu0 %v5867
      %v6011 = vpop.f32.mrb[0].mxu0
      %v6012 = vadd.f32 0.0, %v6011
      %v6013 = vpop.f32.mrb[0].mxu0
      %6014 = vmatprep.mubr.f32.mxu0 0.0
      %6015 = vmatmul.mubr.f32.gmra.mrb[0].mxu0 %v5870
      %v6016 = vpop.f32.mrb[0].mxu0
      %v6017 = vadd.f32 0.0, %v6016
      %v6018 = vpop.f32.mrb[0].mxu0
      %6019 = vmatprep.mubr.f32.mxu0 0.0
      %6020 = vmatmul.mubr.f32.gmra.mrb[0].mxu0 %v5873
      %v6021 = vpop.f32.mrb[0].mxu0
      %v6022 = vadd.f32 0.0, %v6021
      %v6023 = vpop.f32.mrb[0].mxu0
      %6024 = vmatprep.mubr.f32.mxu0 0.0
      %6025 = vmatmul.mubr.f32.gmra.mrb[0].mxu0 %v5876
      %v6026 = vpop.f32.mrb[0].mxu0
      %v6027 = vadd.f32 0.0, %v6026
      %v6028 = vpop.f32.mrb[0].mxu0
      %6029 = vmatprep.mubr.f32.mxu0 0.0
      %6030 = vmatmul.mubr.f32.gmra.mrb[0].mxu0 %v5879
      %v6031 = vpop.f32.mrb[0].mxu0
      %v6032 = vadd.f32 0.0, %v6031
      %v6033 = vpop.f32.mrb[0].mxu0
      %6034 = vmatprep.mubr.f32.mxu0 0.0
      %6035 = vmatmul.mubr.f32.gmra.mrb[0].mxu0 %v5882
      %v6036 = vpop.f32.mrb[0].mxu0
      %v6037 = vadd.f32 0.0, %v6036
      %v6038 = vpop.f32.mrb[0].mxu0
      %6039 = vmatprep.mubr.f32.mxu0 0.0
      %6040 = vmatmul.mubr.f32.gmra.mrb[0].mxu0 %v5885
      %v6041 = vpop.f32.mrb[0].mxu0
      %v6042 = vadd.f32 0.0, %v6041
      %v6043 = vpop.f32.mrb[0].mxu0
      %6044 = vmatprep.mubr.f32.mxu0 0.0
      %6045 = vmatmul.mubr.f32.gmra.mrb[0].mxu0 %v5888
      %v6046 = vpop.f32.mrb[0].mxu0
      %v6047 = vadd.f32 0.0, %v6046
      %v6048 = vpop.f32.mrb[0].mxu0
      %6049 = vmatprep.mubr.f32.mxu0 0.0
      %6050 = vmatmul.mubr.f32.gmra.mrb[0].mxu0 %v5891
      %v6051 = vpop.f32.mrb[0].mxu0
      %v6052 = vadd.f32 0.0, %v6051
      %v6053 = vpop.f32.mrb[0].mxu0
      %6054 = vmatprep.mubr.f32.mxu0 0.0
      %6055 = vmatmul.mubr.f32.gmra.mrb[0].mxu0 %v5894
      %v6056 = vpop.f32.mrb[0].mxu0
      %v6057 = vadd.f32 0.0, %v6056
      %v6058 = vpop.f32.mrb[0].mxu0
      %6059 = vmatprep.mubr.f32.mxu0 0.0
      %6060 = vmatmul.mubr.f32.gmra.mrb[0].mxu0 %v5897
      %v6061 = vpop.f32.mrb[0].mxu0
      %v6062 = vadd.f32 0.0, %v6061
      %v6063 = vpop.f32.mrb[0].mxu0
      %6064 = vmatprep.mubr.f32.mxu0 0.0
      %6065 = vmatmul.mubr.f32.gmra.mrb[0].mxu0 %v5900
      %v6066 = vpop.f32.mrb[0].mxu0
      %v6067 = vadd.f32 0.0, %v6066
      %v6068 = vpop.f32.mrb[0].mxu0
      %6069 = vmatprep.mubr.f32.mxu0 0.0
      %6070 = vmatmul.mubr.f32.gmra.mrb[0].mxu0 %v5903
      %v6071 = vpop.f32.mrb[0].mxu0
      %v6072 = vadd.f32 0.0, %v6071
      %v6073 = vpop.f32.mrb[0].mxu0
      %6074 = vmatprep.mubr.f32.mxu0 0.0
      %6075 = vmatmul.mubr.f32.gmra.mrb[0].mxu0 %v5906
      %v6076 = vpop.f32.mrb[0].mxu0
      %v6077 = vadd.f32 0.0, %v6076
      %v6078 = vpop.f32.mrb[0].mxu0
      %6079 = vmatprep.mubr.f32.mxu0 0.0
      %6080 = vmatmul.mubr.f32.gmra.mrb[0].mxu0 %v5909
      %v6081 = vpop.f32.mrb[0].mxu0
      %v6082 = vadd.f32 0.0, %v6081
      %v6083 = vpop.f32.mrb[0].mxu0
      %6084 = vmatprep.mubr.f32.mxu0 0.0
      %6085 = vmatmul.mubr.f32.gmra.mrb[0].mxu0 %v5912
      %v6086 = vpop.f32.mrb[0].mxu0
      %v6087 = vadd.f32 0.0, %v6086
      %v6088 = vpop.f32.mrb[0].mxu0
      %6089 = vmatprep.mubr.f32.mxu0 0.0
      %6090 = vmatmul.mubr.f32.gmra.mrb[0].mxu0 %v5915
      %v6091 = vpop.f32.mrb[0].mxu0
      %v6092 = vadd.f32 0.0, %v6091
      %v6093 = vpop.f32.mrb[0].mxu0
      %6094 = vmatprep.mubr.f32.mxu0 0.0
      %6095 = vmatmul.mubr.f32.gmra.mrb[0].mxu0 %v5918
      %v6096 = vpop.f32.mrb[0].mxu0
      %v6097 = vadd.f32 0.0, %v6096
      %v6098 = vpop.f32.mrb[0].mxu0
      %6099 = vmatprep.mubr.f32.mxu0 0.0
      %6100 = vmatmul.mubr.f32.gmra.mrb[0].mxu0 %v5921
      %v6101 = vpop.f32.mrb[0].mxu0
      %v6102 = vadd.f32 0.0, %v6101
      %v6103 = vpop.f32.mrb[0].mxu0
      %6104 = vmatprep.mubr.f32.mxu0 0.0
      %6105 = vmatmul.mubr.f32.gmra.mrb[0].mxu0 %v5924
      %v6106 = vpop.f32.mrb[0].mxu0
      %v6107 = vadd.f32 0.0, %v6106
      %v6108 = vpop.f32.mrb[0].mxu0
      %6109 = vmatprep.mubr.f32.mxu0 0.0
      %6110 = vmatmul.mubr.f32.gmra.mrb[0].mxu0 %v5927
      %v6111 = vpop.f32.mrb[0].mxu0
      %v6112 = vadd.f32 0.0, %v6111
      %v6113 = vpop.f32.mrb[0].mxu0
      %6114 = vmatprep.mubr.f32.mxu0 0.0
      %6115 = vmatmul.mubr.f32.gmra.mrb[0].mxu0 %v5930
      %v6116 = vpop.f32.mrb[0].mxu0
      %v6117 = vadd.f32 0.0, %v6116
      %v6118 = vpop.f32.mrb[0].mxu0
      %6119 = vmatprep.mubr.f32.mxu0 0.0
      %6120 = vmatmul.mubr.f32.gmra.mrb[0].mxu0 %v5933
      %v6121 = vpop.f32.mrb[0].mxu0
      %v6122 = vadd.f32 0.0, %v6121
      %v6123 = vpop.f32.mrb[0].mxu0
      %6124 = vdwg.mxu0
      %v6125 = vld [vmem:[%s9] sm:$0xff]
      %v6126 = vld [vmem:[%s9 + $0x8] sm:$0xff]
      %v6127 = vld [vmem:[%s9 + $0x10] sm:$0xff]
      %v6128 = vld [vmem:[%s9 + $0x18] sm:$0xff]
      %6129 = vmatprep.subr.mxu0 0.0
      %6130 = vmatpush1.msra.mxu0 %v6125
      %6131 = vmatprep.subr.mxu0 0.0
      %6132 = vmatpush1.msra.mxu0 %v6126
      %6133 = vmatprep.subr.mxu0 0.0
      %6134 = vmatpush1.msra.mxu0 %v6127
      %6135 = vmatprep.subr.mxu0 0.0
      %6136 = vmatpush1.msra.mxu0 %v6128
      %6137 = vmatprep.subr.mxu0 0.0
      %6138 = vmatpush1.msra.mxu0 0.0
      %6139 = vmatprep.subr.mxu0 0.0
      %6140 = vmatpush1.msra.mxu0 0.0
      %6141 = vmatprep.subr.mxu0 0.0
      %6142 = vmatpush1.msra.mxu0 0.0
      %6143 = vmatprep.subr.mxu0 0.0
      %6144 = vmatpush1.msra.mxu0 0.0
      %6145 = vmatprep.subr.mxu0 0.0
      %6146 = vmatpush1.msra.mxu0 0.0
      %6147 = vmatprep.subr.mxu0 0.0
      %6148 = vmatpush1.msra.mxu0 0.0
      %6149 = vmatprep.subr.mxu0 0.0
      %6150 = vmatpush1.msra.mxu0 0.0
      %6151 = vmatprep.subr.mxu0 0.0
      %6152 = vmatpush1.msra.mxu0 0.0
      %6153 = vmatprep.subr.mxu0 0.0
      %6154 = vmatpush1.msra.mxu0 0.0
      %6155 = vmatprep.subr.mxu0 0.0
      %6156 = vmatpush1.msra.mxu0 0.0
      %6157 = vmatprep.subr.mxu0 0.0
      %6158 = vmatpush1.msra.mxu0 0.0
      %6159 = vmatprep.subr.mxu0 0.0
      %6160 = vmatpush1.msra.mxu0 0.0
      %6161 = vmatprep.subr.mxu0 0.0
      %6162 = vmatpush1.msra.mxu0 0.0
      %6163 = vmatprep.subr.mxu0 0.0
      %6164 = vmatpush1.msra.mxu0 0.0
      %6165 = vmatprep.subr.mxu0 0.0
      %6166 = vmatpush1.msra.mxu0 0.0
      %6167 = vmatprep.subr.mxu0 0.0
      %6168 = vmatpush1.msra.mxu0 0.0
      %6169 = vmatprep.subr.mxu0 0.0
      %6170 = vmatpush1.msra.mxu0 0.0
      %6171 = vmatprep.subr.mxu0 0.0
      %6172 = vmatpush1.msra.mxu0 0.0
      %6173 = vmatprep.subr.mxu0 0.0
      %6174 = vmatpush1.msra.mxu0 0.0
      %6175 = vmatprep.subr.mxu0 0.0
      %6176 = vmatpush1.msra.mxu0 0.0
      %6177 = vmatprep.subr.mxu0 0.0
      %6178 = vmatpush1.msra.mxu0 0.0
      %6179 = vmatprep.subr.mxu0 0.0
      %6180 = vmatpush1.msra.mxu0 0.0
      %6181 = vmatprep.subr.mxu0 0.0
      %6182 = vmatpush1.msra.mxu0 0.0
      %6183 = vmatprep.subr.mxu0 0.0
      %6184 = vmatpush1.msra.mxu0 0.0
      %6185 = vmatprep.subr.mxu0 0.0
      %6186 = vmatpush1.msra.mxu0 0.0
      %6187 = vmatprep.subr.mxu0 0.0
      %6188 = vmatpush1.msra.mxu0 0.0
      %6189 = vmatprep.subr.mxu0 0.0
      %6190 = vmatpush1.msra.mxu0 0.0
      %6191 = vmatprep.subr.mxu0 0.0
      %6192 = vmatpush1.msra.mxu0 0.0
      %6193 = vmatprep.mubr.f32.mxu0 0.0
      %6194 = vmatmul.mubr.f32.gmra.mrb[0].mxu0 %v5861
      %v6195 = vpop.f32.mrb[0].mxu0
      %v6196 = vadd.f32 0.0, %v6195
      %v6197 = vpop.f32.mrb[0].mxu0
      %6198 = vmatprep.mubr.f32.mxu0 0.0
      %6199 = vmatmul.mubr.f32.gmra.mrb[0].mxu0 %v5864
      %v6200 = vpop.f32.mrb[0].mxu0
      %v6201 = vadd.f32 0.0, %v6200
      %v6202 = vpop.f32.mrb[0].mxu0
      %6203 = vmatprep.mubr.f32.mxu0 0.0
      %6204 = vmatmul.mubr.f32.gmra.mrb[0].mxu0 %v5867
      %v6205 = vpop.f32.mrb[0].mxu0
      %v6206 = vadd.f32 0.0, %v6205
      %v6207 = vpop.f32.mrb[0].mxu0
      %6208 = vmatprep.mubr.f32.mxu0 0.0
      %6209 = vmatmul.mubr.f32.gmra.mrb[0].mxu0 %v5870
      %v6210 = vpop.f32.mrb[0].mxu0
      %v6211 = vadd.f32 0.0, %v6210
      %v6212 = vpop.f32.mrb[0].mxu0
      %6213 = vmatprep.mubr.f32.mxu0 0.0
      %6214 = vmatmul.mubr.f32.gmra.mrb[0].mxu0 %v5873
      %v6215 = vpop.f32.mrb[0].mxu0
      %v6216 = vadd.f32 0.0, %v6215
      %v6217 = vpop.f32.mrb[0].mxu0
      %6218 = vmatprep.mubr.f32.mxu0 0.0
      %6219 = vmatmul.mubr.f32.gmra.mrb[0].mxu0 %v5876
      %v6220 = vpop.f32.mrb[0].mxu0
      %v6221 = vadd.f32 0.0, %v6220
      %v6222 = vpop.f32.mrb[0].mxu0
      %6223 = vmatprep.mubr.f32.mxu0 0.0
      %6224 = vmatmul.mubr.f32.gmra.mrb[0].mxu0 %v5879
      %v6225 = vpop.f32.mrb[0].mxu0
      %v6226 = vadd.f32 0.0, %v6225
      %v6227 = vpop.f32.mrb[0].mxu0
      %6228 = vmatprep.mubr.f32.mxu0 0.0
      %6229 = vmatmul.mubr.f32.gmra.mrb[0].mxu0 %v5882
      %v6230 = vpop.f32.mrb[0].mxu0
      %v6231 = vadd.f32 0.0, %v6230
      %v6232 = vpop.f32.mrb[0].mxu0
      %6233 = vmatprep.mubr.f32.mxu0 0.0
      %6234 = vmatmul.mubr.f32.gmra.mrb[0].mxu0 %v5885
      %v6235 = vpop.f32.mrb[0].mxu0
      %v6236 = vadd.f32 0.0, %v6235
      %v6237 = vpop.f32.mrb[0].mxu0
      %6238 = vmatprep.mubr.f32.mxu0 0.0
      %6239 = vmatmul.mubr.f32.gmra.mrb[0].mxu0 %v5888
      %v6240 = vpop.f32.mrb[0].mxu0
      %v6241 = vadd.f32 0.0, %v6240
      %v6242 = vpop.f32.mrb[0].mxu0
      %6243 = vmatprep.mubr.f32.mxu0 0.0
      %6244 = vmatmul.mubr.f32.gmra.mrb[0].mxu0 %v5891
      %v6245 = vpop.f32.mrb[0].mxu0
      %v6246 = vadd.f32 0.0, %v6245
      %v6247 = vpop.f32.mrb[0].mxu0
      %6248 = vmatprep.mubr.f32.mxu0 0.0
      %6249 = vmatmul.mubr.f32.gmra.mrb[0].mxu0 %v5894
      %v6250 = vpop.f32.mrb[0].mxu0
      %v6251 = vadd.f32 0.0, %v6250
      %v6252 = vpop.f32.mrb[0].mxu0
      %6253 = vmatprep.mubr.f32.mxu0 0.0
      %6254 = vmatmul.mubr.f32.gmra.mrb[0].mxu0 %v5897
      %v6255 = vpop.f32.mrb[0].mxu0
      %v6256 = vadd.f32 0.0, %v6255
      %v6257 = vpop.f32.mrb[0].mxu0
      %6258 = vmatprep.mubr.f32.mxu0 0.0
      %6259 = vmatmul.mubr.f32.gmra.mrb[0].mxu0 %v5900
      %v6260 = vpop.f32.mrb[0].mxu0
      %v6261 = vadd.f32 0.0, %v6260
      %v6262 = vpop.f32.mrb[0].mxu0
      %6263 = vmatprep.mubr.f32.mxu0 0.0
      %6264 = vmatmul.mubr.f32.gmra.mrb[0].mxu0 %v5903
      %v6265 = vpop.f32.mrb[0].mxu0
      %v6266 = vadd.f32 0.0, %v6265
      %v6267 = vpop.f32.mrb[0].mxu0
      %6268 = vmatprep.mubr.f32.mxu0 0.0
      %6269 = vmatmul.mubr.f32.gmra.mrb[0].mxu0 %v5906
      %v6270 = vpop.f32.mrb[0].mxu0
      %v6271 = vadd.f32 0.0, %v6270
      %v6272 = vpop.f32.mrb[0].mxu0
      %6273 = vmatprep.mubr.f32.mxu0 0.0
      %6274 = vmatmul.mubr.f32.gmra.mrb[0].mxu0 %v5909
      %v6275 = vpop.f32.mrb[0].mxu0
      %v6276 = vadd.f32 0.0, %v6275
      %v6277 = vpop.f32.mrb[0].mxu0
      %6278 = vmatprep.mubr.f32.mxu0 0.0
      %6279 = vmatmul.mubr.f32.gmra.mrb[0].mxu0 %v5912
      %v6280 = vpop.f32.mrb[0].mxu0
      %v6281 = vadd.f32 0.0, %v6280
      %v6282 = vpop.f32.mrb[0].mxu0
      %6283 = vmatprep.mubr.f32.mxu0 0.0
      %6284 = vmatmul.mubr.f32.gmra.mrb[0].mxu0 %v5915
      %v6285 = vpop.f32.mrb[0].mxu0
      %v6286 = vadd.f32 0.0, %v6285
      %v6287 = vpop.f32.mrb[0].mxu0
      %6288 = vmatprep.mubr.f32.mxu0 0.0
      %6289 = vmatmul.mubr.f32.gmra.mrb[0].mxu0 %v5918
      %v6290 = vpop.f32.mrb[0].mxu0
      %v6291 = vadd.f32 0.0, %v6290
      %v6292 = vpop.f32.mrb[0].mxu0
      %6293 = vmatprep.mubr.f32.mxu0 0.0
      %6294 = vmatmul.mubr.f32.gmra.mrb[0].mxu0 %v5921
      %v6295 = vpop.f32.mrb[0].mxu0
      %v6296 = vadd.f32 0.0, %v6295
      %v6297 = vpop.f32.mrb[0].mxu0
      %6298 = vmatprep.mubr.f32.mxu0 0.0
      %6299 = vmatmul.mubr.f32.gmra.mrb[0].mxu0 %v5924
      %v6300 = vpop.f32.mrb[0].mxu0
      %v6301 = vadd.f32 0.0, %v6300
      %v6302 = vpop.f32.mrb[0].mxu0
      %6303 = vmatprep.mubr.f32.mxu0 0.0
      %6304 = vmatmul.mubr.f32.gmra.mrb[0].mxu0 %v5927
      %v6305 = vpop.f32.mrb[0].mxu0
      %v6306 = vadd.f32 0.0, %v6305
      %v6307 = vpop.f32.mrb[0].mxu0
      %6308 = vmatprep.mubr.f32.mxu0 0.0
      %6309 = vmatmul.mubr.f32.gmra.mrb[0].mxu0 %v5930
      %v6310 = vpop.f32.mrb[0].mxu0
      %v6311 = vadd.f32 0.0, %v6310
      %v6312 = vpop.f32.mrb[0].mxu0
      %6313 = vmatprep.mubr.f32.mxu0 0.0
      %6314 = vmatmul.mubr.f32.gmra.mrb[0].mxu0 %v5933
      %v6315 = vpop.f32.mrb[0].mxu0
      %v6316 = vadd.f32 0.0, %v6315
      %v6317 = vpop.f32.mrb[0].mxu0
      %6318 = vdwg.mxu0
      %v6319 = vlaneseq
      %v6320 = vand.u32 %v6319, 127
      %vm6321 = vcmp.ge.s32.totalorder %v6320, 0
      %vm6322 = vcmp.lt.s32.totalorder %v6320, 16
      %vm6323 = vmand %vm6321, %vm6322
      %v6324 = vsel %vm6323, 1, 0
      %vm6325 = vcmp.eq.s32.totalorder %v6324, 1
      %v6326 = vsel %vm6325, %v6002, 0.0
      %v6327 = vsel %vm6325, %v6007, 0.0
      %v6328 = vsel %vm6325, %v6012, 0.0
      %v6329 = vsel %vm6325, %v6017, 0.0
      %v6330 = vsel %vm6325, %v6022, 0.0
      %v6331 = vsel %vm6325, %v6027, 0.0
      %v6332 = vsel %vm6325, %v6032, 0.0
      %v6333 = vsel %vm6325, %v6037, 0.0
      %v6334 = vsel %vm6325, %v6042, 0.0
      %v6335 = vsel %vm6325, %v6047, 0.0
      %v6336 = vsel %vm6325, %v6052, 0.0
      %v6337 = vsel %vm6325, %v6057, 0.0
      %v6338 = vsel %vm6325, %v6062, 0.0
      %v6339 = vsel %vm6325, %v6067, 0.0
      %v6340 = vsel %vm6325, %v6072, 0.0
      %v6341 = vsel %vm6325, %v6077, 0.0
      %v6342 = vsel %vm6325, %v6082, 0.0
      %v6343 = vsel %vm6325, %v6087, 0.0
      %v6344 = vsel %vm6325, %v6092, 0.0
      %v6345 = vsel %vm6325, %v6097, 0.0
      %v6346 = vsel %vm6325, %v6102, 0.0
      %v6347 = vsel %vm6325, %v6107, 0.0
      %v6348 = vsel %vm6325, %v6112, 0.0
      %v6349 = vsel %vm6325, %v6117, 0.0
      %v6350 = vsel %vm6325, %v6122, 0.0
      %v6351 = vsel %vm6325, %v6196, 0.0
      %v6352 = vsel %vm6325, %v6201, 0.0
      %v6353 = vsel %vm6325, %v6206, 0.0
      %v6354 = vsel %vm6325, %v6211, 0.0
      %v6355 = vsel %vm6325, %v6216, 0.0
      %v6356 = vsel %vm6325, %v6221, 0.0
      %v6357 = vsel %vm6325, %v6226, 0.0
      %v6358 = vsel %vm6325, %v6231, 0.0
      %v6359 = vsel %vm6325, %v6236, 0.0
      %v6360 = vsel %vm6325, %v6241, 0.0
      %v6361 = vsel %vm6325, %v6246, 0.0
      %v6362 = vsel %vm6325, %v6251, 0.0
      %v6363 = vsel %vm6325, %v6256, 0.0
      %v6364 = vsel %vm6325, %v6261, 0.0
      %v6365 = vsel %vm6325, %v6266, 0.0
      %v6366 = vsel %vm6325, %v6271, 0.0
      %v6367 = vsel %vm6325, %v6276, 0.0
      %v6368 = vsel %vm6325, %v6281, 0.0
      %v6369 = vsel %vm6325, %v6286, 0.0
      %v6370 = vsel %vm6325, %v6291, 0.0
      %v6371 = vsel %vm6325, %v6296, 0.0
      %v6372 = vsel %vm6325, %v6301, 0.0
      %v6373 = vsel %vm6325, %v6306, 0.0
      %v6374 = vsel %vm6325, %v6311, 0.0
      %v6375 = vsel %vm6325, %v6316, 0.0
      %v6377 = vsel %vm5234, %v5838, 0
      %v6380 = vsel %vm5234, %v5839, 0
      %v6383 = vsel %vm5234, %v5840, 0
      %v6386 = vsel %vm5234, %v5841, 0
      %v6389 = vsel %vm5234, %v5842, 0
      %v6392 = vsel %vm5234, %v5843, 0
      %v6395 = vsel %vm5234, %v5844, 0
      %v6398 = vsel %vm5234, %v5845, 0
      %v6401 = vsel %vm5234, %v5846, 0
      %v6404 = vsel %vm5234, %v5847, 0
      %v6407 = vsel %vm5234, %v5848, 0
      %v6410 = vsel %vm5234, %v5849, 0
      %v6413 = vsel %vm5234, %v5850, 0
      %v6416 = vsel %vm5234, %v5851, 0
      %v6419 = vsel %vm5234, %v5852, 0
      %v6422 = vsel %vm5234, %v5853, 0
      %v6425 = vsel %vm5234, %v5854, 0
      %v6428 = vsel %vm5234, %v5855, 0
      %v6431 = vsel %vm5234, %v6326, 0
      %v6434 = vsel %vm5234, %v6327, 0
      %v6437 = vsel %vm5234, %v6328, 0
      %v6440 = vsel %vm5234, %v6329, 0
      %v6443 = vsel %vm5234, %v6330, 0
      %v6446 = vsel %vm5234, %v6331, 0
      %v6449 = vsel %vm5234, %v6332, 0
      %v6452 = vsel %vm5234, %v6333, 0
      %v6455 = vsel %vm5234, %v6334, 0
      %v6458 = vsel %vm5234, %v6335, 0
      %v6461 = vsel %vm5234, %v6336, 0
      %v6464 = vsel %vm5234, %v6337, 0
      %v6467 = vsel %vm5234, %v6338, 0
      %v6470 = vsel %vm5234, %v6339, 0
      %v6473 = vsel %vm5234, %v6340, 0
      %v6476 = vsel %vm5234, %v6341, 0
      %v6479 = vsel %vm5234, %v6342, 0
      %v6482 = vsel %vm5234, %v6343, 0
      %v6485 = vsel %vm5234, %v6344, 0
      %v6488 = vsel %vm5234, %v6345, 0
      %v6491 = vsel %vm5234, %v6346, 0
      %v6494 = vsel %vm5234, %v6347, 0
      %v6497 = vsel %vm5234, %v6348, 0
      %v6500 = vsel %vm5234, %v6349, 0
      %v6503 = vsel %vm5234, %v6350, 0
      %6505 = vmatprep.subr.mxu0 0.0
      %6506 = vmatpush1.xpose.msra.mxu0 %v6431
      %6507 = vmatprep.subr.mxu0 0.0
      %6508 = vmatpush1.xpose.msra.mxu0 %v6434
      %6509 = vmatprep.subr.mxu0 0.0
      %6510 = vmatpush1.xpose.msra.mxu0 %v6437
      %6511 = vmatprep.subr.mxu0 0.0
      %6512 = vmatpush1.xpose.msra.mxu0 %v6440
      %6513 = vmatprep.subr.mxu0 0.0
      %6514 = vmatpush1.xpose.msra.mxu0 %v6443
      %6515 = vmatprep.subr.mxu0 0.0
      %6516 = vmatpush1.xpose.msra.mxu0 %v6446
      %6517 = vmatprep.subr.mxu0 0.0
      %6518 = vmatpush1.xpose.msra.mxu0 %v6449
      %6519 = vmatprep.subr.mxu0 0.0
      %6520 = vmatpush1.xpose.msra.mxu0 %v6452
      %6521 = vmatprep.subr.mxu0 0.0
      %6522 = vmatpush1.xpose.msra.mxu0 %v6455
      %6523 = vmatprep.subr.mxu0 0.0
      %6524 = vmatpush1.xpose.msra.mxu0 %v6458
      %6525 = vmatprep.subr.mxu0 0.0
      %6526 = vmatpush1.xpose.msra.mxu0 %v6461
      %6527 = vmatprep.subr.mxu0 0.0
      %6528 = vmatpush1.xpose.msra.mxu0 %v6464
      %6529 = vmatprep.subr.mxu0 0.0
      %6530 = vmatpush1.xpose.msra.mxu0 %v6467
      %6531 = vmatprep.subr.mxu0 0.0
      %6532 = vmatpush1.xpose.msra.mxu0 %v6470
      %6533 = vmatprep.subr.mxu0 0.0
      %6534 = vmatpush1.xpose.msra.mxu0 %v6473
      %6535 = vmatprep.subr.mxu0 0.0
      %6536 = vmatpush1.xpose.msra.mxu0 %v6476
      %6537 = vmatprep.subr.mxu0 0.0
      %6538 = vmatpush1.xpose.msra.mxu0 %v6479
      %6539 = vmatprep.subr.mxu0 0.0
      %6540 = vmatpush1.xpose.msra.mxu0 %v6482
      %6541 = vmatprep.subr.mxu0 0.0
      %6542 = vmatpush1.xpose.msra.mxu0 %v6485
      %6543 = vmatprep.subr.mxu0 0.0
      %6544 = vmatpush1.xpose.msra.mxu0 %v6488
      %6545 = vmatprep.subr.mxu0 0.0
      %6546 = vmatpush1.xpose.msra.mxu0 %v6491
      %6547 = vmatprep.subr.mxu0 0.0
      %6548 = vmatpush1.xpose.msra.mxu0 %v6494
      %6549 = vmatprep.subr.mxu0 0.0
      %6550 = vmatpush1.xpose.msra.mxu0 %v6497
      %6551 = vmatprep.subr.mxu0 0.0
      %6552 = vmatpush1.xpose.msra.mxu0 %v6500
      %6553 = vmatprep.subr.mxu0 0.0
      %6554 = vmatpush1.xpose.msra.mxu0 %v6503
      %6555 = vmatprep.subr.mxu0 0.0
      %6556 = vmatpush1.xpose.msra.mxu0 0.0
      %6557 = vmatprep.subr.mxu0 0.0
      %6558 = vmatpush1.xpose.msra.mxu0 0.0
      %6559 = vmatprep.subr.mxu0 0.0
      %6560 = vmatpush1.xpose.msra.mxu0 0.0
      %6561 = vmatprep.subr.mxu0 0.0
      %6562 = vmatpush1.xpose.msra.mxu0 0.0
      %6563 = vmatprep.subr.mxu0 0.0
      %6564 = vmatpush1.xpose.msra.mxu0 0.0
      %6565 = vmatprep.subr.mxu0 0.0
      %6566 = vmatpush1.xpose.msra.mxu0 0.0
      %6567 = vmatprep.subr.mxu0 0.0
      %6568 = vmatpush1.xpose.msra.mxu0 0.0
      %6569 = vmatprep.mubr.f32.mxu0 0.0
      %6570 = vmatmul.mubr.f32.gmra.mrb[0].mxu0 %v6377
      %v6571 = vpop.f32.mrb[0].mxu0
      %v6572 = vadd.f32 0.0, %v6571
      %v6573 = vpop.f32.mrb[0].mxu0
      %v6574 = vadd.f32 0.0, %v6573
      %6575 = vmatprep.mubr.f32.mxu0 0.0
      %6576 = vmatmul.mubr.f32.gmra.mrb[0].mxu0 %v6380
      %v6577 = vpop.f32.mrb[0].mxu0
      %v6578 = vadd.f32 0.0, %v6577
      %v6579 = vpop.f32.mrb[0].mxu0
      %v6580 = vadd.f32 0.0, %v6579
      %6581 = vmatprep.mubr.f32.mxu0 0.0
      %6582 = vmatmul.mubr.f32.gmra.mrb[0].mxu0 %v6383
      %v6583 = vpop.f32.mrb[0].mxu0
      %v6584 = vadd.f32 0.0, %v6583
      %v6585 = vpop.f32.mrb[0].mxu0
      %v6586 = vadd.f32 0.0, %v6585
      %6587 = vmatprep.mubr.f32.mxu0 0.0
      %6588 = vmatmul.mubr.f32.gmra.mrb[0].mxu0 %v6386
      %v6589 = vpop.f32.mrb[0].mxu0
      %v6590 = vadd.f32 0.0, %v6589
      %v6591 = vpop.f32.mrb[0].mxu0
      %v6592 = vadd.f32 0.0, %v6591
      %6593 = vmatprep.mubr.f32.mxu0 0.0
      %6594 = vmatmul.mubr.f32.gmra.mrb[0].mxu0 %v6389
      %v6595 = vpop.f32.mrb[0].mxu0
      %v6596 = vadd.f32 0.0, %v6595
      %v6597 = vpop.f32.mrb[0].mxu0
      %v6598 = vadd.f32 0.0, %v6597
      %6599 = vmatprep.mubr.f32.mxu0 0.0
      %6600 = vmatmul.mubr.f32.gmra.mrb[0].mxu0 %v6392
      %v6601 = vpop.f32.mrb[0].mxu0
      %v6602 = vadd.f32 0.0, %v6601
      %v6603 = vpop.f32.mrb[0].mxu0
      %v6604 = vadd.f32 0.0, %v6603
      %6605 = vmatprep.mubr.f32.mxu0 0.0
      %6606 = vmatmul.mubr.f32.gmra.mrb[0].mxu0 %v6395
      %v6607 = vpop.f32.mrb[0].mxu0
      %v6608 = vadd.f32 0.0, %v6607
      %v6609 = vpop.f32.mrb[0].mxu0
      %v6610 = vadd.f32 0.0, %v6609
      %6611 = vmatprep.mubr.f32.mxu0 0.0
      %6612 = vmatmul.mubr.f32.gmra.mrb[0].mxu0 %v6398
      %v6613 = vpop.f32.mrb[0].mxu0
      %v6614 = vadd.f32 0.0, %v6613
      %v6615 = vpop.f32.mrb[0].mxu0
      %v6616 = vadd.f32 0.0, %v6615
      %6617 = vmatprep.mubr.f32.mxu0 0.0
      %6618 = vmatmul.mubr.f32.gmra.mrb[0].mxu0 %v6401
      %v6619 = vpop.f32.mrb[0].mxu0
      %v6620 = vadd.f32 0.0, %v6619
      %v6621 = vpop.f32.mrb[0].mxu0
      %v6622 = vadd.f32 0.0, %v6621
      %6623 = vmatprep.mubr.f32.mxu0 0.0
      %6624 = vmatmul.mubr.f32.gmra.mrb[0].mxu0 %v6404
      %v6625 = vpop.f32.mrb[0].mxu0
      %v6626 = vadd.f32 0.0, %v6625
      %v6627 = vpop.f32.mrb[0].mxu0
      %v6628 = vadd.f32 0.0, %v6627
      %6629 = vmatprep.mubr.f32.mxu0 0.0
      %6630 = vmatmul.mubr.f32.gmra.mrb[0].mxu0 %v6407
      %v6631 = vpop.f32.mrb[0].mxu0
      %v6632 = vadd.f32 0.0, %v6631
      %v6633 = vpop.f32.mrb[0].mxu0
      %v6634 = vadd.f32 0.0, %v6633
      %6635 = vmatprep.mubr.f32.mxu0 0.0
      %6636 = vmatmul.mubr.f32.gmra.mrb[0].mxu0 %v6410
      %v6637 = vpop.f32.mrb[0].mxu0
      %v6638 = vadd.f32 0.0, %v6637
      %v6639 = vpop.f32.mrb[0].mxu0
      %v6640 = vadd.f32 0.0, %v6639
      %6641 = vmatprep.mubr.f32.mxu0 0.0
      %6642 = vmatmul.mubr.f32.gmra.mrb[0].mxu0 %v6413
      %v6643 = vpop.f32.mrb[0].mxu0
      %v6644 = vadd.f32 0.0, %v6643
      %v6645 = vpop.f32.mrb[0].mxu0
      %v6646 = vadd.f32 0.0, %v6645
      %6647 = vmatprep.mubr.f32.mxu0 0.0
      %6648 = vmatmul.mubr.f32.gmra.mrb[0].mxu0 %v6416
      %v6649 = vpop.f32.mrb[0].mxu0
      %v6650 = vadd.f32 0.0, %v6649
      %v6651 = vpop.f32.mrb[0].mxu0
      %v6652 = vadd.f32 0.0, %v6651
      %6653 = vmatprep.mubr.f32.mxu0 0.0
      %6654 = vmatmul.mubr.f32.gmra.mrb[0].mxu0 %v6419
      %v6655 = vpop.f32.mrb[0].mxu0
      %v6656 = vadd.f32 0.0, %v6655
      %v6657 = vpop.f32.mrb[0].mxu0
      %v6658 = vadd.f32 0.0, %v6657
      %6659 = vmatprep.mubr.f32.mxu0 0.0
      %6660 = vmatmul.mubr.f32.gmra.mrb[0].mxu0 %v6422
      %v6661 = vpop.f32.mrb[0].mxu0
      %v6662 = vadd.f32 0.0, %v6661
      %v6663 = vpop.f32.mrb[0].mxu0
      %v6664 = vadd.f32 0.0, %v6663
      %6665 = vmatprep.mubr.f32.mxu0 0.0
      %6666 = vmatmul.mubr.f32.gmra.mrb[0].mxu0 %v6425
      %v6667 = vpop.f32.mrb[0].mxu0
      %v6668 = vadd.f32 0.0, %v6667
      %v6669 = vpop.f32.mrb[0].mxu0
      %v6670 = vadd.f32 0.0, %v6669
      %6671 = vmatprep.mubr.f32.mxu0 0.0
      %6672 = vmatmul.mubr.f32.gmra.mrb[0].mxu0 %v6428
      %v6673 = vpop.f32.mrb[0].mxu0
      %v6674 = vadd.f32 0.0, %v6673
      %v6675 = vpop.f32.mrb[0].mxu0
      %v6676 = vadd.f32 0.0, %v6675
      %6677 = vdwg.mxu0
      %vm6678 = vcmask 588800
      %v6679 = vsel %vm6678, %v6574, -inf
      %v6680 = vmax.f32 %v6572, %v6679
      %6681 = vmax.xlane.f32.xlu0 %v6680
      %v6682 = vpop.xlane.xlu0 %6681
      %v6683 = vsel %vm6678, %v6580, -inf
      %v6684 = vmax.f32 %v6578, %v6683
      %6685 = vmax.xlane.f32.xlu0 %v6684
      %v6686 = vpop.xlane.xlu0 %6685
      %v6687 = vsel %vm6678, %v6586, -inf
      %v6688 = vmax.f32 %v6584, %v6687
      %6689 = vmax.xlane.f32.xlu0 %v6688
      %v6690 = vpop.xlane.xlu0 %6689
      %v6691 = vsel %vm6678, %v6592, -inf
      %v6692 = vmax.f32 %v6590, %v6691
      %6693 = vmax.xlane.f32.xlu0 %v6692
      %v6694 = vpop.xlane.xlu0 %6693
      %v6695 = vsel %vm6678, %v6598, -inf
      %v6696 = vmax.f32 %v6596, %v6695
      %6697 = vmax.xlane.f32.xlu0 %v6696
      %v6698 = vpop.xlane.xlu0 %6697
      %v6699 = vsel %vm6678, %v6604, -inf
      %v6700 = vmax.f32 %v6602, %v6699
      %6701 = vmax.xlane.f32.xlu0 %v6700
      %v6702 = vpop.xlane.xlu0 %6701
      %v6703 = vsel %vm6678, %v6610, -inf
      %v6704 = vmax.f32 %v6608, %v6703
      %6705 = vmax.xlane.f32.xlu0 %v6704
      %v6706 = vpop.xlane.xlu0 %6705
      %v6707 = vsel %vm6678, %v6616, -inf
      %v6708 = vmax.f32 %v6614, %v6707
      %6709 = vmax.xlane.f32.xlu0 %v6708
      %v6710 = vpop.xlane.xlu0 %6709
      %v6711 = vsel %vm6678, %v6622, -inf
      %v6712 = vmax.f32 %v6620, %v6711
      %6713 = vmax.xlane.f32.xlu0 %v6712
      %v6714 = vpop.xlane.xlu0 %6713
      %v6715 = vsel %vm6678, %v6628, -inf
      %v6716 = vmax.f32 %v6626, %v6715
      %6717 = vmax.xlane.f32.xlu0 %v6716
      %v6718 = vpop.xlane.xlu0 %6717
      %v6719 = vsel %vm6678, %v6634, -inf
      %v6720 = vmax.f32 %v6632, %v6719
      %6721 = vmax.xlane.f32.xlu0 %v6720
      %v6722 = vpop.xlane.xlu0 %6721
      %v6723 = vsel %vm6678, %v6640, -inf
      %v6724 = vmax.f32 %v6638, %v6723
      %6725 = vmax.xlane.f32.xlu0 %v6724
      %v6726 = vpop.xlane.xlu0 %6725
      %v6727 = vsel %vm6678, %v6646, -inf
      %v6728 = vmax.f32 %v6644, %v6727
      %6729 = vmax.xlane.f32.xlu0 %v6728
      %v6730 = vpop.xlane.xlu0 %6729
      %v6731 = vsel %vm6678, %v6652, -inf
      %v6732 = vmax.f32 %v6650, %v6731
      %6733 = vmax.xlane.f32.xlu0 %v6732
      %v6734 = vpop.xlane.xlu0 %6733
      %v6735 = vsel %vm6678, %v6658, -inf
      %v6736 = vmax.f32 %v6656, %v6735
      %6737 = vmax.xlane.f32.xlu0 %v6736
      %v6738 = vpop.xlane.xlu0 %6737
      %v6739 = vsel %vm6678, %v6664, -inf
      %v6740 = vmax.f32 %v6662, %v6739
      %6741 = vmax.xlane.f32.xlu0 %v6740
      %v6742 = vpop.xlane.xlu0 %6741
      %v6743 = vsel %vm6678, %v6670, -inf
      %v6744 = vmax.f32 %v6668, %v6743
      %6745 = vmax.xlane.f32.xlu0 %v6744
      %v6746 = vpop.xlane.xlu0 %6745
      %v6747 = vsel %vm6678, %v6676, -inf
      %v6748 = vmax.f32 %v6674, %v6747
      %6749 = vmax.xlane.f32.xlu0 %v6748
      %v6750 = vpop.xlane.xlu0 %6749
      %v6751 = vsub.f32 %v6572, %v6682
      %v6752 = vsub.f32 %v6574, %v6682
      %v6753 = vsub.f32 %v6578, %v6686
      %v6754 = vsub.f32 %v6580, %v6686
      %v6755 = vsub.f32 %v6584, %v6690
      %v6756 = vsub.f32 %v6586, %v6690
      %v6757 = vsub.f32 %v6590, %v6694
      %v6758 = vsub.f32 %v6592, %v6694
      %v6759 = vsub.f32 %v6596, %v6698
      %v6760 = vsub.f32 %v6598, %v6698
      %v6761 = vsub.f32 %v6602, %v6702
      %v6762 = vsub.f32 %v6604, %v6702
      %v6763 = vsub.f32 %v6608, %v6706
      %v6764 = vsub.f32 %v6610, %v6706
      %v6765 = vsub.f32 %v6614, %v6710
      %v6766 = vsub.f32 %v6616, %v6710
      %v6767 = vsub.f32 %v6620, %v6714
      %v6768 = vsub.f32 %v6622, %v6714
      %v6769 = vsub.f32 %v6626, %v6718
      %v6770 = vsub.f32 %v6628, %v6718
      %v6771 = vsub.f32 %v6632, %v6722
      %v6772 = vsub.f32 %v6634, %v6722
      %v6773 = vsub.f32 %v6638, %v6726
      %v6774 = vsub.f32 %v6640, %v6726
      %v6775 = vsub.f32 %v6644, %v6730
      %v6776 = vsub.f32 %v6646, %v6730
      %v6777 = vsub.f32 %v6650, %v6734
      %v6778 = vsub.f32 %v6652, %v6734
      %v6779 = vsub.f32 %v6656, %v6738
      %v6780 = vsub.f32 %v6658, %v6738
      %v6781 = vsub.f32 %v6662, %v6742
      %v6782 = vsub.f32 %v6664, %v6742
      %v6783 = vsub.f32 %v6668, %v6746
      %v6784 = vsub.f32 %v6670, %v6746
      %v6785 = vsub.f32 %v6674, %v6750
      %v6786 = vsub.f32 %v6676, %v6750
      %v6787 = vmul.f32 %v6751, 1.442695
      %v6788 = vpow.pop %v6787
      %v6789 = vmul.f32 %v6752, 1.442695
      %v6790 = vpow.pop %v6789
      %v6791 = vmul.f32 %v6753, 1.442695
      %v6792 = vpow.pop %v6791
      %v6793 = vmul.f32 %v6754, 1.442695
      %v6794 = vpow.pop %v6793
      %v6795 = vmul.f32 %v6755, 1.442695
      %v6796 = vpow.pop %v6795
      %v6797 = vmul.f32 %v6756, 1.442695
      %v6798 = vpow.pop %v6797
      %v6799 = vmul.f32 %v6757, 1.442695
      %v6800 = vpow.pop %v6799
      %v6801 = vmul.f32 %v6758, 1.442695
      %v6802 = vpow.pop %v6801
      %v6803 = vmul.f32 %v6759, 1.442695
      %v6804 = vpow.pop %v6803
      %v6805 = vmul.f32 %v6760, 1.442695
      %v6806 = vpow.pop %v6805
      %v6807 = vmul.f32 %v6761, 1.442695
      %v6808 = vpow.pop %v6807
      %v6809 = vmul.f32 %v6762, 1.442695
      %v6810 = vpow.pop %v6809
      %v6811 = vmul.f32 %v6763, 1.442695
      %v6812 = vpow.pop %v6811
      %v6813 = vmul.f32 %v6764, 1.442695
      %v6814 = vpow.pop %v6813
      %v6815 = vmul.f32 %v6765, 1.442695
      %v6816 = vpow.pop %v6815
      %v6817 = vmul.f32 %v6766, 1.442695
      %v6818 = vpow.pop %v6817
      %v6819 = vmul.f32 %v6767, 1.442695
      %v6820 = vpow.pop %v6819
      %v6821 = vmul.f32 %v6768, 1.442695
      %v6822 = vpow.pop %v6821
      %v6823 = vmul.f32 %v6769, 1.442695
      %v6824 = vpow.pop %v6823
      %v6825 = vmul.f32 %v6770, 1.442695
      %v6826 = vpow.pop %v6825
      %v6827 = vmul.f32 %v6771, 1.442695
      %v6828 = vpow.pop %v6827
      %v6829 = vmul.f32 %v6772, 1.442695
      %v6830 = vpow.pop %v6829
      %v6831 = vmul.f32 %v6773, 1.442695
      %v6832 = vpow.pop %v6831
      %v6833 = vmul.f32 %v6774, 1.442695
      %v6834 = vpow.pop %v6833
      %v6835 = vmul.f32 %v6775, 1.442695
      %v6836 = vpow.pop %v6835
      %v6837 = vmul.f32 %v6776, 1.442695
      %v6838 = vpow.pop %v6837
      %v6839 = vmul.f32 %v6777, 1.442695
      %v6840 = vpow.pop %v6839
      %v6841 = vmul.f32 %v6778, 1.442695
      %v6842 = vpow.pop %v6841
      %v6843 = vmul.f32 %v6779, 1.442695
      %v6844 = vpow.pop %v6843
      %v6845 = vmul.f32 %v6780, 1.442695
      %v6846 = vpow.pop %v6845
      %v6847 = vmul.f32 %v6781, 1.442695
      %v6848 = vpow.pop %v6847
      %v6849 = vmul.f32 %v6782, 1.442695
      %v6850 = vpow.pop %v6849
      %v6851 = vmul.f32 %v6783, 1.442695
      %v6852 = vpow.pop %v6851
      %v6853 = vmul.f32 %v6784, 1.442695
      %v6854 = vpow.pop %v6853
      %v6855 = vmul.f32 %v6785, 1.442695
      %v6856 = vpow.pop %v6855
      %v6857 = vmul.f32 %v6786, 1.442695
      %v6858 = vpow.pop %v6857
      %v6859 = vsel %vm6678, %v6790, 0.0
      %v6860 = vadd.f32 %v6788, %v6859
      %6861 = vadd.xlane.f32.xlu0 %v6860
      %v6862 = vpop.xlane.xlu0 %6861
      %v6863 = vsel %vm6678, %v6794, 0.0
      %v6864 = vadd.f32 %v6792, %v6863
      %6865 = vadd.xlane.f32.xlu0 %v6864
      %v6866 = vpop.xlane.xlu0 %6865
      %v6867 = vsel %vm6678, %v6798, 0.0
      %v6868 = vadd.f32 %v6796, %v6867
      %6869 = vadd.xlane.f32.xlu0 %v6868
      %v6870 = vpop.xlane.xlu0 %6869
      %v6871 = vsel %vm6678, %v6802, 0.0
      %v6872 = vadd.f32 %v6800, %v6871
      %6873 = vadd.xlane.f32.xlu0 %v6872
      %v6874 = vpop.xlane.xlu0 %6873
      %v6875 = vsel %vm6678, %v6806, 0.0
      %v6876 = vadd.f32 %v6804, %v6875
      %6877 = vadd.xlane.f32.xlu0 %v6876
      %v6878 = vpop.xlane.xlu0 %6877
      %v6879 = vsel %vm6678, %v6810, 0.0
      %v6880 = vadd.f32 %v6808, %v6879
      %6881 = vadd.xlane.f32.xlu0 %v6880
      %v6882 = vpop.xlane.xlu0 %6881
      %v6883 = vsel %vm6678, %v6814, 0.0
      %v6884 = vadd.f32 %v6812, %v6883
      %6885 = vadd.xlane.f32.xlu0 %v6884
      %v6886 = vpop.xlane.xlu0 %6885
      %v6887 = vsel %vm6678, %v6818, 0.0
      %v6888 = vadd.f32 %v6816, %v6887
      %6889 = vadd.xlane.f32.xlu0 %v6888
      %v6890 = vpop.xlane.xlu0 %6889
      %v6891 = vsel %vm6678, %v6822, 0.0
      %v6892 = vadd.f32 %v6820, %v6891
      %6893 = vadd.xlane.f32.xlu0 %v6892
      %v6894 = vpop.xlane.xlu0 %6893
      %v6895 = vsel %vm6678, %v6826, 0.0
      %v6896 = vadd.f32 %v6824, %v6895
      %6897 = vadd.xlane.f32.xlu0 %v6896
      %v6898 = vpop.xlane.xlu0 %6897
      %v6899 = vsel %vm6678, %v6830, 0.0
      %v6900 = vadd.f32 %v6828, %v6899
      %6901 = vadd.xlane.f32.xlu0 %v6900
      %v6902 = vpop.xlane.xlu0 %6901
      %v6903 = vsel %vm6678, %v6834, 0.0
      %v6904 = vadd.f32 %v6832, %v6903
      %6905 = vadd.xlane.f32.xlu0 %v6904
      %v6906 = vpop.xlane.xlu0 %6905
      %v6907 = vsel %vm6678, %v6838, 0.0
      %v6908 = vadd.f32 %v6836, %v6907
      %6909 = vadd.xlane.f32.xlu0 %v6908
      %v6910 = vpop.xlane.xlu0 %6909
      %v6911 = vsel %vm6678, %v6842, 0.0
      %v6912 = vadd.f32 %v6840, %v6911
      %6913 = vadd.xlane.f32.xlu0 %v6912
      %v6914 = vpop.xlane.xlu0 %6913
      %v6915 = vsel %vm6678, %v6846, 0.0
      %v6916 = vadd.f32 %v6844, %v6915
      %6917 = vadd.xlane.f32.xlu0 %v6916
      %v6918 = vpop.xlane.xlu0 %6917
      %v6919 = vsel %vm6678, %v6850, 0.0
      %v6920 = vadd.f32 %v6848, %v6919
      %6921 = vadd.xlane.f32.xlu0 %v6920
      %v6922 = vpop.xlane.xlu0 %6921
      %v6923 = vsel %vm6678, %v6854, 0.0
      %v6924 = vadd.f32 %v6852, %v6923
      %6925 = vadd.xlane.f32.xlu0 %v6924
      %v6926 = vpop.xlane.xlu0 %6925
      %v6927 = vsel %vm6678, %v6858, 0.0
      %v6928 = vadd.f32 %v6856, %v6927
      %6929 = vadd.xlane.f32.xlu0 %v6928
      %v6930 = vpop.xlane.xlu0 %6929
      %v6931 = vrcp.pop %v6862
      %v6932 = vrcp.pop %v6866
      %v6933 = vrcp.pop %v6870
      %v6934 = vrcp.pop %v6874
      %v6935 = vrcp.pop %v6878
      %v6936 = vrcp.pop %v6882
      %v6937 = vrcp.pop %v6886
      %v6938 = vrcp.pop %v6890
      %v6939 = vrcp.pop %v6894
      %v6940 = vrcp.pop %v6898
      %v6941 = vrcp.pop %v6902
      %v6942 = vrcp.pop %v6906
      %v6943 = vrcp.pop %v6910
      %v6944 = vrcp.pop %v6914
      %v6945 = vrcp.pop %v6918
      %v6946 = vrcp.pop %v6922
      %v6947 = vrcp.pop %v6926
      %v6948 = vrcp.pop %v6930
      %v6949 = vmul.f32 %v6788, %v6931
      %v6950 = vmul.f32 %v6790, %v6931
      %v6951 = vmul.f32 %v6792, %v6932
      %v6952 = vmul.f32 %v6794, %v6932
      %v6953 = vmul.f32 %v6796, %v6933
      %v6954 = vmul.f32 %v6798, %v6933
      %v6955 = vmul.f32 %v6800, %v6934
      %v6956 = vmul.f32 %v6802, %v6934
      %v6957 = vmul.f32 %v6804, %v6935
      %v6958 = vmul.f32 %v6806, %v6935
      %v6959 = vmul.f32 %v6808, %v6936
      %v6960 = vmul.f32 %v6810, %v6936
      %v6961 = vmul.f32 %v6812, %v6937
      %v6962 = vmul.f32 %v6814, %v6937
      %v6963 = vmul.f32 %v6816, %v6938
      %v6964 = vmul.f32 %v6818, %v6938
      %v6965 = vmul.f32 %v6820, %v6939
      %v6966 = vmul.f32 %v6822, %v6939
      %v6967 = vmul.f32 %v6824, %v6940
      %v6968 = vmul.f32 %v6826, %v6940
      %v6969 = vmul.f32 %v6828, %v6941
      %v6970 = vmul.f32 %v6830, %v6941
      %v6971 = vmul.f32 %v6832, %v6942
      %v6972 = vmul.f32 %v6834, %v6942
      %v6973 = vmul.f32 %v6836, %v6943
      %v6974 = vmul.f32 %v6838, %v6943
      %v6975 = vmul.f32 %v6840, %v6944
      %v6976 = vmul.f32 %v6842, %v6944
      %v6977 = vmul.f32 %v6844, %v6945
      %v6978 = vmul.f32 %v6846, %v6945
      %v6979 = vmul.f32 %v6848, %v6946
      %v6980 = vmul.f32 %v6850, %v6946
      %v6981 = vmul.f32 %v6852, %v6947
      %v6982 = vmul.f32 %v6854, %v6947
      %v6983 = vmul.f32 %v6856, %v6948
      %v6984 = vmul.f32 %v6858, %v6948
      %vm6985 = vcmp.ge.s32.totalorder %v6320, 16
      %vm6986 = vcmp.lt.s32.totalorder %v6320, 32
      %vm6987 = vmand %vm6985, %vm6986
      %v6988 = vsel %vm6987, 1, 0
      %vm6989 = vcmp.eq.s32.totalorder %v6988, 1
      %v6990 = vsel %vm6989, %v6002, 0.0
      %v6991 = vsel %vm6989, %v6007, 0.0
      %v6992 = vsel %vm6989, %v6012, 0.0
      %v6993 = vsel %vm6989, %v6017, 0.0
      %v6994 = vsel %vm6989, %v6022, 0.0
      %v6995 = vsel %vm6989, %v6027, 0.0
      %v6996 = vsel %vm6989, %v6032, 0.0
      %v6997 = vsel %vm6989, %v6037, 0.0
      %v6998 = vsel %vm6989, %v6042, 0.0
      %v6999 = vsel %vm6989, %v6047, 0.0
      %v7000 = vsel %vm6989, %v6052, 0.0
      %v7001 = vsel %vm6989, %v6057, 0.0
      %v7002 = vsel %vm6989, %v6062, 0.0
      %v7003 = vsel %vm6989, %v6067, 0.0
      %v7004 = vsel %vm6989, %v6072, 0.0
      %v7005 = vsel %vm6989, %v6077, 0.0
      %v7006 = vsel %vm6989, %v6082, 0.0
      %v7007 = vsel %vm6989, %v6087, 0.0
      %v7008 = vsel %vm6989, %v6092, 0.0
      %v7009 = vsel %vm6989, %v6097, 0.0
      %v7010 = vsel %vm6989, %v6102, 0.0
      %v7011 = vsel %vm6989, %v6107, 0.0
      %v7012 = vsel %vm6989, %v6112, 0.0
      %v7013 = vsel %vm6989, %v6117, 0.0
      %v7014 = vsel %vm6989, %v6122, 0.0
      %v7015 = vsel %vm6989, %v6196, 0.0
      %v7016 = vsel %vm6989, %v6201, 0.0
      %v7017 = vsel %vm6989, %v6206, 0.0
      %v7018 = vsel %vm6989, %v6211, 0.0
      %v7019 = vsel %vm6989, %v6216, 0.0
      %v7020 = vsel %vm6989, %v6221, 0.0
      %v7021 = vsel %vm6989, %v6226, 0.0
      %v7022 = vsel %vm6989, %v6231, 0.0
      %v7023 = vsel %vm6989, %v6236, 0.0
      %v7024 = vsel %vm6989, %v6241, 0.0
      %v7025 = vsel %vm6989, %v6246, 0.0
      %v7026 = vsel %vm6989, %v6251, 0.0
      %v7027 = vsel %vm6989, %v6256, 0.0
      %v7028 = vsel %vm6989, %v6261, 0.0
      %v7029 = vsel %vm6989, %v6266, 0.0
      %v7030 = vsel %vm6989, %v6271, 0.0
      %v7031 = vsel %vm6989, %v6276, 0.0
      %v7032 = vsel %vm6989, %v6281, 0.0
      %v7033 = vsel %vm6989, %v6286, 0.0
      %v7034 = vsel %vm6989, %v6291, 0.0
      %v7035 = vsel %vm6989, %v6296, 0.0
      %v7036 = vsel %vm6989, %v6301, 0.0
      %v7037 = vsel %vm6989, %v6306, 0.0
      %v7038 = vsel %vm6989, %v6311, 0.0
      %v7039 = vsel %vm6989, %v6316, 0.0
      %v7041 = vsel %vm5234, %v6990, 0
      %v7044 = vsel %vm5234, %v6991, 0
      %v7047 = vsel %vm5234, %v6992, 0
      %v7050 = vsel %vm5234, %v6993, 0
      %v7053 = vsel %vm5234, %v6994, 0
      %v7056 = vsel %vm5234, %v6995, 0
      %v7059 = vsel %vm5234, %v6996, 0
      %v7062 = vsel %vm5234, %v6997, 0
      %v7065 = vsel %vm5234, %v6998, 0
      %v7068 = vsel %vm5234, %v6999, 0
      %v7071 = vsel %vm5234, %v7000, 0
      %v7074 = vsel %vm5234, %v7001, 0
      %v7077 = vsel %vm5234, %v7002, 0
      %v7080 = vsel %vm5234, %v7003, 0
      %v7083 = vsel %vm5234, %v7004, 0
      %v7086 = vsel %vm5234, %v7005, 0
      %v7089 = vsel %vm5234, %v7006, 0
      %v7092 = vsel %vm5234, %v7007, 0
      %v7095 = vsel %vm5234, %v7008, 0
      %v7098 = vsel %vm5234, %v7009, 0
      %v7101 = vsel %vm5234, %v7010, 0
      %v7104 = vsel %vm5234, %v7011, 0
      %v7107 = vsel %vm5234, %v7012, 0
      %v7110 = vsel %vm5234, %v7013, 0
      %v7113 = vsel %vm5234, %v7014, 0
      %7115 = vmatprep.subr.mxu0 0.0
      %7116 = vmatpush1.xpose.msra.mxu0 %v7041
      %7117 = vmatprep.subr.mxu0 0.0
      %7118 = vmatpush1.xpose.msra.mxu0 %v7044
      %7119 = vmatprep.subr.mxu0 0.0
      %7120 = vmatpush1.xpose.msra.mxu0 %v7047
      %7121 = vmatprep.subr.mxu0 0.0
      %7122 = vmatpush1.xpose.msra.mxu0 %v7050
      %7123 = vmatprep.subr.mxu0 0.0
      %7124 = vmatpush1.xpose.msra.mxu0 %v7053
      %7125 = vmatprep.subr.mxu0 0.0
      %7126 = vmatpush1.xpose.msra.mxu0 %v7056
      %7127 = vmatprep.subr.mxu0 0.0
      %7128 = vmatpush1.xpose.msra.mxu0 %v7059
      %7129 = vmatprep.subr.mxu0 0.0
      %7130 = vmatpush1.xpose.msra.mxu0 %v7062
      %7131 = vmatprep.subr.mxu0 0.0
      %7132 = vmatpush1.xpose.msra.mxu0 %v7065
      %7133 = vmatprep.subr.mxu0 0.0
      %7134 = vmatpush1.xpose.msra.mxu0 %v7068
      %7135 = vmatprep.subr.mxu0 0.0
      %7136 = vmatpush1.xpose.msra.mxu0 %v7071
      %7137 = vmatprep.subr.mxu0 0.0
      %7138 = vmatpush1.xpose.msra.mxu0 %v7074
      %7139 = vmatprep.subr.mxu0 0.0
      %7140 = vmatpush1.xpose.msra.mxu0 %v7077
      %7141 = vmatprep.subr.mxu0 0.0
      %7142 = vmatpush1.xpose.msra.mxu0 %v7080
      %7143 = vmatprep.subr.mxu0 0.0
      %7144 = vmatpush1.xpose.msra.mxu0 %v7083
      %7145 = vmatprep.subr.mxu0 0.0
      %7146 = vmatpush1.xpose.msra.mxu0 %v7086
      %7147 = vmatprep.subr.mxu0 0.0
      %7148 = vmatpush1.xpose.msra.mxu0 %v7089
      %7149 = vmatprep.subr.mxu0 0.0
      %7150 = vmatpush1.xpose.msra.mxu0 %v7092
      %7151 = vmatprep.subr.mxu0 0.0
      %7152 = vmatpush1.xpose.msra.mxu0 %v7095
      %7153 = vmatprep.subr.mxu0 0.0
      %7154 = vmatpush1.xpose.msra.mxu0 %v7098
      %7155 = vmatprep.subr.mxu0 0.0
      %7156 = vmatpush1.xpose.msra.mxu0 %v7101
      %7157 = vmatprep.subr.mxu0 0.0
      %7158 = vmatpush1.xpose.msra.mxu0 %v7104
      %7159 = vmatprep.subr.mxu0 0.0
      %7160 = vmatpush1.xpose.msra.mxu0 %v7107
      %7161 = vmatprep.subr.mxu0 0.0
      %7162 = vmatpush1.xpose.msra.mxu0 %v7110
      %7163 = vmatprep.subr.mxu0 0.0
      %7164 = vmatpush1.xpose.msra.mxu0 %v7113
      %7165 = vmatprep.subr.mxu0 0.0
      %7166 = vmatpush1.xpose.msra.mxu0 0.0
      %7167 = vmatprep.subr.mxu0 0.0
      %7168 = vmatpush1.xpose.msra.mxu0 0.0
      %7169 = vmatprep.subr.mxu0 0.0
      %7170 = vmatpush1.xpose.msra.mxu0 0.0
      %7171 = vmatprep.subr.mxu0 0.0
      %7172 = vmatpush1.xpose.msra.mxu0 0.0
      %7173 = vmatprep.subr.mxu0 0.0
      %7174 = vmatpush1.xpose.msra.mxu0 0.0
      %7175 = vmatprep.subr.mxu0 0.0
      %7176 = vmatpush1.xpose.msra.mxu0 0.0
      %7177 = vmatprep.subr.mxu0 0.0
      %7178 = vmatpush1.xpose.msra.mxu0 0.0
      %7179 = vmatprep.mubr.f32.mxu0 0.0
      %7180 = vmatmul.mubr.f32.gmra.mrb[0].mxu0 %v6377
      %v7181 = vpop.f32.mrb[0].mxu0
      %v7182 = vadd.f32 0.0, %v7181
      %v7183 = vpop.f32.mrb[0].mxu0
      %v7184 = vadd.f32 0.0, %v7183
      %7185 = vmatprep.mubr.f32.mxu0 0.0
      %7186 = vmatmul.mubr.f32.gmra.mrb[0].mxu0 %v6380
      %v7187 = vpop.f32.mrb[0].mxu0
      %v7188 = vadd.f32 0.0, %v7187
      %v7189 = vpop.f32.mrb[0].mxu0
      %v7190 = vadd.f32 0.0, %v7189
      %7191 = vmatprep.mubr.f32.mxu0 0.0
      %7192 = vmatmul.mubr.f32.gmra.mrb[0].mxu0 %v6383
      %v7193 = vpop.f32.mrb[0].mxu0
      %v7194 = vadd.f32 0.0, %v7193
      %v7195 = vpop.f32.mrb[0].mxu0
      %v7196 = vadd.f32 0.0, %v7195
      %7197 = vmatprep.mubr.f32.mxu0 0.0
      %7198 = vmatmul.mubr.f32.gmra.mrb[0].mxu0 %v6386
      %v7199 = vpop.f32.mrb[0].mxu0
      %v7200 = vadd.f32 0.0, %v7199
      %v7201 = vpop.f32.mrb[0].mxu0
      %v7202 = vadd.f32 0.0, %v7201
      %7203 = vmatprep.mubr.f32.mxu0 0.0
      %7204 = vmatmul.mubr.f32.gmra.mrb[0].mxu0 %v6389
      %v7205 = vpop.f32.mrb[0].mxu0
      %v7206 = vadd.f32 0.0, %v7205
      %v7207 = vpop.f32.mrb[0].mxu0
      %v7208 = vadd.f32 0.0, %v7207
      %7209 = vmatprep.mubr.f32.mxu0 0.0
      %7210 = vmatmul.mubr.f32.gmra.mrb[0].mxu0 %v6392
      %v7211 = vpop.f32.mrb[0].mxu0
      %v7212 = vadd.f32 0.0, %v7211
      %v7213 = vpop.f32.mrb[0].mxu0
      %v7214 = vadd.f32 0.0, %v7213
      %7215 = vmatprep.mubr.f32.mxu0 0.0
      %7216 = vmatmul.mubr.f32.gmra.mrb[0].mxu0 %v6395
      %v7217 = vpop.f32.mrb[0].mxu0
      %v7218 = vadd.f32 0.0, %v7217
      %v7219 = vpop.f32.mrb[0].mxu0
      %v7220 = vadd.f32 0.0, %v7219
      %7221 = vmatprep.mubr.f32.mxu0 0.0
      %7222 = vmatmul.mubr.f32.gmra.mrb[0].mxu0 %v6398
      %v7223 = vpop.f32.mrb[0].mxu0
      %v7224 = vadd.f32 0.0, %v7223
      %v7225 = vpop.f32.mrb[0].mxu0
      %v7226 = vadd.f32 0.0, %v7225
      %7227 = vmatprep.mubr.f32.mxu0 0.0
      %7228 = vmatmul.mubr.f32.gmra.mrb[0].mxu0 %v6401
      %v7229 = vpop.f32.mrb[0].mxu0
      %v7230 = vadd.f32 0.0, %v7229
      %v7231 = vpop.f32.mrb[0].mxu0
      %v7232 = vadd.f32 0.0, %v7231
      %7233 = vmatprep.mubr.f32.mxu0 0.0
      %7234 = vmatmul.mubr.f32.gmra.mrb[0].mxu0 %v6404
      %v7235 = vpop.f32.mrb[0].mxu0
      %v7236 = vadd.f32 0.0, %v7235
      %v7237 = vpop.f32.mrb[0].mxu0
      %v7238 = vadd.f32 0.0, %v7237
      %7239 = vmatprep.mubr.f32.mxu0 0.0
      %7240 = vmatmul.mubr.f32.gmra.mrb[0].mxu0 %v6407
      %v7241 = vpop.f32.mrb[0].mxu0
      %v7242 = vadd.f32 0.0, %v7241
      %v7243 = vpop.f32.mrb[0].mxu0
      %v7244 = vadd.f32 0.0, %v7243
      %7245 = vmatprep.mubr.f32.mxu0 0.0
      %7246 = vmatmul.mubr.f32.gmra.mrb[0].mxu0 %v6410
      %v7247 = vpop.f32.mrb[0].mxu0
      %v7248 = vadd.f32 0.0, %v7247
      %v7249 = vpop.f32.mrb[0].mxu0
      %v7250 = vadd.f32 0.0, %v7249
      %7251 = vmatprep.mubr.f32.mxu0 0.0
      %7252 = vmatmul.mubr.f32.gmra.mrb[0].mxu0 %v6413
      %v7253 = vpop.f32.mrb[0].mxu0
      %v7254 = vadd.f32 0.0, %v7253
      %v7255 = vpop.f32.mrb[0].mxu0
      %v7256 = vadd.f32 0.0, %v7255
      %7257 = vmatprep.mubr.f32.mxu0 0.0
      %7258 = vmatmul.mubr.f32.gmra.mrb[0].mxu0 %v6416
      %v7259 = vpop.f32.mrb[0].mxu0
      %v7260 = vadd.f32 0.0, %v7259
      %v7261 = vpop.f32.mrb[0].mxu0
      %v7262 = vadd.f32 0.0, %v7261
      %7263 = vmatprep.mubr.f32.mxu0 0.0
      %7264 = vmatmul.mubr.f32.gmra.mrb[0].mxu0 %v6419
      %v7265 = vpop.f32.mrb[0].mxu0
      %v7266 = vadd.f32 0.0, %v7265
      %v7267 = vpop.f32.mrb[0].mxu0
      %v7268 = vadd.f32 0.0, %v7267
      %7269 = vmatprep.mubr.f32.mxu0 0.0
      %7270 = vmatmul.mubr.f32.gmra.mrb[0].mxu0 %v6422
      %v7271 = vpop.f32.mrb[0].mxu0
      %v7272 = vadd.f32 0.0, %v7271
      %v7273 = vpop.f32.mrb[0].mxu0
      %v7274 = vadd.f32 0.0, %v7273
      %7275 = vmatprep.mubr.f32.mxu0 0.0
      %7276 = vmatmul.mubr.f32.gmra.mrb[0].mxu0 %v6425
      %v7277 = vpop.f32.mrb[0].mxu0
      %v7278 = vadd.f32 0.0, %v7277
      %v7279 = vpop.f32.mrb[0].mxu0
      %v7280 = vadd.f32 0.0, %v7279
      %7281 = vmatprep.mubr.f32.mxu0 0.0
      %7282 = vmatmul.mubr.f32.gmra.mrb[0].mxu0 %v6428
      %v7283 = vpop.f32.mrb[0].mxu0
      %v7284 = vadd.f32 0.0, %v7283
      %v7285 = vpop.f32.mrb[0].mxu0
      %v7286 = vadd.f32 0.0, %v7285
      %7287 = vdwg.mxu0
      %v7288 = vsel %vm6678, %v7184, -inf
      %v7289 = vmax.f32 %v7182, %v7288
      %7290 = vmax.xlane.f32.xlu0 %v7289
      %v7291 = vpop.xlane.xlu0 %7290
      %v7292 = vsel %vm6678, %v7190, -inf
      %v7293 = vmax.f32 %v7188, %v7292
      %7294 = vmax.xlane.f32.xlu0 %v7293
      %v7295 = vpop.xlane.xlu0 %7294
      %v7296 = vsel %vm6678, %v7196, -inf
      %v7297 = vmax.f32 %v7194, %v7296
      %7298 = vmax.xlane.f32.xlu0 %v7297
      %v7299 = vpop.xlane.xlu0 %7298
      %v7300 = vsel %vm6678, %v7202, -inf
      %v7301 = vmax.f32 %v7200, %v7300
      %7302 = vmax.xlane.f32.xlu0 %v7301
      %v7303 = vpop.xlane.xlu0 %7302
      %v7304 = vsel %vm6678, %v7208, -inf
      %v7305 = vmax.f32 %v7206, %v7304
      %7306 = vmax.xlane.f32.xlu0 %v7305
      %v7307 = vpop.xlane.xlu0 %7306
      %v7308 = vsel %vm6678, %v7214, -inf
      %v7309 = vmax.f32 %v7212, %v7308
      %7310 = vmax.xlane.f32.xlu0 %v7309
      %v7311 = vpop.xlane.xlu0 %7310
      %v7312 = vsel %vm6678, %v7220, -inf
      %v7313 = vmax.f32 %v7218, %v7312
      %7314 = vmax.xlane.f32.xlu0 %v7313
      %v7315 = vpop.xlane.xlu0 %7314
      %v7316 = vsel %vm6678, %v7226, -inf
      %v7317 = vmax.f32 %v7224, %v7316
      %7318 = vmax.xlane.f32.xlu0 %v7317
      %v7319 = vpop.xlane.xlu0 %7318
      %v7320 = vsel %vm6678, %v7232, -inf
      %v7321 = vmax.f32 %v7230, %v7320
      %7322 = vmax.xlane.f32.xlu0 %v7321
      %v7323 = vpop.xlane.xlu0 %7322
      %v7324 = vsel %vm6678, %v7238, -inf
      %v7325 = vmax.f32 %v7236, %v7324
      %7326 = vmax.xlane.f32.xlu0 %v7325
      %v7327 = vpop.xlane.xlu0 %7326
      %v7328 = vsel %vm6678, %v7244, -inf
      %v7329 = vmax.f32 %v7242, %v7328
      %7330 = vmax.xlane.f32.xlu0 %v7329
      %v7331 = vpop.xlane.xlu0 %7330
      %v7332 = vsel %vm6678, %v7250, -inf
      %v7333 = vmax.f32 %v7248, %v7332
      %7334 = vmax.xlane.f32.xlu0 %v7333
      %v7335 = vpop.xlane.xlu0 %7334
      %v7336 = vsel %vm6678, %v7256, -inf
      %v7337 = vmax.f32 %v7254, %v7336
      %7338 = vmax.xlane.f32.xlu0 %v7337
      %v7339 = vpop.xlane.xlu0 %7338
      %v7340 = vsel %vm6678, %v7262, -inf
      %v7341 = vmax.f32 %v7260, %v7340
      %7342 = vmax.xlane.f32.xlu0 %v7341
      %v7343 = vpop.xlane.xlu0 %7342
      %v7344 = vsel %vm6678, %v7268, -inf
      %v7345 = vmax.f32 %v7266, %v7344
      %7346 = vmax.xlane.f32.xlu0 %v7345
      %v7347 = vpop.xlane.xlu0 %7346
      %v7348 = vsel %vm6678, %v7274, -inf
      %v7349 = vmax.f32 %v7272, %v7348
      %7350 = vmax.xlane.f32.xlu0 %v7349
      %v7351 = vpop.xlane.xlu0 %7350
      %v7352 = vsel %vm6678, %v7280, -inf
      %v7353 = vmax.f32 %v7278, %v7352
      %7354 = vmax.xlane.f32.xlu0 %v7353
      %v7355 = vpop.xlane.xlu0 %7354
      %v7356 = vsel %vm6678, %v7286, -inf
      %v7357 = vmax.f32 %v7284, %v7356
      %7358 = vmax.xlane.f32.xlu0 %v7357
      %v7359 = vpop.xlane.xlu0 %7358
      %v7360 = vsub.f32 %v7182, %v7291
      %v7361 = vsub.f32 %v7184, %v7291
      %v7362 = vsub.f32 %v7188, %v7295
      %v7363 = vsub.f32 %v7190, %v7295
      %v7364 = vsub.f32 %v7194, %v7299
      %v7365 = vsub.f32 %v7196, %v7299
      %v7366 = vsub.f32 %v7200, %v7303
      %v7367 = vsub.f32 %v7202, %v7303
      %v7368 = vsub.f32 %v7206, %v7307
      %v7369 = vsub.f32 %v7208, %v7307
      %v7370 = vsub.f32 %v7212, %v7311
      %v7371 = vsub.f32 %v7214, %v7311
      %v7372 = vsub.f32 %v7218, %v7315
      %v7373 = vsub.f32 %v7220, %v7315
      %v7374 = vsub.f32 %v7224, %v7319
      %v7375 = vsub.f32 %v7226, %v7319
      %v7376 = vsub.f32 %v7230, %v7323
      %v7377 = vsub.f32 %v7232, %v7323
      %v7378 = vsub.f32 %v7236, %v7327
      %v7379 = vsub.f32 %v7238, %v7327
      %v7380 = vsub.f32 %v7242, %v7331
      %v7381 = vsub.f32 %v7244, %v7331
      %v7382 = vsub.f32 %v7248, %v7335
      %v7383 = vsub.f32 %v7250, %v7335
      %v7384 = vsub.f32 %v7254, %v7339
      %v7385 = vsub.f32 %v7256, %v7339
      %v7386 = vsub.f32 %v7260, %v7343
      %v7387 = vsub.f32 %v7262, %v7343
      %v7388 = vsub.f32 %v7266, %v7347
      %v7389 = vsub.f32 %v7268, %v7347
      %v7390 = vsub.f32 %v7272, %v7351
      %v7391 = vsub.f32 %v7274, %v7351
      %v7392 = vsub.f32 %v7278, %v7355
      %v7393 = vsub.f32 %v7280, %v7355
      %v7394 = vsub.f32 %v7284, %v7359
      %v7395 = vsub.f32 %v7286, %v7359
      %v7396 = vmul.f32 %v7360, 1.442695
      %v7397 = vpow.pop %v7396
      %v7398 = vmul.f32 %v7361, 1.442695
      %v7399 = vpow.pop %v7398
      %v7400 = vmul.f32 %v7362, 1.442695
      %v7401 = vpow.pop %v7400
      %v7402 = vmul.f32 %v7363, 1.442695
      %v7403 = vpow.pop %v7402
      %v7404 = vmul.f32 %v7364, 1.442695
      %v7405 = vpow.pop %v7404
      %v7406 = vmul.f32 %v7365, 1.442695
      %v7407 = vpow.pop %v7406
      %v7408 = vmul.f32 %v7366, 1.442695
      %v7409 = vpow.pop %v7408
      %v7410 = vmul.f32 %v7367, 1.442695
      %v7411 = vpow.pop %v7410
      %v7412 = vmul.f32 %v7368, 1.442695
      %v7413 = vpow.pop %v7412
      %v7414 = vmul.f32 %v7369, 1.442695
      %v7415 = vpow.pop %v7414
      %v7416 = vmul.f32 %v7370, 1.442695
      %v7417 = vpow.pop %v7416
      %v7418 = vmul.f32 %v7371, 1.442695
      %v7419 = vpow.pop %v7418
      %v7420 = vmul.f32 %v7372, 1.442695
      %v7421 = vpow.pop %v7420
      %v7422 = vmul.f32 %v7373, 1.442695
      %v7423 = vpow.pop %v7422
      %v7424 = vmul.f32 %v7374, 1.442695
      %v7425 = vpow.pop %v7424
      %v7426 = vmul.f32 %v7375, 1.442695
      %v7427 = vpow.pop %v7426
      %v7428 = vmul.f32 %v7376, 1.442695
      %v7429 = vpow.pop %v7428
      %v7430 = vmul.f32 %v7377, 1.442695
      %v7431 = vpow.pop %v7430
      %v7432 = vmul.f32 %v7378, 1.442695
      %v7433 = vpow.pop %v7432
      %v7434 = vmul.f32 %v7379, 1.442695
      %v7435 = vpow.pop %v7434
      %v7436 = vmul.f32 %v7380, 1.442695
      %v7437 = vpow.pop %v7436
      %v7438 = vmul.f32 %v7381, 1.442695
      %v7439 = vpow.pop %v7438
      %v7440 = vmul.f32 %v7382, 1.442695
      %v7441 = vpow.pop %v7440
      %v7442 = vmul.f32 %v7383, 1.442695
      %v7443 = vpow.pop %v7442
      %v7444 = vmul.f32 %v7384, 1.442695
      %v7445 = vpow.pop %v7444
      %v7446 = vmul.f32 %v7385, 1.442695
      %v7447 = vpow.pop %v7446
      %v7448 = vmul.f32 %v7386, 1.442695
      %v7449 = vpow.pop %v7448
      %v7450 = vmul.f32 %v7387, 1.442695
      %v7451 = vpow.pop %v7450
      %v7452 = vmul.f32 %v7388, 1.442695
      %v7453 = vpow.pop %v7452
      %v7454 = vmul.f32 %v7389, 1.442695
      %v7455 = vpow.pop %v7454
      %v7456 = vmul.f32 %v7390, 1.442695
      %v7457 = vpow.pop %v7456
      %v7458 = vmul.f32 %v7391, 1.442695
      %v7459 = vpow.pop %v7458
      %v7460 = vmul.f32 %v7392, 1.442695
      %v7461 = vpow.pop %v7460
      %v7462 = vmul.f32 %v7393, 1.442695
      %v7463 = vpow.pop %v7462
      %v7464 = vmul.f32 %v7394, 1.442695
      %v7465 = vpow.pop %v7464
      %v7466 = vmul.f32 %v7395, 1.442695
      %v7467 = vpow.pop %v7466
      %v7468 = vsel %vm6678, %v7399, 0.0
      %v7469 = vadd.f32 %v7397, %v7468
      %7470 = vadd.xlane.f32.xlu0 %v7469
      %v7471 = vpop.xlane.xlu0 %7470
      %v7472 = vsel %vm6678, %v7403, 0.0
      %v7473 = vadd.f32 %v7401, %v7472
      %7474 = vadd.xlane.f32.xlu0 %v7473
      %v7475 = vpop.xlane.xlu0 %7474
      %v7476 = vsel %vm6678, %v7407, 0.0
      %v7477 = vadd.f32 %v7405, %v7476
      %7478 = vadd.xlane.f32.xlu0 %v7477
      %v7479 = vpop.xlane.xlu0 %7478
      %v7480 = vsel %vm6678, %v7411, 0.0
      %v7481 = vadd.f32 %v7409, %v7480
      %7482 = vadd.xlane.f32.xlu0 %v7481
      %v7483 = vpop.xlane.xlu0 %7482
      %v7484 = vsel %vm6678, %v7415, 0.0
      %v7485 = vadd.f32 %v7413, %v7484
      %7486 = vadd.xlane.f32.xlu0 %v7485
      %v7487 = vpop.xlane.xlu0 %7486
      %v7488 = vsel %vm6678, %v7419, 0.0
      %v7489 = vadd.f32 %v7417, %v7488
      %7490 = vadd.xlane.f32.xlu0 %v7489
      %v7491 = vpop.xlane.xlu0 %7490
      %v7492 = vsel %vm6678, %v7423, 0.0
      %v7493 = vadd.f32 %v7421, %v7492
      %7494 = vadd.xlane.f32.xlu0 %v7493
      %v7495 = vpop.xlane.xlu0 %7494
      %v7496 = vsel %vm6678, %v7427, 0.0
      %v7497 = vadd.f32 %v7425, %v7496
      %7498 = vadd.xlane.f32.xlu0 %v7497
      %v7499 = vpop.xlane.xlu0 %7498
      %v7500 = vsel %vm6678, %v7431, 0.0
      %v7501 = vadd.f32 %v7429, %v7500
      %7502 = vadd.xlane.f32.xlu0 %v7501
      %v7503 = vpop.xlane.xlu0 %7502
      %v7504 = vsel %vm6678, %v7435, 0.0
      %v7505 = vadd.f32 %v7433, %v7504
      %7506 = vadd.xlane.f32.xlu0 %v7505
      %v7507 = vpop.xlane.xlu0 %7506
      %v7508 = vsel %vm6678, %v7439, 0.0
      %v7509 = vadd.f32 %v7437, %v7508
      %7510 = vadd.xlane.f32.xlu0 %v7509
      %v7511 = vpop.xlane.xlu0 %7510
      %v7512 = vsel %vm6678, %v7443, 0.0
      %v7513 = vadd.f32 %v7441, %v7512
      %7514 = vadd.xlane.f32.xlu0 %v7513
      %v7515 = vpop.xlane.xlu0 %7514
      %v7516 = vsel %vm6678, %v7447, 0.0
      %v7517 = vadd.f32 %v7445, %v7516
      %7518 = vadd.xlane.f32.xlu0 %v7517
      %v7519 = vpop.xlane.xlu0 %7518
      %v7520 = vsel %vm6678, %v7451, 0.0
      %v7521 = vadd.f32 %v7449, %v7520
      %7522 = vadd.xlane.f32.xlu0 %v7521
      %v7523 = vpop.xlane.xlu0 %7522
      %v7524 = vsel %vm6678, %v7455, 0.0
      %v7525 = vadd.f32 %v7453, %v7524
      %7526 = vadd.xlane.f32.xlu0 %v7525
      %v7527 = vpop.xlane.xlu0 %7526
      %v7528 = vsel %vm6678, %v7459, 0.0
      %v7529 = vadd.f32 %v7457, %v7528
      %7530 = vadd.xlane.f32.xlu0 %v7529
      %v7531 = vpop.xlane.xlu0 %7530
      %v7532 = vsel %vm6678, %v7463, 0.0
      %v7533 = vadd.f32 %v7461, %v7532
      %7534 = vadd.xlane.f32.xlu0 %v7533
      %v7535 = vpop.xlane.xlu0 %7534
      %v7536 = vsel %vm6678, %v7467, 0.0
      %v7537 = vadd.f32 %v7465, %v7536
      %7538 = vadd.xlane.f32.xlu0 %v7537
      %v7539 = vpop.xlane.xlu0 %7538
      %v7540 = vrcp.pop %v7471
      %v7541 = vrcp.pop %v7475
      %v7542 = vrcp.pop %v7479
      %v7543 = vrcp.pop %v7483
      %v7544 = vrcp.pop %v7487
      %v7545 = vrcp.pop %v7491
      %v7546 = vrcp.pop %v7495
      %v7547 = vrcp.pop %v7499
      %v7548 = vrcp.pop %v7503
      %v7549 = vrcp.pop %v7507
      %v7550 = vrcp.pop %v7511
      %v7551 = vrcp.pop %v7515
      %v7552 = vrcp.pop %v7519
      %v7553 = vrcp.pop %v7523
      %v7554 = vrcp.pop %v7527
      %v7555 = vrcp.pop %v7531
      %v7556 = vrcp.pop %v7535
      %v7557 = vrcp.pop %v7539
      %v7558 = vmul.f32 %v7397, %v7540
      %v7559 = vmul.f32 %v7399, %v7540
      %v7560 = vmul.f32 %v7401, %v7541
      %v7561 = vmul.f32 %v7403, %v7541
      %v7562 = vmul.f32 %v7405, %v7542
      %v7563 = vmul.f32 %v7407, %v7542
      %v7564 = vmul.f32 %v7409, %v7543
      %v7565 = vmul.f32 %v7411, %v7543
      %v7566 = vmul.f32 %v7413, %v7544
      %v7567 = vmul.f32 %v7415, %v7544
      %v7568 = vmul.f32 %v7417, %v7545
      %v7569 = vmul.f32 %v7419, %v7545
      %v7570 = vmul.f32 %v7421, %v7546
      %v7571 = vmul.f32 %v7423, %v7546
      %v7572 = vmul.f32 %v7425, %v7547
      %v7573 = vmul.f32 %v7427, %v7547
      %v7574 = vmul.f32 %v7429, %v7548
      %v7575 = vmul.f32 %v7431, %v7548
      %v7576 = vmul.f32 %v7433, %v7549
      %v7577 = vmul.f32 %v7435, %v7549
      %v7578 = vmul.f32 %v7437, %v7550
      %v7579 = vmul.f32 %v7439, %v7550
      %v7580 = vmul.f32 %v7441, %v7551
      %v7581 = vmul.f32 %v7443, %v7551
      %v7582 = vmul.f32 %v7445, %v7552
      %v7583 = vmul.f32 %v7447, %v7552
      %v7584 = vmul.f32 %v7449, %v7553
      %v7585 = vmul.f32 %v7451, %v7553
      %v7586 = vmul.f32 %v7453, %v7554
      %v7587 = vmul.f32 %v7455, %v7554
      %v7588 = vmul.f32 %v7457, %v7555
      %v7589 = vmul.f32 %v7459, %v7555
      %v7590 = vmul.f32 %v7461, %v7556
      %v7591 = vmul.f32 %v7463, %v7556
      %v7592 = vmul.f32 %v7465, %v7557
      %v7593 = vmul.f32 %v7467, %v7557
      %v7595 = vsel %vm6678, %v7559, 0
      %v7598 = vsel %vm6678, %v7561, 0
      %v7601 = vsel %vm6678, %v7563, 0
      %v7604 = vsel %vm6678, %v7565, 0
      %v7607 = vsel %vm6678, %v7567, 0
      %v7610 = vsel %vm6678, %v7569, 0
      %v7613 = vsel %vm6678, %v7571, 0
      %v7616 = vsel %vm6678, %v7573, 0
      %v7619 = vsel %vm6678, %v7575, 0
      %v7622 = vsel %vm6678, %v7577, 0
      %v7625 = vsel %vm6678, %v7579, 0
      %v7628 = vsel %vm6678, %v7581, 0
      %v7631 = vsel %vm6678, %v7583, 0
      %v7634 = vsel %vm6678, %v7585, 0
      %v7637 = vsel %vm6678, %v7587, 0
      %v7640 = vsel %vm6678, %v7589, 0
      %v7643 = vsel %vm6678, %v7591, 0
      %v7646 = vsel %vm6678, %v7593, 0
      %7648 = vmatprep.subr.mxu0 0.0
      %7649 = vmatpush1.msra.mxu0 %v7015
      %7650 = vmatprep.subr.mxu0 0.0
      %7651 = vmatpush1.msra.mxu0 %v7016
      %7652 = vmatprep.subr.mxu0 0.0
      %7653 = vmatpush1.msra.mxu0 %v7017
      %7654 = vmatprep.subr.mxu0 0.0
      %7655 = vmatpush1.msra.mxu0 %v7018
      %7656 = vmatprep.subr.mxu0 0.0
      %7657 = vmatpush1.msra.mxu0 %v7019
      %7658 = vmatprep.subr.mxu0 0.0
      %7659 = vmatpush1.msra.mxu0 %v7020
      %7660 = vmatprep.subr.mxu0 0.0
      %7661 = vmatpush1.msra.mxu0 %v7021
      %7662 = vmatprep.subr.mxu0 0.0
      %7663 = vmatpush1.msra.mxu0 %v7022
      %7664 = vmatprep.subr.mxu0 0.0
      %7665 = vmatpush1.msra.mxu0 %v7023
      %7666 = vmatprep.subr.mxu0 0.0
      %7667 = vmatpush1.msra.mxu0 %v7024
      %7668 = vmatprep.subr.mxu0 0.0
      %7669 = vmatpush1.msra.mxu0 %v7025
      %7670 = vmatprep.subr.mxu0 0.0
      %7671 = vmatpush1.msra.mxu0 %v7026
      %7672 = vmatprep.subr.mxu0 0.0
      %7673 = vmatpush1.msra.mxu0 %v7027
      %7674 = vmatprep.subr.mxu0 0.0
      %7675 = vmatpush1.msra.mxu0 %v7028
      %7676 = vmatprep.subr.mxu0 0.0
      %7677 = vmatpush1.msra.mxu0 %v7029
      %7678 = vmatprep.subr.mxu0 0.0
      %7679 = vmatpush1.msra.mxu0 %v7030
      %7680 = vmatprep.subr.mxu0 0.0
      %7681 = vmatpush1.msra.mxu0 %v7031
      %7682 = vmatprep.subr.mxu0 0.0
      %7683 = vmatpush1.msra.mxu0 %v7032
      %7684 = vmatprep.subr.mxu0 0.0
      %7685 = vmatpush1.msra.mxu0 %v7033
      %7686 = vmatprep.subr.mxu0 0.0
      %7687 = vmatpush1.msra.mxu0 %v7034
      %7688 = vmatprep.subr.mxu0 0.0
      %7689 = vmatpush1.msra.mxu0 %v7035
      %7690 = vmatprep.subr.mxu0 0.0
      %7691 = vmatpush1.msra.mxu0 %v7036
      %7692 = vmatprep.subr.mxu0 0.0
      %7693 = vmatpush1.msra.mxu0 %v7037
      %7694 = vmatprep.subr.mxu0 0.0
      %7695 = vmatpush1.msra.mxu0 %v7038
      %7696 = vmatprep.subr.mxu0 0.0
      %7697 = vmatpush1.msra.mxu0 %v7039
      %7698 = vmatprep.subr.mxu0 0.0
      %7699 = vmatpush1.msra.mxu0 0.0
      %7700 = vmatprep.subr.mxu0 0.0
      %7701 = vmatpush1.msra.mxu0 0.0
      %7702 = vmatprep.subr.mxu0 0.0
      %7703 = vmatpush1.msra.mxu0 0.0
      %7704 = vmatprep.subr.mxu0 0.0
      %7705 = vmatpush1.msra.mxu0 0.0
      %7706 = vmatprep.subr.mxu0 0.0
      %7707 = vmatpush1.msra.mxu0 0.0
      %7708 = vmatprep.subr.mxu0 0.0
      %7709 = vmatpush1.msra.mxu0 0.0
      %7710 = vmatprep.subr.mxu0 0.0
      %7711 = vmatpush1.msra.mxu0 0.0
      %7712 = vmatprep.mubr.f32.mxu0 %v7595
      %7713 = vmatmul.mubr.f32.gmra.mrb[0].mxu0 %v7558
      %v7714 = vpop.f32.mrb[0].mxu0
      %v7715 = vadd.f32 0.0, %v7714
      %v7716 = vpop.f32.mrb[0].mxu0
      %7717 = vmatprep.mubr.f32.mxu0 %v7598
      %7718 = vmatmul.mubr.f32.gmra.mrb[0].mxu0 %v7560
      %v7719 = vpop.f32.mrb[0].mxu0
      %v7720 = vadd.f32 0.0, %v7719
      %v7721 = vpop.f32.mrb[0].mxu0
      %7722 = vmatprep.mubr.f32.mxu0 %v7601
      %7723 = vmatmul.mubr.f32.gmra.mrb[0].mxu0 %v7562
      %v7724 = vpop.f32.mrb[0].mxu0
      %v7725 = vadd.f32 0.0, %v7724
      %v7726 = vpop.f32.mrb[0].mxu0
      %7727 = vmatprep.mubr.f32.mxu0 %v7604
      %7728 = vmatmul.mubr.f32.gmra.mrb[0].mxu0 %v7564
      %v7729 = vpop.f32.mrb[0].mxu0
      %v7730 = vadd.f32 0.0, %v7729
      %v7731 = vpop.f32.mrb[0].mxu0
      %7732 = vmatprep.mubr.f32.mxu0 %v7607
      %7733 = vmatmul.mubr.f32.gmra.mrb[0].mxu0 %v7566
      %v7734 = vpop.f32.mrb[0].mxu0
      %v7735 = vadd.f32 0.0, %v7734
      %v7736 = vpop.f32.mrb[0].mxu0
      %7737 = vmatprep.mubr.f32.mxu0 %v7610
      %7738 = vmatmul.mubr.f32.gmra.mrb[0].mxu0 %v7568
      %v7739 = vpop.f32.mrb[0].mxu0
      %v7740 = vadd.f32 0.0, %v7739
      %v7741 = vpop.f32.mrb[0].mxu0
      %7742 = vmatprep.mubr.f32.mxu0 %v7613
      %7743 = vmatmul.mubr.f32.gmra.mrb[0].mxu0 %v7570
      %v7744 = vpop.f32.mrb[0].mxu0
      %v7745 = vadd.f32 0.0, %v7744
      %v7746 = vpop.f32.mrb[0].mxu0
      %7747 = vmatprep.mubr.f32.mxu0 %v7616
      %7748 = vmatmul.mubr.f32.gmra.mrb[0].mxu0 %v7572
      %v7749 = vpop.f32.mrb[0].mxu0
      %v7750 = vadd.f32 0.0, %v7749
      %v7751 = vpop.f32.mrb[0].mxu0
      %7752 = vmatprep.mubr.f32.mxu0 %v7619
      %7753 = vmatmul.mubr.f32.gmra.mrb[0].mxu0 %v7574
      %v7754 = vpop.f32.mrb[0].mxu0
      %v7755 = vadd.f32 0.0, %v7754
      %v7756 = vpop.f32.mrb[0].mxu0
      %7757 = vmatprep.mubr.f32.mxu0 %v7622
      %7758 = vmatmul.mubr.f32.gmra.mrb[0].mxu0 %v7576
      %v7759 = vpop.f32.mrb[0].mxu0
      %v7760 = vadd.f32 0.0, %v7759
      %v7761 = vpop.f32.mrb[0].mxu0
      %7762 = vmatprep.mubr.f32.mxu0 %v7625
      %7763 = vmatmul.mubr.f32.gmra.mrb[0].mxu0 %v7578
      %v7764 = vpop.f32.mrb[0].mxu0
      %v7765 = vadd.f32 0.0, %v7764
      %v7766 = vpop.f32.mrb[0].mxu0
      %7767 = vmatprep.mubr.f32.mxu0 %v7628
      %7768 = vmatmul.mubr.f32.gmra.mrb[0].mxu0 %v7580
      %v7769 = vpop.f32.mrb[0].mxu0
      %v7770 = vadd.f32 0.0, %v7769
      %v7771 = vpop.f32.mrb[0].mxu0
      %7772 = vmatprep.mubr.f32.mxu0 %v7631
      %7773 = vmatmul.mubr.f32.gmra.mrb[0].mxu0 %v7582
      %v7774 = vpop.f32.mrb[0].mxu0
      %v7775 = vadd.f32 0.0, %v7774
      %v7776 = vpop.f32.mrb[0].mxu0
      %7777 = vmatprep.mubr.f32.mxu0 %v7634
      %7778 = vmatmul.mubr.f32.gmra.mrb[0].mxu0 %v7584
      %v7779 = vpop.f32.mrb[0].mxu0
      %v7780 = vadd.f32 0.0, %v7779
      %v7781 = vpop.f32.mrb[0].mxu0
      %7782 = vmatprep.mubr.f32.mxu0 %v7637
      %7783 = vmatmul.mubr.f32.gmra.mrb[0].mxu0 %v7586
      %v7784 = vpop.f32.mrb[0].mxu0
      %v7785 = vadd.f32 0.0, %v7784
      %v7786 = vpop.f32.mrb[0].mxu0
      %7787 = vmatprep.mubr.f32.mxu0 %v7640
      %7788 = vmatmul.mubr.f32.gmra.mrb[0].mxu0 %v7588
      %v7789 = vpop.f32.mrb[0].mxu0
      %v7790 = vadd.f32 0.0, %v7789
      %v7791 = vpop.f32.mrb[0].mxu0
      %7792 = vmatprep.mubr.f32.mxu0 %v7643
      %7793 = vmatmul.mubr.f32.gmra.mrb[0].mxu0 %v7590
      %v7794 = vpop.f32.mrb[0].mxu0
      %v7795 = vadd.f32 0.0, %v7794
      %v7796 = vpop.f32.mrb[0].mxu0
      %7797 = vmatprep.mubr.f32.mxu0 %v7646
      %7798 = vmatmul.mubr.f32.gmra.mrb[0].mxu0 %v7592
      %v7799 = vpop.f32.mrb[0].mxu0
      %v7800 = vadd.f32 0.0, %v7799
      %v7801 = vpop.f32.mrb[0].mxu0
      %7802 = vdwg.mxu0
      %v7804 = vsel %vm6678, %v6950, 0
      %v7807 = vsel %vm6678, %v6952, 0
      %v7810 = vsel %vm6678, %v6954, 0
      %v7813 = vsel %vm6678, %v6956, 0
      %v7816 = vsel %vm6678, %v6958, 0
      %v7819 = vsel %vm6678, %v6960, 0
      %v7822 = vsel %vm6678, %v6962, 0
      %v7825 = vsel %vm6678, %v6964, 0
      %v7828 = vsel %vm6678, %v6966, 0
      %v7831 = vsel %vm6678, %v6968, 0
      %v7834 = vsel %vm6678, %v6970, 0
      %v7837 = vsel %vm6678, %v6972, 0
      %v7840 = vsel %vm6678, %v6974, 0
      %v7843 = vsel %vm6678, %v6976, 0
      %v7846 = vsel %vm6678, %v6978, 0
      %v7849 = vsel %vm6678, %v6980, 0
      %v7852 = vsel %vm6678, %v6982, 0
      %v7855 = vsel %vm6678, %v6984, 0
      %7857 = vmatprep.subr.mxu0 0.0
      %7858 = vmatpush1.msra.mxu0 %v6351
      %7859 = vmatprep.subr.mxu0 0.0
      %7860 = vmatpush1.msra.mxu0 %v6352
      %7861 = vmatprep.subr.mxu0 0.0
      %7862 = vmatpush1.msra.mxu0 %v6353
      %7863 = vmatprep.subr.mxu0 0.0
      %7864 = vmatpush1.msra.mxu0 %v6354
      %7865 = vmatprep.subr.mxu0 0.0
      %7866 = vmatpush1.msra.mxu0 %v6355
      %7867 = vmatprep.subr.mxu0 0.0
      %7868 = vmatpush1.msra.mxu0 %v6356
      %7869 = vmatprep.subr.mxu0 0.0
      %7870 = vmatpush1.msra.mxu0 %v6357
      %7871 = vmatprep.subr.mxu0 0.0
      %7872 = vmatpush1.msra.mxu0 %v6358
      %7873 = vmatprep.subr.mxu0 0.0
      %7874 = vmatpush1.msra.mxu0 %v6359
      %7875 = vmatprep.subr.mxu0 0.0
      %7876 = vmatpush1.msra.mxu0 %v6360
      %7877 = vmatprep.subr.mxu0 0.0
      %7878 = vmatpush1.msra.mxu0 %v6361
      %7879 = vmatprep.subr.mxu0 0.0
      %7880 = vmatpush1.msra.mxu0 %v6362
      %7881 = vmatprep.subr.mxu0 0.0
      %7882 = vmatpush1.msra.mxu0 %v6363
      %7883 = vmatprep.subr.mxu0 0.0
      %7884 = vmatpush1.msra.mxu0 %v6364
      %7885 = vmatprep.subr.mxu0 0.0
      %7886 = vmatpush1.msra.mxu0 %v6365
      %7887 = vmatprep.subr.mxu0 0.0
      %7888 = vmatpush1.msra.mxu0 %v6366
      %7889 = vmatprep.subr.mxu0 0.0
      %7890 = vmatpush1.msra.mxu0 %v6367
      %7891 = vmatprep.subr.mxu0 0.0
      %7892 = vmatpush1.msra.mxu0 %v6368
      %7893 = vmatprep.subr.mxu0 0.0
      %7894 = vmatpush1.msra.mxu0 %v6369
      %7895 = vmatprep.subr.mxu0 0.0
      %7896 = vmatpush1.msra.mxu0 %v6370
      %7897 = vmatprep.subr.mxu0 0.0
      %7898 = vmatpush1.msra.mxu0 %v6371
      %7899 = vmatprep.subr.mxu0 0.0
      %7900 = vmatpush1.msra.mxu0 %v6372
      %7901 = vmatprep.subr.mxu0 0.0
      %7902 = vmatpush1.msra.mxu0 %v6373
      %7903 = vmatprep.subr.mxu0 0.0
      %7904 = vmatpush1.msra.mxu0 %v6374
      %7905 = vmatprep.subr.mxu0 0.0
      %7906 = vmatpush1.msra.mxu0 %v6375
      %7907 = vmatprep.subr.mxu0 0.0
      %7908 = vmatpush1.msra.mxu0 0.0
      %7909 = vmatprep.subr.mxu0 0.0
      %7910 = vmatpush1.msra.mxu0 0.0
      %7911 = vmatprep.subr.mxu0 0.0
      %7912 = vmatpush1.msra.mxu0 0.0
      %7913 = vmatprep.subr.mxu0 0.0
      %7914 = vmatpush1.msra.mxu0 0.0
      %7915 = vmatprep.subr.mxu0 0.0
      %7916 = vmatpush1.msra.mxu0 0.0
      %7917 = vmatprep.subr.mxu0 0.0
      %7918 = vmatpush1.msra.mxu0 0.0
      %7919 = vmatprep.subr.mxu0 0.0
      %7920 = vmatpush1.msra.mxu0 0.0
      %7921 = vmatprep.mubr.f32.mxu0 %v7804
      %7922 = vmatmul.mubr.f32.gmra.mrb[0].mxu0 %v6949
      %v7923 = vpop.f32.mrb[0].mxu0
      %v7924 = vadd.f32 %v7715, %v7923
      %v7925 = vpop.f32.mrb[0].mxu0
      %7926 = vmatprep.mubr.f32.mxu0 %v7807
      %7927 = vmatmul.mubr.f32.gmra.mrb[0].mxu0 %v6951
      %v7928 = vpop.f32.mrb[0].mxu0
      %v7929 = vadd.f32 %v7720, %v7928
      %v7930 = vpop.f32.mrb[0].mxu0
      %7931 = vmatprep.mubr.f32.mxu0 %v7810
      %7932 = vmatmul.mubr.f32.gmra.mrb[0].mxu0 %v6953
      %v7933 = vpop.f32.mrb[0].mxu0
      %v7934 = vadd.f32 %v7725, %v7933
      %v7935 = vpop.f32.mrb[0].mxu0
      %7936 = vmatprep.mubr.f32.mxu0 %v7813
      %7937 = vmatmul.mubr.f32.gmra.mrb[0].mxu0 %v6955
      %v7938 = vpop.f32.mrb[0].mxu0
      %v7939 = vadd.f32 %v7730, %v7938
      %v7940 = vpop.f32.mrb[0].mxu0
      %7941 = vmatprep.mubr.f32.mxu0 %v7816
      %7942 = vmatmul.mubr.f32.gmra.mrb[0].mxu0 %v6957
      %v7943 = vpop.f32.mrb[0].mxu0
      %v7944 = vadd.f32 %v7735, %v7943
      %v7945 = vpop.f32.mrb[0].mxu0
      %7946 = vmatprep.mubr.f32.mxu0 %v7819
      %7947 = vmatmul.mubr.f32.gmra.mrb[0].mxu0 %v6959
      %v7948 = vpop.f32.mrb[0].mxu0
      %v7949 = vadd.f32 %v7740, %v7948
      %v7950 = vpop.f32.mrb[0].mxu0
      %7951 = vmatprep.mubr.f32.mxu0 %v7822
      %7952 = vmatmul.mubr.f32.gmra.mrb[0].mxu0 %v6961
      %v7953 = vpop.f32.mrb[0].mxu0
      %v7954 = vadd.f32 %v7745, %v7953
      %v7955 = vpop.f32.mrb[0].mxu0
      %7956 = vmatprep.mubr.f32.mxu0 %v7825
      %7957 = vmatmul.mubr.f32.gmra.mrb[0].mxu0 %v6963
      %v7958 = vpop.f32.mrb[0].mxu0
      %v7959 = vadd.f32 %v7750, %v7958
      %v7960 = vpop.f32.mrb[0].mxu0
      %7961 = vmatprep.mubr.f32.mxu0 %v7828
      %7962 = vmatmul.mubr.f32.gmra.mrb[0].mxu0 %v6965
      %v7963 = vpop.f32.mrb[0].mxu0
      %v7964 = vadd.f32 %v7755, %v7963
      %v7965 = vpop.f32.mrb[0].mxu0
      %7966 = vmatprep.mubr.f32.mxu0 %v7831
      %7967 = vmatmul.mubr.f32.gmra.mrb[0].mxu0 %v6967
      %v7968 = vpop.f32.mrb[0].mxu0
      %v7969 = vadd.f32 %v7760, %v7968
      %v7970 = vpop.f32.mrb[0].mxu0
      %7971 = vmatprep.mubr.f32.mxu0 %v7834
      %7972 = vmatmul.mubr.f32.gmra.mrb[0].mxu0 %v6969
      %v7973 = vpop.f32.mrb[0].mxu0
      %v7974 = vadd.f32 %v7765, %v7973
      %v7975 = vpop.f32.mrb[0].mxu0
      %7976 = vmatprep.mubr.f32.mxu0 %v7837
      %7977 = vmatmul.mubr.f32.gmra.mrb[0].mxu0 %v6971
      %v7978 = vpop.f32.mrb[0].mxu0
      %v7979 = vadd.f32 %v7770, %v7978
      %v7980 = vpop.f32.mrb[0].mxu0
      %7981 = vmatprep.mubr.f32.mxu0 %v7840
      %7982 = vmatmul.mubr.f32.gmra.mrb[0].mxu0 %v6973
      %v7983 = vpop.f32.mrb[0].mxu0
      %v7984 = vadd.f32 %v7775, %v7983
      %v7985 = vpop.f32.mrb[0].mxu0
      %7986 = vmatprep.mubr.f32.mxu0 %v7843
      %7987 = vmatmul.mubr.f32.gmra.mrb[0].mxu0 %v6975
      %v7988 = vpop.f32.mrb[0].mxu0
      %v7989 = vadd.f32 %v7780, %v7988
      %v7990 = vpop.f32.mrb[0].mxu0
      %7991 = vmatprep.mubr.f32.mxu0 %v7846
      %7992 = vmatmul.mubr.f32.gmra.mrb[0].mxu0 %v6977
      %v7993 = vpop.f32.mrb[0].mxu0
      %v7994 = vadd.f32 %v7785, %v7993
      %v7995 = vpop.f32.mrb[0].mxu0
      %7996 = vmatprep.mubr.f32.mxu0 %v7849
      %7997 = vmatmul.mubr.f32.gmra.mrb[0].mxu0 %v6979
      %v7998 = vpop.f32.mrb[0].mxu0
      %v7999 = vadd.f32 %v7790, %v7998
      %v8000 = vpop.f32.mrb[0].mxu0
      %8001 = vmatprep.mubr.f32.mxu0 %v7852
      %8002 = vmatmul.mubr.f32.gmra.mrb[0].mxu0 %v6981
      %v8003 = vpop.f32.mrb[0].mxu0
      %v8004 = vadd.f32 %v7795, %v8003
      %v8005 = vpop.f32.mrb[0].mxu0
      %8006 = vmatprep.mubr.f32.mxu0 %v7855
      %8007 = vmatmul.mubr.f32.gmra.mrb[0].mxu0 %v6983
      %v8008 = vpop.f32.mrb[0].mxu0
      %v8009 = vadd.f32 %v7800, %v8008
      %v8010 = vpop.f32.mrb[0].mxu0
      %8011 = vdwg.mxu0
      %v8012 = vld [vmem:[%s10] sm:$0xff]
      %v8013 = vld [vmem:[%s10 + $0x8] sm:$0xff]
      %v8014 = vld [vmem:[%s10 + $0x10] sm:$0xff]
      %v8015 = vld [vmem:[%s10 + $0x18] sm:$0xff]
      %v8016 = vld [vmem:[%s11] sm:$0x1]
      %v8018 = vlaneseq
      %v8019 = vshrl.u32 %v8018, 7
      %v8020 = vsub.s32 0, %v8019
      %v8021 = vrot.slane %v8016, %v8020
      %v8024 = vsel %vm5234, %v7924, 0
      %v8027 = vsel %vm5234, %v7929, 0
      %v8030 = vsel %vm5234, %v7934, 0
      %v8033 = vsel %vm5234, %v7939, 0
      %v8036 = vsel %vm5234, %v7944, 0
      %v8039 = vsel %vm5234, %v7949, 0
      %v8042 = vsel %vm5234, %v7954, 0
      %v8045 = vsel %vm5234, %v7959, 0
      %v8048 = vsel %vm5234, %v7964, 0
      %v8051 = vsel %vm5234, %v7969, 0
      %v8054 = vsel %vm5234, %v7974, 0
      %v8057 = vsel %vm5234, %v7979, 0
      %v8060 = vsel %vm5234, %v7984, 0
      %v8063 = vsel %vm5234, %v7989, 0
      %v8066 = vsel %vm5234, %v7994, 0
      %v8069 = vsel %vm5234, %v7999, 0
      %v8072 = vsel %vm5234, %v8004, 0
      %v8075 = vsel %vm5234, %v8009, 0
      %8077 = vmatprep.subr.mxu0 0.0
      %8078 = vmatpush1.msra.mxu0 %v8012
      %8079 = vmatprep.subr.mxu0 0.0
      %8080 = vmatpush1.msra.mxu0 %v8013
      %8081 = vmatprep.subr.mxu0 0.0
      %8082 = vmatpush1.msra.mxu0 %v8014
      %8083 = vmatprep.subr.mxu0 0.0
      %8084 = vmatpush1.msra.mxu0 %v8015
      %8085 = vmatprep.subr.mxu0 0.0
      %8086 = vmatpush1.msra.mxu0 0.0
      %8087 = vmatprep.subr.mxu0 0.0
      %8088 = vmatpush1.msra.mxu0 0.0
      %8089 = vmatprep.subr.mxu0 0.0
      %8090 = vmatpush1.msra.mxu0 0.0
      %8091 = vmatprep.subr.mxu0 0.0
      %8092 = vmatpush1.msra.mxu0 0.0
      %8093 = vmatprep.subr.mxu0 0.0
      %8094 = vmatpush1.msra.mxu0 0.0
      %8095 = vmatprep.subr.mxu0 0.0
      %8096 = vmatpush1.msra.mxu0 0.0
      %8097 = vmatprep.subr.mxu0 0.0
      %8098 = vmatpush1.msra.mxu0 0.0
      %8099 = vmatprep.subr.mxu0 0.0
      %8100 = vmatpush1.msra.mxu0 0.0
      %8101 = vmatprep.subr.mxu0 0.0
      %8102 = vmatpush1.msra.mxu0 0.0
      %8103 = vmatprep.subr.mxu0 0.0
      %8104 = vmatpush1.msra.mxu0 0.0
      %8105 = vmatprep.subr.mxu0 0.0
      %8106 = vmatpush1.msra.mxu0 0.0
      %8107 = vmatprep.subr.mxu0 0.0
      %8108 = vmatpush1.msra.mxu0 0.0
      %8109 = vmatprep.subr.mxu0 0.0
      %8110 = vmatpush1.msra.mxu0 0.0
      %8111 = vmatprep.subr.mxu0 0.0
      %8112 = vmatpush1.msra.mxu0 0.0
      %8113 = vmatprep.subr.mxu0 0.0
      %8114 = vmatpush1.msra.mxu0 0.0
      %8115 = vmatprep.subr.mxu0 0.0
      %8116 = vmatpush1.msra.mxu0 0.0
      %8117 = vmatprep.subr.mxu0 0.0
      %8118 = vmatpush1.msra.mxu0 0.0
      %8119 = vmatprep.subr.mxu0 0.0
      %8120 = vmatpush1.msra.mxu0 0.0
      %8121 = vmatprep.subr.mxu0 0.0
      %8122 = vmatpush1.msra.mxu0 0.0
      %8123 = vmatprep.subr.mxu0 0.0
      %8124 = vmatpush1.msra.mxu0 0.0
      %8125 = vmatprep.subr.mxu0 0.0
      %8126 = vmatpush1.msra.mxu0 0.0
      %8127 = vmatprep.subr.mxu0 0.0
      %8128 = vmatpush1.msra.mxu0 0.0
      %8129 = vmatprep.subr.mxu0 0.0
      %8130 = vmatpush1.msra.mxu0 0.0
      %8131 = vmatprep.subr.mxu0 0.0
      %8132 = vmatpush1.msra.mxu0 0.0
      %8133 = vmatprep.subr.mxu0 0.0
      %8134 = vmatpush1.msra.mxu0 0.0
      %8135 = vmatprep.subr.mxu0 0.0
      %8136 = vmatpush1.msra.mxu0 0.0
      %8137 = vmatprep.subr.mxu0 0.0
      %8138 = vmatpush1.msra.mxu0 0.0
      %8139 = vmatprep.subr.mxu0 0.0
      %8140 = vmatpush1.msra.mxu0 0.0
      %8141 = vmatprep.mubr.f32.mxu0 0.0
      %8142 = vmatmul.mubr.f32.gmra.mrb[0].mxu0 %v8024
      %v8143 = vpop.f32.mrb[0].mxu0
      %v8144 = vadd.f32 %v8021, %v8143
      %v8145 = vpop.f32.mrb[0].mxu0
      %8146 = vmatprep.mubr.f32.mxu0 0.0
      %8147 = vmatmul.mubr.f32.gmra.mrb[0].mxu0 %v8027
      %v8148 = vpop.f32.mrb[0].mxu0
      %v8149 = vadd.f32 %v8021, %v8148
      %v8150 = vpop.f32.mrb[0].mxu0
      %8151 = vmatprep.mubr.f32.mxu0 0.0
      %8152 = vmatmul.mubr.f32.gmra.mrb[0].mxu0 %v8030
      %v8153 = vpop.f32.mrb[0].mxu0
      %v8154 = vadd.f32 %v8021, %v8153
      %v8155 = vpop.f32.mrb[0].mxu0
      %8156 = vmatprep.mubr.f32.mxu0 0.0
      %8157 = vmatmul.mubr.f32.gmra.mrb[0].mxu0 %v8033
      %v8158 = vpop.f32.mrb[0].mxu0
      %v8159 = vadd.f32 %v8021, %v8158
      %v8160 = vpop.f32.mrb[0].mxu0
      %8161 = vmatprep.mubr.f32.mxu0 0.0
      %8162 = vmatmul.mubr.f32.gmra.mrb[0].mxu0 %v8036
      %v8163 = vpop.f32.mrb[0].mxu0
      %v8164 = vadd.f32 %v8021, %v8163
      %v8165 = vpop.f32.mrb[0].mxu0
      %8166 = vmatprep.mubr.f32.mxu0 0.0
      %8167 = vmatmul.mubr.f32.gmra.mrb[0].mxu0 %v8039
      %v8168 = vpop.f32.mrb[0].mxu0
      %v8169 = vadd.f32 %v8021, %v8168
      %v8170 = vpop.f32.mrb[0].mxu0
      %8171 = vmatprep.mubr.f32.mxu0 0.0
      %8172 = vmatmul.mubr.f32.gmra.mrb[0].mxu0 %v8042
      %v8173 = vpop.f32.mrb[0].mxu0
      %v8174 = vadd.f32 %v8021, %v8173
      %v8175 = vpop.f32.mrb[0].mxu0
      %8176 = vmatprep.mubr.f32.mxu0 0.0
      %8177 = vmatmul.mubr.f32.gmra.mrb[0].mxu0 %v8045
      %v8178 = vpop.f32.mrb[0].mxu0
      %v8179 = vadd.f32 %v8021, %v8178
      %v8180 = vpop.f32.mrb[0].mxu0
      %8181 = vmatprep.mubr.f32.mxu0 0.0
      %8182 = vmatmul.mubr.f32.gmra.mrb[0].mxu0 %v8048
      %v8183 = vpop.f32.mrb[0].mxu0
      %v8184 = vadd.f32 %v8021, %v8183
      %v8185 = vpop.f32.mrb[0].mxu0
      %8186 = vmatprep.mubr.f32.mxu0 0.0
      %8187 = vmatmul.mubr.f32.gmra.mrb[0].mxu0 %v8051
      %v8188 = vpop.f32.mrb[0].mxu0
      %v8189 = vadd.f32 %v8021, %v8188
      %v8190 = vpop.f32.mrb[0].mxu0
      %8191 = vmatprep.mubr.f32.mxu0 0.0
      %8192 = vmatmul.mubr.f32.gmra.mrb[0].mxu0 %v8054
      %v8193 = vpop.f32.mrb[0].mxu0
      %v8194 = vadd.f32 %v8021, %v8193
      %v8195 = vpop.f32.mrb[0].mxu0
      %8196 = vmatprep.mubr.f32.mxu0 0.0
      %8197 = vmatmul.mubr.f32.gmra.mrb[0].mxu0 %v8057
      %v8198 = vpop.f32.mrb[0].mxu0
      %v8199 = vadd.f32 %v8021, %v8198
      %v8200 = vpop.f32.mrb[0].mxu0
      %8201 = vmatprep.mubr.f32.mxu0 0.0
      %8202 = vmatmul.mubr.f32.gmra.mrb[0].mxu0 %v8060
      %v8203 = vpop.f32.mrb[0].mxu0
      %v8204 = vadd.f32 %v8021, %v8203
      %v8205 = vpop.f32.mrb[0].mxu0
      %8206 = vmatprep.mubr.f32.mxu0 0.0
      %8207 = vmatmul.mubr.f32.gmra.mrb[0].mxu0 %v8063
      %v8208 = vpop.f32.mrb[0].mxu0
      %v8209 = vadd.f32 %v8021, %v8208
      %v8210 = vpop.f32.mrb[0].mxu0
      %8211 = vmatprep.mubr.f32.mxu0 0.0
      %8212 = vmatmul.mubr.f32.gmra.mrb[0].mxu0 %v8066
      %v8213 = vpop.f32.mrb[0].mxu0
      %v8214 = vadd.f32 %v8021, %v8213
      %v8215 = vpop.f32.mrb[0].mxu0
      %8216 = vmatprep.mubr.f32.mxu0 0.0
      %8217 = vmatmul.mubr.f32.gmra.mrb[0].mxu0 %v8069
      %v8218 = vpop.f32.mrb[0].mxu0
      %v8219 = vadd.f32 %v8021, %v8218
      %v8220 = vpop.f32.mrb[0].mxu0
      %8221 = vmatprep.mubr.f32.mxu0 0.0
      %8222 = vmatmul.mubr.f32.gmra.mrb[0].mxu0 %v8072
      %v8223 = vpop.f32.mrb[0].mxu0
      %v8224 = vadd.f32 %v8021, %v8223
      %v8225 = vpop.f32.mrb[0].mxu0
      %8226 = vmatprep.mubr.f32.mxu0 0.0
      %8227 = vmatmul.mubr.f32.gmra.mrb[0].mxu0 %v8075
      %v8228 = vpop.f32.mrb[0].mxu0
      %v8229 = vadd.f32 %v8021, %v8228
      %v8230 = vpop.f32.mrb[0].mxu0
      %8231 = vdwg.mxu0
      %8232 = vst.msk [vmem:[%s413] sm:$0xff] %vm5234, %v8144
      %8233 = vst.msk [vmem:[%s413 + $0x8] sm:$0xff] %vm5234, %v8149
      %8234 = vst.msk [vmem:[%s413 + $0x10] sm:$0xff] %vm5234, %v8154
      %8235 = vst.msk [vmem:[%s413 + $0x18] sm:$0xff] %vm5234, %v8159
      %8236 = vst.msk [vmem:[%s413 + $0x20] sm:$0xff] %vm5234, %v8164
      %8237 = vst.msk [vmem:[%s413 + $0x28] sm:$0xff] %vm5234, %v8169
      %8238 = vst.msk [vmem:[%s413 + $0x30] sm:$0xff] %vm5234, %v8174
      %8239 = vst.msk [vmem:[%s413 + $0x38] sm:$0xff] %vm5234, %v8179
      %8240 = vst.msk [vmem:[%s413 + $0x40] sm:$0xff] %vm5234, %v8184
      %8241 = vst.msk [vmem:[%s413 + $0x48] sm:$0xff] %vm5234, %v8189
      %8242 = vst.msk [vmem:[%s413 + $0x50] sm:$0xff] %vm5234, %v8194
      %8243 = vst.msk [vmem:[%s413 + $0x58] sm:$0xff] %vm5234, %v8199
      %8244 = vst.msk [vmem:[%s413 + $0x60] sm:$0xff] %vm5234, %v8204
      %8245 = vst.msk [vmem:[%s413 + $0x68] sm:$0xff] %vm5234, %v8209
      %8246 = vst.msk [vmem:[%s413 + $0x70] sm:$0xff] %vm5234, %v8214
      %8247 = vst.msk [vmem:[%s413 + $0x78] sm:$0xff] %vm5234, %v8219
      %8248 = vst.msk [vmem:[%s413 + $0x80] sm:$0xff] %vm5234, %v8224
      %8249 = vst.msk [vmem:[%s413 + $0x88] sm:$0xff] %vm5234, %v8229
      %p8250 = scmp.lt.s32.totalorder %s23, 1
      %s8251 = scalar_select %p8250, %s23, 1
      %s8252 = smul.addr %s8251, 18
      %s8253 = smul.addr %s8252, 8
      %s8254 = scalar_lea.vmem %s12, %s8253
      // Predicated region
      $region69: #{tpu_custom_call.1} parent=67 // pred_check
        %p8255 = pneg %p298
      $region70: #{tpu_custom_call.1} parent=67 // pred_check_branch
        %8257 = sbr.rel (%p8255) target = $region72
      $region71: #{tpu_custom_call.1} parent=67 // pred_region
        _
      $region72: #{tpu_custom_call.1} parent=67 // pred_fallthru
        _
    $region68: #{tpu_custom_call.1} parent=5 // pred_fallthru
      _
    %p8258 = scmp.le.s32.totalorder 2, %s18
    // Predicated region
    $region73: #{tpu_custom_call.1} parent=5 // pred_check
      %p8259 = pneg %p8258
    $region74: #{tpu_custom_call.1} parent=5 // pred_check_branch
      %8261 = sbr.rel (%p8259) target = $region76
    $region75: #{tpu_custom_call.1} parent=5 // pred_region
      %s8262 = ssub.s32 %s18, 2
      // Predicated region
      $region77: #{tpu_custom_call.1} parent=75 // pred_check
        %p8263 = pneg %p304
      $region78: #{tpu_custom_call.1} parent=75 // pred_check_branch
        %8265 = sbr.rel (%p8263) target = $region80
      $region79: #{tpu_custom_call.1} parent=75 // pred_region
        %p8266 = scmp.lt.s32.totalorder %s24, 1
        %s8267 = scalar_select %p8266, %s24, 1
        %s8268 = smul.addr %s8267, 18
        %s8269 = smul.addr %s8268, 8
        %s8270 = scalar_lea.vmem %s12, %s8269
      $region80: #{tpu_custom_call.1} parent=75 // pred_fallthru
        _
    $region76: #{tpu_custom_call.1} parent=5 // pred_fallthru
      _
  $region6: #{tpu_custom_call.1} parent=0 // loop_footer
    %s22 = sadd.s32 1, %s18
  $region7: #{tpu_custom_call.1} parent=0 // loop_footer_branch
    %17 = sbr.rel target = $region3
  $region8: #{tpu_custom_call.1} parent=0 // loop_exit
    _

</llo_original>
